<compile_context>
chip_gen: v7x
topology: tpu7x:2x2x1
jax: 0.10.0
libtpu: 0.0.40
codegen_flags: <defaults>
</compile_context>

<pallas_src>
import jax
import jax.numpy as jnp
from jax.experimental import pallas as pl
from jax.experimental.pallas import tpu as pltpu

NUM_DEFECT_TP = 2
OUT_PAD = 128                 # pad the logits to a full lane-dense 128-wide store
TS = 1024                     # sz-chunk streamed per grid step (lane-dense, 10 MiB W2 tile)
TH = 1280                     # SE-hidden chunk for kernel A (2 chunks -> parallel axis)
VMEM_LIMIT = 28 * 1024 * 1024  # > v5e's 16 MiB default, < every generation's ceiling


# ----------------------------------------------------------------------------
# Kernel A: s = relu(x_pool @ W1 + b1)     (SEBlock.linear_1 + relu)
# grid = (hid // TH  [parallel],  sz // TS  [arbitrary / reduction])
# ----------------------------------------------------------------------------
def _se_linear1_kernel(xp_ref, w1_ref, b1_ref, s_ref, acc_ref):
    k = pl.program_id(1)

    @pl.when(k == 0)
    def _init():
        acc_ref[...] = jnp.zeros_like(acc_ref)

    acc_ref[...] += jnp.dot(xp_ref[...], w1_ref[...],
                            preferred_element_type=jnp.float32)

    @pl.when(k == pl.num_programs(1) - 1)
    def _finalize():
        s_ref[...] = jnp.maximum(acc_ref[...] + b1_ref[...], 0.0)


def se_linear1(xp, w1, b1):
    B, sz = xp.shape
    hid = w1.shape[1]
    assert sz % TS == 0, "sz must be a multiple of TS"
    assert hid % TH == 0, "hid must be a multiple of TH"
    nh, nk = hid // TH, sz // TS
    return pl.pallas_call(
        _se_linear1_kernel,
        out_shape=jax.ShapeDtypeStruct((B, hid), jnp.float32),
        grid=(nh, nk),
        in_specs=[
            pl.BlockSpec((B, TS), lambda i, k: (0, k)),    # pooled activations
            pl.BlockSpec((TS, TH), lambda i, k: (k, i)),   # W1 tile (streamed)
            pl.BlockSpec((1, TH), lambda i, k: (0, i)),    # b1 tile
        ],
        out_specs=pl.BlockSpec((B, TH), lambda i, k: (0, i)),
        scratch_shapes=[pltpu.VMEM((B, TH), jnp.float32)],
        compiler_params=pltpu.CompilerParams(
            dimension_semantics=("parallel", "arbitrary"),
            vmem_limit_bytes=VMEM_LIMIT),
    )(xp, w1, b1)


# ----------------------------------------------------------------------------
# Kernel B: per sz-chunk j:
#   g_j  = sigmoid(s @ W2[:, j] + b2[j])          (SEBlock.linear_2 + sigmoid)
#   xg_j = x_pool[:, j] * g_j                     (SE gating)
#   h   += xg_j @ W_fc1[j, :]                     (Linear(sz, 16), streamed reduction)
# last chunk:
#   o    = sigmoid((h + b_fc1) @ W_fc2_pad + b_fc2_pad)    (Linear(16, 2) + sigmoid)
# ----------------------------------------------------------------------------
def _se_gate_fc_kernel(xp_ref, s_ref, w2_ref, b2_ref, w3_ref, b3_ref,
                       w4_ref, b4_ref, o_ref, h_acc_ref):
    j = pl.program_id(0)

    @pl.when(j == 0)
    def _init():
        h_acc_ref[...] = jnp.zeros_like(h_acc_ref)

    g = jax.nn.sigmoid(
        jnp.dot(s_ref[...], w2_ref[...], preferred_element_type=jnp.float32)
        + b2_ref[...])
    xg = xp_ref[...] * g
    h_acc_ref[...] += jnp.dot(xg, w3_ref[...], preferred_element_type=jnp.float32)

    @pl.when(j == pl.num_programs(0) - 1)
    def _finalize():
        h = h_acc_ref[...] + b3_ref[...]
        y = jnp.dot(h, w4_ref[...], preferred_element_type=jnp.float32) + b4_ref[...]
        o_ref[...] = jax.nn.sigmoid(y)


def se_gate_fc(xp, s, w2, b2, w3, b3, w4_pad, b4_pad):
    B, sz = xp.shape
    hid = s.shape[1]
    assert sz % TS == 0
    nk = sz // TS
    return pl.pallas_call(
        _se_gate_fc_kernel,
        out_shape=jax.ShapeDtypeStruct((B, OUT_PAD), jnp.float32),
        grid=(nk,),
        in_specs=[
            pl.BlockSpec((B, TS), lambda j: (0, j)),        # pooled activations chunk
            pl.BlockSpec((B, hid), lambda j: (0, 0)),       # s (VMEM-resident)
            pl.BlockSpec((hid, TS), lambda j: (0, j)),      # W2 tile (streamed)
            pl.BlockSpec((1, TS), lambda j: (0, j)),        # b2 chunk
            pl.BlockSpec((TS, 16), lambda j: (j, 0)),       # W_fc1 tile (streamed)
            pl.BlockSpec((1, 16), lambda j: (0, 0)),        # b_fc1
            pl.BlockSpec((16, OUT_PAD), lambda j: (0, 0)),  # W_fc2 (zero-padded to 128)
            pl.BlockSpec((1, OUT_PAD), lambda j: (0, 0)),   # b_fc2 (zero-padded to 128)
        ],
        out_specs=pl.BlockSpec((B, OUT_PAD), lambda j: (0, 0)),
        scratch_shapes=[pltpu.VMEM((B, 16), jnp.float32)],
        compiler_params=pltpu.CompilerParams(
            dimension_semantics=("arbitrary",),
            vmem_limit_bytes=VMEM_LIMIT),
    )(xp, s, w2, b2, w3, b3, w4_pad, b4_pad)


# ----------------------------------------------------------------------------
# Full forward: BSL_MultiNet_SEBlock_LN.forward(m_merge)
# ----------------------------------------------------------------------------
@jax.jit
def bsl_multinet_seblock_ln_forward(m_merge, params):
    B, C, H, W = m_merge.shape
    Hp, Wp = H // 2, W // 2
    x = m_merge.astype(jnp.float32)

    # AvgPool2d(2, 2) + NCHW flatten (== pooled.view(B, -1)); cheap XLA reshape-mean,
    # replaces the dense pool-matrix matmul of the previous version.
    xp = x.reshape(B, C, Hp, 2, Wp, 2).mean(axis=(3, 5)).reshape(B, C * Hp * Wp)

    # TODO(synk): Dropout(0.7) is inference-mode identity.

    # SEBlock.linear_1 + relu (kernel A, streams W1).
    s = se_linear1(xp, params["w_se1"], params["b_se1"])

    # Pad the tiny fc2 weights to a lane-dense 128-wide output block.
    nd = params["w_fc2"].shape[1]
    w4_pad = jnp.zeros((16, OUT_PAD), jnp.float32).at[:, :nd].set(params["w_fc2"])
    b4_pad = jnp.zeros((1, OUT_PAD), jnp.float32).at[:, :nd].set(params["b_fc2"])

    # SEBlock.linear_2 + sigmoid gate + Linear(sz,16) + Linear(16,nd) + sigmoid
    # (kernel B, streams W2 / W_fc1).
    y = se_gate_fc(xp, s, params["w_se2"], params["b_se2"],
                   params["w_fc1"], params["b_fc1"], w4_pad, b4_pad)
    return y[:, :nd]


# ----------------------------------------------------------------------------
# Parameters (PyTorch-Linear-style init; weights stored as [in, out] == W.T)
# ----------------------------------------------------------------------------
def init_params(key, C, H, W, num_defect_tp=NUM_DEFECT_TP):
    Hp, Wp = H // 2, W // 2
    sz = C * Hp * Wp                 # 20480 for the canonical [B, 1280, 8, 8] input
    hid = sz // 8                    # SEBlock bottleneck (r = 8)
    ks = jax.random.split(key, 8)

    def linear(kw, kb, fan_in, fan_out):
        bound = 1.0 / (fan_in ** 0.5)
        w = jax.random.uniform(kw, (fan_in, fan_out), jnp.float32, -bound, bound)
        b = jax.random.uniform(kb, (1, fan_out), jnp.float32, -bound, bound)
        return w, b

    w_se1, b_se1 = linear(ks[0], ks[1], sz, hid)
    w_se2, b_se2 = linear(ks[2], ks[3], hid, sz)
    w_fc1, b_fc1 = linear(ks[4], ks[5], sz, 16)
    w_fc2, b_fc2 = linear(ks[6], ks[7], 16, num_defect_tp)
    return dict(w_se1=w_se1, b_se1=b_se1, w_se2=w_se2, b_se2=b_se2,
                w_fc1=w_fc1, b_fc1=b_fc1, w_fc2=w_fc2, b_fc2=b_fc2)


# ----------------------------------------------------------------------------
# Pure-JAX reference (for correctness check)
# ----------------------------------------------------------------------------
def reference_forward(m_merge, params):
    B, C, H, W = m_merge.shape
    Hp, Wp = H // 2, W // 2
    hp = jax.lax.Precision.HIGHEST
    x = m_merge.reshape(B, C, Hp, 2, Wp, 2).mean(axis=(3, 5)).reshape(B, C * Hp * Wp)
    s = jnp.maximum(jnp.dot(x, params["w_se1"], precision=hp) + params["b_se1"], 0.0)
    g = jax.nn.sigmoid(jnp.dot(s, params["w_se2"], precision=hp) + params["b_se2"])
    xg = x * g
    h = jnp.dot(xg, params["w_fc1"], precision=hp) + params["b_fc1"]
    y = jnp.dot(h, params["w_fc2"], precision=hp) + params["b_fc2"]
    return jax.nn.sigmoid(y)


if __name__ == "__main__":
    key = jax.random.PRNGKey(0)
    k_data, k_param = jax.random.split(key)

    # Canonical input for the module's hard-coded sz: 1280 * (8/2) * (8/2) = 20480.
    B, C, H, W = 8, 1280, 8, 8
    m_merge = jax.random.normal(k_data, (B, C, H, W), jnp.float32)
    params = init_params(k_param, C, H, W, num_defect_tp=NUM_DEFECT_TP)

    out = bsl_multinet_seblock_ln_forward(m_merge, params)
    out = jax.block_until_ready(out)

    assert out.shape == (B, NUM_DEFECT_TP), out.shape
    assert out.dtype == jnp.float32
    assert bool(jnp.all((out >= 0.0) & (out <= 1.0)))   # sigmoid output range

    ref = jax.block_until_ready(reference_forward(m_merge, params))
    max_err = float(jnp.max(jnp.abs(out - ref)))
    assert max_err < 5e-3, f"mismatch vs reference: max abs err = {max_err}"

    print("KERNEL_OK")
</pallas_src>

<mosaic_0001>
module attributes {stable_mosaic.version = 11 : i64} {
  func.func @_se_linear1_kernel(%arg0: i32, %arg1: i32, %arg2: memref<8x1024xf32, #tpu.memory_space<vmem>>, %arg3: memref<1024x1280xf32, #tpu.memory_space<vmem>>, %arg4: memref<1x1280xf32, #tpu.memory_space<vmem>>, %arg5: memref<8x1280xf32, #tpu.memory_space<vmem>>, %arg6: memref<8x1280xf32, #tpu.memory_space<vmem>>) attributes {dimension_semantics = [#tpu.dimension_semantics<parallel>, #tpu.dimension_semantics<arbitrary>], iteration_bounds = array<i64: 2, 20>, scalar_prefetch = 0 : i64, scratch_operands = 1 : i64, tpu.core_type = #tpu.core_type<tc>, window_params = [{transform_indices = @transform_0, window_bounds = array<i64: 8, 1024>}, {transform_indices = @transform_1, window_bounds = array<i64: 1024, 1280>}, {transform_indices = @transform_2, window_bounds = array<i64: 1, 1280>}, {transform_indices = @transform_3, window_bounds = array<i64: 8, 1280>}]} {
    %c0_i32 = arith.constant 0 : i32
    %0 = arith.cmpi eq, %arg1, %c0_i32 : i32
    %1 = arith.extui %0 : i1 to i32
    %c0_i32_0 = arith.constant 0 : i32
    %2 = arith.cmpi ne, %1, %c0_i32_0 : i32
    scf.if %2 {
      %cst_9 = arith.constant 0.000000e+00 : f32
      %12 = vector.broadcast %cst_9 : f32 to vector<8x1280xf32>
      %c0_10 = arith.constant 0 : index
      %c0_11 = arith.constant 0 : index
      %13 = vector.load %arg6[%c0_10, %c0_11] : memref<8x1280xf32, #tpu.memory_space<vmem>>, vector<8x1280xf32>
      tpu.vector_store %arg6[%c0_10, %c0_11], %12 {strides = array<i32>} : memref<8x1280xf32, #tpu.memory_space<vmem>>, vector<8x1280xf32>,
    } else {
    }
    %c0 = arith.constant 0 : index
    %c0_1 = arith.constant 0 : index
    %3 = vector.load %arg6[%c0, %c0_1] : memref<8x1280xf32, #tpu.memory_space<vmem>>, vector<8x1280xf32>
    %c0_2 = arith.constant 0 : index
    %c0_3 = arith.constant 0 : index
    %4 = vector.load %arg2[%c0_2, %c0_3] : memref<8x1024xf32, #tpu.memory_space<vmem>>, vector<8x1024xf32>
    %c0_4 = arith.constant 0 : index
    %c0_5 = arith.constant 0 : index
    %5 = vector.load %arg3[%c0_4, %c0_5] : memref<1024x1280xf32, #tpu.memory_space<vmem>>, vector<1024x1280xf32>
    %cst = arith.constant dense<0.000000e+00> : vector<8x1280xf32>
    %6 = tpu.matmul %4, %5, %cst {dimension_numbers = #tpu.dot_dimension_numbers<[1], [0], [0], [1], [0, 0, 1, 1], [], []>} : vector<8x1024xf32>, vector<1024x1280xf32>, vector<8x1280xf32> -> vector<8x1280xf32>
    %7 = arith.addf %3, %6 : vector<8x1280xf32>
    %c0_6 = arith.constant 0 : index
    %c0_7 = arith.constant 0 : index
    %8 = vector.load %arg6[%c0_6, %c0_7] : memref<8x1280xf32, #tpu.memory_space<vmem>>, vector<8x1280xf32>
    tpu.vector_store %arg6[%c0_6, %c0_7], %7 {strides = array<i32>} : memref<8x1280xf32, #tpu.memory_space<vmem>>, vector<8x1280xf32>,
    %c19_i32 = arith.constant 19 : i32
    %9 = arith.cmpi eq, %arg1, %c19_i32 : i32
    %10 = arith.extui %9 : i1 to i32
    %c0_i32_8 = arith.constant 0 : i32
    %11 = arith.cmpi ne, %10, %c0_i32_8 : i32
    scf.if %11 {
      %c0_9 = arith.constant 0 : index
      %c0_10 = arith.constant 0 : index
      %12 = vector.load %arg6[%c0_9, %c0_10] : memref<8x1280xf32, #tpu.memory_space<vmem>>, vector<8x1280xf32>
      %c0_11 = arith.constant 0 : index
      %c0_12 = arith.constant 0 : index
      %13 = vector.load %arg4[%c0_11, %c0_12] : memref<1x1280xf32, #tpu.memory_space<vmem>>, vector<1x1280xf32>
      %14 = vector.broadcast %13 : vector<1x1280xf32> to vector<8x1280xf32>
      %15 = arith.addf %12, %14 : vector<8x1280xf32>
      %cst_13 = arith.constant 0.000000e+00 : f32
      %16 = vector.broadcast %cst_13 : f32 to vector<8x1280xf32>
      %17 = arith.maximumf %15, %16 : vector<8x1280xf32>
      %c0_14 = arith.constant 0 : index
      %c0_15 = arith.constant 0 : index
      %18 = vector.load %arg5[%c0_14, %c0_15] : memref<8x1280xf32, #tpu.memory_space<vmem>>, vector<8x1280xf32>
      tpu.vector_store %arg5[%c0_14, %c0_15], %17 {strides = array<i32>} : memref<8x1280xf32, #tpu.memory_space<vmem>>, vector<8x1280xf32>,
    } else {
    }
    return
  }
  func.func @transform_0(%arg0: i32, %arg1: i32) -> (i32, i32) {
    %c0_i32 = arith.constant 0 : i32
    %c0_i32_0 = arith.constant 0 : i32
    return %c0_i32, %arg1 : i32, i32
  }
  func.func @transform_1(%arg0: i32, %arg1: i32) -> (i32, i32) {
    %c0_i32 = arith.constant 0 : i32
    return %arg1, %arg0 : i32, i32
  }
  func.func @transform_2(%arg0: i32, %arg1: i32) -> (i32, i32) {
    %c0_i32 = arith.constant 0 : i32
    %c0_i32_0 = arith.constant 0 : i32
    return %c0_i32, %arg0 : i32, i32
  }
  func.func @transform_3(%arg0: i32, %arg1: i32) -> (i32, i32) {
    %c0_i32 = arith.constant 0 : i32
    %c0_i32_0 = arith.constant 0 : i32
    return %c0_i32, %arg0 : i32, i32
  }
}

module attributes {stable_mosaic.version = 11 : i64} {
  func.func @_se_gate_fc_kernel(%arg0: i32, %arg1: memref<8x1024xf32, #tpu.memory_space<vmem>>, %arg2: memref<8x2560xf32, #tpu.memory_space<vmem>>, %arg3: memref<2560x1024xf32, #tpu.memory_space<vmem>>, %arg4: memref<1x1024xf32, #tpu.memory_space<vmem>>, %arg5: memref<1024x16xf32, #tpu.memory_space<vmem>>, %arg6: memref<1x16xf32, #tpu.memory_space<vmem>>, %arg7: memref<16x128xf32, #tpu.memory_space<vmem>>, %arg8: memref<1x128xf32, #tpu.memory_space<vmem>>, %arg9: memref<8x128xf32, #tpu.memory_space<vmem>>, %arg10: memref<8x16xf32, #tpu.memory_space<vmem>>) attributes {dimension_semantics = [#tpu.dimension_semantics<arbitrary>], iteration_bounds = array<i64: 20>, scalar_prefetch = 0 : i64, scratch_operands = 1 : i64, tpu.core_type = #tpu.core_type<tc>, window_params = [{transform_indices = @transform_0, window_bounds = array<i64: 8, 1024>}, {pipeline_mode = #tpu.pipeline_mode<synchronous>, transform_indices = @transform_1, window_bounds = array<i64: 8, 2560>}, {transform_indices = @transform_2, window_bounds = array<i64: 2560, 1024>}, {transform_indices = @transform_3, window_bounds = array<i64: 1, 1024>}, {transform_indices = @transform_4, window_bounds = array<i64: 1024, 16>}, {pipeline_mode = #tpu.pipeline_mode<synchronous>, transform_indices = @transform_5, window_bounds = array<i64: 1, 16>}, {pipeline_mode = #tpu.pipeline_mode<synchronous>, transform_indices = @transform_6, window_bounds = array<i64: 16, 128>}, {pipeline_mode = #tpu.pipeline_mode<synchronous>, transform_indices = @transform_7, window_bounds = array<i64: 1, 128>}, {pipeline_mode = #tpu.pipeline_mode<synchronous>, transform_indices = @transform_8, window_bounds = array<i64: 8, 128>}]} {
    %c0_i32 = arith.constant 0 : i32
    %0 = arith.cmpi eq, %arg0, %c0_i32 : i32
    %1 = arith.extui %0 : i1 to i32
    %c0_i32_0 = arith.constant 0 : i32
    %2 = arith.cmpi ne, %1, %c0_i32_0 : i32
    scf.if %2 {
      %cst_17 = arith.constant 0.000000e+00 : f32
      %24 = vector.broadcast %cst_17 : f32 to vector<8x16xf32>
      %c0_18 = arith.constant 0 : index
      %c0_19 = arith.constant 0 : index
      %25 = vector.load %arg10[%c0_18, %c0_19] : memref<8x16xf32, #tpu.memory_space<vmem>>, vector<8x16xf32>
      tpu.vector_store %arg10[%c0_18, %c0_19], %24 {strides = array<i32>} : memref<8x16xf32, #tpu.memory_space<vmem>>, vector<8x16xf32>,
    } else {
    }
    %c0 = arith.constant 0 : index
    %c0_1 = arith.constant 0 : index
    %3 = vector.load %arg2[%c0, %c0_1] : memref<8x2560xf32, #tpu.memory_space<vmem>>, vector<8x2560xf32>
    %c0_2 = arith.constant 0 : index
    %c0_3 = arith.constant 0 : index
    %4 = vector.load %arg3[%c0_2, %c0_3] : memref<2560x1024xf32, #tpu.memory_space<vmem>>, vector<2560x1024xf32>
    %cst = arith.constant dense<0.000000e+00> : vector<8x1024xf32>
    %5 = tpu.matmul %3, %4, %cst {dimension_numbers = #tpu.dot_dimension_numbers<[1], [0], [0], [1], [0, 0, 1, 1], [], []>} : vector<8x2560xf32>, vector<2560x1024xf32>, vector<8x1024xf32> -> vector<8x1024xf32>
    %c0_4 = arith.constant 0 : index
    %c0_5 = arith.constant 0 : index
    %6 = vector.load %arg4[%c0_4, %c0_5] : memref<1x1024xf32, #tpu.memory_space<vmem>>, vector<1x1024xf32>
    %7 = vector.broadcast %6 : vector<1x1024xf32> to vector<8x1024xf32>
    %8 = arith.addf %5, %7 : vector<8x1024xf32>
    %9 = arith.negf %8 : vector<8x1024xf32>
    %10 = math.exp %9 : vector<8x1024xf32>
    %cst_6 = arith.constant 1.000000e+00 : f32
    %11 = vector.broadcast %cst_6 : f32 to vector<8x1024xf32>
    %12 = arith.addf %11, %10 : vector<8x1024xf32>
    %13 = arith.divf %11, %12 : vector<8x1024xf32>
    %c0_7 = arith.constant 0 : index
    %c0_8 = arith.constant 0 : index
    %14 = vector.load %arg1[%c0_7, %c0_8] : memref<8x1024xf32, #tpu.memory_space<vmem>>, vector<8x1024xf32>
    %15 = arith.mulf %14, %13 : vector<8x1024xf32>
    %c0_9 = arith.constant 0 : index
    %c0_10 = arith.constant 0 : index
    %16 = vector.load %arg10[%c0_9, %c0_10] : memref<8x16xf32, #tpu.memory_space<vmem>>, vector<8x16xf32>
    %c0_11 = arith.constant 0 : index
    %c0_12 = arith.constant 0 : index
    %17 = vector.load %arg5[%c0_11, %c0_12] : memref<1024x16xf32, #tpu.memory_space<vmem>>, vector<1024x16xf32>
    %cst_13 = arith.constant dense<0.000000e+00> : vector<8x16xf32>
    %18 = tpu.matmul %15, %17, %cst_13 {dimension_numbers = #tpu.dot_dimension_numbers<[1], [0], [0], [1], [0, 0, 1, 1], [], []>} : vector<8x1024xf32>, vector<1024x16xf32>, vector<8x16xf32> -> vector<8x16xf32>
    %19 = arith.addf %16, %18 : vector<8x16xf32>
    %c0_14 = arith.constant 0 : index
    %c0_15 = arith.constant 0 : index
    %20 = vector.load %arg10[%c0_14, %c0_15] : memref<8x16xf32, #tpu.memory_space<vmem>>, vector<8x16xf32>
    tpu.vector_store %arg10[%c0_14, %c0_15], %19 {strides = array<i32>} : memref<8x16xf32, #tpu.memory_space<vmem>>, vector<8x16xf32>,
    %c19_i32 = arith.constant 19 : i32
    %21 = arith.cmpi eq, %arg0, %c19_i32 : i32
    %22 = arith.extui %21 : i1 to i32
    %c0_i32_16 = arith.constant 0 : i32
    %23 = arith.cmpi ne, %22, %c0_i32_16 : i32
    scf.if %23 {
      %c0_17 = arith.constant 0 : index
      %c0_18 = arith.constant 0 : index
      %24 = vector.load %arg10[%c0_17, %c0_18] : memref<8x16xf32, #tpu.memory_space<vmem>>, vector<8x16xf32>
      %c0_19 = arith.constant 0 : index
      %c0_20 = arith.constant 0 : index
      %25 = vector.load %arg6[%c0_19, %c0_20] : memref<1x16xf32, #tpu.memory_space<vmem>>, vector<1x16xf32>
      %26 = vector.broadcast %25 : vector<1x16xf32> to vector<8x16xf32>
      %27 = arith.addf %24, %26 : vector<8x16xf32>
      %c0_21 = arith.constant 0 : index
      %c0_22 = arith.constant 0 : index
      %28 = vector.load %arg7[%c0_21, %c0_22] : memref<16x128xf32, #tpu.memory_space<vmem>>, vector<16x128xf32>
      %cst_23 = arith.constant dense<0.000000e+00> : vector<8x128xf32>
      %29 = tpu.matmul %27, %28, %cst_23 {dimension_numbers = #tpu.dot_dimension_numbers<[1], [0], [0], [1], [0, 0, 1, 1], [], []>} : vector<8x16xf32>, vector<16x128xf32>, vector<8x128xf32> -> vector<8x128xf32>
      %c0_24 = arith.constant 0 : index
      %c0_25 = arith.constant 0 : index
      %30 = vector.load %arg8[%c0_24, %c0_25] : memref<1x128xf32, #tpu.memory_space<vmem>>, vector<1x128xf32>
      %31 = vector.broadcast %30 : vector<1x128xf32> to vector<8x128xf32>
      %32 = arith.addf %29, %31 : vector<8x128xf32>
      %33 = arith.negf %32 : vector<8x128xf32>
      %34 = math.exp %33 : vector<8x128xf32>
      %cst_26 = arith.constant 1.000000e+00 : f32
      %35 = vector.broadcast %cst_26 : f32 to vector<8x128xf32>
      %36 = arith.addf %35, %34 : vector<8x128xf32>
      %37 = arith.divf %35, %36 : vector<8x128xf32>
      %c0_27 = arith.constant 0 : index
      %c0_28 = arith.constant 0 : index
      %38 = vector.load %arg9[%c0_27, %c0_28] : memref<8x128xf32, #tpu.memory_space<vmem>>, vector<8x128xf32>
      tpu.vector_store %arg9[%c0_27, %c0_28], %37 {strides = array<i32>} : memref<8x128xf32, #tpu.memory_space<vmem>>, vector<8x128xf32>,
    } else {
    }
    return
  }
  func.func @transform_0(%arg0: i32) -> (i32, i32) {
    %c0_i32 = arith.constant 0 : i32
    %c0_i32_0 = arith.constant 0 : i32
    return %c0_i32, %arg0 : i32, i32
  }
  func.func @transform_1(%arg0: i32) -> (i32, i32) {
    %c0_i32 = arith.constant 0 : i32
    %c0_i32_0 = arith.constant 0 : i32
    %c0_i32_1 = arith.constant 0 : i32
    return %c0_i32, %c0_i32_0 : i32, i32
  }
  func.func @transform_2(%arg0: i32) -> (i32, i32) {
    %c0_i32 = arith.constant 0 : i32
    %c0_i32_0 = arith.constant 0 : i32
    return %c0_i32, %arg0 : i32, i32
  }
  func.func @transform_3(%arg0: i32) -> (i32, i32) {
    %c0_i32 = arith.constant 0 : i32
    %c0_i32_0 = arith.constant 0 : i32
    return %c0_i32, %arg0 : i32, i32
  }
  func.func @transform_4(%arg0: i32) -> (i32, i32) {
    %c0_i32 = arith.constant 0 : i32
    %c0_i32_0 = arith.constant 0 : i32
    return %arg0, %c0_i32 : i32, i32
  }
  func.func @transform_5(%arg0: i32) -> (i32, i32) {
    %c0_i32 = arith.constant 0 : i32
    %c0_i32_0 = arith.constant 0 : i32
    %c0_i32_1 = arith.constant 0 : i32
    return %c0_i32, %c0_i32_0 : i32, i32
  }
  func.func @transform_6(%arg0: i32) -> (i32, i32) {
    %c0_i32 = arith.constant 0 : i32
    %c0_i32_0 = arith.constant 0 : i32
    %c0_i32_1 = arith.constant 0 : i32
    return %c0_i32, %c0_i32_0 : i32, i32
  }
  func.func @transform_7(%arg0: i32) -> (i32, i32) {
    %c0_i32 = arith.constant 0 : i32
    %c0_i32_0 = arith.constant 0 : i32
    %c0_i32_1 = arith.constant 0 : i32
    return %c0_i32, %c0_i32_0 : i32, i32
  }
  func.func @transform_8(%arg0: i32) -> (i32, i32) {
    %c0_i32 = arith.constant 0 : i32
    %c0_i32_0 = arith.constant 0 : i32
    %c0_i32_1 = arith.constant 0 : i32
    return %c0_i32, %c0_i32_0 : i32, i32
  }
}

</mosaic_0001>

<llo_original>
// kernel: bsl_multinet_seblock_ln_forward.2
$region0: #{bsl_multinet_seblock_ln_forward.2}
  #allocation0 [shape = 'u32[]', space=smem, size = 0x4, offset = 0x4, fixed_abs, tag = 'smem constant byte address 0x4 - core index']
  #allocation1 [shape = 'u32[144,128]{1,0:T(1,128)}', space=vmem, size = 0x12000, scoped, tag = 'internal scratch']
  #allocation2 [shape = 'f32[8,1280]{1,0:T(8,128)}', space=vmem, size = 0xa000, scoped, tag = 'scratch operand']
  %s0 = inlined_call_operand.vmem [shape: f32[8,20480], index: 0, kind: input, shape index: {}]
  %s1 = inlined_call_operand.hbm [shape: f32[20480,2560], index: 1, kind: input, shape index: {}]
  %s2 = inlined_call_operand.vmem [shape: f32[1,2560], index: 2, kind: input, shape index: {}]
  %s3 = inlined_call_operand.vmem [shape: f32[8,2560], index: 3, kind: output, shape index: {}]
  %s4 = sld [smem:[#allocation0]]
  $region57: #{bsl_multinet_seblock_ln_forward.2} parent=0
    _
  %s6 = ssub.s32 1, %s4
  %s7 = scalar_select 0, %s6, %s4
  $region1: #{bsl_multinet_seblock_ln_forward.2} parent=0
    #allocation3 [shape = 'u8[10485760]{0}', space=vmem, size = 0xa00000, scoped, tag = 'input window, operand 1']
    #allocation4 [shape = 's32[2]{0}', space=sflag, size = 0x8, scoped, tag = 'scoped memory for bsl_multinet_seblock_ln_forward.2']
    %8 = vsyncpa [#allocation4], 0
    %s9 = scalar_lea.sflag [#allocation4], 1
    %10 = vsyncpa %s9, 0
    loop: start=0, step=1, limit=42
    $region2: #{bsl_multinet_seblock_ln_forward.2} parent=1 // loop_pre_header
      _
    $region3: #{bsl_multinet_seblock_ln_forward.2} parent=1 // loop_header
      %s12 = sphi 0, %s16
      %p13 = scmp.ge.s32.totalorder %s12, 42
      %s19 = sphi 0, %s31
      %s20 = sphi 0, %s27
      %s21 = sphi 0, %s19
      %s22 = sphi 0, %s20
      %s23 = sphi 0, %s21
      %s24 = sphi 0, %s22
      %s34 = sphi 0, %s36
      %s37 = sphi 0, %s34
      %s38 = sphi 0, %s37
      %s54 = sphi 0, %s38
      %s62 = sphi 0, %s64
      %s65 = sphi 0, %s62
      %s66 = sphi 0, %s65
      %s82 = sphi 0, %s66
      %s88 = sphi 0, %s90
      %s91 = sphi 0, %s88
      %s92 = sphi 0, %s91
      %s108 = sphi 0, %s92
      %s114 = sphi 0, %s116
      %s117 = sphi 0, %s114
      %s118 = sphi 0, %s117
      %s134 = sphi 0, %s118
    $region4: #{bsl_multinet_seblock_ln_forward.2} parent=1 // loop_header_branch
      %15 = sbr.rel (%p13) target = $region8
    $region5: #{bsl_multinet_seblock_ln_forward.2} parent=1 // loop_body
      %s17 = ssub.s32 %s12, 1
      %s18 = ssub.s32 %s12, 2
      %s25 = sadd.s32 1, %s20
      %p26 = scmp.ge.s32.totalorder %s25, 20
      %s27 = scalar_select %p26, 0, %s25
      %s28 = sadd.s32 1, %s19
      %s29 = scalar_select %p26, %s28, %s19
      %p30 = scmp.ge.s32.totalorder %s29, 2
      %s31 = scalar_select %p30, 0, %s29
      %s32 = ssub.s32 %s20, %s27
      %p33 = scmp.eq.s32.totalorder %s32, 0
      %s35 = sadd.s32 %s34, 1
      %s36 = scalar_select %p33, %s34, %s35
      %p39 = pneg %p33
      %p40 = scmp.eq.s32.totalorder %s12, 39
      %p41 = por %p39, %p40
      %p42 = scmp.ne.s32.totalorder %s34, %s37
      %p43 = scmp.eq.s32.totalorder %s12, 0
      %p44 = por %p42, %p43
      %p45 = scmp.ne.s32.totalorder %s34, %s37
      %p46 = scmp.eq.s32.totalorder %s17, 39
      %p47 = por %p45, %p46
      %p48 = scmp.ne.s32.totalorder %s37, %s38
      %p49 = scmp.eq.s32.totalorder %s17, 0
      %p50 = por %p48, %p49
      %p51 = scmp.ne.s32.totalorder %s37, %s38
      %p52 = scmp.eq.s32.totalorder %s18, 39
      %p53 = por %p51, %p52
      %p55 = scmp.ne.s32.totalorder %s38, %s54
      %p56 = scmp.eq.s32.totalorder %s18, 0
      %p57 = por %p55, %p56
      %s58 = ssub.s32 %s20, %s27
      %s59 = ssub.s32 %s19, %s31
      %s60 = sor.u32 %s58, %s59
      %p61 = scmp.eq.s32.totalorder %s60, 0
      %s63 = sadd.s32 %s62, 1
      %s64 = scalar_select %p61, %s62, %s63
      %p67 = pneg %p61
      %p68 = scmp.eq.s32.totalorder %s12, 39
      %p69 = por %p67, %p68
      %p70 = scmp.ne.s32.totalorder %s62, %s65
      %p71 = scmp.eq.s32.totalorder %s12, 0
      %p72 = por %p70, %p71
      %p73 = scmp.ne.s32.totalorder %s62, %s65
      %p74 = scmp.eq.s32.totalorder %s17, 39
      %p75 = por %p73, %p74
      %p76 = scmp.ne.s32.totalorder %s65, %s66
      %p77 = scmp.eq.s32.totalorder %s17, 0
      %p78 = por %p76, %p77
      %p79 = scmp.ne.s32.totalorder %s65, %s66
      %p80 = scmp.eq.s32.totalorder %s18, 39
      %p81 = por %p79, %p80
      %p83 = scmp.ne.s32.totalorder %s66, %s82
      %p84 = scmp.eq.s32.totalorder %s18, 0
      %p85 = por %p83, %p84
      %s86 = ssub.s32 %s19, %s31
      %p87 = scmp.eq.s32.totalorder %s86, 0
      %s89 = sadd.s32 %s88, 1
      %s90 = scalar_select %p87, %s88, %s89
      %p93 = pneg %p87
      %p94 = scmp.eq.s32.totalorder %s12, 39
      %p95 = por %p93, %p94
      %p96 = scmp.ne.s32.totalorder %s88, %s91
      %p97 = scmp.eq.s32.totalorder %s12, 0
      %p98 = por %p96, %p97
      %p99 = scmp.ne.s32.totalorder %s88, %s91
      %p100 = scmp.eq.s32.totalorder %s17, 39
      %p101 = por %p99, %p100
      %p102 = scmp.ne.s32.totalorder %s91, %s92
      %p103 = scmp.eq.s32.totalorder %s17, 0
      %p104 = por %p102, %p103
      %p105 = scmp.ne.s32.totalorder %s91, %s92
      %p106 = scmp.eq.s32.totalorder %s18, 39
      %p107 = por %p105, %p106
      %p109 = scmp.ne.s32.totalorder %s92, %s108
      %p110 = scmp.eq.s32.totalorder %s18, 0
      %p111 = por %p109, %p110
      %s112 = ssub.s32 %s19, %s31
      %p113 = scmp.eq.s32.totalorder %s112, 0
      %s115 = sadd.s32 %s114, 1
      %s116 = scalar_select %p113, %s114, %s115
      %p119 = pneg %p113
      %p120 = scmp.eq.s32.totalorder %s12, 39
      %p121 = por %p119, %p120
      %p122 = scmp.ne.s32.totalorder %s114, %s117
      %p123 = scmp.eq.s32.totalorder %s12, 0
      %p124 = por %p122, %p123
      %p125 = scmp.ne.s32.totalorder %s114, %s117
      %p126 = scmp.eq.s32.totalorder %s17, 39
      %p127 = por %p125, %p126
      %p128 = scmp.ne.s32.totalorder %s117, %s118
      %p129 = scmp.eq.s32.totalorder %s17, 0
      %p130 = por %p128, %p129
      %p131 = scmp.ne.s32.totalorder %s117, %s118
      %p132 = scmp.eq.s32.totalorder %s18, 39
      %p133 = por %p131, %p132
      %p135 = scmp.ne.s32.totalorder %s118, %s134
      %p136 = scmp.eq.s32.totalorder %s18, 0
      %p137 = por %p135, %p136
      %p138 = scmp.le.s32.totalorder 1, %s12
      %p139 = scmp.lt.s32.totalorder %s12, 41
      %p140 = pnand %p138, %p139
      %p141 = pneg %p140
      // Predicated region
      $region9: #{bsl_multinet_seblock_ln_forward.2} parent=5 // pred_check
        _
      $region10: #{bsl_multinet_seblock_ln_forward.2} parent=5 // pred_check_branch
        %143 = sbr.rel (%p140) target = $region12
      $region11: #{bsl_multinet_seblock_ln_forward.2} parent=5 // pred_region
        %s144 = ssub.s32 %s12, 1
      $region12: #{bsl_multinet_seblock_ln_forward.2} parent=5 // pred_fallthru
        _
      %p145 = scmp.lt.s32.totalorder %s12, 40
      // Predicated region
      $region13: #{bsl_multinet_seblock_ln_forward.2} parent=5 // pred_check
        %p146 = pneg %p145
      $region14: #{bsl_multinet_seblock_ln_forward.2} parent=5 // pred_check_branch
        %148 = sbr.rel (%p146) target = $region16
      $region15: #{bsl_multinet_seblock_ln_forward.2} parent=5 // pred_region
        // Predicated region
        $region17: #{bsl_multinet_seblock_ln_forward.2} parent=15 // pred_check
          %p149 = pneg %p44
        $region18: #{bsl_multinet_seblock_ln_forward.2} parent=15 // pred_check_branch
          %151 = sbr.rel (%p149) target = $region20
        $region19: #{bsl_multinet_seblock_ln_forward.2} parent=15 // pred_region
          %s152 = smul.u32 8, %s20
          %p153 = scmp.lt.s32.totalorder %s152, 159
          %s154 = scalar_select %p153, %s152, 159
          %s155 = smul.addr %s154, 8
          %s156 = scalar_lea.vmem %s0, %s155
          %s157 = smul.u32 8, %s20
        $region20: #{bsl_multinet_seblock_ln_forward.2} parent=15 // pred_fallthru
          _
        // Predicated region
        $region21: #{bsl_multinet_seblock_ln_forward.2} parent=15 // pred_check
          %p158 = pneg %p72
        $region22: #{bsl_multinet_seblock_ln_forward.2} parent=15 // pred_check_branch
          %160 = sbr.rel (%p158) target = $region24
        $region23: #{bsl_multinet_seblock_ln_forward.2} parent=15 // pred_region
          %s161 = sand.u32 %s62, 1
          %s162 = scalar_lea.sflag [#allocation4], %s161
          %s163 = sand.u32 %s62, 1
          %s164 = smul.addr %s163, 10240
          %s165 = scalar_lea.vmem [#allocation3], %s164
          %s166 = smul.u32 128, %s20
          %s167 = smul.u32 10, %s19
          %s169 = ssub.s32 163840, 163840
          %170 = vsyncadd %s162, %s169
          %s171 = smul.addr %s166, 20
          %s172 = sadd.s32 %s167, %s171
          %s173 = smul.addr %s172, 128
          %s174 = scalar_lea.hbm %s1, %s173
          %s175 = sshll.u32 %s165, 4
          %s176 = int_to_ptr.vmem [resolvable:$true] %s175
          %181 = dma.hbm_to_vmem [thread:$0]  %s174, 163840, %s176, %s162, 2560, 1280, 80
        $region24: #{bsl_multinet_seblock_ln_forward.2} parent=15 // pred_fallthru
          _
        // Predicated region
        $region25: #{bsl_multinet_seblock_ln_forward.2} parent=15 // pred_check
          %p182 = pneg %p98
        $region26: #{bsl_multinet_seblock_ln_forward.2} parent=15 // pred_check_branch
          %184 = sbr.rel (%p182) target = $region28
        $region27: #{bsl_multinet_seblock_ln_forward.2} parent=15 // pred_region
          %s185 = smul.u32 10, %s19
          %p186 = scmp.lt.s32.totalorder %s185, 19
          %s187 = scalar_select %p186, %s185, 19
          %s188 = scalar_lea.vmem %s2, %s187
          %s189 = smul.u32 10, %s19
        $region28: #{bsl_multinet_seblock_ln_forward.2} parent=15 // pred_fallthru
          _
      $region16: #{bsl_multinet_seblock_ln_forward.2} parent=5 // pred_fallthru
        _
      %p190 = scmp.le.s32.totalorder 1, %s12
      %p191 = scmp.lt.s32.totalorder %s12, 41
      %p192 = pnand %p190, %p191
      %p193 = pneg %p192
      // Predicated region
      $region29: #{bsl_multinet_seblock_ln_forward.2} parent=5 // pred_check
        _
      $region30: #{bsl_multinet_seblock_ln_forward.2} parent=5 // pred_check_branch
        %195 = sbr.rel (%p192) target = $region32
      $region31: #{bsl_multinet_seblock_ln_forward.2} parent=5 // pred_region
        %s196 = ssub.s32 %s12, 1
        %s197 = sand.u32 %s65, 1
        %s198 = scalar_lea.sflag [#allocation4], %s197
        %s199 = sand.u32 %s65, 1
        %s200 = smul.addr %s199, 10240
        %s201 = scalar_lea.vmem [#allocation3], %s200
        // Predicated region
        $region33: #{bsl_multinet_seblock_ln_forward.2} parent=31 // pred_check
          %p202 = pneg %p78
        $region34: #{bsl_multinet_seblock_ln_forward.2} parent=31 // pred_check_branch
          %204 = sbr.rel (%p202) target = $region36
        $region35: #{bsl_multinet_seblock_ln_forward.2} parent=31 // pred_region
          %205 = dma.done %s198, 163840
        $region36: #{bsl_multinet_seblock_ln_forward.2} parent=31 // pred_fallthru
          _
        %s206 = smul.u32 8, %s22
        %p207 = scmp.lt.s32.totalorder %s206, 159
        %s208 = scalar_select %p207, %s206, 159
        %s209 = smul.addr %s208, 8
        %s210 = scalar_lea.vmem %s0, %s209
        %p211 = pneg %p50
        %p212 = pneg %p47
        %s213 = sand.u32 %s65, 1
        %s214 = scalar_lea.sflag [#allocation4], %s213
        %s215 = sand.u32 %s65, 1
        %s216 = smul.addr %s215, 10240
        %s217 = scalar_lea.vmem [#allocation3], %s216
        %p218 = pneg %p78
        %p219 = pneg %p75
        %s220 = smul.u32 10, %s21
        %p221 = scmp.lt.s32.totalorder %s220, 19
        %s222 = scalar_select %p221, %s220, 19
        %s223 = scalar_lea.vmem %s2, %s222
        %p224 = pneg %p104
        %p225 = pneg %p101
        %p226 = pneg %p130
        %p227 = pneg %p127
        %s228 = smul.u32 10, %s21
        %p229 = scmp.lt.s32.totalorder %s228, 19
        %s230 = scalar_select %p229, %s228, 19
        %s231 = smul.addr %s230, 8
        %s232 = scalar_lea.vmem %s3, %s231
        %s233 = smul.u32 8, %s22
        %p234 = scmp.lt.s32.totalorder %s233, 159
        %s235 = scalar_select %p234, %s233, 159
        %s236 = smul.addr %s235, 8
        %s237 = scalar_lea.vmem %s0, %s236
        %s238 = smul.u32 8, %s22
        %s239 = smul.u32 128, %s22
        %s240 = smul.u32 10, %s21
        %s241 = smul.u32 10, %s21
        %p242 = scmp.lt.s32.totalorder %s241, 19
        %s243 = scalar_select %p242, %s241, 19
        %s244 = scalar_lea.vmem %s2, %s243
        %s245 = smul.u32 10, %s21
        %s246 = smul.u32 10, %s21
        %p247 = scmp.lt.s32.totalorder %s246, 19
        %s248 = scalar_select %p247, %s246, 19
        %s249 = smul.addr %s248, 8
        %s250 = scalar_lea.vmem %s3, %s249
        %s251 = smul.u32 10, %s21
        %p252 = scmp.eq.s32.totalorder %s22, 0
        // Predicated region
        $region37: #{bsl_multinet_seblock_ln_forward.2} parent=31 // pred_check
          %p253 = pneg %p252
        $region38: #{bsl_multinet_seblock_ln_forward.2} parent=31 // pred_check_branch
          %255 = sbr.rel (%p253) target = $region40
        $region39: #{bsl_multinet_seblock_ln_forward.2} parent=31 // pred_region
          %256 = vst [vmem:[#allocation2] sm:$0xff] 0.0
          %257 = vst [vmem:[#allocation2 + $0x8] sm:$0xff] 0.0
          %258 = vst [vmem:[#allocation2 + $0x10] sm:$0xff] 0.0
          %259 = vst [vmem:[#allocation2 + $0x18] sm:$0xff] 0.0
          %260 = vst [vmem:[#allocation2 + $0x20] sm:$0xff] 0.0
          %261 = vst [vmem:[#allocation2 + $0x28] sm:$0xff] 0.0
          %262 = vst [vmem:[#allocation2 + $0x30] sm:$0xff] 0.0
          %263 = vst [vmem:[#allocation2 + $0x38] sm:$0xff] 0.0
          %264 = vst [vmem:[#allocation2 + $0x40] sm:$0xff] 0.0
          %265 = vst [vmem:[#allocation2 + $0x48] sm:$0xff] 0.0
        $region40: #{bsl_multinet_seblock_ln_forward.2} parent=31 // pred_fallthru
          _
        %v266 = vld [vmem:[#allocation2] sm:$0xff]
        %v267 = vld [vmem:[#allocation2 + $0x8] sm:$0xff]
        %v268 = vld [vmem:[#allocation2 + $0x10] sm:$0xff]
        %v269 = vld [vmem:[#allocation2 + $0x18] sm:$0xff]
        %v270 = vld [vmem:[#allocation2 + $0x20] sm:$0xff]
        %v271 = vld [vmem:[#allocation2 + $0x28] sm:$0xff]
        %v272 = vld [vmem:[#allocation2 + $0x30] sm:$0xff]
        %v273 = vld [vmem:[#allocation2 + $0x38] sm:$0xff]
        %v274 = vld [vmem:[#allocation2 + $0x40] sm:$0xff]
        %v275 = vld [vmem:[#allocation2 + $0x48] sm:$0xff]
        %v276 = vld [vmem:[%s237] sm:$0xff]
        %v277 = vld [vmem:[%s237 + $0x8] sm:$0xff]
        %v278 = vld [vmem:[%s237 + $0x10] sm:$0xff]
        %v279 = vld [vmem:[%s237 + $0x18] sm:$0xff]
        %v280 = vld [vmem:[%s237 + $0x20] sm:$0xff]
        %v281 = vld [vmem:[%s237 + $0x28] sm:$0xff]
        %v282 = vld [vmem:[%s237 + $0x30] sm:$0xff]
        %v283 = vld [vmem:[%s237 + $0x38] sm:$0xff]
        %v284 = vld [vmem:[%s201] sm:$0xff]
        %v285 = vld [vmem:[%s201 + $0x8] sm:$0xff]
        %v286 = vld [vmem:[%s201 + $0x10] sm:$0xff]
        %v287 = vld [vmem:[%s201 + $0x18] sm:$0xff]
        %v288 = vld [vmem:[%s201 + $0x20] sm:$0xff]
        %v289 = vld [vmem:[%s201 + $0x28] sm:$0xff]
        %v290 = vld [vmem:[%s201 + $0x30] sm:$0xff]
        %v291 = vld [vmem:[%s201 + $0x38] sm:$0xff]
        %v292 = vld [vmem:[%s201 + $0x40] sm:$0xff]
        %v293 = vld [vmem:[%s201 + $0x48] sm:$0xff]
        %v294 = vld [vmem:[%s201 + $0x50] sm:$0xff]
        %v295 = vld [vmem:[%s201 + $0x58] sm:$0xff]
        %v296 = vld [vmem:[%s201 + $0x60] sm:$0xff]
        %v297 = vld [vmem:[%s201 + $0x68] sm:$0xff]
        %v298 = vld [vmem:[%s201 + $0x70] sm:$0xff]
        %v299 = vld [vmem:[%s201 + $0x78] sm:$0xff]
        %v300 = vld [vmem:[%s201 + $0x80] sm:$0xff]
        %v301 = vld [vmem:[%s201 + $0x88] sm:$0xff]
        %v302 = vld [vmem:[%s201 + $0x90] sm:$0xff]
        %v303 = vld [vmem:[%s201 + $0x98] sm:$0xff]
        %v304 = vld [vmem:[%s201 + $0xa0] sm:$0xff]
        %v305 = vld [vmem:[%s201 + $0xa8] sm:$0xff]
        %v306 = vld [vmem:[%s201 + $0xb0] sm:$0xff]
        %v307 = vld [vmem:[%s201 + $0xb8] sm:$0xff]
        %v308 = vld [vmem:[%s201 + $0xc0] sm:$0xff]
        %v309 = vld [vmem:[%s201 + $0xc8] sm:$0xff]
        %v310 = vld [vmem:[%s201 + $0xd0] sm:$0xff]
        %v311 = vld [vmem:[%s201 + $0xd8] sm:$0xff]
        %v312 = vld [vmem:[%s201 + $0xe0] sm:$0xff]
        %v313 = vld [vmem:[%s201 + $0xe8] sm:$0xff]
        %v314 = vld [vmem:[%s201 + $0xf0] sm:$0xff]
        %v315 = vld [vmem:[%s201 + $0xf8] sm:$0xff]
        %v316 = vld [vmem:[%s201 + $0x100] sm:$0xff]
        %v317 = vld [vmem:[%s201 + $0x108] sm:$0xff]
        %v318 = vld [vmem:[%s201 + $0x110] sm:$0xff]
        %v319 = vld [vmem:[%s201 + $0x118] sm:$0xff]
        %v320 = vld [vmem:[%s201 + $0x120] sm:$0xff]
        %v321 = vld [vmem:[%s201 + $0x128] sm:$0xff]
        %v322 = vld [vmem:[%s201 + $0x130] sm:$0xff]
        %v323 = vld [vmem:[%s201 + $0x138] sm:$0xff]
        %v324 = vld [vmem:[%s201 + $0x140] sm:$0xff]
        %v325 = vld [vmem:[%s201 + $0x148] sm:$0xff]
        %v326 = vld [vmem:[%s201 + $0x150] sm:$0xff]
        %v327 = vld [vmem:[%s201 + $0x158] sm:$0xff]
        %v328 = vld [vmem:[%s201 + $0x160] sm:$0xff]
        %v329 = vld [vmem:[%s201 + $0x168] sm:$0xff]
        %v330 = vld [vmem:[%s201 + $0x170] sm:$0xff]
        %v331 = vld [vmem:[%s201 + $0x178] sm:$0xff]
        %v332 = vld [vmem:[%s201 + $0x180] sm:$0xff]
        %v333 = vld [vmem:[%s201 + $0x188] sm:$0xff]
        %v334 = vld [vmem:[%s201 + $0x190] sm:$0xff]
        %v335 = vld [vmem:[%s201 + $0x198] sm:$0xff]
        %v336 = vld [vmem:[%s201 + $0x1a0] sm:$0xff]
        %v337 = vld [vmem:[%s201 + $0x1a8] sm:$0xff]
        %v338 = vld [vmem:[%s201 + $0x1b0] sm:$0xff]
        %v339 = vld [vmem:[%s201 + $0x1b8] sm:$0xff]
        %v340 = vld [vmem:[%s201 + $0x1c0] sm:$0xff]
        %v341 = vld [vmem:[%s201 + $0x1c8] sm:$0xff]
        %v342 = vld [vmem:[%s201 + $0x1d0] sm:$0xff]
        %v343 = vld [vmem:[%s201 + $0x1d8] sm:$0xff]
        %v344 = vld [vmem:[%s201 + $0x1e0] sm:$0xff]
        %v345 = vld [vmem:[%s201 + $0x1e8] sm:$0xff]
        %v346 = vld [vmem:[%s201 + $0x1f0] sm:$0xff]
        %v347 = vld [vmem:[%s201 + $0x1f8] sm:$0xff]
        %v348 = vld [vmem:[%s201 + $0x200] sm:$0xff]
        %v349 = vld [vmem:[%s201 + $0x208] sm:$0xff]
        %v350 = vld [vmem:[%s201 + $0x210] sm:$0xff]
        %v351 = vld [vmem:[%s201 + $0x218] sm:$0xff]
        %v352 = vld [vmem:[%s201 + $0x220] sm:$0xff]
        %v353 = vld [vmem:[%s201 + $0x228] sm:$0xff]
        %v354 = vld [vmem:[%s201 + $0x230] sm:$0xff]
        %v355 = vld [vmem:[%s201 + $0x238] sm:$0xff]
        %v356 = vld [vmem:[%s201 + $0x240] sm:$0xff]
        %v357 = vld [vmem:[%s201 + $0x248] sm:$0xff]
        %v358 = vld [vmem:[%s201 + $0x250] sm:$0xff]
        %v359 = vld [vmem:[%s201 + $0x258] sm:$0xff]
        %v360 = vld [vmem:[%s201 + $0x260] sm:$0xff]
        %v361 = vld [vmem:[%s201 + $0x268] sm:$0xff]
        %v362 = vld [vmem:[%s201 + $0x270] sm:$0xff]
        %v363 = vld [vmem:[%s201 + $0x278] sm:$0xff]
        %v364 = vld [vmem:[%s201 + $0x280] sm:$0xff]
        %v365 = vld [vmem:[%s201 + $0x288] sm:$0xff]
        %v366 = vld [vmem:[%s201 + $0x290] sm:$0xff]
        %v367 = vld [vmem:[%s201 + $0x298] sm:$0xff]
        %v368 = vld [vmem:[%s201 + $0x2a0] sm:$0xff]
        %v369 = vld [vmem:[%s201 + $0x2a8] sm:$0xff]
        %v370 = vld [vmem:[%s201 + $0x2b0] sm:$0xff]
        %v371 = vld [vmem:[%s201 + $0x2b8] sm:$0xff]
        %v372 = vld [vmem:[%s201 + $0x2c0] sm:$0xff]
        %v373 = vld [vmem:[%s201 + $0x2c8] sm:$0xff]
        %v374 = vld [vmem:[%s201 + $0x2d0] sm:$0xff]
        %v375 = vld [vmem:[%s201 + $0x2d8] sm:$0xff]
        %v376 = vld [vmem:[%s201 + $0x2e0] sm:$0xff]
        %v377 = vld [vmem:[%s201 + $0x2e8] sm:$0xff]
        %v378 = vld [vmem:[%s201 + $0x2f0] sm:$0xff]
        %v379 = vld [vmem:[%s201 + $0x2f8] sm:$0xff]
        %v380 = vld [vmem:[%s201 + $0x300] sm:$0xff]
        %v381 = vld [vmem:[%s201 + $0x308] sm:$0xff]
        %v382 = vld [vmem:[%s201 + $0x310] sm:$0xff]
        %v383 = vld [vmem:[%s201 + $0x318] sm:$0xff]
        %v384 = vld [vmem:[%s201 + $0x320] sm:$0xff]
        %v385 = vld [vmem:[%s201 + $0x328] sm:$0xff]
        %v386 = vld [vmem:[%s201 + $0x330] sm:$0xff]
        %v387 = vld [vmem:[%s201 + $0x338] sm:$0xff]
        %v388 = vld [vmem:[%s201 + $0x340] sm:$0xff]
        %v389 = vld [vmem:[%s201 + $0x348] sm:$0xff]
        %v390 = vld [vmem:[%s201 + $0x350] sm:$0xff]
        %v391 = vld [vmem:[%s201 + $0x358] sm:$0xff]
        %v392 = vld [vmem:[%s201 + $0x360] sm:$0xff]
        %v393 = vld [vmem:[%s201 + $0x368] sm:$0xff]
        %v394 = vld [vmem:[%s201 + $0x370] sm:$0xff]
        %v395 = vld [vmem:[%s201 + $0x378] sm:$0xff]
        %v396 = vld [vmem:[%s201 + $0x380] sm:$0xff]
        %v397 = vld [vmem:[%s201 + $0x388] sm:$0xff]
        %v398 = vld [vmem:[%s201 + $0x390] sm:$0xff]
        %v399 = vld [vmem:[%s201 + $0x398] sm:$0xff]
        %v400 = vld [vmem:[%s201 + $0x3a0] sm:$0xff]
        %v401 = vld [vmem:[%s201 + $0x3a8] sm:$0xff]
        %v402 = vld [vmem:[%s201 + $0x3b0] sm:$0xff]
        %v403 = vld [vmem:[%s201 + $0x3b8] sm:$0xff]
        %v404 = vld [vmem:[%s201 + $0x3c0] sm:$0xff]
        %v405 = vld [vmem:[%s201 + $0x3c8] sm:$0xff]
        %v406 = vld [vmem:[%s201 + $0x3d0] sm:$0xff]
        %v407 = vld [vmem:[%s201 + $0x3d8] sm:$0xff]
        %v408 = vld [vmem:[%s201 + $0x3e0] sm:$0xff]
        %v409 = vld [vmem:[%s201 + $0x3e8] sm:$0xff]
        %v410 = vld [vmem:[%s201 + $0x3f0] sm:$0xff]
        %v411 = vld [vmem:[%s201 + $0x3f8] sm:$0xff]
        %v412 = vld [vmem:[%s201 + $0x400] sm:$0xff]
        %v413 = vld [vmem:[%s201 + $0x408] sm:$0xff]
        %v414 = vld [vmem:[%s201 + $0x410] sm:$0xff]
        %v415 = vld [vmem:[%s201 + $0x418] sm:$0xff]
        %v416 = vld [vmem:[%s201 + $0x420] sm:$0xff]
        %v417 = vld [vmem:[%s201 + $0x428] sm:$0xff]
        %v418 = vld [vmem:[%s201 + $0x430] sm:$0xff]
        %v419 = vld [vmem:[%s201 + $0x438] sm:$0xff]
        %v420 = vld [vmem:[%s201 + $0x440] sm:$0xff]
        %v421 = vld [vmem:[%s201 + $0x448] sm:$0xff]
        %v422 = vld [vmem:[%s201 + $0x450] sm:$0xff]
        %v423 = vld [vmem:[%s201 + $0x458] sm:$0xff]
        %v424 = vld [vmem:[%s201 + $0x460] sm:$0xff]
        %v425 = vld [vmem:[%s201 + $0x468] sm:$0xff]
        %v426 = vld [vmem:[%s201 + $0x470] sm:$0xff]
        %v427 = vld [vmem:[%s201 + $0x478] sm:$0xff]
        %v428 = vld [vmem:[%s201 + $0x480] sm:$0xff]
        %v429 = vld [vmem:[%s201 + $0x488] sm:$0xff]
        %v430 = vld [vmem:[%s201 + $0x490] sm:$0xff]
        %v431 = vld [vmem:[%s201 + $0x498] sm:$0xff]
        %v432 = vld [vmem:[%s201 + $0x4a0] sm:$0xff]
        %v433 = vld [vmem:[%s201 + $0x4a8] sm:$0xff]
        %v434 = vld [vmem:[%s201 + $0x4b0] sm:$0xff]
        %v435 = vld [vmem:[%s201 + $0x4b8] sm:$0xff]
        %v436 = vld [vmem:[%s201 + $0x4c0] sm:$0xff]
        %v437 = vld [vmem:[%s201 + $0x4c8] sm:$0xff]
        %v438 = vld [vmem:[%s201 + $0x4d0] sm:$0xff]
        %v439 = vld [vmem:[%s201 + $0x4d8] sm:$0xff]
        %v440 = vld [vmem:[%s201 + $0x4e0] sm:$0xff]
        %v441 = vld [vmem:[%s201 + $0x4e8] sm:$0xff]
        %v442 = vld [vmem:[%s201 + $0x4f0] sm:$0xff]
        %v443 = vld [vmem:[%s201 + $0x4f8] sm:$0xff]
        %v444 = vld [vmem:[%s201 + $0x500] sm:$0xff]
        %v445 = vld [vmem:[%s201 + $0x508] sm:$0xff]
        %v446 = vld [vmem:[%s201 + $0x510] sm:$0xff]
        %v447 = vld [vmem:[%s201 + $0x518] sm:$0xff]
        %v448 = vld [vmem:[%s201 + $0x520] sm:$0xff]
        %v449 = vld [vmem:[%s201 + $0x528] sm:$0xff]
        %v450 = vld [vmem:[%s201 + $0x530] sm:$0xff]
        %v451 = vld [vmem:[%s201 + $0x538] sm:$0xff]
        %v452 = vld [vmem:[%s201 + $0x540] sm:$0xff]
        %v453 = vld [vmem:[%s201 + $0x548] sm:$0xff]
        %v454 = vld [vmem:[%s201 + $0x550] sm:$0xff]
        %v455 = vld [vmem:[%s201 + $0x558] sm:$0xff]
        %v456 = vld [vmem:[%s201 + $0x560] sm:$0xff]
        %v457 = vld [vmem:[%s201 + $0x568] sm:$0xff]
        %v458 = vld [vmem:[%s201 + $0x570] sm:$0xff]
        %v459 = vld [vmem:[%s201 + $0x578] sm:$0xff]
        %v460 = vld [vmem:[%s201 + $0x580] sm:$0xff]
        %v461 = vld [vmem:[%s201 + $0x588] sm:$0xff]
        %v462 = vld [vmem:[%s201 + $0x590] sm:$0xff]
        %v463 = vld [vmem:[%s201 + $0x598] sm:$0xff]
        %v464 = vld [vmem:[%s201 + $0x5a0] sm:$0xff]
        %v465 = vld [vmem:[%s201 + $0x5a8] sm:$0xff]
        %v466 = vld [vmem:[%s201 + $0x5b0] sm:$0xff]
        %v467 = vld [vmem:[%s201 + $0x5b8] sm:$0xff]
        %v468 = vld [vmem:[%s201 + $0x5c0] sm:$0xff]
        %v469 = vld [vmem:[%s201 + $0x5c8] sm:$0xff]
        %v470 = vld [vmem:[%s201 + $0x5d0] sm:$0xff]
        %v471 = vld [vmem:[%s201 + $0x5d8] sm:$0xff]
        %v472 = vld [vmem:[%s201 + $0x5e0] sm:$0xff]
        %v473 = vld [vmem:[%s201 + $0x5e8] sm:$0xff]
        %v474 = vld [vmem:[%s201 + $0x5f0] sm:$0xff]
        %v475 = vld [vmem:[%s201 + $0x5f8] sm:$0xff]
        %v476 = vld [vmem:[%s201 + $0x600] sm:$0xff]
        %v477 = vld [vmem:[%s201 + $0x608] sm:$0xff]
        %v478 = vld [vmem:[%s201 + $0x610] sm:$0xff]
        %v479 = vld [vmem:[%s201 + $0x618] sm:$0xff]
        %v480 = vld [vmem:[%s201 + $0x620] sm:$0xff]
        %v481 = vld [vmem:[%s201 + $0x628] sm:$0xff]
        %v482 = vld [vmem:[%s201 + $0x630] sm:$0xff]
        %v483 = vld [vmem:[%s201 + $0x638] sm:$0xff]
        %v484 = vld [vmem:[%s201 + $0x640] sm:$0xff]
        %v485 = vld [vmem:[%s201 + $0x648] sm:$0xff]
        %v486 = vld [vmem:[%s201 + $0x650] sm:$0xff]
        %v487 = vld [vmem:[%s201 + $0x658] sm:$0xff]
        %v488 = vld [vmem:[%s201 + $0x660] sm:$0xff]
        %v489 = vld [vmem:[%s201 + $0x668] sm:$0xff]
        %v490 = vld [vmem:[%s201 + $0x670] sm:$0xff]
        %v491 = vld [vmem:[%s201 + $0x678] sm:$0xff]
        %v492 = vld [vmem:[%s201 + $0x680] sm:$0xff]
        %v493 = vld [vmem:[%s201 + $0x688] sm:$0xff]
        %v494 = vld [vmem:[%s201 + $0x690] sm:$0xff]
        %v495 = vld [vmem:[%s201 + $0x698] sm:$0xff]
        %v496 = vld [vmem:[%s201 + $0x6a0] sm:$0xff]
        %v497 = vld [vmem:[%s201 + $0x6a8] sm:$0xff]
        %v498 = vld [vmem:[%s201 + $0x6b0] sm:$0xff]
        %v499 = vld [vmem:[%s201 + $0x6b8] sm:$0xff]
        %v500 = vld [vmem:[%s201 + $0x6c0] sm:$0xff]
        %v501 = vld [vmem:[%s201 + $0x6c8] sm:$0xff]
        %v502 = vld [vmem:[%s201 + $0x6d0] sm:$0xff]
        %v503 = vld [vmem:[%s201 + $0x6d8] sm:$0xff]
        %v504 = vld [vmem:[%s201 + $0x6e0] sm:$0xff]
        %v505 = vld [vmem:[%s201 + $0x6e8] sm:$0xff]
        %v506 = vld [vmem:[%s201 + $0x6f0] sm:$0xff]
        %v507 = vld [vmem:[%s201 + $0x6f8] sm:$0xff]
        %v508 = vld [vmem:[%s201 + $0x700] sm:$0xff]
        %v509 = vld [vmem:[%s201 + $0x708] sm:$0xff]
        %v510 = vld [vmem:[%s201 + $0x710] sm:$0xff]
        %v511 = vld [vmem:[%s201 + $0x718] sm:$0xff]
        %v512 = vld [vmem:[%s201 + $0x720] sm:$0xff]
        %v513 = vld [vmem:[%s201 + $0x728] sm:$0xff]
        %v514 = vld [vmem:[%s201 + $0x730] sm:$0xff]
        %v515 = vld [vmem:[%s201 + $0x738] sm:$0xff]
        %v516 = vld [vmem:[%s201 + $0x740] sm:$0xff]
        %v517 = vld [vmem:[%s201 + $0x748] sm:$0xff]
        %v518 = vld [vmem:[%s201 + $0x750] sm:$0xff]
        %v519 = vld [vmem:[%s201 + $0x758] sm:$0xff]
        %v520 = vld [vmem:[%s201 + $0x760] sm:$0xff]
        %v521 = vld [vmem:[%s201 + $0x768] sm:$0xff]
        %v522 = vld [vmem:[%s201 + $0x770] sm:$0xff]
        %v523 = vld [vmem:[%s201 + $0x778] sm:$0xff]
        %v524 = vld [vmem:[%s201 + $0x780] sm:$0xff]
        %v525 = vld [vmem:[%s201 + $0x788] sm:$0xff]
        %v526 = vld [vmem:[%s201 + $0x790] sm:$0xff]
        %v527 = vld [vmem:[%s201 + $0x798] sm:$0xff]
        %v528 = vld [vmem:[%s201 + $0x7a0] sm:$0xff]
        %v529 = vld [vmem:[%s201 + $0x7a8] sm:$0xff]
        %v530 = vld [vmem:[%s201 + $0x7b0] sm:$0xff]
        %v531 = vld [vmem:[%s201 + $0x7b8] sm:$0xff]
        %v532 = vld [vmem:[%s201 + $0x7c0] sm:$0xff]
        %v533 = vld [vmem:[%s201 + $0x7c8] sm:$0xff]
        %v534 = vld [vmem:[%s201 + $0x7d0] sm:$0xff]
        %v535 = vld [vmem:[%s201 + $0x7d8] sm:$0xff]
        %v536 = vld [vmem:[%s201 + $0x7e0] sm:$0xff]
        %v537 = vld [vmem:[%s201 + $0x7e8] sm:$0xff]
        %v538 = vld [vmem:[%s201 + $0x7f0] sm:$0xff]
        %v539 = vld [vmem:[%s201 + $0x7f8] sm:$0xff]
        %v540 = vld [vmem:[%s201 + $0x800] sm:$0xff]
        %v541 = vld [vmem:[%s201 + $0x808] sm:$0xff]
        %v542 = vld [vmem:[%s201 + $0x810] sm:$0xff]
        %v543 = vld [vmem:[%s201 + $0x818] sm:$0xff]
        %v544 = vld [vmem:[%s201 + $0x820] sm:$0xff]
        %v545 = vld [vmem:[%s201 + $0x828] sm:$0xff]
        %v546 = vld [vmem:[%s201 + $0x830] sm:$0xff]
        %v547 = vld [vmem:[%s201 + $0x838] sm:$0xff]
        %v548 = vld [vmem:[%s201 + $0x840] sm:$0xff]
        %v549 = vld [vmem:[%s201 + $0x848] sm:$0xff]
        %v550 = vld [vmem:[%s201 + $0x850] sm:$0xff]
        %v551 = vld [vmem:[%s201 + $0x858] sm:$0xff]
        %v552 = vld [vmem:[%s201 + $0x860] sm:$0xff]
        %v553 = vld [vmem:[%s201 + $0x868] sm:$0xff]
        %v554 = vld [vmem:[%s201 + $0x870] sm:$0xff]
        %v555 = vld [vmem:[%s201 + $0x878] sm:$0xff]
        %v556 = vld [vmem:[%s201 + $0x880] sm:$0xff]
        %v557 = vld [vmem:[%s201 + $0x888] sm:$0xff]
        %v558 = vld [vmem:[%s201 + $0x890] sm:$0xff]
        %v559 = vld [vmem:[%s201 + $0x898] sm:$0xff]
        %v560 = vld [vmem:[%s201 + $0x8a0] sm:$0xff]
        %v561 = vld [vmem:[%s201 + $0x8a8] sm:$0xff]
        %v562 = vld [vmem:[%s201 + $0x8b0] sm:$0xff]
        %v563 = vld [vmem:[%s201 + $0x8b8] sm:$0xff]
        %v564 = vld [vmem:[%s201 + $0x8c0] sm:$0xff]
        %v565 = vld [vmem:[%s201 + $0x8c8] sm:$0xff]
        %v566 = vld [vmem:[%s201 + $0x8d0] sm:$0xff]
        %v567 = vld [vmem:[%s201 + $0x8d8] sm:$0xff]
        %v568 = vld [vmem:[%s201 + $0x8e0] sm:$0xff]
        %v569 = vld [vmem:[%s201 + $0x8e8] sm:$0xff]
        %v570 = vld [vmem:[%s201 + $0x8f0] sm:$0xff]
        %v571 = vld [vmem:[%s201 + $0x8f8] sm:$0xff]
        %v572 = vld [vmem:[%s201 + $0x900] sm:$0xff]
        %v573 = vld [vmem:[%s201 + $0x908] sm:$0xff]
        %v574 = vld [vmem:[%s201 + $0x910] sm:$0xff]
        %v575 = vld [vmem:[%s201 + $0x918] sm:$0xff]
        %v576 = vld [vmem:[%s201 + $0x920] sm:$0xff]
        %v577 = vld [vmem:[%s201 + $0x928] sm:$0xff]
        %v578 = vld [vmem:[%s201 + $0x930] sm:$0xff]
        %v579 = vld [vmem:[%s201 + $0x938] sm:$0xff]
        %v580 = vld [vmem:[%s201 + $0x940] sm:$0xff]
        %v581 = vld [vmem:[%s201 + $0x948] sm:$0xff]
        %v582 = vld [vmem:[%s201 + $0x950] sm:$0xff]
        %v583 = vld [vmem:[%s201 + $0x958] sm:$0xff]
        %v584 = vld [vmem:[%s201 + $0x960] sm:$0xff]
        %v585 = vld [vmem:[%s201 + $0x968] sm:$0xff]
        %v586 = vld [vmem:[%s201 + $0x970] sm:$0xff]
        %v587 = vld [vmem:[%s201 + $0x978] sm:$0xff]
        %v588 = vld [vmem:[%s201 + $0x980] sm:$0xff]
        %v589 = vld [vmem:[%s201 + $0x988] sm:$0xff]
        %v590 = vld [vmem:[%s201 + $0x990] sm:$0xff]
        %v591 = vld [vmem:[%s201 + $0x998] sm:$0xff]
        %v592 = vld [vmem:[%s201 + $0x9a0] sm:$0xff]
        %v593 = vld [vmem:[%s201 + $0x9a8] sm:$0xff]
        %v594 = vld [vmem:[%s201 + $0x9b0] sm:$0xff]
        %v595 = vld [vmem:[%s201 + $0x9b8] sm:$0xff]
        %v596 = vld [vmem:[%s201 + $0x9c0] sm:$0xff]
        %v597 = vld [vmem:[%s201 + $0x9c8] sm:$0xff]
        %v598 = vld [vmem:[%s201 + $0x9d0] sm:$0xff]
        %v599 = vld [vmem:[%s201 + $0x9d8] sm:$0xff]
        %v600 = vld [vmem:[%s201 + $0x9e0] sm:$0xff]
        %v601 = vld [vmem:[%s201 + $0x9e8] sm:$0xff]
        %v602 = vld [vmem:[%s201 + $0x9f0] sm:$0xff]
        %v603 = vld [vmem:[%s201 + $0x9f8] sm:$0xff]
        %v604 = vld [vmem:[%s201 + $0xa00] sm:$0xff]
        %v605 = vld [vmem:[%s201 + $0xa08] sm:$0xff]
        %v606 = vld [vmem:[%s201 + $0xa10] sm:$0xff]
        %v607 = vld [vmem:[%s201 + $0xa18] sm:$0xff]
        %v608 = vld [vmem:[%s201 + $0xa20] sm:$0xff]
        %v609 = vld [vmem:[%s201 + $0xa28] sm:$0xff]
        %v610 = vld [vmem:[%s201 + $0xa30] sm:$0xff]
        %v611 = vld [vmem:[%s201 + $0xa38] sm:$0xff]
        %v612 = vld [vmem:[%s201 + $0xa40] sm:$0xff]
        %v613 = vld [vmem:[%s201 + $0xa48] sm:$0xff]
        %v614 = vld [vmem:[%s201 + $0xa50] sm:$0xff]
        %v615 = vld [vmem:[%s201 + $0xa58] sm:$0xff]
        %v616 = vld [vmem:[%s201 + $0xa60] sm:$0xff]
        %v617 = vld [vmem:[%s201 + $0xa68] sm:$0xff]
        %v618 = vld [vmem:[%s201 + $0xa70] sm:$0xff]
        %v619 = vld [vmem:[%s201 + $0xa78] sm:$0xff]
        %v620 = vld [vmem:[%s201 + $0xa80] sm:$0xff]
        %v621 = vld [vmem:[%s201 + $0xa88] sm:$0xff]
        %v622 = vld [vmem:[%s201 + $0xa90] sm:$0xff]
        %v623 = vld [vmem:[%s201 + $0xa98] sm:$0xff]
        %v624 = vld [vmem:[%s201 + $0xaa0] sm:$0xff]
        %v625 = vld [vmem:[%s201 + $0xaa8] sm:$0xff]
        %v626 = vld [vmem:[%s201 + $0xab0] sm:$0xff]
        %v627 = vld [vmem:[%s201 + $0xab8] sm:$0xff]
        %v628 = vld [vmem:[%s201 + $0xac0] sm:$0xff]
        %v629 = vld [vmem:[%s201 + $0xac8] sm:$0xff]
        %v630 = vld [vmem:[%s201 + $0xad0] sm:$0xff]
        %v631 = vld [vmem:[%s201 + $0xad8] sm:$0xff]
        %v632 = vld [vmem:[%s201 + $0xae0] sm:$0xff]
        %v633 = vld [vmem:[%s201 + $0xae8] sm:$0xff]
        %v634 = vld [vmem:[%s201 + $0xaf0] sm:$0xff]
        %v635 = vld [vmem:[%s201 + $0xaf8] sm:$0xff]
        %v636 = vld [vmem:[%s201 + $0xb00] sm:$0xff]
        %v637 = vld [vmem:[%s201 + $0xb08] sm:$0xff]
        %v638 = vld [vmem:[%s201 + $0xb10] sm:$0xff]
        %v639 = vld [vmem:[%s201 + $0xb18] sm:$0xff]
        %v640 = vld [vmem:[%s201 + $0xb20] sm:$0xff]
        %v641 = vld [vmem:[%s201 + $0xb28] sm:$0xff]
        %v642 = vld [vmem:[%s201 + $0xb30] sm:$0xff]
        %v643 = vld [vmem:[%s201 + $0xb38] sm:$0xff]
        %v644 = vld [vmem:[%s201 + $0xb40] sm:$0xff]
        %v645 = vld [vmem:[%s201 + $0xb48] sm:$0xff]
        %v646 = vld [vmem:[%s201 + $0xb50] sm:$0xff]
        %v647 = vld [vmem:[%s201 + $0xb58] sm:$0xff]
        %v648 = vld [vmem:[%s201 + $0xb60] sm:$0xff]
        %v649 = vld [vmem:[%s201 + $0xb68] sm:$0xff]
        %v650 = vld [vmem:[%s201 + $0xb70] sm:$0xff]
        %v651 = vld [vmem:[%s201 + $0xb78] sm:$0xff]
        %v652 = vld [vmem:[%s201 + $0xb80] sm:$0xff]
        %v653 = vld [vmem:[%s201 + $0xb88] sm:$0xff]
        %v654 = vld [vmem:[%s201 + $0xb90] sm:$0xff]
        %v655 = vld [vmem:[%s201 + $0xb98] sm:$0xff]
        %v656 = vld [vmem:[%s201 + $0xba0] sm:$0xff]
        %v657 = vld [vmem:[%s201 + $0xba8] sm:$0xff]
        %v658 = vld [vmem:[%s201 + $0xbb0] sm:$0xff]
        %v659 = vld [vmem:[%s201 + $0xbb8] sm:$0xff]
        %v660 = vld [vmem:[%s201 + $0xbc0] sm:$0xff]
        %v661 = vld [vmem:[%s201 + $0xbc8] sm:$0xff]
        %v662 = vld [vmem:[%s201 + $0xbd0] sm:$0xff]
        %v663 = vld [vmem:[%s201 + $0xbd8] sm:$0xff]
        %v664 = vld [vmem:[%s201 + $0xbe0] sm:$0xff]
        %v665 = vld [vmem:[%s201 + $0xbe8] sm:$0xff]
        %v666 = vld [vmem:[%s201 + $0xbf0] sm:$0xff]
        %v667 = vld [vmem:[%s201 + $0xbf8] sm:$0xff]
        %v668 = vld [vmem:[%s201 + $0xc00] sm:$0xff]
        %v669 = vld [vmem:[%s201 + $0xc08] sm:$0xff]
        %v670 = vld [vmem:[%s201 + $0xc10] sm:$0xff]
        %v671 = vld [vmem:[%s201 + $0xc18] sm:$0xff]
        %v672 = vld [vmem:[%s201 + $0xc20] sm:$0xff]
        %v673 = vld [vmem:[%s201 + $0xc28] sm:$0xff]
        %v674 = vld [vmem:[%s201 + $0xc30] sm:$0xff]
        %v675 = vld [vmem:[%s201 + $0xc38] sm:$0xff]
        %v676 = vld [vmem:[%s201 + $0xc40] sm:$0xff]
        %v677 = vld [vmem:[%s201 + $0xc48] sm:$0xff]
        %v678 = vld [vmem:[%s201 + $0xc50] sm:$0xff]
        %v679 = vld [vmem:[%s201 + $0xc58] sm:$0xff]
        %v680 = vld [vmem:[%s201 + $0xc60] sm:$0xff]
        %v681 = vld [vmem:[%s201 + $0xc68] sm:$0xff]
        %v682 = vld [vmem:[%s201 + $0xc70] sm:$0xff]
        %v683 = vld [vmem:[%s201 + $0xc78] sm:$0xff]
        %v684 = vld [vmem:[%s201 + $0xc80] sm:$0xff]
        %v685 = vld [vmem:[%s201 + $0xc88] sm:$0xff]
        %v686 = vld [vmem:[%s201 + $0xc90] sm:$0xff]
        %v687 = vld [vmem:[%s201 + $0xc98] sm:$0xff]
        %v688 = vld [vmem:[%s201 + $0xca0] sm:$0xff]
        %v689 = vld [vmem:[%s201 + $0xca8] sm:$0xff]
        %v690 = vld [vmem:[%s201 + $0xcb0] sm:$0xff]
        %v691 = vld [vmem:[%s201 + $0xcb8] sm:$0xff]
        %v692 = vld [vmem:[%s201 + $0xcc0] sm:$0xff]
        %v693 = vld [vmem:[%s201 + $0xcc8] sm:$0xff]
        %v694 = vld [vmem:[%s201 + $0xcd0] sm:$0xff]
        %v695 = vld [vmem:[%s201 + $0xcd8] sm:$0xff]
        %v696 = vld [vmem:[%s201 + $0xce0] sm:$0xff]
        %v697 = vld [vmem:[%s201 + $0xce8] sm:$0xff]
        %v698 = vld [vmem:[%s201 + $0xcf0] sm:$0xff]
        %v699 = vld [vmem:[%s201 + $0xcf8] sm:$0xff]
        %v700 = vld [vmem:[%s201 + $0xd00] sm:$0xff]
        %v701 = vld [vmem:[%s201 + $0xd08] sm:$0xff]
        %v702 = vld [vmem:[%s201 + $0xd10] sm:$0xff]
        %v703 = vld [vmem:[%s201 + $0xd18] sm:$0xff]
        %v704 = vld [vmem:[%s201 + $0xd20] sm:$0xff]
        %v705 = vld [vmem:[%s201 + $0xd28] sm:$0xff]
        %v706 = vld [vmem:[%s201 + $0xd30] sm:$0xff]
        %v707 = vld [vmem:[%s201 + $0xd38] sm:$0xff]
        %v708 = vld [vmem:[%s201 + $0xd40] sm:$0xff]
        %v709 = vld [vmem:[%s201 + $0xd48] sm:$0xff]
        %v710 = vld [vmem:[%s201 + $0xd50] sm:$0xff]
        %v711 = vld [vmem:[%s201 + $0xd58] sm:$0xff]
        %v712 = vld [vmem:[%s201 + $0xd60] sm:$0xff]
        %v713 = vld [vmem:[%s201 + $0xd68] sm:$0xff]
        %v714 = vld [vmem:[%s201 + $0xd70] sm:$0xff]
        %v715 = vld [vmem:[%s201 + $0xd78] sm:$0xff]
        %v716 = vld [vmem:[%s201 + $0xd80] sm:$0xff]
        %v717 = vld [vmem:[%s201 + $0xd88] sm:$0xff]
        %v718 = vld [vmem:[%s201 + $0xd90] sm:$0xff]
        %v719 = vld [vmem:[%s201 + $0xd98] sm:$0xff]
        %v720 = vld [vmem:[%s201 + $0xda0] sm:$0xff]
        %v721 = vld [vmem:[%s201 + $0xda8] sm:$0xff]
        %v722 = vld [vmem:[%s201 + $0xdb0] sm:$0xff]
        %v723 = vld [vmem:[%s201 + $0xdb8] sm:$0xff]
        %v724 = vld [vmem:[%s201 + $0xdc0] sm:$0xff]
        %v725 = vld [vmem:[%s201 + $0xdc8] sm:$0xff]
        %v726 = vld [vmem:[%s201 + $0xdd0] sm:$0xff]
        %v727 = vld [vmem:[%s201 + $0xdd8] sm:$0xff]
        %v728 = vld [vmem:[%s201 + $0xde0] sm:$0xff]
        %v729 = vld [vmem:[%s201 + $0xde8] sm:$0xff]
        %v730 = vld [vmem:[%s201 + $0xdf0] sm:$0xff]
        %v731 = vld [vmem:[%s201 + $0xdf8] sm:$0xff]
        %v732 = vld [vmem:[%s201 + $0xe00] sm:$0xff]
        %v733 = vld [vmem:[%s201 + $0xe08] sm:$0xff]
        %v734 = vld [vmem:[%s201 + $0xe10] sm:$0xff]
        %v735 = vld [vmem:[%s201 + $0xe18] sm:$0xff]
        %v736 = vld [vmem:[%s201 + $0xe20] sm:$0xff]
        %v737 = vld [vmem:[%s201 + $0xe28] sm:$0xff]
        %v738 = vld [vmem:[%s201 + $0xe30] sm:$0xff]
        %v739 = vld [vmem:[%s201 + $0xe38] sm:$0xff]
        %v740 = vld [vmem:[%s201 + $0xe40] sm:$0xff]
        %v741 = vld [vmem:[%s201 + $0xe48] sm:$0xff]
        %v742 = vld [vmem:[%s201 + $0xe50] sm:$0xff]
        %v743 = vld [vmem:[%s201 + $0xe58] sm:$0xff]
        %v744 = vld [vmem:[%s201 + $0xe60] sm:$0xff]
        %v745 = vld [vmem:[%s201 + $0xe68] sm:$0xff]
        %v746 = vld [vmem:[%s201 + $0xe70] sm:$0xff]
        %v747 = vld [vmem:[%s201 + $0xe78] sm:$0xff]
        %v748 = vld [vmem:[%s201 + $0xe80] sm:$0xff]
        %v749 = vld [vmem:[%s201 + $0xe88] sm:$0xff]
        %v750 = vld [vmem:[%s201 + $0xe90] sm:$0xff]
        %v751 = vld [vmem:[%s201 + $0xe98] sm:$0xff]
        %v752 = vld [vmem:[%s201 + $0xea0] sm:$0xff]
        %v753 = vld [vmem:[%s201 + $0xea8] sm:$0xff]
        %v754 = vld [vmem:[%s201 + $0xeb0] sm:$0xff]
        %v755 = vld [vmem:[%s201 + $0xeb8] sm:$0xff]
        %v756 = vld [vmem:[%s201 + $0xec0] sm:$0xff]
        %v757 = vld [vmem:[%s201 + $0xec8] sm:$0xff]
        %v758 = vld [vmem:[%s201 + $0xed0] sm:$0xff]
        %v759 = vld [vmem:[%s201 + $0xed8] sm:$0xff]
        %v760 = vld [vmem:[%s201 + $0xee0] sm:$0xff]
        %v761 = vld [vmem:[%s201 + $0xee8] sm:$0xff]
        %v762 = vld [vmem:[%s201 + $0xef0] sm:$0xff]
        %v763 = vld [vmem:[%s201 + $0xef8] sm:$0xff]
        %v764 = vld [vmem:[%s201 + $0xf00] sm:$0xff]
        %v765 = vld [vmem:[%s201 + $0xf08] sm:$0xff]
        %v766 = vld [vmem:[%s201 + $0xf10] sm:$0xff]
        %v767 = vld [vmem:[%s201 + $0xf18] sm:$0xff]
        %v768 = vld [vmem:[%s201 + $0xf20] sm:$0xff]
        %v769 = vld [vmem:[%s201 + $0xf28] sm:$0xff]
        %v770 = vld [vmem:[%s201 + $0xf30] sm:$0xff]
        %v771 = vld [vmem:[%s201 + $0xf38] sm:$0xff]
        %v772 = vld [vmem:[%s201 + $0xf40] sm:$0xff]
        %v773 = vld [vmem:[%s201 + $0xf48] sm:$0xff]
        %v774 = vld [vmem:[%s201 + $0xf50] sm:$0xff]
        %v775 = vld [vmem:[%s201 + $0xf58] sm:$0xff]
        %v776 = vld [vmem:[%s201 + $0xf60] sm:$0xff]
        %v777 = vld [vmem:[%s201 + $0xf68] sm:$0xff]
        %v778 = vld [vmem:[%s201 + $0xf70] sm:$0xff]
        %v779 = vld [vmem:[%s201 + $0xf78] sm:$0xff]
        %v780 = vld [vmem:[%s201 + $0xf80] sm:$0xff]
        %v781 = vld [vmem:[%s201 + $0xf88] sm:$0xff]
        %v782 = vld [vmem:[%s201 + $0xf90] sm:$0xff]
        %v783 = vld [vmem:[%s201 + $0xf98] sm:$0xff]
        %v784 = vld [vmem:[%s201 + $0xfa0] sm:$0xff]
        %v785 = vld [vmem:[%s201 + $0xfa8] sm:$0xff]
        %v786 = vld [vmem:[%s201 + $0xfb0] sm:$0xff]
        %v787 = vld [vmem:[%s201 + $0xfb8] sm:$0xff]
        %v788 = vld [vmem:[%s201 + $0xfc0] sm:$0xff]
        %v789 = vld [vmem:[%s201 + $0xfc8] sm:$0xff]
        %v790 = vld [vmem:[%s201 + $0xfd0] sm:$0xff]
        %v791 = vld [vmem:[%s201 + $0xfd8] sm:$0xff]
        %v792 = vld [vmem:[%s201 + $0xfe0] sm:$0xff]
        %v793 = vld [vmem:[%s201 + $0xfe8] sm:$0xff]
        %v794 = vld [vmem:[%s201 + $0xff0] sm:$0xff]
        %v795 = vld [vmem:[%s201 + $0xff8] sm:$0xff]
        %v796 = vld [vmem:[%s201 + $0x1000] sm:$0xff]
        %v797 = vld [vmem:[%s201 + $0x1008] sm:$0xff]
        %v798 = vld [vmem:[%s201 + $0x1010] sm:$0xff]
        %v799 = vld [vmem:[%s201 + $0x1018] sm:$0xff]
        %v800 = vld [vmem:[%s201 + $0x1020] sm:$0xff]
        %v801 = vld [vmem:[%s201 + $0x1028] sm:$0xff]
        %v802 = vld [vmem:[%s201 + $0x1030] sm:$0xff]
        %v803 = vld [vmem:[%s201 + $0x1038] sm:$0xff]
        %v804 = vld [vmem:[%s201 + $0x1040] sm:$0xff]
        %v805 = vld [vmem:[%s201 + $0x1048] sm:$0xff]
        %v806 = vld [vmem:[%s201 + $0x1050] sm:$0xff]
        %v807 = vld [vmem:[%s201 + $0x1058] sm:$0xff]
        %v808 = vld [vmem:[%s201 + $0x1060] sm:$0xff]
        %v809 = vld [vmem:[%s201 + $0x1068] sm:$0xff]
        %v810 = vld [vmem:[%s201 + $0x1070] sm:$0xff]
        %v811 = vld [vmem:[%s201 + $0x1078] sm:$0xff]
        %v812 = vld [vmem:[%s201 + $0x1080] sm:$0xff]
        %v813 = vld [vmem:[%s201 + $0x1088] sm:$0xff]
        %v814 = vld [vmem:[%s201 + $0x1090] sm:$0xff]
        %v815 = vld [vmem:[%s201 + $0x1098] sm:$0xff]
        %v816 = vld [vmem:[%s201 + $0x10a0] sm:$0xff]
        %v817 = vld [vmem:[%s201 + $0x10a8] sm:$0xff]
        %v818 = vld [vmem:[%s201 + $0x10b0] sm:$0xff]
        %v819 = vld [vmem:[%s201 + $0x10b8] sm:$0xff]
        %v820 = vld [vmem:[%s201 + $0x10c0] sm:$0xff]
        %v821 = vld [vmem:[%s201 + $0x10c8] sm:$0xff]
        %v822 = vld [vmem:[%s201 + $0x10d0] sm:$0xff]
        %v823 = vld [vmem:[%s201 + $0x10d8] sm:$0xff]
        %v824 = vld [vmem:[%s201 + $0x10e0] sm:$0xff]
        %v825 = vld [vmem:[%s201 + $0x10e8] sm:$0xff]
        %v826 = vld [vmem:[%s201 + $0x10f0] sm:$0xff]
        %v827 = vld [vmem:[%s201 + $0x10f8] sm:$0xff]
        %v828 = vld [vmem:[%s201 + $0x1100] sm:$0xff]
        %v829 = vld [vmem:[%s201 + $0x1108] sm:$0xff]
        %v830 = vld [vmem:[%s201 + $0x1110] sm:$0xff]
        %v831 = vld [vmem:[%s201 + $0x1118] sm:$0xff]
        %v832 = vld [vmem:[%s201 + $0x1120] sm:$0xff]
        %v833 = vld [vmem:[%s201 + $0x1128] sm:$0xff]
        %v834 = vld [vmem:[%s201 + $0x1130] sm:$0xff]
        %v835 = vld [vmem:[%s201 + $0x1138] sm:$0xff]
        %v836 = vld [vmem:[%s201 + $0x1140] sm:$0xff]
        %v837 = vld [vmem:[%s201 + $0x1148] sm:$0xff]
        %v838 = vld [vmem:[%s201 + $0x1150] sm:$0xff]
        %v839 = vld [vmem:[%s201 + $0x1158] sm:$0xff]
        %v840 = vld [vmem:[%s201 + $0x1160] sm:$0xff]
        %v841 = vld [vmem:[%s201 + $0x1168] sm:$0xff]
        %v842 = vld [vmem:[%s201 + $0x1170] sm:$0xff]
        %v843 = vld [vmem:[%s201 + $0x1178] sm:$0xff]
        %v844 = vld [vmem:[%s201 + $0x1180] sm:$0xff]
        %v845 = vld [vmem:[%s201 + $0x1188] sm:$0xff]
        %v846 = vld [vmem:[%s201 + $0x1190] sm:$0xff]
        %v847 = vld [vmem:[%s201 + $0x1198] sm:$0xff]
        %v848 = vld [vmem:[%s201 + $0x11a0] sm:$0xff]
        %v849 = vld [vmem:[%s201 + $0x11a8] sm:$0xff]
        %v850 = vld [vmem:[%s201 + $0x11b0] sm:$0xff]
        %v851 = vld [vmem:[%s201 + $0x11b8] sm:$0xff]
        %v852 = vld [vmem:[%s201 + $0x11c0] sm:$0xff]
        %v853 = vld [vmem:[%s201 + $0x11c8] sm:$0xff]
        %v854 = vld [vmem:[%s201 + $0x11d0] sm:$0xff]
        %v855 = vld [vmem:[%s201 + $0x11d8] sm:$0xff]
        %v856 = vld [vmem:[%s201 + $0x11e0] sm:$0xff]
        %v857 = vld [vmem:[%s201 + $0x11e8] sm:$0xff]
        %v858 = vld [vmem:[%s201 + $0x11f0] sm:$0xff]
        %v859 = vld [vmem:[%s201 + $0x11f8] sm:$0xff]
        %v860 = vld [vmem:[%s201 + $0x1200] sm:$0xff]
        %v861 = vld [vmem:[%s201 + $0x1208] sm:$0xff]
        %v862 = vld [vmem:[%s201 + $0x1210] sm:$0xff]
        %v863 = vld [vmem:[%s201 + $0x1218] sm:$0xff]
        %v864 = vld [vmem:[%s201 + $0x1220] sm:$0xff]
        %v865 = vld [vmem:[%s201 + $0x1228] sm:$0xff]
        %v866 = vld [vmem:[%s201 + $0x1230] sm:$0xff]
        %v867 = vld [vmem:[%s201 + $0x1238] sm:$0xff]
        %v868 = vld [vmem:[%s201 + $0x1240] sm:$0xff]
        %v869 = vld [vmem:[%s201 + $0x1248] sm:$0xff]
        %v870 = vld [vmem:[%s201 + $0x1250] sm:$0xff]
        %v871 = vld [vmem:[%s201 + $0x1258] sm:$0xff]
        %v872 = vld [vmem:[%s201 + $0x1260] sm:$0xff]
        %v873 = vld [vmem:[%s201 + $0x1268] sm:$0xff]
        %v874 = vld [vmem:[%s201 + $0x1270] sm:$0xff]
        %v875 = vld [vmem:[%s201 + $0x1278] sm:$0xff]
        %v876 = vld [vmem:[%s201 + $0x1280] sm:$0xff]
        %v877 = vld [vmem:[%s201 + $0x1288] sm:$0xff]
        %v878 = vld [vmem:[%s201 + $0x1290] sm:$0xff]
        %v879 = vld [vmem:[%s201 + $0x1298] sm:$0xff]
        %v880 = vld [vmem:[%s201 + $0x12a0] sm:$0xff]
        %v881 = vld [vmem:[%s201 + $0x12a8] sm:$0xff]
        %v882 = vld [vmem:[%s201 + $0x12b0] sm:$0xff]
        %v883 = vld [vmem:[%s201 + $0x12b8] sm:$0xff]
        %v884 = vld [vmem:[%s201 + $0x12c0] sm:$0xff]
        %v885 = vld [vmem:[%s201 + $0x12c8] sm:$0xff]
        %v886 = vld [vmem:[%s201 + $0x12d0] sm:$0xff]
        %v887 = vld [vmem:[%s201 + $0x12d8] sm:$0xff]
        %v888 = vld [vmem:[%s201 + $0x12e0] sm:$0xff]
        %v889 = vld [vmem:[%s201 + $0x12e8] sm:$0xff]
        %v890 = vld [vmem:[%s201 + $0x12f0] sm:$0xff]
        %v891 = vld [vmem:[%s201 + $0x12f8] sm:$0xff]
        %v892 = vld [vmem:[%s201 + $0x1300] sm:$0xff]
        %v893 = vld [vmem:[%s201 + $0x1308] sm:$0xff]
        %v894 = vld [vmem:[%s201 + $0x1310] sm:$0xff]
        %v895 = vld [vmem:[%s201 + $0x1318] sm:$0xff]
        %v896 = vld [vmem:[%s201 + $0x1320] sm:$0xff]
        %v897 = vld [vmem:[%s201 + $0x1328] sm:$0xff]
        %v898 = vld [vmem:[%s201 + $0x1330] sm:$0xff]
        %v899 = vld [vmem:[%s201 + $0x1338] sm:$0xff]
        %v900 = vld [vmem:[%s201 + $0x1340] sm:$0xff]
        %v901 = vld [vmem:[%s201 + $0x1348] sm:$0xff]
        %v902 = vld [vmem:[%s201 + $0x1350] sm:$0xff]
        %v903 = vld [vmem:[%s201 + $0x1358] sm:$0xff]
        %v904 = vld [vmem:[%s201 + $0x1360] sm:$0xff]
        %v905 = vld [vmem:[%s201 + $0x1368] sm:$0xff]
        %v906 = vld [vmem:[%s201 + $0x1370] sm:$0xff]
        %v907 = vld [vmem:[%s201 + $0x1378] sm:$0xff]
        %v908 = vld [vmem:[%s201 + $0x1380] sm:$0xff]
        %v909 = vld [vmem:[%s201 + $0x1388] sm:$0xff]
        %v910 = vld [vmem:[%s201 + $0x1390] sm:$0xff]
        %v911 = vld [vmem:[%s201 + $0x1398] sm:$0xff]
        %v912 = vld [vmem:[%s201 + $0x13a0] sm:$0xff]
        %v913 = vld [vmem:[%s201 + $0x13a8] sm:$0xff]
        %v914 = vld [vmem:[%s201 + $0x13b0] sm:$0xff]
        %v915 = vld [vmem:[%s201 + $0x13b8] sm:$0xff]
        %v916 = vld [vmem:[%s201 + $0x13c0] sm:$0xff]
        %v917 = vld [vmem:[%s201 + $0x13c8] sm:$0xff]
        %v918 = vld [vmem:[%s201 + $0x13d0] sm:$0xff]
        %v919 = vld [vmem:[%s201 + $0x13d8] sm:$0xff]
        %v920 = vld [vmem:[%s201 + $0x13e0] sm:$0xff]
        %v921 = vld [vmem:[%s201 + $0x13e8] sm:$0xff]
        %v922 = vld [vmem:[%s201 + $0x13f0] sm:$0xff]
        %v923 = vld [vmem:[%s201 + $0x13f8] sm:$0xff]
        %v924 = vld [vmem:[%s201 + $0x1400] sm:$0xff]
        %v925 = vld [vmem:[%s201 + $0x1408] sm:$0xff]
        %v926 = vld [vmem:[%s201 + $0x1410] sm:$0xff]
        %v927 = vld [vmem:[%s201 + $0x1418] sm:$0xff]
        %v928 = vld [vmem:[%s201 + $0x1420] sm:$0xff]
        %v929 = vld [vmem:[%s201 + $0x1428] sm:$0xff]
        %v930 = vld [vmem:[%s201 + $0x1430] sm:$0xff]
        %v931 = vld [vmem:[%s201 + $0x1438] sm:$0xff]
        %v932 = vld [vmem:[%s201 + $0x1440] sm:$0xff]
        %v933 = vld [vmem:[%s201 + $0x1448] sm:$0xff]
        %v934 = vld [vmem:[%s201 + $0x1450] sm:$0xff]
        %v935 = vld [vmem:[%s201 + $0x1458] sm:$0xff]
        %v936 = vld [vmem:[%s201 + $0x1460] sm:$0xff]
        %v937 = vld [vmem:[%s201 + $0x1468] sm:$0xff]
        %v938 = vld [vmem:[%s201 + $0x1470] sm:$0xff]
        %v939 = vld [vmem:[%s201 + $0x1478] sm:$0xff]
        %v940 = vld [vmem:[%s201 + $0x1480] sm:$0xff]
        %v941 = vld [vmem:[%s201 + $0x1488] sm:$0xff]
        %v942 = vld [vmem:[%s201 + $0x1490] sm:$0xff]
        %v943 = vld [vmem:[%s201 + $0x1498] sm:$0xff]
        %v944 = vld [vmem:[%s201 + $0x14a0] sm:$0xff]
        %v945 = vld [vmem:[%s201 + $0x14a8] sm:$0xff]
        %v946 = vld [vmem:[%s201 + $0x14b0] sm:$0xff]
        %v947 = vld [vmem:[%s201 + $0x14b8] sm:$0xff]
        %v948 = vld [vmem:[%s201 + $0x14c0] sm:$0xff]
        %v949 = vld [vmem:[%s201 + $0x14c8] sm:$0xff]
        %v950 = vld [vmem:[%s201 + $0x14d0] sm:$0xff]
        %v951 = vld [vmem:[%s201 + $0x14d8] sm:$0xff]
        %v952 = vld [vmem:[%s201 + $0x14e0] sm:$0xff]
        %v953 = vld [vmem:[%s201 + $0x14e8] sm:$0xff]
        %v954 = vld [vmem:[%s201 + $0x14f0] sm:$0xff]
        %v955 = vld [vmem:[%s201 + $0x14f8] sm:$0xff]
        %v956 = vld [vmem:[%s201 + $0x1500] sm:$0xff]
        %v957 = vld [vmem:[%s201 + $0x1508] sm:$0xff]
        %v958 = vld [vmem:[%s201 + $0x1510] sm:$0xff]
        %v959 = vld [vmem:[%s201 + $0x1518] sm:$0xff]
        %v960 = vld [vmem:[%s201 + $0x1520] sm:$0xff]
        %v961 = vld [vmem:[%s201 + $0x1528] sm:$0xff]
        %v962 = vld [vmem:[%s201 + $0x1530] sm:$0xff]
        %v963 = vld [vmem:[%s201 + $0x1538] sm:$0xff]
        %v964 = vld [vmem:[%s201 + $0x1540] sm:$0xff]
        %v965 = vld [vmem:[%s201 + $0x1548] sm:$0xff]
        %v966 = vld [vmem:[%s201 + $0x1550] sm:$0xff]
        %v967 = vld [vmem:[%s201 + $0x1558] sm:$0xff]
        %v968 = vld [vmem:[%s201 + $0x1560] sm:$0xff]
        %v969 = vld [vmem:[%s201 + $0x1568] sm:$0xff]
        %v970 = vld [vmem:[%s201 + $0x1570] sm:$0xff]
        %v971 = vld [vmem:[%s201 + $0x1578] sm:$0xff]
        %v972 = vld [vmem:[%s201 + $0x1580] sm:$0xff]
        %v973 = vld [vmem:[%s201 + $0x1588] sm:$0xff]
        %v974 = vld [vmem:[%s201 + $0x1590] sm:$0xff]
        %v975 = vld [vmem:[%s201 + $0x1598] sm:$0xff]
        %v976 = vld [vmem:[%s201 + $0x15a0] sm:$0xff]
        %v977 = vld [vmem:[%s201 + $0x15a8] sm:$0xff]
        %v978 = vld [vmem:[%s201 + $0x15b0] sm:$0xff]
        %v979 = vld [vmem:[%s201 + $0x15b8] sm:$0xff]
        %v980 = vld [vmem:[%s201 + $0x15c0] sm:$0xff]
        %v981 = vld [vmem:[%s201 + $0x15c8] sm:$0xff]
        %v982 = vld [vmem:[%s201 + $0x15d0] sm:$0xff]
        %v983 = vld [vmem:[%s201 + $0x15d8] sm:$0xff]
        %v984 = vld [vmem:[%s201 + $0x15e0] sm:$0xff]
        %v985 = vld [vmem:[%s201 + $0x15e8] sm:$0xff]
        %v986 = vld [vmem:[%s201 + $0x15f0] sm:$0xff]
        %v987 = vld [vmem:[%s201 + $0x15f8] sm:$0xff]
        %v988 = vld [vmem:[%s201 + $0x1600] sm:$0xff]
        %v989 = vld [vmem:[%s201 + $0x1608] sm:$0xff]
        %v990 = vld [vmem:[%s201 + $0x1610] sm:$0xff]
        %v991 = vld [vmem:[%s201 + $0x1618] sm:$0xff]
        %v992 = vld [vmem:[%s201 + $0x1620] sm:$0xff]
        %v993 = vld [vmem:[%s201 + $0x1628] sm:$0xff]
        %v994 = vld [vmem:[%s201 + $0x1630] sm:$0xff]
        %v995 = vld [vmem:[%s201 + $0x1638] sm:$0xff]
        %v996 = vld [vmem:[%s201 + $0x1640] sm:$0xff]
        %v997 = vld [vmem:[%s201 + $0x1648] sm:$0xff]
        %v998 = vld [vmem:[%s201 + $0x1650] sm:$0xff]
        %v999 = vld [vmem:[%s201 + $0x1658] sm:$0xff]
        %v1000 = vld [vmem:[%s201 + $0x1660] sm:$0xff]
        %v1001 = vld [vmem:[%s201 + $0x1668] sm:$0xff]
        %v1002 = vld [vmem:[%s201 + $0x1670] sm:$0xff]
        %v1003 = vld [vmem:[%s201 + $0x1678] sm:$0xff]
        %v1004 = vld [vmem:[%s201 + $0x1680] sm:$0xff]
        %v1005 = vld [vmem:[%s201 + $0x1688] sm:$0xff]
        %v1006 = vld [vmem:[%s201 + $0x1690] sm:$0xff]
        %v1007 = vld [vmem:[%s201 + $0x1698] sm:$0xff]
        %v1008 = vld [vmem:[%s201 + $0x16a0] sm:$0xff]
        %v1009 = vld [vmem:[%s201 + $0x16a8] sm:$0xff]
        %v1010 = vld [vmem:[%s201 + $0x16b0] sm:$0xff]
        %v1011 = vld [vmem:[%s201 + $0x16b8] sm:$0xff]
        %v1012 = vld [vmem:[%s201 + $0x16c0] sm:$0xff]
        %v1013 = vld [vmem:[%s201 + $0x16c8] sm:$0xff]
        %v1014 = vld [vmem:[%s201 + $0x16d0] sm:$0xff]
        %v1015 = vld [vmem:[%s201 + $0x16d8] sm:$0xff]
        %v1016 = vld [vmem:[%s201 + $0x16e0] sm:$0xff]
        %v1017 = vld [vmem:[%s201 + $0x16e8] sm:$0xff]
        %v1018 = vld [vmem:[%s201 + $0x16f0] sm:$0xff]
        %v1019 = vld [vmem:[%s201 + $0x16f8] sm:$0xff]
        %v1020 = vld [vmem:[%s201 + $0x1700] sm:$0xff]
        %v1021 = vld [vmem:[%s201 + $0x1708] sm:$0xff]
        %v1022 = vld [vmem:[%s201 + $0x1710] sm:$0xff]
        %v1023 = vld [vmem:[%s201 + $0x1718] sm:$0xff]
        %v1024 = vld [vmem:[%s201 + $0x1720] sm:$0xff]
        %v1025 = vld [vmem:[%s201 + $0x1728] sm:$0xff]
        %v1026 = vld [vmem:[%s201 + $0x1730] sm:$0xff]
        %v1027 = vld [vmem:[%s201 + $0x1738] sm:$0xff]
        %v1028 = vld [vmem:[%s201 + $0x1740] sm:$0xff]
        %v1029 = vld [vmem:[%s201 + $0x1748] sm:$0xff]
        %v1030 = vld [vmem:[%s201 + $0x1750] sm:$0xff]
        %v1031 = vld [vmem:[%s201 + $0x1758] sm:$0xff]
        %v1032 = vld [vmem:[%s201 + $0x1760] sm:$0xff]
        %v1033 = vld [vmem:[%s201 + $0x1768] sm:$0xff]
        %v1034 = vld [vmem:[%s201 + $0x1770] sm:$0xff]
        %v1035 = vld [vmem:[%s201 + $0x1778] sm:$0xff]
        %v1036 = vld [vmem:[%s201 + $0x1780] sm:$0xff]
        %v1037 = vld [vmem:[%s201 + $0x1788] sm:$0xff]
        %v1038 = vld [vmem:[%s201 + $0x1790] sm:$0xff]
        %v1039 = vld [vmem:[%s201 + $0x1798] sm:$0xff]
        %v1040 = vld [vmem:[%s201 + $0x17a0] sm:$0xff]
        %v1041 = vld [vmem:[%s201 + $0x17a8] sm:$0xff]
        %v1042 = vld [vmem:[%s201 + $0x17b0] sm:$0xff]
        %v1043 = vld [vmem:[%s201 + $0x17b8] sm:$0xff]
        %v1044 = vld [vmem:[%s201 + $0x17c0] sm:$0xff]
        %v1045 = vld [vmem:[%s201 + $0x17c8] sm:$0xff]
        %v1046 = vld [vmem:[%s201 + $0x17d0] sm:$0xff]
        %v1047 = vld [vmem:[%s201 + $0x17d8] sm:$0xff]
        %v1048 = vld [vmem:[%s201 + $0x17e0] sm:$0xff]
        %v1049 = vld [vmem:[%s201 + $0x17e8] sm:$0xff]
        %v1050 = vld [vmem:[%s201 + $0x17f0] sm:$0xff]
        %v1051 = vld [vmem:[%s201 + $0x17f8] sm:$0xff]
        %v1052 = vld [vmem:[%s201 + $0x1800] sm:$0xff]
        %v1053 = vld [vmem:[%s201 + $0x1808] sm:$0xff]
        %v1054 = vld [vmem:[%s201 + $0x1810] sm:$0xff]
        %v1055 = vld [vmem:[%s201 + $0x1818] sm:$0xff]
        %v1056 = vld [vmem:[%s201 + $0x1820] sm:$0xff]
        %v1057 = vld [vmem:[%s201 + $0x1828] sm:$0xff]
        %v1058 = vld [vmem:[%s201 + $0x1830] sm:$0xff]
        %v1059 = vld [vmem:[%s201 + $0x1838] sm:$0xff]
        %v1060 = vld [vmem:[%s201 + $0x1840] sm:$0xff]
        %v1061 = vld [vmem:[%s201 + $0x1848] sm:$0xff]
        %v1062 = vld [vmem:[%s201 + $0x1850] sm:$0xff]
        %v1063 = vld [vmem:[%s201 + $0x1858] sm:$0xff]
        %v1064 = vld [vmem:[%s201 + $0x1860] sm:$0xff]
        %v1065 = vld [vmem:[%s201 + $0x1868] sm:$0xff]
        %v1066 = vld [vmem:[%s201 + $0x1870] sm:$0xff]
        %v1067 = vld [vmem:[%s201 + $0x1878] sm:$0xff]
        %v1068 = vld [vmem:[%s201 + $0x1880] sm:$0xff]
        %v1069 = vld [vmem:[%s201 + $0x1888] sm:$0xff]
        %v1070 = vld [vmem:[%s201 + $0x1890] sm:$0xff]
        %v1071 = vld [vmem:[%s201 + $0x1898] sm:$0xff]
        %v1072 = vld [vmem:[%s201 + $0x18a0] sm:$0xff]
        %v1073 = vld [vmem:[%s201 + $0x18a8] sm:$0xff]
        %v1074 = vld [vmem:[%s201 + $0x18b0] sm:$0xff]
        %v1075 = vld [vmem:[%s201 + $0x18b8] sm:$0xff]
        %v1076 = vld [vmem:[%s201 + $0x18c0] sm:$0xff]
        %v1077 = vld [vmem:[%s201 + $0x18c8] sm:$0xff]
        %v1078 = vld [vmem:[%s201 + $0x18d0] sm:$0xff]
        %v1079 = vld [vmem:[%s201 + $0x18d8] sm:$0xff]
        %v1080 = vld [vmem:[%s201 + $0x18e0] sm:$0xff]
        %v1081 = vld [vmem:[%s201 + $0x18e8] sm:$0xff]
        %v1082 = vld [vmem:[%s201 + $0x18f0] sm:$0xff]
        %v1083 = vld [vmem:[%s201 + $0x18f8] sm:$0xff]
        %v1084 = vld [vmem:[%s201 + $0x1900] sm:$0xff]
        %v1085 = vld [vmem:[%s201 + $0x1908] sm:$0xff]
        %v1086 = vld [vmem:[%s201 + $0x1910] sm:$0xff]
        %v1087 = vld [vmem:[%s201 + $0x1918] sm:$0xff]
        %v1088 = vld [vmem:[%s201 + $0x1920] sm:$0xff]
        %v1089 = vld [vmem:[%s201 + $0x1928] sm:$0xff]
        %v1090 = vld [vmem:[%s201 + $0x1930] sm:$0xff]
        %v1091 = vld [vmem:[%s201 + $0x1938] sm:$0xff]
        %v1092 = vld [vmem:[%s201 + $0x1940] sm:$0xff]
        %v1093 = vld [vmem:[%s201 + $0x1948] sm:$0xff]
        %v1094 = vld [vmem:[%s201 + $0x1950] sm:$0xff]
        %v1095 = vld [vmem:[%s201 + $0x1958] sm:$0xff]
        %v1096 = vld [vmem:[%s201 + $0x1960] sm:$0xff]
        %v1097 = vld [vmem:[%s201 + $0x1968] sm:$0xff]
        %v1098 = vld [vmem:[%s201 + $0x1970] sm:$0xff]
        %v1099 = vld [vmem:[%s201 + $0x1978] sm:$0xff]
        %v1100 = vld [vmem:[%s201 + $0x1980] sm:$0xff]
        %v1101 = vld [vmem:[%s201 + $0x1988] sm:$0xff]
        %v1102 = vld [vmem:[%s201 + $0x1990] sm:$0xff]
        %v1103 = vld [vmem:[%s201 + $0x1998] sm:$0xff]
        %v1104 = vld [vmem:[%s201 + $0x19a0] sm:$0xff]
        %v1105 = vld [vmem:[%s201 + $0x19a8] sm:$0xff]
        %v1106 = vld [vmem:[%s201 + $0x19b0] sm:$0xff]
        %v1107 = vld [vmem:[%s201 + $0x19b8] sm:$0xff]
        %v1108 = vld [vmem:[%s201 + $0x19c0] sm:$0xff]
        %v1109 = vld [vmem:[%s201 + $0x19c8] sm:$0xff]
        %v1110 = vld [vmem:[%s201 + $0x19d0] sm:$0xff]
        %v1111 = vld [vmem:[%s201 + $0x19d8] sm:$0xff]
        %v1112 = vld [vmem:[%s201 + $0x19e0] sm:$0xff]
        %v1113 = vld [vmem:[%s201 + $0x19e8] sm:$0xff]
        %v1114 = vld [vmem:[%s201 + $0x19f0] sm:$0xff]
        %v1115 = vld [vmem:[%s201 + $0x19f8] sm:$0xff]
        %v1116 = vld [vmem:[%s201 + $0x1a00] sm:$0xff]
        %v1117 = vld [vmem:[%s201 + $0x1a08] sm:$0xff]
        %v1118 = vld [vmem:[%s201 + $0x1a10] sm:$0xff]
        %v1119 = vld [vmem:[%s201 + $0x1a18] sm:$0xff]
        %v1120 = vld [vmem:[%s201 + $0x1a20] sm:$0xff]
        %v1121 = vld [vmem:[%s201 + $0x1a28] sm:$0xff]
        %v1122 = vld [vmem:[%s201 + $0x1a30] sm:$0xff]
        %v1123 = vld [vmem:[%s201 + $0x1a38] sm:$0xff]
        %v1124 = vld [vmem:[%s201 + $0x1a40] sm:$0xff]
        %v1125 = vld [vmem:[%s201 + $0x1a48] sm:$0xff]
        %v1126 = vld [vmem:[%s201 + $0x1a50] sm:$0xff]
        %v1127 = vld [vmem:[%s201 + $0x1a58] sm:$0xff]
        %v1128 = vld [vmem:[%s201 + $0x1a60] sm:$0xff]
        %v1129 = vld [vmem:[%s201 + $0x1a68] sm:$0xff]
        %v1130 = vld [vmem:[%s201 + $0x1a70] sm:$0xff]
        %v1131 = vld [vmem:[%s201 + $0x1a78] sm:$0xff]
        %v1132 = vld [vmem:[%s201 + $0x1a80] sm:$0xff]
        %v1133 = vld [vmem:[%s201 + $0x1a88] sm:$0xff]
        %v1134 = vld [vmem:[%s201 + $0x1a90] sm:$0xff]
        %v1135 = vld [vmem:[%s201 + $0x1a98] sm:$0xff]
        %v1136 = vld [vmem:[%s201 + $0x1aa0] sm:$0xff]
        %v1137 = vld [vmem:[%s201 + $0x1aa8] sm:$0xff]
        %v1138 = vld [vmem:[%s201 + $0x1ab0] sm:$0xff]
        %v1139 = vld [vmem:[%s201 + $0x1ab8] sm:$0xff]
        %v1140 = vld [vmem:[%s201 + $0x1ac0] sm:$0xff]
        %v1141 = vld [vmem:[%s201 + $0x1ac8] sm:$0xff]
        %v1142 = vld [vmem:[%s201 + $0x1ad0] sm:$0xff]
        %v1143 = vld [vmem:[%s201 + $0x1ad8] sm:$0xff]
        %v1144 = vld [vmem:[%s201 + $0x1ae0] sm:$0xff]
        %v1145 = vld [vmem:[%s201 + $0x1ae8] sm:$0xff]
        %v1146 = vld [vmem:[%s201 + $0x1af0] sm:$0xff]
        %v1147 = vld [vmem:[%s201 + $0x1af8] sm:$0xff]
        %v1148 = vld [vmem:[%s201 + $0x1b00] sm:$0xff]
        %v1149 = vld [vmem:[%s201 + $0x1b08] sm:$0xff]
        %v1150 = vld [vmem:[%s201 + $0x1b10] sm:$0xff]
        %v1151 = vld [vmem:[%s201 + $0x1b18] sm:$0xff]
        %v1152 = vld [vmem:[%s201 + $0x1b20] sm:$0xff]
        %v1153 = vld [vmem:[%s201 + $0x1b28] sm:$0xff]
        %v1154 = vld [vmem:[%s201 + $0x1b30] sm:$0xff]
        %v1155 = vld [vmem:[%s201 + $0x1b38] sm:$0xff]
        %v1156 = vld [vmem:[%s201 + $0x1b40] sm:$0xff]
        %v1157 = vld [vmem:[%s201 + $0x1b48] sm:$0xff]
        %v1158 = vld [vmem:[%s201 + $0x1b50] sm:$0xff]
        %v1159 = vld [vmem:[%s201 + $0x1b58] sm:$0xff]
        %v1160 = vld [vmem:[%s201 + $0x1b60] sm:$0xff]
        %v1161 = vld [vmem:[%s201 + $0x1b68] sm:$0xff]
        %v1162 = vld [vmem:[%s201 + $0x1b70] sm:$0xff]
        %v1163 = vld [vmem:[%s201 + $0x1b78] sm:$0xff]
        %v1164 = vld [vmem:[%s201 + $0x1b80] sm:$0xff]
        %v1165 = vld [vmem:[%s201 + $0x1b88] sm:$0xff]
        %v1166 = vld [vmem:[%s201 + $0x1b90] sm:$0xff]
        %v1167 = vld [vmem:[%s201 + $0x1b98] sm:$0xff]
        %v1168 = vld [vmem:[%s201 + $0x1ba0] sm:$0xff]
        %v1169 = vld [vmem:[%s201 + $0x1ba8] sm:$0xff]
        %v1170 = vld [vmem:[%s201 + $0x1bb0] sm:$0xff]
        %v1171 = vld [vmem:[%s201 + $0x1bb8] sm:$0xff]
        %v1172 = vld [vmem:[%s201 + $0x1bc0] sm:$0xff]
        %v1173 = vld [vmem:[%s201 + $0x1bc8] sm:$0xff]
        %v1174 = vld [vmem:[%s201 + $0x1bd0] sm:$0xff]
        %v1175 = vld [vmem:[%s201 + $0x1bd8] sm:$0xff]
        %v1176 = vld [vmem:[%s201 + $0x1be0] sm:$0xff]
        %v1177 = vld [vmem:[%s201 + $0x1be8] sm:$0xff]
        %v1178 = vld [vmem:[%s201 + $0x1bf0] sm:$0xff]
        %v1179 = vld [vmem:[%s201 + $0x1bf8] sm:$0xff]
        %v1180 = vld [vmem:[%s201 + $0x1c00] sm:$0xff]
        %v1181 = vld [vmem:[%s201 + $0x1c08] sm:$0xff]
        %v1182 = vld [vmem:[%s201 + $0x1c10] sm:$0xff]
        %v1183 = vld [vmem:[%s201 + $0x1c18] sm:$0xff]
        %v1184 = vld [vmem:[%s201 + $0x1c20] sm:$0xff]
        %v1185 = vld [vmem:[%s201 + $0x1c28] sm:$0xff]
        %v1186 = vld [vmem:[%s201 + $0x1c30] sm:$0xff]
        %v1187 = vld [vmem:[%s201 + $0x1c38] sm:$0xff]
        %v1188 = vld [vmem:[%s201 + $0x1c40] sm:$0xff]
        %v1189 = vld [vmem:[%s201 + $0x1c48] sm:$0xff]
        %v1190 = vld [vmem:[%s201 + $0x1c50] sm:$0xff]
        %v1191 = vld [vmem:[%s201 + $0x1c58] sm:$0xff]
        %v1192 = vld [vmem:[%s201 + $0x1c60] sm:$0xff]
        %v1193 = vld [vmem:[%s201 + $0x1c68] sm:$0xff]
        %v1194 = vld [vmem:[%s201 + $0x1c70] sm:$0xff]
        %v1195 = vld [vmem:[%s201 + $0x1c78] sm:$0xff]
        %v1196 = vld [vmem:[%s201 + $0x1c80] sm:$0xff]
        %v1197 = vld [vmem:[%s201 + $0x1c88] sm:$0xff]
        %v1198 = vld [vmem:[%s201 + $0x1c90] sm:$0xff]
        %v1199 = vld [vmem:[%s201 + $0x1c98] sm:$0xff]
        %v1200 = vld [vmem:[%s201 + $0x1ca0] sm:$0xff]
        %v1201 = vld [vmem:[%s201 + $0x1ca8] sm:$0xff]
        %v1202 = vld [vmem:[%s201 + $0x1cb0] sm:$0xff]
        %v1203 = vld [vmem:[%s201 + $0x1cb8] sm:$0xff]
        %v1204 = vld [vmem:[%s201 + $0x1cc0] sm:$0xff]
        %v1205 = vld [vmem:[%s201 + $0x1cc8] sm:$0xff]
        %v1206 = vld [vmem:[%s201 + $0x1cd0] sm:$0xff]
        %v1207 = vld [vmem:[%s201 + $0x1cd8] sm:$0xff]
        %v1208 = vld [vmem:[%s201 + $0x1ce0] sm:$0xff]
        %v1209 = vld [vmem:[%s201 + $0x1ce8] sm:$0xff]
        %v1210 = vld [vmem:[%s201 + $0x1cf0] sm:$0xff]
        %v1211 = vld [vmem:[%s201 + $0x1cf8] sm:$0xff]
        %v1212 = vld [vmem:[%s201 + $0x1d00] sm:$0xff]
        %v1213 = vld [vmem:[%s201 + $0x1d08] sm:$0xff]
        %v1214 = vld [vmem:[%s201 + $0x1d10] sm:$0xff]
        %v1215 = vld [vmem:[%s201 + $0x1d18] sm:$0xff]
        %v1216 = vld [vmem:[%s201 + $0x1d20] sm:$0xff]
        %v1217 = vld [vmem:[%s201 + $0x1d28] sm:$0xff]
        %v1218 = vld [vmem:[%s201 + $0x1d30] sm:$0xff]
        %v1219 = vld [vmem:[%s201 + $0x1d38] sm:$0xff]
        %v1220 = vld [vmem:[%s201 + $0x1d40] sm:$0xff]
        %v1221 = vld [vmem:[%s201 + $0x1d48] sm:$0xff]
        %v1222 = vld [vmem:[%s201 + $0x1d50] sm:$0xff]
        %v1223 = vld [vmem:[%s201 + $0x1d58] sm:$0xff]
        %v1224 = vld [vmem:[%s201 + $0x1d60] sm:$0xff]
        %v1225 = vld [vmem:[%s201 + $0x1d68] sm:$0xff]
        %v1226 = vld [vmem:[%s201 + $0x1d70] sm:$0xff]
        %v1227 = vld [vmem:[%s201 + $0x1d78] sm:$0xff]
        %v1228 = vld [vmem:[%s201 + $0x1d80] sm:$0xff]
        %v1229 = vld [vmem:[%s201 + $0x1d88] sm:$0xff]
        %v1230 = vld [vmem:[%s201 + $0x1d90] sm:$0xff]
        %v1231 = vld [vmem:[%s201 + $0x1d98] sm:$0xff]
        %v1232 = vld [vmem:[%s201 + $0x1da0] sm:$0xff]
        %v1233 = vld [vmem:[%s201 + $0x1da8] sm:$0xff]
        %v1234 = vld [vmem:[%s201 + $0x1db0] sm:$0xff]
        %v1235 = vld [vmem:[%s201 + $0x1db8] sm:$0xff]
        %v1236 = vld [vmem:[%s201 + $0x1dc0] sm:$0xff]
        %v1237 = vld [vmem:[%s201 + $0x1dc8] sm:$0xff]
        %v1238 = vld [vmem:[%s201 + $0x1dd0] sm:$0xff]
        %v1239 = vld [vmem:[%s201 + $0x1dd8] sm:$0xff]
        %v1240 = vld [vmem:[%s201 + $0x1de0] sm:$0xff]
        %v1241 = vld [vmem:[%s201 + $0x1de8] sm:$0xff]
        %v1242 = vld [vmem:[%s201 + $0x1df0] sm:$0xff]
        %v1243 = vld [vmem:[%s201 + $0x1df8] sm:$0xff]
        %v1244 = vld [vmem:[%s201 + $0x1e00] sm:$0xff]
        %v1245 = vld [vmem:[%s201 + $0x1e08] sm:$0xff]
        %v1246 = vld [vmem:[%s201 + $0x1e10] sm:$0xff]
        %v1247 = vld [vmem:[%s201 + $0x1e18] sm:$0xff]
        %v1248 = vld [vmem:[%s201 + $0x1e20] sm:$0xff]
        %v1249 = vld [vmem:[%s201 + $0x1e28] sm:$0xff]
        %v1250 = vld [vmem:[%s201 + $0x1e30] sm:$0xff]
        %v1251 = vld [vmem:[%s201 + $0x1e38] sm:$0xff]
        %v1252 = vld [vmem:[%s201 + $0x1e40] sm:$0xff]
        %v1253 = vld [vmem:[%s201 + $0x1e48] sm:$0xff]
        %v1254 = vld [vmem:[%s201 + $0x1e50] sm:$0xff]
        %v1255 = vld [vmem:[%s201 + $0x1e58] sm:$0xff]
        %v1256 = vld [vmem:[%s201 + $0x1e60] sm:$0xff]
        %v1257 = vld [vmem:[%s201 + $0x1e68] sm:$0xff]
        %v1258 = vld [vmem:[%s201 + $0x1e70] sm:$0xff]
        %v1259 = vld [vmem:[%s201 + $0x1e78] sm:$0xff]
        %v1260 = vld [vmem:[%s201 + $0x1e80] sm:$0xff]
        %v1261 = vld [vmem:[%s201 + $0x1e88] sm:$0xff]
        %v1262 = vld [vmem:[%s201 + $0x1e90] sm:$0xff]
        %v1263 = vld [vmem:[%s201 + $0x1e98] sm:$0xff]
        %v1264 = vld [vmem:[%s201 + $0x1ea0] sm:$0xff]
        %v1265 = vld [vmem:[%s201 + $0x1ea8] sm:$0xff]
        %v1266 = vld [vmem:[%s201 + $0x1eb0] sm:$0xff]
        %v1267 = vld [vmem:[%s201 + $0x1eb8] sm:$0xff]
        %v1268 = vld [vmem:[%s201 + $0x1ec0] sm:$0xff]
        %v1269 = vld [vmem:[%s201 + $0x1ec8] sm:$0xff]
        %v1270 = vld [vmem:[%s201 + $0x1ed0] sm:$0xff]
        %v1271 = vld [vmem:[%s201 + $0x1ed8] sm:$0xff]
        %v1272 = vld [vmem:[%s201 + $0x1ee0] sm:$0xff]
        %v1273 = vld [vmem:[%s201 + $0x1ee8] sm:$0xff]
        %v1274 = vld [vmem:[%s201 + $0x1ef0] sm:$0xff]
        %v1275 = vld [vmem:[%s201 + $0x1ef8] sm:$0xff]
        %v1276 = vld [vmem:[%s201 + $0x1f00] sm:$0xff]
        %v1277 = vld [vmem:[%s201 + $0x1f08] sm:$0xff]
        %v1278 = vld [vmem:[%s201 + $0x1f10] sm:$0xff]
        %v1279 = vld [vmem:[%s201 + $0x1f18] sm:$0xff]
        %v1280 = vld [vmem:[%s201 + $0x1f20] sm:$0xff]
        %v1281 = vld [vmem:[%s201 + $0x1f28] sm:$0xff]
        %v1282 = vld [vmem:[%s201 + $0x1f30] sm:$0xff]
        %v1283 = vld [vmem:[%s201 + $0x1f38] sm:$0xff]
        %v1284 = vld [vmem:[%s201 + $0x1f40] sm:$0xff]
        %v1285 = vld [vmem:[%s201 + $0x1f48] sm:$0xff]
        %v1286 = vld [vmem:[%s201 + $0x1f50] sm:$0xff]
        %v1287 = vld [vmem:[%s201 + $0x1f58] sm:$0xff]
        %v1288 = vld [vmem:[%s201 + $0x1f60] sm:$0xff]
        %v1289 = vld [vmem:[%s201 + $0x1f68] sm:$0xff]
        %v1290 = vld [vmem:[%s201 + $0x1f70] sm:$0xff]
        %v1291 = vld [vmem:[%s201 + $0x1f78] sm:$0xff]
        %v1292 = vld [vmem:[%s201 + $0x1f80] sm:$0xff]
        %v1293 = vld [vmem:[%s201 + $0x1f88] sm:$0xff]
        %v1294 = vld [vmem:[%s201 + $0x1f90] sm:$0xff]
        %v1295 = vld [vmem:[%s201 + $0x1f98] sm:$0xff]
        %v1296 = vld [vmem:[%s201 + $0x1fa0] sm:$0xff]
        %v1297 = vld [vmem:[%s201 + $0x1fa8] sm:$0xff]
        %v1298 = vld [vmem:[%s201 + $0x1fb0] sm:$0xff]
        %v1299 = vld [vmem:[%s201 + $0x1fb8] sm:$0xff]
        %v1300 = vld [vmem:[%s201 + $0x1fc0] sm:$0xff]
        %v1301 = vld [vmem:[%s201 + $0x1fc8] sm:$0xff]
        %v1302 = vld [vmem:[%s201 + $0x1fd0] sm:$0xff]
        %v1303 = vld [vmem:[%s201 + $0x1fd8] sm:$0xff]
        %v1304 = vld [vmem:[%s201 + $0x1fe0] sm:$0xff]
        %v1305 = vld [vmem:[%s201 + $0x1fe8] sm:$0xff]
        %v1306 = vld [vmem:[%s201 + $0x1ff0] sm:$0xff]
        %v1307 = vld [vmem:[%s201 + $0x1ff8] sm:$0xff]
        %v1308 = vld [vmem:[%s201 + $0x2000] sm:$0xff]
        %v1309 = vld [vmem:[%s201 + $0x2008] sm:$0xff]
        %v1310 = vld [vmem:[%s201 + $0x2010] sm:$0xff]
        %v1311 = vld [vmem:[%s201 + $0x2018] sm:$0xff]
        %v1312 = vld [vmem:[%s201 + $0x2020] sm:$0xff]
        %v1313 = vld [vmem:[%s201 + $0x2028] sm:$0xff]
        %v1314 = vld [vmem:[%s201 + $0x2030] sm:$0xff]
        %v1315 = vld [vmem:[%s201 + $0x2038] sm:$0xff]
        %v1316 = vld [vmem:[%s201 + $0x2040] sm:$0xff]
        %v1317 = vld [vmem:[%s201 + $0x2048] sm:$0xff]
        %v1318 = vld [vmem:[%s201 + $0x2050] sm:$0xff]
        %v1319 = vld [vmem:[%s201 + $0x2058] sm:$0xff]
        %v1320 = vld [vmem:[%s201 + $0x2060] sm:$0xff]
        %v1321 = vld [vmem:[%s201 + $0x2068] sm:$0xff]
        %v1322 = vld [vmem:[%s201 + $0x2070] sm:$0xff]
        %v1323 = vld [vmem:[%s201 + $0x2078] sm:$0xff]
        %v1324 = vld [vmem:[%s201 + $0x2080] sm:$0xff]
        %v1325 = vld [vmem:[%s201 + $0x2088] sm:$0xff]
        %v1326 = vld [vmem:[%s201 + $0x2090] sm:$0xff]
        %v1327 = vld [vmem:[%s201 + $0x2098] sm:$0xff]
        %v1328 = vld [vmem:[%s201 + $0x20a0] sm:$0xff]
        %v1329 = vld [vmem:[%s201 + $0x20a8] sm:$0xff]
        %v1330 = vld [vmem:[%s201 + $0x20b0] sm:$0xff]
        %v1331 = vld [vmem:[%s201 + $0x20b8] sm:$0xff]
        %v1332 = vld [vmem:[%s201 + $0x20c0] sm:$0xff]
        %v1333 = vld [vmem:[%s201 + $0x20c8] sm:$0xff]
        %v1334 = vld [vmem:[%s201 + $0x20d0] sm:$0xff]
        %v1335 = vld [vmem:[%s201 + $0x20d8] sm:$0xff]
        %v1336 = vld [vmem:[%s201 + $0x20e0] sm:$0xff]
        %v1337 = vld [vmem:[%s201 + $0x20e8] sm:$0xff]
        %v1338 = vld [vmem:[%s201 + $0x20f0] sm:$0xff]
        %v1339 = vld [vmem:[%s201 + $0x20f8] sm:$0xff]
        %v1340 = vld [vmem:[%s201 + $0x2100] sm:$0xff]
        %v1341 = vld [vmem:[%s201 + $0x2108] sm:$0xff]
        %v1342 = vld [vmem:[%s201 + $0x2110] sm:$0xff]
        %v1343 = vld [vmem:[%s201 + $0x2118] sm:$0xff]
        %v1344 = vld [vmem:[%s201 + $0x2120] sm:$0xff]
        %v1345 = vld [vmem:[%s201 + $0x2128] sm:$0xff]
        %v1346 = vld [vmem:[%s201 + $0x2130] sm:$0xff]
        %v1347 = vld [vmem:[%s201 + $0x2138] sm:$0xff]
        %v1348 = vld [vmem:[%s201 + $0x2140] sm:$0xff]
        %v1349 = vld [vmem:[%s201 + $0x2148] sm:$0xff]
        %v1350 = vld [vmem:[%s201 + $0x2150] sm:$0xff]
        %v1351 = vld [vmem:[%s201 + $0x2158] sm:$0xff]
        %v1352 = vld [vmem:[%s201 + $0x2160] sm:$0xff]
        %v1353 = vld [vmem:[%s201 + $0x2168] sm:$0xff]
        %v1354 = vld [vmem:[%s201 + $0x2170] sm:$0xff]
        %v1355 = vld [vmem:[%s201 + $0x2178] sm:$0xff]
        %v1356 = vld [vmem:[%s201 + $0x2180] sm:$0xff]
        %v1357 = vld [vmem:[%s201 + $0x2188] sm:$0xff]
        %v1358 = vld [vmem:[%s201 + $0x2190] sm:$0xff]
        %v1359 = vld [vmem:[%s201 + $0x2198] sm:$0xff]
        %v1360 = vld [vmem:[%s201 + $0x21a0] sm:$0xff]
        %v1361 = vld [vmem:[%s201 + $0x21a8] sm:$0xff]
        %v1362 = vld [vmem:[%s201 + $0x21b0] sm:$0xff]
        %v1363 = vld [vmem:[%s201 + $0x21b8] sm:$0xff]
        %v1364 = vld [vmem:[%s201 + $0x21c0] sm:$0xff]
        %v1365 = vld [vmem:[%s201 + $0x21c8] sm:$0xff]
        %v1366 = vld [vmem:[%s201 + $0x21d0] sm:$0xff]
        %v1367 = vld [vmem:[%s201 + $0x21d8] sm:$0xff]
        %v1368 = vld [vmem:[%s201 + $0x21e0] sm:$0xff]
        %v1369 = vld [vmem:[%s201 + $0x21e8] sm:$0xff]
        %v1370 = vld [vmem:[%s201 + $0x21f0] sm:$0xff]
        %v1371 = vld [vmem:[%s201 + $0x21f8] sm:$0xff]
        %v1372 = vld [vmem:[%s201 + $0x2200] sm:$0xff]
        %v1373 = vld [vmem:[%s201 + $0x2208] sm:$0xff]
        %v1374 = vld [vmem:[%s201 + $0x2210] sm:$0xff]
        %v1375 = vld [vmem:[%s201 + $0x2218] sm:$0xff]
        %v1376 = vld [vmem:[%s201 + $0x2220] sm:$0xff]
        %v1377 = vld [vmem:[%s201 + $0x2228] sm:$0xff]
        %v1378 = vld [vmem:[%s201 + $0x2230] sm:$0xff]
        %v1379 = vld [vmem:[%s201 + $0x2238] sm:$0xff]
        %v1380 = vld [vmem:[%s201 + $0x2240] sm:$0xff]
        %v1381 = vld [vmem:[%s201 + $0x2248] sm:$0xff]
        %v1382 = vld [vmem:[%s201 + $0x2250] sm:$0xff]
        %v1383 = vld [vmem:[%s201 + $0x2258] sm:$0xff]
        %v1384 = vld [vmem:[%s201 + $0x2260] sm:$0xff]
        %v1385 = vld [vmem:[%s201 + $0x2268] sm:$0xff]
        %v1386 = vld [vmem:[%s201 + $0x2270] sm:$0xff]
        %v1387 = vld [vmem:[%s201 + $0x2278] sm:$0xff]
        %v1388 = vld [vmem:[%s201 + $0x2280] sm:$0xff]
        %v1389 = vld [vmem:[%s201 + $0x2288] sm:$0xff]
        %v1390 = vld [vmem:[%s201 + $0x2290] sm:$0xff]
        %v1391 = vld [vmem:[%s201 + $0x2298] sm:$0xff]
        %v1392 = vld [vmem:[%s201 + $0x22a0] sm:$0xff]
        %v1393 = vld [vmem:[%s201 + $0x22a8] sm:$0xff]
        %v1394 = vld [vmem:[%s201 + $0x22b0] sm:$0xff]
        %v1395 = vld [vmem:[%s201 + $0x22b8] sm:$0xff]
        %v1396 = vld [vmem:[%s201 + $0x22c0] sm:$0xff]
        %v1397 = vld [vmem:[%s201 + $0x22c8] sm:$0xff]
        %v1398 = vld [vmem:[%s201 + $0x22d0] sm:$0xff]
        %v1399 = vld [vmem:[%s201 + $0x22d8] sm:$0xff]
        %v1400 = vld [vmem:[%s201 + $0x22e0] sm:$0xff]
        %v1401 = vld [vmem:[%s201 + $0x22e8] sm:$0xff]
        %v1402 = vld [vmem:[%s201 + $0x22f0] sm:$0xff]
        %v1403 = vld [vmem:[%s201 + $0x22f8] sm:$0xff]
        %v1404 = vld [vmem:[%s201 + $0x2300] sm:$0xff]
        %v1405 = vld [vmem:[%s201 + $0x2308] sm:$0xff]
        %v1406 = vld [vmem:[%s201 + $0x2310] sm:$0xff]
        %v1407 = vld [vmem:[%s201 + $0x2318] sm:$0xff]
        %v1408 = vld [vmem:[%s201 + $0x2320] sm:$0xff]
        %v1409 = vld [vmem:[%s201 + $0x2328] sm:$0xff]
        %v1410 = vld [vmem:[%s201 + $0x2330] sm:$0xff]
        %v1411 = vld [vmem:[%s201 + $0x2338] sm:$0xff]
        %v1412 = vld [vmem:[%s201 + $0x2340] sm:$0xff]
        %v1413 = vld [vmem:[%s201 + $0x2348] sm:$0xff]
        %v1414 = vld [vmem:[%s201 + $0x2350] sm:$0xff]
        %v1415 = vld [vmem:[%s201 + $0x2358] sm:$0xff]
        %v1416 = vld [vmem:[%s201 + $0x2360] sm:$0xff]
        %v1417 = vld [vmem:[%s201 + $0x2368] sm:$0xff]
        %v1418 = vld [vmem:[%s201 + $0x2370] sm:$0xff]
        %v1419 = vld [vmem:[%s201 + $0x2378] sm:$0xff]
        %v1420 = vld [vmem:[%s201 + $0x2380] sm:$0xff]
        %v1421 = vld [vmem:[%s201 + $0x2388] sm:$0xff]
        %v1422 = vld [vmem:[%s201 + $0x2390] sm:$0xff]
        %v1423 = vld [vmem:[%s201 + $0x2398] sm:$0xff]
        %v1424 = vld [vmem:[%s201 + $0x23a0] sm:$0xff]
        %v1425 = vld [vmem:[%s201 + $0x23a8] sm:$0xff]
        %v1426 = vld [vmem:[%s201 + $0x23b0] sm:$0xff]
        %v1427 = vld [vmem:[%s201 + $0x23b8] sm:$0xff]
        %v1428 = vld [vmem:[%s201 + $0x23c0] sm:$0xff]
        %v1429 = vld [vmem:[%s201 + $0x23c8] sm:$0xff]
        %v1430 = vld [vmem:[%s201 + $0x23d0] sm:$0xff]
        %v1431 = vld [vmem:[%s201 + $0x23d8] sm:$0xff]
        %v1432 = vld [vmem:[%s201 + $0x23e0] sm:$0xff]
        %v1433 = vld [vmem:[%s201 + $0x23e8] sm:$0xff]
        %v1434 = vld [vmem:[%s201 + $0x23f0] sm:$0xff]
        %v1435 = vld [vmem:[%s201 + $0x23f8] sm:$0xff]
        %v1436 = vld [vmem:[%s201 + $0x2400] sm:$0xff]
        %v1437 = vld [vmem:[%s201 + $0x2408] sm:$0xff]
        %v1438 = vld [vmem:[%s201 + $0x2410] sm:$0xff]
        %v1439 = vld [vmem:[%s201 + $0x2418] sm:$0xff]
        %v1440 = vld [vmem:[%s201 + $0x2420] sm:$0xff]
        %v1441 = vld [vmem:[%s201 + $0x2428] sm:$0xff]
        %v1442 = vld [vmem:[%s201 + $0x2430] sm:$0xff]
        %v1443 = vld [vmem:[%s201 + $0x2438] sm:$0xff]
        %v1444 = vld [vmem:[%s201 + $0x2440] sm:$0xff]
        %v1445 = vld [vmem:[%s201 + $0x2448] sm:$0xff]
        %v1446 = vld [vmem:[%s201 + $0x2450] sm:$0xff]
        %v1447 = vld [vmem:[%s201 + $0x2458] sm:$0xff]
        %v1448 = vld [vmem:[%s201 + $0x2460] sm:$0xff]
        %v1449 = vld [vmem:[%s201 + $0x2468] sm:$0xff]
        %v1450 = vld [vmem:[%s201 + $0x2470] sm:$0xff]
        %v1451 = vld [vmem:[%s201 + $0x2478] sm:$0xff]
        %v1452 = vld [vmem:[%s201 + $0x2480] sm:$0xff]
        %v1453 = vld [vmem:[%s201 + $0x2488] sm:$0xff]
        %v1454 = vld [vmem:[%s201 + $0x2490] sm:$0xff]
        %v1455 = vld [vmem:[%s201 + $0x2498] sm:$0xff]
        %v1456 = vld [vmem:[%s201 + $0x24a0] sm:$0xff]
        %v1457 = vld [vmem:[%s201 + $0x24a8] sm:$0xff]
        %v1458 = vld [vmem:[%s201 + $0x24b0] sm:$0xff]
        %v1459 = vld [vmem:[%s201 + $0x24b8] sm:$0xff]
        %v1460 = vld [vmem:[%s201 + $0x24c0] sm:$0xff]
        %v1461 = vld [vmem:[%s201 + $0x24c8] sm:$0xff]
        %v1462 = vld [vmem:[%s201 + $0x24d0] sm:$0xff]
        %v1463 = vld [vmem:[%s201 + $0x24d8] sm:$0xff]
        %v1464 = vld [vmem:[%s201 + $0x24e0] sm:$0xff]
        %v1465 = vld [vmem:[%s201 + $0x24e8] sm:$0xff]
        %v1466 = vld [vmem:[%s201 + $0x24f0] sm:$0xff]
        %v1467 = vld [vmem:[%s201 + $0x24f8] sm:$0xff]
        %v1468 = vld [vmem:[%s201 + $0x2500] sm:$0xff]
        %v1469 = vld [vmem:[%s201 + $0x2508] sm:$0xff]
        %v1470 = vld [vmem:[%s201 + $0x2510] sm:$0xff]
        %v1471 = vld [vmem:[%s201 + $0x2518] sm:$0xff]
        %v1472 = vld [vmem:[%s201 + $0x2520] sm:$0xff]
        %v1473 = vld [vmem:[%s201 + $0x2528] sm:$0xff]
        %v1474 = vld [vmem:[%s201 + $0x2530] sm:$0xff]
        %v1475 = vld [vmem:[%s201 + $0x2538] sm:$0xff]
        %v1476 = vld [vmem:[%s201 + $0x2540] sm:$0xff]
        %v1477 = vld [vmem:[%s201 + $0x2548] sm:$0xff]
        %v1478 = vld [vmem:[%s201 + $0x2550] sm:$0xff]
        %v1479 = vld [vmem:[%s201 + $0x2558] sm:$0xff]
        %v1480 = vld [vmem:[%s201 + $0x2560] sm:$0xff]
        %v1481 = vld [vmem:[%s201 + $0x2568] sm:$0xff]
        %v1482 = vld [vmem:[%s201 + $0x2570] sm:$0xff]
        %v1483 = vld [vmem:[%s201 + $0x2578] sm:$0xff]
        %v1484 = vld [vmem:[%s201 + $0x2580] sm:$0xff]
        %v1485 = vld [vmem:[%s201 + $0x2588] sm:$0xff]
        %v1486 = vld [vmem:[%s201 + $0x2590] sm:$0xff]
        %v1487 = vld [vmem:[%s201 + $0x2598] sm:$0xff]
        %v1488 = vld [vmem:[%s201 + $0x25a0] sm:$0xff]
        %v1489 = vld [vmem:[%s201 + $0x25a8] sm:$0xff]
        %v1490 = vld [vmem:[%s201 + $0x25b0] sm:$0xff]
        %v1491 = vld [vmem:[%s201 + $0x25b8] sm:$0xff]
        %v1492 = vld [vmem:[%s201 + $0x25c0] sm:$0xff]
        %v1493 = vld [vmem:[%s201 + $0x25c8] sm:$0xff]
        %v1494 = vld [vmem:[%s201 + $0x25d0] sm:$0xff]
        %v1495 = vld [vmem:[%s201 + $0x25d8] sm:$0xff]
        %v1496 = vld [vmem:[%s201 + $0x25e0] sm:$0xff]
        %v1497 = vld [vmem:[%s201 + $0x25e8] sm:$0xff]
        %v1498 = vld [vmem:[%s201 + $0x25f0] sm:$0xff]
        %v1499 = vld [vmem:[%s201 + $0x25f8] sm:$0xff]
        %v1500 = vld [vmem:[%s201 + $0x2600] sm:$0xff]
        %v1501 = vld [vmem:[%s201 + $0x2608] sm:$0xff]
        %v1502 = vld [vmem:[%s201 + $0x2610] sm:$0xff]
        %v1503 = vld [vmem:[%s201 + $0x2618] sm:$0xff]
        %v1504 = vld [vmem:[%s201 + $0x2620] sm:$0xff]
        %v1505 = vld [vmem:[%s201 + $0x2628] sm:$0xff]
        %v1506 = vld [vmem:[%s201 + $0x2630] sm:$0xff]
        %v1507 = vld [vmem:[%s201 + $0x2638] sm:$0xff]
        %v1508 = vld [vmem:[%s201 + $0x2640] sm:$0xff]
        %v1509 = vld [vmem:[%s201 + $0x2648] sm:$0xff]
        %v1510 = vld [vmem:[%s201 + $0x2650] sm:$0xff]
        %v1511 = vld [vmem:[%s201 + $0x2658] sm:$0xff]
        %v1512 = vld [vmem:[%s201 + $0x2660] sm:$0xff]
        %v1513 = vld [vmem:[%s201 + $0x2668] sm:$0xff]
        %v1514 = vld [vmem:[%s201 + $0x2670] sm:$0xff]
        %v1515 = vld [vmem:[%s201 + $0x2678] sm:$0xff]
        %v1516 = vld [vmem:[%s201 + $0x2680] sm:$0xff]
        %v1517 = vld [vmem:[%s201 + $0x2688] sm:$0xff]
        %v1518 = vld [vmem:[%s201 + $0x2690] sm:$0xff]
        %v1519 = vld [vmem:[%s201 + $0x2698] sm:$0xff]
        %v1520 = vld [vmem:[%s201 + $0x26a0] sm:$0xff]
        %v1521 = vld [vmem:[%s201 + $0x26a8] sm:$0xff]
        %v1522 = vld [vmem:[%s201 + $0x26b0] sm:$0xff]
        %v1523 = vld [vmem:[%s201 + $0x26b8] sm:$0xff]
        %v1524 = vld [vmem:[%s201 + $0x26c0] sm:$0xff]
        %v1525 = vld [vmem:[%s201 + $0x26c8] sm:$0xff]
        %v1526 = vld [vmem:[%s201 + $0x26d0] sm:$0xff]
        %v1527 = vld [vmem:[%s201 + $0x26d8] sm:$0xff]
        %v1528 = vld [vmem:[%s201 + $0x26e0] sm:$0xff]
        %v1529 = vld [vmem:[%s201 + $0x26e8] sm:$0xff]
        %v1530 = vld [vmem:[%s201 + $0x26f0] sm:$0xff]
        %v1531 = vld [vmem:[%s201 + $0x26f8] sm:$0xff]
        %v1532 = vld [vmem:[%s201 + $0x2700] sm:$0xff]
        %v1533 = vld [vmem:[%s201 + $0x2708] sm:$0xff]
        %v1534 = vld [vmem:[%s201 + $0x2710] sm:$0xff]
        %v1535 = vld [vmem:[%s201 + $0x2718] sm:$0xff]
        %v1536 = vld [vmem:[%s201 + $0x2720] sm:$0xff]
        %v1537 = vld [vmem:[%s201 + $0x2728] sm:$0xff]
        %v1538 = vld [vmem:[%s201 + $0x2730] sm:$0xff]
        %v1539 = vld [vmem:[%s201 + $0x2738] sm:$0xff]
        %v1540 = vld [vmem:[%s201 + $0x2740] sm:$0xff]
        %v1541 = vld [vmem:[%s201 + $0x2748] sm:$0xff]
        %v1542 = vld [vmem:[%s201 + $0x2750] sm:$0xff]
        %v1543 = vld [vmem:[%s201 + $0x2758] sm:$0xff]
        %v1544 = vld [vmem:[%s201 + $0x2760] sm:$0xff]
        %v1545 = vld [vmem:[%s201 + $0x2768] sm:$0xff]
        %v1546 = vld [vmem:[%s201 + $0x2770] sm:$0xff]
        %v1547 = vld [vmem:[%s201 + $0x2778] sm:$0xff]
        %v1548 = vld [vmem:[%s201 + $0x2780] sm:$0xff]
        %v1549 = vld [vmem:[%s201 + $0x2788] sm:$0xff]
        %v1550 = vld [vmem:[%s201 + $0x2790] sm:$0xff]
        %v1551 = vld [vmem:[%s201 + $0x2798] sm:$0xff]
        %v1552 = vld [vmem:[%s201 + $0x27a0] sm:$0xff]
        %v1553 = vld [vmem:[%s201 + $0x27a8] sm:$0xff]
        %v1554 = vld [vmem:[%s201 + $0x27b0] sm:$0xff]
        %v1555 = vld [vmem:[%s201 + $0x27b8] sm:$0xff]
        %v1556 = vld [vmem:[%s201 + $0x27c0] sm:$0xff]
        %v1557 = vld [vmem:[%s201 + $0x27c8] sm:$0xff]
        %v1558 = vld [vmem:[%s201 + $0x27d0] sm:$0xff]
        %v1559 = vld [vmem:[%s201 + $0x27d8] sm:$0xff]
        %v1560 = vld [vmem:[%s201 + $0x27e0] sm:$0xff]
        %v1561 = vld [vmem:[%s201 + $0x27e8] sm:$0xff]
        %v1562 = vld [vmem:[%s201 + $0x27f0] sm:$0xff]
        %v1563 = vld [vmem:[%s201 + $0x27f8] sm:$0xff]
        %1564 = vmatprep.subr.mxu0 %v285
        %1565 = vmatpush1.msra.mxu0 %v284
        %1566 = vmatprep.subr.mxu0 %v295
        %1567 = vmatpush1.msra.mxu0 %v294
        %1568 = vmatprep.subr.mxu0 %v305
        %1569 = vmatpush1.msra.mxu0 %v304
        %1570 = vmatprep.subr.mxu0 %v315
        %1571 = vmatpush1.msra.mxu0 %v314
        %1572 = vmatprep.subr.mxu0 %v325
        %1573 = vmatpush1.msra.mxu0 %v324
        %1574 = vmatprep.subr.mxu0 %v335
        %1575 = vmatpush1.msra.mxu0 %v334
        %1576 = vmatprep.subr.mxu0 %v345
        %1577 = vmatpush1.msra.mxu0 %v344
        %1578 = vmatprep.subr.mxu0 %v355
        %1579 = vmatpush1.msra.mxu0 %v354
        %1580 = vmatprep.subr.mxu0 %v365
        %1581 = vmatpush1.msra.mxu0 %v364
        %1582 = vmatprep.subr.mxu0 %v375
        %1583 = vmatpush1.msra.mxu0 %v374
        %1584 = vmatprep.subr.mxu0 %v385
        %1585 = vmatpush1.msra.mxu0 %v384
        %1586 = vmatprep.subr.mxu0 %v395
        %1587 = vmatpush1.msra.mxu0 %v394
        %1588 = vmatprep.subr.mxu0 %v405
        %1589 = vmatpush1.msra.mxu0 %v404
        %1590 = vmatprep.subr.mxu0 %v415
        %1591 = vmatpush1.msra.mxu0 %v414
        %1592 = vmatprep.subr.mxu0 %v425
        %1593 = vmatpush1.msra.mxu0 %v424
        %1594 = vmatprep.subr.mxu0 %v435
        %1595 = vmatpush1.msra.mxu0 %v434
        %1596 = vmatprep.subr.mxu0 %v445
        %1597 = vmatpush1.msra.mxu0 %v444
        %1598 = vmatprep.subr.mxu0 %v455
        %1599 = vmatpush1.msra.mxu0 %v454
        %1600 = vmatprep.subr.mxu0 %v465
        %1601 = vmatpush1.msra.mxu0 %v464
        %1602 = vmatprep.subr.mxu0 %v475
        %1603 = vmatpush1.msra.mxu0 %v474
        %1604 = vmatprep.subr.mxu0 %v485
        %1605 = vmatpush1.msra.mxu0 %v484
        %1606 = vmatprep.subr.mxu0 %v495
        %1607 = vmatpush1.msra.mxu0 %v494
        %1608 = vmatprep.subr.mxu0 %v505
        %1609 = vmatpush1.msra.mxu0 %v504
        %1610 = vmatprep.subr.mxu0 %v515
        %1611 = vmatpush1.msra.mxu0 %v514
        %1612 = vmatprep.subr.mxu0 %v525
        %1613 = vmatpush1.msra.mxu0 %v524
        %1614 = vmatprep.subr.mxu0 %v535
        %1615 = vmatpush1.msra.mxu0 %v534
        %1616 = vmatprep.subr.mxu0 %v545
        %1617 = vmatpush1.msra.mxu0 %v544
        %1618 = vmatprep.subr.mxu0 %v555
        %1619 = vmatpush1.msra.mxu0 %v554
        %1620 = vmatprep.subr.mxu0 %v565
        %1621 = vmatpush1.msra.mxu0 %v564
        %1622 = vmatprep.subr.mxu0 %v575
        %1623 = vmatpush1.msra.mxu0 %v574
        %1624 = vmatprep.subr.mxu0 %v585
        %1625 = vmatpush1.msra.mxu0 %v584
        %1626 = vmatprep.subr.mxu0 %v595
        %1627 = vmatpush1.msra.mxu0 %v594
        %1628 = vmatprep.mubr.f32.mxu0 %v277
        %1629 = vmatmul.mubr.f32.gmra.mrb[0].mxu0 %v276
        %v1630 = vpop.f32.mrb[0].mxu0
        %v1631 = vadd.f32 0.0, %v1630
        %v1632 = vpop.f32.mrb[0].mxu0
        %v1633 = vadd.f32 0.0, %v1632
        %1634 = vdwg.mxu0
        %1635 = vmatprep.subr.mxu0 %v605
        %1636 = vmatpush1.msra.mxu0 %v604
        %1637 = vmatprep.subr.mxu0 %v615
        %1638 = vmatpush1.msra.mxu0 %v614
        %1639 = vmatprep.subr.mxu0 %v625
        %1640 = vmatpush1.msra.mxu0 %v624
        %1641 = vmatprep.subr.mxu0 %v635
        %1642 = vmatpush1.msra.mxu0 %v634
        %1643 = vmatprep.subr.mxu0 %v645
        %1644 = vmatpush1.msra.mxu0 %v644
        %1645 = vmatprep.subr.mxu0 %v655
        %1646 = vmatpush1.msra.mxu0 %v654
        %1647 = vmatprep.subr.mxu0 %v665
        %1648 = vmatpush1.msra.mxu0 %v664
        %1649 = vmatprep.subr.mxu0 %v675
        %1650 = vmatpush1.msra.mxu0 %v674
        %1651 = vmatprep.subr.mxu0 %v685
        %1652 = vmatpush1.msra.mxu0 %v684
        %1653 = vmatprep.subr.mxu0 %v695
        %1654 = vmatpush1.msra.mxu0 %v694
        %1655 = vmatprep.subr.mxu0 %v705
        %1656 = vmatpush1.msra.mxu0 %v704
        %1657 = vmatprep.subr.mxu0 %v715
        %1658 = vmatpush1.msra.mxu0 %v714
        %1659 = vmatprep.subr.mxu0 %v725
        %1660 = vmatpush1.msra.mxu0 %v724
        %1661 = vmatprep.subr.mxu0 %v735
        %1662 = vmatpush1.msra.mxu0 %v734
        %1663 = vmatprep.subr.mxu0 %v745
        %1664 = vmatpush1.msra.mxu0 %v744
        %1665 = vmatprep.subr.mxu0 %v755
        %1666 = vmatpush1.msra.mxu0 %v754
        %1667 = vmatprep.subr.mxu0 %v765
        %1668 = vmatpush1.msra.mxu0 %v764
        %1669 = vmatprep.subr.mxu0 %v775
        %1670 = vmatpush1.msra.mxu0 %v774
        %1671 = vmatprep.subr.mxu0 %v785
        %1672 = vmatpush1.msra.mxu0 %v784
        %1673 = vmatprep.subr.mxu0 %v795
        %1674 = vmatpush1.msra.mxu0 %v794
        %1675 = vmatprep.subr.mxu0 %v805
        %1676 = vmatpush1.msra.mxu0 %v804
        %1677 = vmatprep.subr.mxu0 %v815
        %1678 = vmatpush1.msra.mxu0 %v814
        %1679 = vmatprep.subr.mxu0 %v825
        %1680 = vmatpush1.msra.mxu0 %v824
        %1681 = vmatprep.subr.mxu0 %v835
        %1682 = vmatpush1.msra.mxu0 %v834
        %1683 = vmatprep.subr.mxu0 %v845
        %1684 = vmatpush1.msra.mxu0 %v844
        %1685 = vmatprep.subr.mxu0 %v855
        %1686 = vmatpush1.msra.mxu0 %v854
        %1687 = vmatprep.subr.mxu0 %v865
        %1688 = vmatpush1.msra.mxu0 %v864
        %1689 = vmatprep.subr.mxu0 %v875
        %1690 = vmatpush1.msra.mxu0 %v874
        %1691 = vmatprep.subr.mxu0 %v885
        %1692 = vmatpush1.msra.mxu0 %v884
        %1693 = vmatprep.subr.mxu0 %v895
        %1694 = vmatpush1.msra.mxu0 %v894
        %1695 = vmatprep.subr.mxu0 %v905
        %1696 = vmatpush1.msra.mxu0 %v904
        %1697 = vmatprep.subr.mxu0 %v915
        %1698 = vmatpush1.msra.mxu0 %v914
        %1699 = vmatprep.mubr.f32.mxu0 %v279
        %1700 = vmatmul.mubr.f32.gmra.mrb[0].mxu0 %v278
        %v1701 = vpop.f32.mrb[0].mxu0
        %v1702 = vadd.f32 %v1631, %v1701
        %v1703 = vpop.f32.mrb[0].mxu0
        %v1704 = vadd.f32 %v1633, %v1703
        %1705 = vdwg.mxu0
        %1706 = vmatprep.subr.mxu0 %v925
        %1707 = vmatpush1.msra.mxu0 %v924
        %1708 = vmatprep.subr.mxu0 %v935
        %1709 = vmatpush1.msra.mxu0 %v934
        %1710 = vmatprep.subr.mxu0 %v945
        %1711 = vmatpush1.msra.mxu0 %v944
        %1712 = vmatprep.subr.mxu0 %v955
        %1713 = vmatpush1.msra.mxu0 %v954
        %1714 = vmatprep.subr.mxu0 %v965
        %1715 = vmatpush1.msra.mxu0 %v964
        %1716 = vmatprep.subr.mxu0 %v975
        %1717 = vmatpush1.msra.mxu0 %v974
        %1718 = vmatprep.subr.mxu0 %v985
        %1719 = vmatpush1.msra.mxu0 %v984
        %1720 = vmatprep.subr.mxu0 %v995
        %1721 = vmatpush1.msra.mxu0 %v994
        %1722 = vmatprep.subr.mxu0 %v1005
        %1723 = vmatpush1.msra.mxu0 %v1004
        %1724 = vmatprep.subr.mxu0 %v1015
        %1725 = vmatpush1.msra.mxu0 %v1014
        %1726 = vmatprep.subr.mxu0 %v1025
        %1727 = vmatpush1.msra.mxu0 %v1024
        %1728 = vmatprep.subr.mxu0 %v1035
        %1729 = vmatpush1.msra.mxu0 %v1034
        %1730 = vmatprep.subr.mxu0 %v1045
        %1731 = vmatpush1.msra.mxu0 %v1044
        %1732 = vmatprep.subr.mxu0 %v1055
        %1733 = vmatpush1.msra.mxu0 %v1054
        %1734 = vmatprep.subr.mxu0 %v1065
        %1735 = vmatpush1.msra.mxu0 %v1064
        %1736 = vmatprep.subr.mxu0 %v1075
        %1737 = vmatpush1.msra.mxu0 %v1074
        %1738 = vmatprep.subr.mxu0 %v1085
        %1739 = vmatpush1.msra.mxu0 %v1084
        %1740 = vmatprep.subr.mxu0 %v1095
        %1741 = vmatpush1.msra.mxu0 %v1094
        %1742 = vmatprep.subr.mxu0 %v1105
        %1743 = vmatpush1.msra.mxu0 %v1104
        %1744 = vmatprep.subr.mxu0 %v1115
        %1745 = vmatpush1.msra.mxu0 %v1114
        %1746 = vmatprep.subr.mxu0 %v1125
        %1747 = vmatpush1.msra.mxu0 %v1124
        %1748 = vmatprep.subr.mxu0 %v1135
        %1749 = vmatpush1.msra.mxu0 %v1134
        %1750 = vmatprep.subr.mxu0 %v1145
        %1751 = vmatpush1.msra.mxu0 %v1144
        %1752 = vmatprep.subr.mxu0 %v1155
        %1753 = vmatpush1.msra.mxu0 %v1154
        %1754 = vmatprep.subr.mxu0 %v1165
        %1755 = vmatpush1.msra.mxu0 %v1164
        %1756 = vmatprep.subr.mxu0 %v1175
        %1757 = vmatpush1.msra.mxu0 %v1174
        %1758 = vmatprep.subr.mxu0 %v1185
        %1759 = vmatpush1.msra.mxu0 %v1184
        %1760 = vmatprep.subr.mxu0 %v1195
        %1761 = vmatpush1.msra.mxu0 %v1194
        %1762 = vmatprep.subr.mxu0 %v1205
        %1763 = vmatpush1.msra.mxu0 %v1204
        %1764 = vmatprep.subr.mxu0 %v1215
        %1765 = vmatpush1.msra.mxu0 %v1214
        %1766 = vmatprep.subr.mxu0 %v1225
        %1767 = vmatpush1.msra.mxu0 %v1224
        %1768 = vmatprep.subr.mxu0 %v1235
        %1769 = vmatpush1.msra.mxu0 %v1234
        %1770 = vmatprep.mubr.f32.mxu0 %v281
        %1771 = vmatmul.mubr.f32.gmra.mrb[0].mxu0 %v280
        %v1772 = vpop.f32.mrb[0].mxu0
        %v1773 = vadd.f32 %v1702, %v1772
        %v1774 = vpop.f32.mrb[0].mxu0
        %v1775 = vadd.f32 %v1704, %v1774
        %1776 = vdwg.mxu0
        %1777 = vmatprep.subr.mxu0 %v1245
        %1778 = vmatpush1.msra.mxu0 %v1244
        %1779 = vmatprep.subr.mxu0 %v1255
        %1780 = vmatpush1.msra.mxu0 %v1254
        %1781 = vmatprep.subr.mxu0 %v1265
        %1782 = vmatpush1.msra.mxu0 %v1264
        %1783 = vmatprep.subr.mxu0 %v1275
        %1784 = vmatpush1.msra.mxu0 %v1274
        %1785 = vmatprep.subr.mxu0 %v1285
        %1786 = vmatpush1.msra.mxu0 %v1284
        %1787 = vmatprep.subr.mxu0 %v1295
        %1788 = vmatpush1.msra.mxu0 %v1294
        %1789 = vmatprep.subr.mxu0 %v1305
        %1790 = vmatpush1.msra.mxu0 %v1304
        %1791 = vmatprep.subr.mxu0 %v1315
        %1792 = vmatpush1.msra.mxu0 %v1314
        %1793 = vmatprep.subr.mxu0 %v1325
        %1794 = vmatpush1.msra.mxu0 %v1324
        %1795 = vmatprep.subr.mxu0 %v1335
        %1796 = vmatpush1.msra.mxu0 %v1334
        %1797 = vmatprep.subr.mxu0 %v1345
        %1798 = vmatpush1.msra.mxu0 %v1344
        %1799 = vmatprep.subr.mxu0 %v1355
        %1800 = vmatpush1.msra.mxu0 %v1354
        %1801 = vmatprep.subr.mxu0 %v1365
        %1802 = vmatpush1.msra.mxu0 %v1364
        %1803 = vmatprep.subr.mxu0 %v1375
        %1804 = vmatpush1.msra.mxu0 %v1374
        %1805 = vmatprep.subr.mxu0 %v1385
        %1806 = vmatpush1.msra.mxu0 %v1384
        %1807 = vmatprep.subr.mxu0 %v1395
        %1808 = vmatpush1.msra.mxu0 %v1394
        %1809 = vmatprep.subr.mxu0 %v1405
        %1810 = vmatpush1.msra.mxu0 %v1404
        %1811 = vmatprep.subr.mxu0 %v1415
        %1812 = vmatpush1.msra.mxu0 %v1414
        %1813 = vmatprep.subr.mxu0 %v1425
        %1814 = vmatpush1.msra.mxu0 %v1424
        %1815 = vmatprep.subr.mxu0 %v1435
        %1816 = vmatpush1.msra.mxu0 %v1434
        %1817 = vmatprep.subr.mxu0 %v1445
        %1818 = vmatpush1.msra.mxu0 %v1444
        %1819 = vmatprep.subr.mxu0 %v1455
        %1820 = vmatpush1.msra.mxu0 %v1454
        %1821 = vmatprep.subr.mxu0 %v1465
        %1822 = vmatpush1.msra.mxu0 %v1464
        %1823 = vmatprep.subr.mxu0 %v1475
        %1824 = vmatpush1.msra.mxu0 %v1474
        %1825 = vmatprep.subr.mxu0 %v1485
        %1826 = vmatpush1.msra.mxu0 %v1484
        %1827 = vmatprep.subr.mxu0 %v1495
        %1828 = vmatpush1.msra.mxu0 %v1494
        %1829 = vmatprep.subr.mxu0 %v1505
        %1830 = vmatpush1.msra.mxu0 %v1504
        %1831 = vmatprep.subr.mxu0 %v1515
        %1832 = vmatpush1.msra.mxu0 %v1514
        %1833 = vmatprep.subr.mxu0 %v1525
        %1834 = vmatpush1.msra.mxu0 %v1524
        %1835 = vmatprep.subr.mxu0 %v1535
        %1836 = vmatpush1.msra.mxu0 %v1534
        %1837 = vmatprep.subr.mxu0 %v1545
        %1838 = vmatpush1.msra.mxu0 %v1544
        %1839 = vmatprep.subr.mxu0 %v1555
        %1840 = vmatpush1.msra.mxu0 %v1554
        %1841 = vmatprep.mubr.f32.mxu0 %v283
        %1842 = vmatmul.mubr.f32.gmra.mrb[0].mxu0 %v282
        %v1843 = vpop.f32.mrb[0].mxu0
        %v1844 = vadd.f32 %v1773, %v1843
        %v1845 = vpop.f32.mrb[0].mxu0
        %v1846 = vadd.f32 %v1775, %v1845
        %1847 = vdwg.mxu0
        %1848 = vmatprep.subr.mxu0 %v287
        %1849 = vmatpush1.msra.mxu0 %v286
        %1850 = vmatprep.subr.mxu0 %v297
        %1851 = vmatpush1.msra.mxu0 %v296
        %1852 = vmatprep.subr.mxu0 %v307
        %1853 = vmatpush1.msra.mxu0 %v306
        %1854 = vmatprep.subr.mxu0 %v317
        %1855 = vmatpush1.msra.mxu0 %v316
        %1856 = vmatprep.subr.mxu0 %v327
        %1857 = vmatpush1.msra.mxu0 %v326
        %1858 = vmatprep.subr.mxu0 %v337
        %1859 = vmatpush1.msra.mxu0 %v336
        %1860 = vmatprep.subr.mxu0 %v347
        %1861 = vmatpush1.msra.mxu0 %v346
        %1862 = vmatprep.subr.mxu0 %v357
        %1863 = vmatpush1.msra.mxu0 %v356
        %1864 = vmatprep.subr.mxu0 %v367
        %1865 = vmatpush1.msra.mxu0 %v366
        %1866 = vmatprep.subr.mxu0 %v377
        %1867 = vmatpush1.msra.mxu0 %v376
        %1868 = vmatprep.subr.mxu0 %v387
        %1869 = vmatpush1.msra.mxu0 %v386
        %1870 = vmatprep.subr.mxu0 %v397
        %1871 = vmatpush1.msra.mxu0 %v396
        %1872 = vmatprep.subr.mxu0 %v407
        %1873 = vmatpush1.msra.mxu0 %v406
        %1874 = vmatprep.subr.mxu0 %v417
        %1875 = vmatpush1.msra.mxu0 %v416
        %1876 = vmatprep.subr.mxu0 %v427
        %1877 = vmatpush1.msra.mxu0 %v426
        %1878 = vmatprep.subr.mxu0 %v437
        %1879 = vmatpush1.msra.mxu0 %v436
        %1880 = vmatprep.subr.mxu0 %v447
        %1881 = vmatpush1.msra.mxu0 %v446
        %1882 = vmatprep.subr.mxu0 %v457
        %1883 = vmatpush1.msra.mxu0 %v456
        %1884 = vmatprep.subr.mxu0 %v467
        %1885 = vmatpush1.msra.mxu0 %v466
        %1886 = vmatprep.subr.mxu0 %v477
        %1887 = vmatpush1.msra.mxu0 %v476
        %1888 = vmatprep.subr.mxu0 %v487
        %1889 = vmatpush1.msra.mxu0 %v486
        %1890 = vmatprep.subr.mxu0 %v497
        %1891 = vmatpush1.msra.mxu0 %v496
        %1892 = vmatprep.subr.mxu0 %v507
        %1893 = vmatpush1.msra.mxu0 %v506
        %1894 = vmatprep.subr.mxu0 %v517
        %1895 = vmatpush1.msra.mxu0 %v516
        %1896 = vmatprep.subr.mxu0 %v527
        %1897 = vmatpush1.msra.mxu0 %v526
        %1898 = vmatprep.subr.mxu0 %v537
        %1899 = vmatpush1.msra.mxu0 %v536
        %1900 = vmatprep.subr.mxu0 %v547
        %1901 = vmatpush1.msra.mxu0 %v546
        %1902 = vmatprep.subr.mxu0 %v557
        %1903 = vmatpush1.msra.mxu0 %v556
        %1904 = vmatprep.subr.mxu0 %v567
        %1905 = vmatpush1.msra.mxu0 %v566
        %1906 = vmatprep.subr.mxu0 %v577
        %1907 = vmatpush1.msra.mxu0 %v576
        %1908 = vmatprep.subr.mxu0 %v587
        %1909 = vmatpush1.msra.mxu0 %v586
        %1910 = vmatprep.subr.mxu0 %v597
        %1911 = vmatpush1.msra.mxu0 %v596
        %1912 = vmatprep.mubr.f32.mxu0 %v277
        %1913 = vmatmul.mubr.f32.gmra.mrb[0].mxu0 %v276
        %v1914 = vpop.f32.mrb[0].mxu0
        %v1915 = vadd.f32 0.0, %v1914
        %v1916 = vpop.f32.mrb[0].mxu0
        %v1917 = vadd.f32 0.0, %v1916
        %1918 = vdwg.mxu0
        %1919 = vmatprep.subr.mxu0 %v607
        %1920 = vmatpush1.msra.mxu0 %v606
        %1921 = vmatprep.subr.mxu0 %v617
        %1922 = vmatpush1.msra.mxu0 %v616
        %1923 = vmatprep.subr.mxu0 %v627
        %1924 = vmatpush1.msra.mxu0 %v626
        %1925 = vmatprep.subr.mxu0 %v637
        %1926 = vmatpush1.msra.mxu0 %v636
        %1927 = vmatprep.subr.mxu0 %v647
        %1928 = vmatpush1.msra.mxu0 %v646
        %1929 = vmatprep.subr.mxu0 %v657
        %1930 = vmatpush1.msra.mxu0 %v656
        %1931 = vmatprep.subr.mxu0 %v667
        %1932 = vmatpush1.msra.mxu0 %v666
        %1933 = vmatprep.subr.mxu0 %v677
        %1934 = vmatpush1.msra.mxu0 %v676
        %1935 = vmatprep.subr.mxu0 %v687
        %1936 = vmatpush1.msra.mxu0 %v686
        %1937 = vmatprep.subr.mxu0 %v697
        %1938 = vmatpush1.msra.mxu0 %v696
        %1939 = vmatprep.subr.mxu0 %v707
        %1940 = vmatpush1.msra.mxu0 %v706
        %1941 = vmatprep.subr.mxu0 %v717
        %1942 = vmatpush1.msra.mxu0 %v716
        %1943 = vmatprep.subr.mxu0 %v727
        %1944 = vmatpush1.msra.mxu0 %v726
        %1945 = vmatprep.subr.mxu0 %v737
        %1946 = vmatpush1.msra.mxu0 %v736
        %1947 = vmatprep.subr.mxu0 %v747
        %1948 = vmatpush1.msra.mxu0 %v746
        %1949 = vmatprep.subr.mxu0 %v757
        %1950 = vmatpush1.msra.mxu0 %v756
        %1951 = vmatprep.subr.mxu0 %v767
        %1952 = vmatpush1.msra.mxu0 %v766
        %1953 = vmatprep.subr.mxu0 %v777
        %1954 = vmatpush1.msra.mxu0 %v776
        %1955 = vmatprep.subr.mxu0 %v787
        %1956 = vmatpush1.msra.mxu0 %v786
        %1957 = vmatprep.subr.mxu0 %v797
        %1958 = vmatpush1.msra.mxu0 %v796
        %1959 = vmatprep.subr.mxu0 %v807
        %1960 = vmatpush1.msra.mxu0 %v806
        %1961 = vmatprep.subr.mxu0 %v817
        %1962 = vmatpush1.msra.mxu0 %v816
        %1963 = vmatprep.subr.mxu0 %v827
        %1964 = vmatpush1.msra.mxu0 %v826
        %1965 = vmatprep.subr.mxu0 %v837
        %1966 = vmatpush1.msra.mxu0 %v836
        %1967 = vmatprep.subr.mxu0 %v847
        %1968 = vmatpush1.msra.mxu0 %v846
        %1969 = vmatprep.subr.mxu0 %v857
        %1970 = vmatpush1.msra.mxu0 %v856
        %1971 = vmatprep.subr.mxu0 %v867
        %1972 = vmatpush1.msra.mxu0 %v866
        %1973 = vmatprep.subr.mxu0 %v877
        %1974 = vmatpush1.msra.mxu0 %v876
        %1975 = vmatprep.subr.mxu0 %v887
        %1976 = vmatpush1.msra.mxu0 %v886
        %1977 = vmatprep.subr.mxu0 %v897
        %1978 = vmatpush1.msra.mxu0 %v896
        %1979 = vmatprep.subr.mxu0 %v907
        %1980 = vmatpush1.msra.mxu0 %v906
        %1981 = vmatprep.subr.mxu0 %v917
        %1982 = vmatpush1.msra.mxu0 %v916
        %1983 = vmatprep.mubr.f32.mxu0 %v279
        %1984 = vmatmul.mubr.f32.gmra.mrb[0].mxu0 %v278
        %v1985 = vpop.f32.mrb[0].mxu0
        %v1986 = vadd.f32 %v1915, %v1985
        %v1987 = vpop.f32.mrb[0].mxu0
        %v1988 = vadd.f32 %v1917, %v1987
        %1989 = vdwg.mxu0
        %1990 = vmatprep.subr.mxu0 %v927
        %1991 = vmatpush1.msra.mxu0 %v926
        %1992 = vmatprep.subr.mxu0 %v937
        %1993 = vmatpush1.msra.mxu0 %v936
        %1994 = vmatprep.subr.mxu0 %v947
        %1995 = vmatpush1.msra.mxu0 %v946
        %1996 = vmatprep.subr.mxu0 %v957
        %1997 = vmatpush1.msra.mxu0 %v956
        %1998 = vmatprep.subr.mxu0 %v967
        %1999 = vmatpush1.msra.mxu0 %v966
        %2000 = vmatprep.subr.mxu0 %v977
        %2001 = vmatpush1.msra.mxu0 %v976
        %2002 = vmatprep.subr.mxu0 %v987
        %2003 = vmatpush1.msra.mxu0 %v986
        %2004 = vmatprep.subr.mxu0 %v997
        %2005 = vmatpush1.msra.mxu0 %v996
        %2006 = vmatprep.subr.mxu0 %v1007
        %2007 = vmatpush1.msra.mxu0 %v1006
        %2008 = vmatprep.subr.mxu0 %v1017
        %2009 = vmatpush1.msra.mxu0 %v1016
        %2010 = vmatprep.subr.mxu0 %v1027
        %2011 = vmatpush1.msra.mxu0 %v1026
        %2012 = vmatprep.subr.mxu0 %v1037
        %2013 = vmatpush1.msra.mxu0 %v1036
        %2014 = vmatprep.subr.mxu0 %v1047
        %2015 = vmatpush1.msra.mxu0 %v1046
        %2016 = vmatprep.subr.mxu0 %v1057
        %2017 = vmatpush1.msra.mxu0 %v1056
        %2018 = vmatprep.subr.mxu0 %v1067
        %2019 = vmatpush1.msra.mxu0 %v1066
        %2020 = vmatprep.subr.mxu0 %v1077
        %2021 = vmatpush1.msra.mxu0 %v1076
        %2022 = vmatprep.subr.mxu0 %v1087
        %2023 = vmatpush1.msra.mxu0 %v1086
        %2024 = vmatprep.subr.mxu0 %v1097
        %2025 = vmatpush1.msra.mxu0 %v1096
        %2026 = vmatprep.subr.mxu0 %v1107
        %2027 = vmatpush1.msra.mxu0 %v1106
        %2028 = vmatprep.subr.mxu0 %v1117
        %2029 = vmatpush1.msra.mxu0 %v1116
        %2030 = vmatprep.subr.mxu0 %v1127
        %2031 = vmatpush1.msra.mxu0 %v1126
        %2032 = vmatprep.subr.mxu0 %v1137
        %2033 = vmatpush1.msra.mxu0 %v1136
        %2034 = vmatprep.subr.mxu0 %v1147
        %2035 = vmatpush1.msra.mxu0 %v1146
        %2036 = vmatprep.subr.mxu0 %v1157
        %2037 = vmatpush1.msra.mxu0 %v1156
        %2038 = vmatprep.subr.mxu0 %v1167
        %2039 = vmatpush1.msra.mxu0 %v1166
        %2040 = vmatprep.subr.mxu0 %v1177
        %2041 = vmatpush1.msra.mxu0 %v1176
        %2042 = vmatprep.subr.mxu0 %v1187
        %2043 = vmatpush1.msra.mxu0 %v1186
        %2044 = vmatprep.subr.mxu0 %v1197
        %2045 = vmatpush1.msra.mxu0 %v1196
        %2046 = vmatprep.subr.mxu0 %v1207
        %2047 = vmatpush1.msra.mxu0 %v1206
        %2048 = vmatprep.subr.mxu0 %v1217
        %2049 = vmatpush1.msra.mxu0 %v1216
        %2050 = vmatprep.subr.mxu0 %v1227
        %2051 = vmatpush1.msra.mxu0 %v1226
        %2052 = vmatprep.subr.mxu0 %v1237
        %2053 = vmatpush1.msra.mxu0 %v1236
        %2054 = vmatprep.mubr.f32.mxu0 %v281
        %2055 = vmatmul.mubr.f32.gmra.mrb[0].mxu0 %v280
        %v2056 = vpop.f32.mrb[0].mxu0
        %v2057 = vadd.f32 %v1986, %v2056
        %v2058 = vpop.f32.mrb[0].mxu0
        %v2059 = vadd.f32 %v1988, %v2058
        %2060 = vdwg.mxu0
        %2061 = vmatprep.subr.mxu0 %v1247
        %2062 = vmatpush1.msra.mxu0 %v1246
        %2063 = vmatprep.subr.mxu0 %v1257
        %2064 = vmatpush1.msra.mxu0 %v1256
        %2065 = vmatprep.subr.mxu0 %v1267
        %2066 = vmatpush1.msra.mxu0 %v1266
        %2067 = vmatprep.subr.mxu0 %v1277
        %2068 = vmatpush1.msra.mxu0 %v1276
        %2069 = vmatprep.subr.mxu0 %v1287
        %2070 = vmatpush1.msra.mxu0 %v1286
        %2071 = vmatprep.subr.mxu0 %v1297
        %2072 = vmatpush1.msra.mxu0 %v1296
        %2073 = vmatprep.subr.mxu0 %v1307
        %2074 = vmatpush1.msra.mxu0 %v1306
        %2075 = vmatprep.subr.mxu0 %v1317
        %2076 = vmatpush1.msra.mxu0 %v1316
        %2077 = vmatprep.subr.mxu0 %v1327
        %2078 = vmatpush1.msra.mxu0 %v1326
        %2079 = vmatprep.subr.mxu0 %v1337
        %2080 = vmatpush1.msra.mxu0 %v1336
        %2081 = vmatprep.subr.mxu0 %v1347
        %2082 = vmatpush1.msra.mxu0 %v1346
        %2083 = vmatprep.subr.mxu0 %v1357
        %2084 = vmatpush1.msra.mxu0 %v1356
        %2085 = vmatprep.subr.mxu0 %v1367
        %2086 = vmatpush1.msra.mxu0 %v1366
        %2087 = vmatprep.subr.mxu0 %v1377
        %2088 = vmatpush1.msra.mxu0 %v1376
        %2089 = vmatprep.subr.mxu0 %v1387
        %2090 = vmatpush1.msra.mxu0 %v1386
        %2091 = vmatprep.subr.mxu0 %v1397
        %2092 = vmatpush1.msra.mxu0 %v1396
        %2093 = vmatprep.subr.mxu0 %v1407
        %2094 = vmatpush1.msra.mxu0 %v1406
        %2095 = vmatprep.subr.mxu0 %v1417
        %2096 = vmatpush1.msra.mxu0 %v1416
        %2097 = vmatprep.subr.mxu0 %v1427
        %2098 = vmatpush1.msra.mxu0 %v1426
        %2099 = vmatprep.subr.mxu0 %v1437
        %2100 = vmatpush1.msra.mxu0 %v1436
        %2101 = vmatprep.subr.mxu0 %v1447
        %2102 = vmatpush1.msra.mxu0 %v1446
        %2103 = vmatprep.subr.mxu0 %v1457
        %2104 = vmatpush1.msra.mxu0 %v1456
        %2105 = vmatprep.subr.mxu0 %v1467
        %2106 = vmatpush1.msra.mxu0 %v1466
        %2107 = vmatprep.subr.mxu0 %v1477
        %2108 = vmatpush1.msra.mxu0 %v1476
        %2109 = vmatprep.subr.mxu0 %v1487
        %2110 = vmatpush1.msra.mxu0 %v1486
        %2111 = vmatprep.subr.mxu0 %v1497
        %2112 = vmatpush1.msra.mxu0 %v1496
        %2113 = vmatprep.subr.mxu0 %v1507
        %2114 = vmatpush1.msra.mxu0 %v1506
        %2115 = vmatprep.subr.mxu0 %v1517
        %2116 = vmatpush1.msra.mxu0 %v1516
        %2117 = vmatprep.subr.mxu0 %v1527
        %2118 = vmatpush1.msra.mxu0 %v1526
        %2119 = vmatprep.subr.mxu0 %v1537
        %2120 = vmatpush1.msra.mxu0 %v1536
        %2121 = vmatprep.subr.mxu0 %v1547
        %2122 = vmatpush1.msra.mxu0 %v1546
        %2123 = vmatprep.subr.mxu0 %v1557
        %2124 = vmatpush1.msra.mxu0 %v1556
        %2125 = vmatprep.mubr.f32.mxu0 %v283
        %2126 = vmatmul.mubr.f32.gmra.mrb[0].mxu0 %v282
        %v2127 = vpop.f32.mrb[0].mxu0
        %v2128 = vadd.f32 %v2057, %v2127
        %v2129 = vpop.f32.mrb[0].mxu0
        %v2130 = vadd.f32 %v2059, %v2129
        %2131 = vdwg.mxu0
        %2132 = vmatprep.subr.mxu0 %v289
        %2133 = vmatpush1.msra.mxu0 %v288
        %2134 = vmatprep.subr.mxu0 %v299
        %2135 = vmatpush1.msra.mxu0 %v298
        %2136 = vmatprep.subr.mxu0 %v309
        %2137 = vmatpush1.msra.mxu0 %v308
        %2138 = vmatprep.subr.mxu0 %v319
        %2139 = vmatpush1.msra.mxu0 %v318
        %2140 = vmatprep.subr.mxu0 %v329
        %2141 = vmatpush1.msra.mxu0 %v328
        %2142 = vmatprep.subr.mxu0 %v339
        %2143 = vmatpush1.msra.mxu0 %v338
        %2144 = vmatprep.subr.mxu0 %v349
        %2145 = vmatpush1.msra.mxu0 %v348
        %2146 = vmatprep.subr.mxu0 %v359
        %2147 = vmatpush1.msra.mxu0 %v358
        %2148 = vmatprep.subr.mxu0 %v369
        %2149 = vmatpush1.msra.mxu0 %v368
        %2150 = vmatprep.subr.mxu0 %v379
        %2151 = vmatpush1.msra.mxu0 %v378
        %2152 = vmatprep.subr.mxu0 %v389
        %2153 = vmatpush1.msra.mxu0 %v388
        %2154 = vmatprep.subr.mxu0 %v399
        %2155 = vmatpush1.msra.mxu0 %v398
        %2156 = vmatprep.subr.mxu0 %v409
        %2157 = vmatpush1.msra.mxu0 %v408
        %2158 = vmatprep.subr.mxu0 %v419
        %2159 = vmatpush1.msra.mxu0 %v418
        %2160 = vmatprep.subr.mxu0 %v429
        %2161 = vmatpush1.msra.mxu0 %v428
        %2162 = vmatprep.subr.mxu0 %v439
        %2163 = vmatpush1.msra.mxu0 %v438
        %2164 = vmatprep.subr.mxu0 %v449
        %2165 = vmatpush1.msra.mxu0 %v448
        %2166 = vmatprep.subr.mxu0 %v459
        %2167 = vmatpush1.msra.mxu0 %v458
        %2168 = vmatprep.subr.mxu0 %v469
        %2169 = vmatpush1.msra.mxu0 %v468
        %2170 = vmatprep.subr.mxu0 %v479
        %2171 = vmatpush1.msra.mxu0 %v478
        %2172 = vmatprep.subr.mxu0 %v489
        %2173 = vmatpush1.msra.mxu0 %v488
        %2174 = vmatprep.subr.mxu0 %v499
        %2175 = vmatpush1.msra.mxu0 %v498
        %2176 = vmatprep.subr.mxu0 %v509
        %2177 = vmatpush1.msra.mxu0 %v508
        %2178 = vmatprep.subr.mxu0 %v519
        %2179 = vmatpush1.msra.mxu0 %v518
        %2180 = vmatprep.subr.mxu0 %v529
        %2181 = vmatpush1.msra.mxu0 %v528
        %2182 = vmatprep.subr.mxu0 %v539
        %2183 = vmatpush1.msra.mxu0 %v538
        %2184 = vmatprep.subr.mxu0 %v549
        %2185 = vmatpush1.msra.mxu0 %v548
        %2186 = vmatprep.subr.mxu0 %v559
        %2187 = vmatpush1.msra.mxu0 %v558
        %2188 = vmatprep.subr.mxu0 %v569
        %2189 = vmatpush1.msra.mxu0 %v568
        %2190 = vmatprep.subr.mxu0 %v579
        %2191 = vmatpush1.msra.mxu0 %v578
        %2192 = vmatprep.subr.mxu0 %v589
        %2193 = vmatpush1.msra.mxu0 %v588
        %2194 = vmatprep.subr.mxu0 %v599
        %2195 = vmatpush1.msra.mxu0 %v598
        %2196 = vmatprep.mubr.f32.mxu0 %v277
        %2197 = vmatmul.mubr.f32.gmra.mrb[0].mxu0 %v276
        %v2198 = vpop.f32.mrb[0].mxu0
        %v2199 = vadd.f32 0.0, %v2198
        %v2200 = vpop.f32.mrb[0].mxu0
        %v2201 = vadd.f32 0.0, %v2200
        %2202 = vdwg.mxu0
        %2203 = vmatprep.subr.mxu0 %v609
        %2204 = vmatpush1.msra.mxu0 %v608
        %2205 = vmatprep.subr.mxu0 %v619
        %2206 = vmatpush1.msra.mxu0 %v618
        %2207 = vmatprep.subr.mxu0 %v629
        %2208 = vmatpush1.msra.mxu0 %v628
        %2209 = vmatprep.subr.mxu0 %v639
        %2210 = vmatpush1.msra.mxu0 %v638
        %2211 = vmatprep.subr.mxu0 %v649
        %2212 = vmatpush1.msra.mxu0 %v648
        %2213 = vmatprep.subr.mxu0 %v659
        %2214 = vmatpush1.msra.mxu0 %v658
        %2215 = vmatprep.subr.mxu0 %v669
        %2216 = vmatpush1.msra.mxu0 %v668
        %2217 = vmatprep.subr.mxu0 %v679
        %2218 = vmatpush1.msra.mxu0 %v678
        %2219 = vmatprep.subr.mxu0 %v689
        %2220 = vmatpush1.msra.mxu0 %v688
        %2221 = vmatprep.subr.mxu0 %v699
        %2222 = vmatpush1.msra.mxu0 %v698
        %2223 = vmatprep.subr.mxu0 %v709
        %2224 = vmatpush1.msra.mxu0 %v708
        %2225 = vmatprep.subr.mxu0 %v719
        %2226 = vmatpush1.msra.mxu0 %v718
        %2227 = vmatprep.subr.mxu0 %v729
        %2228 = vmatpush1.msra.mxu0 %v728
        %2229 = vmatprep.subr.mxu0 %v739
        %2230 = vmatpush1.msra.mxu0 %v738
        %2231 = vmatprep.subr.mxu0 %v749
        %2232 = vmatpush1.msra.mxu0 %v748
        %2233 = vmatprep.subr.mxu0 %v759
        %2234 = vmatpush1.msra.mxu0 %v758
        %2235 = vmatprep.subr.mxu0 %v769
        %2236 = vmatpush1.msra.mxu0 %v768
        %2237 = vmatprep.subr.mxu0 %v779
        %2238 = vmatpush1.msra.mxu0 %v778
        %2239 = vmatprep.subr.mxu0 %v789
        %2240 = vmatpush1.msra.mxu0 %v788
        %2241 = vmatprep.subr.mxu0 %v799
        %2242 = vmatpush1.msra.mxu0 %v798
        %2243 = vmatprep.subr.mxu0 %v809
        %2244 = vmatpush1.msra.mxu0 %v808
        %2245 = vmatprep.subr.mxu0 %v819
        %2246 = vmatpush1.msra.mxu0 %v818
        %2247 = vmatprep.subr.mxu0 %v829
        %2248 = vmatpush1.msra.mxu0 %v828
        %2249 = vmatprep.subr.mxu0 %v839
        %2250 = vmatpush1.msra.mxu0 %v838
        %2251 = vmatprep.subr.mxu0 %v849
        %2252 = vmatpush1.msra.mxu0 %v848
        %2253 = vmatprep.subr.mxu0 %v859
        %2254 = vmatpush1.msra.mxu0 %v858
        %2255 = vmatprep.subr.mxu0 %v869
        %2256 = vmatpush1.msra.mxu0 %v868
        %2257 = vmatprep.subr.mxu0 %v879
        %2258 = vmatpush1.msra.mxu0 %v878
        %2259 = vmatprep.subr.mxu0 %v889
        %2260 = vmatpush1.msra.mxu0 %v888
        %2261 = vmatprep.subr.mxu0 %v899
        %2262 = vmatpush1.msra.mxu0 %v898
        %2263 = vmatprep.subr.mxu0 %v909
        %2264 = vmatpush1.msra.mxu0 %v908
        %2265 = vmatprep.subr.mxu0 %v919
        %2266 = vmatpush1.msra.mxu0 %v918
        %2267 = vmatprep.mubr.f32.mxu0 %v279
        %2268 = vmatmul.mubr.f32.gmra.mrb[0].mxu0 %v278
        %v2269 = vpop.f32.mrb[0].mxu0
        %v2270 = vadd.f32 %v2199, %v2269
        %v2271 = vpop.f32.mrb[0].mxu0
        %v2272 = vadd.f32 %v2201, %v2271
        %2273 = vdwg.mxu0
        %2274 = vmatprep.subr.mxu0 %v929
        %2275 = vmatpush1.msra.mxu0 %v928
        %2276 = vmatprep.subr.mxu0 %v939
        %2277 = vmatpush1.msra.mxu0 %v938
        %2278 = vmatprep.subr.mxu0 %v949
        %2279 = vmatpush1.msra.mxu0 %v948
        %2280 = vmatprep.subr.mxu0 %v959
        %2281 = vmatpush1.msra.mxu0 %v958
        %2282 = vmatprep.subr.mxu0 %v969
        %2283 = vmatpush1.msra.mxu0 %v968
        %2284 = vmatprep.subr.mxu0 %v979
        %2285 = vmatpush1.msra.mxu0 %v978
        %2286 = vmatprep.subr.mxu0 %v989
        %2287 = vmatpush1.msra.mxu0 %v988
        %2288 = vmatprep.subr.mxu0 %v999
        %2289 = vmatpush1.msra.mxu0 %v998
        %2290 = vmatprep.subr.mxu0 %v1009
        %2291 = vmatpush1.msra.mxu0 %v1008
        %2292 = vmatprep.subr.mxu0 %v1019
        %2293 = vmatpush1.msra.mxu0 %v1018
        %2294 = vmatprep.subr.mxu0 %v1029
        %2295 = vmatpush1.msra.mxu0 %v1028
        %2296 = vmatprep.subr.mxu0 %v1039
        %2297 = vmatpush1.msra.mxu0 %v1038
        %2298 = vmatprep.subr.mxu0 %v1049
        %2299 = vmatpush1.msra.mxu0 %v1048
        %2300 = vmatprep.subr.mxu0 %v1059
        %2301 = vmatpush1.msra.mxu0 %v1058
        %2302 = vmatprep.subr.mxu0 %v1069
        %2303 = vmatpush1.msra.mxu0 %v1068
        %2304 = vmatprep.subr.mxu0 %v1079
        %2305 = vmatpush1.msra.mxu0 %v1078
        %2306 = vmatprep.subr.mxu0 %v1089
        %2307 = vmatpush1.msra.mxu0 %v1088
        %2308 = vmatprep.subr.mxu0 %v1099
        %2309 = vmatpush1.msra.mxu0 %v1098
        %2310 = vmatprep.subr.mxu0 %v1109
        %2311 = vmatpush1.msra.mxu0 %v1108
        %2312 = vmatprep.subr.mxu0 %v1119
        %2313 = vmatpush1.msra.mxu0 %v1118
        %2314 = vmatprep.subr.mxu0 %v1129
        %2315 = vmatpush1.msra.mxu0 %v1128
        %2316 = vmatprep.subr.mxu0 %v1139
        %2317 = vmatpush1.msra.mxu0 %v1138
        %2318 = vmatprep.subr.mxu0 %v1149
        %2319 = vmatpush1.msra.mxu0 %v1148
        %2320 = vmatprep.subr.mxu0 %v1159
        %2321 = vmatpush1.msra.mxu0 %v1158
        %2322 = vmatprep.subr.mxu0 %v1169
        %2323 = vmatpush1.msra.mxu0 %v1168
        %2324 = vmatprep.subr.mxu0 %v1179
        %2325 = vmatpush1.msra.mxu0 %v1178
        %2326 = vmatprep.subr.mxu0 %v1189
        %2327 = vmatpush1.msra.mxu0 %v1188
        %2328 = vmatprep.subr.mxu0 %v1199
        %2329 = vmatpush1.msra.mxu0 %v1198
        %2330 = vmatprep.subr.mxu0 %v1209
        %2331 = vmatpush1.msra.mxu0 %v1208
        %2332 = vmatprep.subr.mxu0 %v1219
        %2333 = vmatpush1.msra.mxu0 %v1218
        %2334 = vmatprep.subr.mxu0 %v1229
        %2335 = vmatpush1.msra.mxu0 %v1228
        %2336 = vmatprep.subr.mxu0 %v1239
        %2337 = vmatpush1.msra.mxu0 %v1238
        %2338 = vmatprep.mubr.f32.mxu0 %v281
        %2339 = vmatmul.mubr.f32.gmra.mrb[0].mxu0 %v280
        %v2340 = vpop.f32.mrb[0].mxu0
        %v2341 = vadd.f32 %v2270, %v2340
        %v2342 = vpop.f32.mrb[0].mxu0
        %v2343 = vadd.f32 %v2272, %v2342
        %2344 = vdwg.mxu0
        %2345 = vmatprep.subr.mxu0 %v1249
        %2346 = vmatpush1.msra.mxu0 %v1248
        %2347 = vmatprep.subr.mxu0 %v1259
        %2348 = vmatpush1.msra.mxu0 %v1258
        %2349 = vmatprep.subr.mxu0 %v1269
        %2350 = vmatpush1.msra.mxu0 %v1268
        %2351 = vmatprep.subr.mxu0 %v1279
        %2352 = vmatpush1.msra.mxu0 %v1278
        %2353 = vmatprep.subr.mxu0 %v1289
        %2354 = vmatpush1.msra.mxu0 %v1288
        %2355 = vmatprep.subr.mxu0 %v1299
        %2356 = vmatpush1.msra.mxu0 %v1298
        %2357 = vmatprep.subr.mxu0 %v1309
        %2358 = vmatpush1.msra.mxu0 %v1308
        %2359 = vmatprep.subr.mxu0 %v1319
        %2360 = vmatpush1.msra.mxu0 %v1318
        %2361 = vmatprep.subr.mxu0 %v1329
        %2362 = vmatpush1.msra.mxu0 %v1328
        %2363 = vmatprep.subr.mxu0 %v1339
        %2364 = vmatpush1.msra.mxu0 %v1338
        %2365 = vmatprep.subr.mxu0 %v1349
        %2366 = vmatpush1.msra.mxu0 %v1348
        %2367 = vmatprep.subr.mxu0 %v1359
        %2368 = vmatpush1.msra.mxu0 %v1358
        %2369 = vmatprep.subr.mxu0 %v1369
        %2370 = vmatpush1.msra.mxu0 %v1368
        %2371 = vmatprep.subr.mxu0 %v1379
        %2372 = vmatpush1.msra.mxu0 %v1378
        %2373 = vmatprep.subr.mxu0 %v1389
        %2374 = vmatpush1.msra.mxu0 %v1388
        %2375 = vmatprep.subr.mxu0 %v1399
        %2376 = vmatpush1.msra.mxu0 %v1398
        %2377 = vmatprep.subr.mxu0 %v1409
        %2378 = vmatpush1.msra.mxu0 %v1408
        %2379 = vmatprep.subr.mxu0 %v1419
        %2380 = vmatpush1.msra.mxu0 %v1418
        %2381 = vmatprep.subr.mxu0 %v1429
        %2382 = vmatpush1.msra.mxu0 %v1428
        %2383 = vmatprep.subr.mxu0 %v1439
        %2384 = vmatpush1.msra.mxu0 %v1438
        %2385 = vmatprep.subr.mxu0 %v1449
        %2386 = vmatpush1.msra.mxu0 %v1448
        %2387 = vmatprep.subr.mxu0 %v1459
        %2388 = vmatpush1.msra.mxu0 %v1458
        %2389 = vmatprep.subr.mxu0 %v1469
        %2390 = vmatpush1.msra.mxu0 %v1468
        %2391 = vmatprep.subr.mxu0 %v1479
        %2392 = vmatpush1.msra.mxu0 %v1478
        %2393 = vmatprep.subr.mxu0 %v1489
        %2394 = vmatpush1.msra.mxu0 %v1488
        %2395 = vmatprep.subr.mxu0 %v1499
        %2396 = vmatpush1.msra.mxu0 %v1498
        %2397 = vmatprep.subr.mxu0 %v1509
        %2398 = vmatpush1.msra.mxu0 %v1508
        %2399 = vmatprep.subr.mxu0 %v1519
        %2400 = vmatpush1.msra.mxu0 %v1518
        %2401 = vmatprep.subr.mxu0 %v1529
        %2402 = vmatpush1.msra.mxu0 %v1528
        %2403 = vmatprep.subr.mxu0 %v1539
        %2404 = vmatpush1.msra.mxu0 %v1538
        %2405 = vmatprep.subr.mxu0 %v1549
        %2406 = vmatpush1.msra.mxu0 %v1548
        %2407 = vmatprep.subr.mxu0 %v1559
        %2408 = vmatpush1.msra.mxu0 %v1558
        %2409 = vmatprep.mubr.f32.mxu0 %v283
        %2410 = vmatmul.mubr.f32.gmra.mrb[0].mxu0 %v282
        %v2411 = vpop.f32.mrb[0].mxu0
        %v2412 = vadd.f32 %v2341, %v2411
        %v2413 = vpop.f32.mrb[0].mxu0
        %v2414 = vadd.f32 %v2343, %v2413
        %2415 = vdwg.mxu0
        %2416 = vmatprep.subr.mxu0 %v291
        %2417 = vmatpush1.msra.mxu0 %v290
        %2418 = vmatprep.subr.mxu0 %v301
        %2419 = vmatpush1.msra.mxu0 %v300
        %2420 = vmatprep.subr.mxu0 %v311
        %2421 = vmatpush1.msra.mxu0 %v310
        %2422 = vmatprep.subr.mxu0 %v321
        %2423 = vmatpush1.msra.mxu0 %v320
        %2424 = vmatprep.subr.mxu0 %v331
        %2425 = vmatpush1.msra.mxu0 %v330
        %2426 = vmatprep.subr.mxu0 %v341
        %2427 = vmatpush1.msra.mxu0 %v340
        %2428 = vmatprep.subr.mxu0 %v351
        %2429 = vmatpush1.msra.mxu0 %v350
        %2430 = vmatprep.subr.mxu0 %v361
        %2431 = vmatpush1.msra.mxu0 %v360
        %2432 = vmatprep.subr.mxu0 %v371
        %2433 = vmatpush1.msra.mxu0 %v370
        %2434 = vmatprep.subr.mxu0 %v381
        %2435 = vmatpush1.msra.mxu0 %v380
        %2436 = vmatprep.subr.mxu0 %v391
        %2437 = vmatpush1.msra.mxu0 %v390
        %2438 = vmatprep.subr.mxu0 %v401
        %2439 = vmatpush1.msra.mxu0 %v400
        %2440 = vmatprep.subr.mxu0 %v411
        %2441 = vmatpush1.msra.mxu0 %v410
        %2442 = vmatprep.subr.mxu0 %v421
        %2443 = vmatpush1.msra.mxu0 %v420
        %2444 = vmatprep.subr.mxu0 %v431
        %2445 = vmatpush1.msra.mxu0 %v430
        %2446 = vmatprep.subr.mxu0 %v441
        %2447 = vmatpush1.msra.mxu0 %v440
        %2448 = vmatprep.subr.mxu0 %v451
        %2449 = vmatpush1.msra.mxu0 %v450
        %2450 = vmatprep.subr.mxu0 %v461
        %2451 = vmatpush1.msra.mxu0 %v460
        %2452 = vmatprep.subr.mxu0 %v471
        %2453 = vmatpush1.msra.mxu0 %v470
        %2454 = vmatprep.subr.mxu0 %v481
        %2455 = vmatpush1.msra.mxu0 %v480
        %2456 = vmatprep.subr.mxu0 %v491
        %2457 = vmatpush1.msra.mxu0 %v490
        %2458 = vmatprep.subr.mxu0 %v501
        %2459 = vmatpush1.msra.mxu0 %v500
        %2460 = vmatprep.subr.mxu0 %v511
        %2461 = vmatpush1.msra.mxu0 %v510
        %2462 = vmatprep.subr.mxu0 %v521
        %2463 = vmatpush1.msra.mxu0 %v520
        %2464 = vmatprep.subr.mxu0 %v531
        %2465 = vmatpush1.msra.mxu0 %v530
        %2466 = vmatprep.subr.mxu0 %v541
        %2467 = vmatpush1.msra.mxu0 %v540
        %2468 = vmatprep.subr.mxu0 %v551
        %2469 = vmatpush1.msra.mxu0 %v550
        %2470 = vmatprep.subr.mxu0 %v561
        %2471 = vmatpush1.msra.mxu0 %v560
        %2472 = vmatprep.subr.mxu0 %v571
        %2473 = vmatpush1.msra.mxu0 %v570
        %2474 = vmatprep.subr.mxu0 %v581
        %2475 = vmatpush1.msra.mxu0 %v580
        %2476 = vmatprep.subr.mxu0 %v591
        %2477 = vmatpush1.msra.mxu0 %v590
        %2478 = vmatprep.subr.mxu0 %v601
        %2479 = vmatpush1.msra.mxu0 %v600
        %2480 = vmatprep.mubr.f32.mxu0 %v277
        %2481 = vmatmul.mubr.f32.gmra.mrb[0].mxu0 %v276
        %v2482 = vpop.f32.mrb[0].mxu0
        %v2483 = vadd.f32 0.0, %v2482
        %v2484 = vpop.f32.mrb[0].mxu0
        %v2485 = vadd.f32 0.0, %v2484
        %2486 = vdwg.mxu0
        %2487 = vmatprep.subr.mxu0 %v611
        %2488 = vmatpush1.msra.mxu0 %v610
        %2489 = vmatprep.subr.mxu0 %v621
        %2490 = vmatpush1.msra.mxu0 %v620
        %2491 = vmatprep.subr.mxu0 %v631
        %2492 = vmatpush1.msra.mxu0 %v630
        %2493 = vmatprep.subr.mxu0 %v641
        %2494 = vmatpush1.msra.mxu0 %v640
        %2495 = vmatprep.subr.mxu0 %v651
        %2496 = vmatpush1.msra.mxu0 %v650
        %2497 = vmatprep.subr.mxu0 %v661
        %2498 = vmatpush1.msra.mxu0 %v660
        %2499 = vmatprep.subr.mxu0 %v671
        %2500 = vmatpush1.msra.mxu0 %v670
        %2501 = vmatprep.subr.mxu0 %v681
        %2502 = vmatpush1.msra.mxu0 %v680
        %2503 = vmatprep.subr.mxu0 %v691
        %2504 = vmatpush1.msra.mxu0 %v690
        %2505 = vmatprep.subr.mxu0 %v701
        %2506 = vmatpush1.msra.mxu0 %v700
        %2507 = vmatprep.subr.mxu0 %v711
        %2508 = vmatpush1.msra.mxu0 %v710
        %2509 = vmatprep.subr.mxu0 %v721
        %2510 = vmatpush1.msra.mxu0 %v720
        %2511 = vmatprep.subr.mxu0 %v731
        %2512 = vmatpush1.msra.mxu0 %v730
        %2513 = vmatprep.subr.mxu0 %v741
        %2514 = vmatpush1.msra.mxu0 %v740
        %2515 = vmatprep.subr.mxu0 %v751
        %2516 = vmatpush1.msra.mxu0 %v750
        %2517 = vmatprep.subr.mxu0 %v761
        %2518 = vmatpush1.msra.mxu0 %v760
        %2519 = vmatprep.subr.mxu0 %v771
        %2520 = vmatpush1.msra.mxu0 %v770
        %2521 = vmatprep.subr.mxu0 %v781
        %2522 = vmatpush1.msra.mxu0 %v780
        %2523 = vmatprep.subr.mxu0 %v791
        %2524 = vmatpush1.msra.mxu0 %v790
        %2525 = vmatprep.subr.mxu0 %v801
        %2526 = vmatpush1.msra.mxu0 %v800
        %2527 = vmatprep.subr.mxu0 %v811
        %2528 = vmatpush1.msra.mxu0 %v810
        %2529 = vmatprep.subr.mxu0 %v821
        %2530 = vmatpush1.msra.mxu0 %v820
        %2531 = vmatprep.subr.mxu0 %v831
        %2532 = vmatpush1.msra.mxu0 %v830
        %2533 = vmatprep.subr.mxu0 %v841
        %2534 = vmatpush1.msra.mxu0 %v840
        %2535 = vmatprep.subr.mxu0 %v851
        %2536 = vmatpush1.msra.mxu0 %v850
        %2537 = vmatprep.subr.mxu0 %v861
        %2538 = vmatpush1.msra.mxu0 %v860
        %2539 = vmatprep.subr.mxu0 %v871
        %2540 = vmatpush1.msra.mxu0 %v870
        %2541 = vmatprep.subr.mxu0 %v881
        %2542 = vmatpush1.msra.mxu0 %v880
        %2543 = vmatprep.subr.mxu0 %v891
        %2544 = vmatpush1.msra.mxu0 %v890
        %2545 = vmatprep.subr.mxu0 %v901
        %2546 = vmatpush1.msra.mxu0 %v900
        %2547 = vmatprep.subr.mxu0 %v911
        %2548 = vmatpush1.msra.mxu0 %v910
        %2549 = vmatprep.subr.mxu0 %v921
        %2550 = vmatpush1.msra.mxu0 %v920
        %2551 = vmatprep.mubr.f32.mxu0 %v279
        %2552 = vmatmul.mubr.f32.gmra.mrb[0].mxu0 %v278
        %v2553 = vpop.f32.mrb[0].mxu0
        %v2554 = vadd.f32 %v2483, %v2553
        %v2555 = vpop.f32.mrb[0].mxu0
        %v2556 = vadd.f32 %v2485, %v2555
        %2557 = vdwg.mxu0
        %2558 = vmatprep.subr.mxu0 %v931
        %2559 = vmatpush1.msra.mxu0 %v930
        %2560 = vmatprep.subr.mxu0 %v941
        %2561 = vmatpush1.msra.mxu0 %v940
        %2562 = vmatprep.subr.mxu0 %v951
        %2563 = vmatpush1.msra.mxu0 %v950
        %2564 = vmatprep.subr.mxu0 %v961
        %2565 = vmatpush1.msra.mxu0 %v960
        %2566 = vmatprep.subr.mxu0 %v971
        %2567 = vmatpush1.msra.mxu0 %v970
        %2568 = vmatprep.subr.mxu0 %v981
        %2569 = vmatpush1.msra.mxu0 %v980
        %2570 = vmatprep.subr.mxu0 %v991
        %2571 = vmatpush1.msra.mxu0 %v990
        %2572 = vmatprep.subr.mxu0 %v1001
        %2573 = vmatpush1.msra.mxu0 %v1000
        %2574 = vmatprep.subr.mxu0 %v1011
        %2575 = vmatpush1.msra.mxu0 %v1010
        %2576 = vmatprep.subr.mxu0 %v1021
        %2577 = vmatpush1.msra.mxu0 %v1020
        %2578 = vmatprep.subr.mxu0 %v1031
        %2579 = vmatpush1.msra.mxu0 %v1030
        %2580 = vmatprep.subr.mxu0 %v1041
        %2581 = vmatpush1.msra.mxu0 %v1040
        %2582 = vmatprep.subr.mxu0 %v1051
        %2583 = vmatpush1.msra.mxu0 %v1050
        %2584 = vmatprep.subr.mxu0 %v1061
        %2585 = vmatpush1.msra.mxu0 %v1060
        %2586 = vmatprep.subr.mxu0 %v1071
        %2587 = vmatpush1.msra.mxu0 %v1070
        %2588 = vmatprep.subr.mxu0 %v1081
        %2589 = vmatpush1.msra.mxu0 %v1080
        %2590 = vmatprep.subr.mxu0 %v1091
        %2591 = vmatpush1.msra.mxu0 %v1090
        %2592 = vmatprep.subr.mxu0 %v1101
        %2593 = vmatpush1.msra.mxu0 %v1100
        %2594 = vmatprep.subr.mxu0 %v1111
        %2595 = vmatpush1.msra.mxu0 %v1110
        %2596 = vmatprep.subr.mxu0 %v1121
        %2597 = vmatpush1.msra.mxu0 %v1120
        %2598 = vmatprep.subr.mxu0 %v1131
        %2599 = vmatpush1.msra.mxu0 %v1130
        %2600 = vmatprep.subr.mxu0 %v1141
        %2601 = vmatpush1.msra.mxu0 %v1140
        %2602 = vmatprep.subr.mxu0 %v1151
        %2603 = vmatpush1.msra.mxu0 %v1150
        %2604 = vmatprep.subr.mxu0 %v1161
        %2605 = vmatpush1.msra.mxu0 %v1160
        %2606 = vmatprep.subr.mxu0 %v1171
        %2607 = vmatpush1.msra.mxu0 %v1170
        %2608 = vmatprep.subr.mxu0 %v1181
        %2609 = vmatpush1.msra.mxu0 %v1180
        %2610 = vmatprep.subr.mxu0 %v1191
        %2611 = vmatpush1.msra.mxu0 %v1190
        %2612 = vmatprep.subr.mxu0 %v1201
        %2613 = vmatpush1.msra.mxu0 %v1200
        %2614 = vmatprep.subr.mxu0 %v1211
        %2615 = vmatpush1.msra.mxu0 %v1210
        %2616 = vmatprep.subr.mxu0 %v1221
        %2617 = vmatpush1.msra.mxu0 %v1220
        %2618 = vmatprep.subr.mxu0 %v1231
        %2619 = vmatpush1.msra.mxu0 %v1230
        %2620 = vmatprep.subr.mxu0 %v1241
        %2621 = vmatpush1.msra.mxu0 %v1240
        %2622 = vmatprep.mubr.f32.mxu0 %v281
        %2623 = vmatmul.mubr.f32.gmra.mrb[0].mxu0 %v280
        %v2624 = vpop.f32.mrb[0].mxu0
        %v2625 = vadd.f32 %v2554, %v2624
        %v2626 = vpop.f32.mrb[0].mxu0
        %v2627 = vadd.f32 %v2556, %v2626
        %2628 = vdwg.mxu0
        %2629 = vmatprep.subr.mxu0 %v1251
        %2630 = vmatpush1.msra.mxu0 %v1250
        %2631 = vmatprep.subr.mxu0 %v1261
        %2632 = vmatpush1.msra.mxu0 %v1260
        %2633 = vmatprep.subr.mxu0 %v1271
        %2634 = vmatpush1.msra.mxu0 %v1270
        %2635 = vmatprep.subr.mxu0 %v1281
        %2636 = vmatpush1.msra.mxu0 %v1280
        %2637 = vmatprep.subr.mxu0 %v1291
        %2638 = vmatpush1.msra.mxu0 %v1290
        %2639 = vmatprep.subr.mxu0 %v1301
        %2640 = vmatpush1.msra.mxu0 %v1300
        %2641 = vmatprep.subr.mxu0 %v1311
        %2642 = vmatpush1.msra.mxu0 %v1310
        %2643 = vmatprep.subr.mxu0 %v1321
        %2644 = vmatpush1.msra.mxu0 %v1320
        %2645 = vmatprep.subr.mxu0 %v1331
        %2646 = vmatpush1.msra.mxu0 %v1330
        %2647 = vmatprep.subr.mxu0 %v1341
        %2648 = vmatpush1.msra.mxu0 %v1340
        %2649 = vmatprep.subr.mxu0 %v1351
        %2650 = vmatpush1.msra.mxu0 %v1350
        %2651 = vmatprep.subr.mxu0 %v1361
        %2652 = vmatpush1.msra.mxu0 %v1360
        %2653 = vmatprep.subr.mxu0 %v1371
        %2654 = vmatpush1.msra.mxu0 %v1370
        %2655 = vmatprep.subr.mxu0 %v1381
        %2656 = vmatpush1.msra.mxu0 %v1380
        %2657 = vmatprep.subr.mxu0 %v1391
        %2658 = vmatpush1.msra.mxu0 %v1390
        %2659 = vmatprep.subr.mxu0 %v1401
        %2660 = vmatpush1.msra.mxu0 %v1400
        %2661 = vmatprep.subr.mxu0 %v1411
        %2662 = vmatpush1.msra.mxu0 %v1410
        %2663 = vmatprep.subr.mxu0 %v1421
        %2664 = vmatpush1.msra.mxu0 %v1420
        %2665 = vmatprep.subr.mxu0 %v1431
        %2666 = vmatpush1.msra.mxu0 %v1430
        %2667 = vmatprep.subr.mxu0 %v1441
        %2668 = vmatpush1.msra.mxu0 %v1440
        %2669 = vmatprep.subr.mxu0 %v1451
        %2670 = vmatpush1.msra.mxu0 %v1450
        %2671 = vmatprep.subr.mxu0 %v1461
        %2672 = vmatpush1.msra.mxu0 %v1460
        %2673 = vmatprep.subr.mxu0 %v1471
        %2674 = vmatpush1.msra.mxu0 %v1470
        %2675 = vmatprep.subr.mxu0 %v1481
        %2676 = vmatpush1.msra.mxu0 %v1480
        %2677 = vmatprep.subr.mxu0 %v1491
        %2678 = vmatpush1.msra.mxu0 %v1490
        %2679 = vmatprep.subr.mxu0 %v1501
        %2680 = vmatpush1.msra.mxu0 %v1500
        %2681 = vmatprep.subr.mxu0 %v1511
        %2682 = vmatpush1.msra.mxu0 %v1510
        %2683 = vmatprep.subr.mxu0 %v1521
        %2684 = vmatpush1.msra.mxu0 %v1520
        %2685 = vmatprep.subr.mxu0 %v1531
        %2686 = vmatpush1.msra.mxu0 %v1530
        %2687 = vmatprep.subr.mxu0 %v1541
        %2688 = vmatpush1.msra.mxu0 %v1540
        %2689 = vmatprep.subr.mxu0 %v1551
        %2690 = vmatpush1.msra.mxu0 %v1550
        %2691 = vmatprep.subr.mxu0 %v1561
        %2692 = vmatpush1.msra.mxu0 %v1560
        %2693 = vmatprep.mubr.f32.mxu0 %v283
        %2694 = vmatmul.mubr.f32.gmra.mrb[0].mxu0 %v282
        %v2695 = vpop.f32.mrb[0].mxu0
        %v2696 = vadd.f32 %v2625, %v2695
        %v2697 = vpop.f32.mrb[0].mxu0
        %v2698 = vadd.f32 %v2627, %v2697
        %2699 = vdwg.mxu0
        %2700 = vmatprep.subr.mxu0 %v293
        %2701 = vmatpush1.msra.mxu0 %v292
        %2702 = vmatprep.subr.mxu0 %v303
        %2703 = vmatpush1.msra.mxu0 %v302
        %2704 = vmatprep.subr.mxu0 %v313
        %2705 = vmatpush1.msra.mxu0 %v312
        %2706 = vmatprep.subr.mxu0 %v323
        %2707 = vmatpush1.msra.mxu0 %v322
        %2708 = vmatprep.subr.mxu0 %v333
        %2709 = vmatpush1.msra.mxu0 %v332
        %2710 = vmatprep.subr.mxu0 %v343
        %2711 = vmatpush1.msra.mxu0 %v342
        %2712 = vmatprep.subr.mxu0 %v353
        %2713 = vmatpush1.msra.mxu0 %v352
        %2714 = vmatprep.subr.mxu0 %v363
        %2715 = vmatpush1.msra.mxu0 %v362
        %2716 = vmatprep.subr.mxu0 %v373
        %2717 = vmatpush1.msra.mxu0 %v372
        %2718 = vmatprep.subr.mxu0 %v383
        %2719 = vmatpush1.msra.mxu0 %v382
        %2720 = vmatprep.subr.mxu0 %v393
        %2721 = vmatpush1.msra.mxu0 %v392
        %2722 = vmatprep.subr.mxu0 %v403
        %2723 = vmatpush1.msra.mxu0 %v402
        %2724 = vmatprep.subr.mxu0 %v413
        %2725 = vmatpush1.msra.mxu0 %v412
        %2726 = vmatprep.subr.mxu0 %v423
        %2727 = vmatpush1.msra.mxu0 %v422
        %2728 = vmatprep.subr.mxu0 %v433
        %2729 = vmatpush1.msra.mxu0 %v432
        %2730 = vmatprep.subr.mxu0 %v443
        %2731 = vmatpush1.msra.mxu0 %v442
        %2732 = vmatprep.subr.mxu0 %v453
        %2733 = vmatpush1.msra.mxu0 %v452
        %2734 = vmatprep.subr.mxu0 %v463
        %2735 = vmatpush1.msra.mxu0 %v462
        %2736 = vmatprep.subr.mxu0 %v473
        %2737 = vmatpush1.msra.mxu0 %v472
        %2738 = vmatprep.subr.mxu0 %v483
        %2739 = vmatpush1.msra.mxu0 %v482
        %2740 = vmatprep.subr.mxu0 %v493
        %2741 = vmatpush1.msra.mxu0 %v492
        %2742 = vmatprep.subr.mxu0 %v503
        %2743 = vmatpush1.msra.mxu0 %v502
        %2744 = vmatprep.subr.mxu0 %v513
        %2745 = vmatpush1.msra.mxu0 %v512
        %2746 = vmatprep.subr.mxu0 %v523
        %2747 = vmatpush1.msra.mxu0 %v522
        %2748 = vmatprep.subr.mxu0 %v533
        %2749 = vmatpush1.msra.mxu0 %v532
        %2750 = vmatprep.subr.mxu0 %v543
        %2751 = vmatpush1.msra.mxu0 %v542
        %2752 = vmatprep.subr.mxu0 %v553
        %2753 = vmatpush1.msra.mxu0 %v552
        %2754 = vmatprep.subr.mxu0 %v563
        %2755 = vmatpush1.msra.mxu0 %v562
        %2756 = vmatprep.subr.mxu0 %v573
        %2757 = vmatpush1.msra.mxu0 %v572
        %2758 = vmatprep.subr.mxu0 %v583
        %2759 = vmatpush1.msra.mxu0 %v582
        %2760 = vmatprep.subr.mxu0 %v593
        %2761 = vmatpush1.msra.mxu0 %v592
        %2762 = vmatprep.subr.mxu0 %v603
        %2763 = vmatpush1.msra.mxu0 %v602
        %2764 = vmatprep.mubr.f32.mxu0 %v277
        %2765 = vmatmul.mubr.f32.gmra.mrb[0].mxu0 %v276
        %v2766 = vpop.f32.mrb[0].mxu0
        %v2767 = vadd.f32 0.0, %v2766
        %v2768 = vpop.f32.mrb[0].mxu0
        %v2769 = vadd.f32 0.0, %v2768
        %2770 = vdwg.mxu0
        %2771 = vmatprep.subr.mxu0 %v613
        %2772 = vmatpush1.msra.mxu0 %v612
        %2773 = vmatprep.subr.mxu0 %v623
        %2774 = vmatpush1.msra.mxu0 %v622
        %2775 = vmatprep.subr.mxu0 %v633
        %2776 = vmatpush1.msra.mxu0 %v632
        %2777 = vmatprep.subr.mxu0 %v643
        %2778 = vmatpush1.msra.mxu0 %v642
        %2779 = vmatprep.subr.mxu0 %v653
        %2780 = vmatpush1.msra.mxu0 %v652
        %2781 = vmatprep.subr.mxu0 %v663
        %2782 = vmatpush1.msra.mxu0 %v662
        %2783 = vmatprep.subr.mxu0 %v673
        %2784 = vmatpush1.msra.mxu0 %v672
        %2785 = vmatprep.subr.mxu0 %v683
        %2786 = vmatpush1.msra.mxu0 %v682
        %2787 = vmatprep.subr.mxu0 %v693
        %2788 = vmatpush1.msra.mxu0 %v692
        %2789 = vmatprep.subr.mxu0 %v703
        %2790 = vmatpush1.msra.mxu0 %v702
        %2791 = vmatprep.subr.mxu0 %v713
        %2792 = vmatpush1.msra.mxu0 %v712
        %2793 = vmatprep.subr.mxu0 %v723
        %2794 = vmatpush1.msra.mxu0 %v722
        %2795 = vmatprep.subr.mxu0 %v733
        %2796 = vmatpush1.msra.mxu0 %v732
        %2797 = vmatprep.subr.mxu0 %v743
        %2798 = vmatpush1.msra.mxu0 %v742
        %2799 = vmatprep.subr.mxu0 %v753
        %2800 = vmatpush1.msra.mxu0 %v752
        %2801 = vmatprep.subr.mxu0 %v763
        %2802 = vmatpush1.msra.mxu0 %v762
        %2803 = vmatprep.subr.mxu0 %v773
        %2804 = vmatpush1.msra.mxu0 %v772
        %2805 = vmatprep.subr.mxu0 %v783
        %2806 = vmatpush1.msra.mxu0 %v782
        %2807 = vmatprep.subr.mxu0 %v793
        %2808 = vmatpush1.msra.mxu0 %v792
        %2809 = vmatprep.subr.mxu0 %v803
        %2810 = vmatpush1.msra.mxu0 %v802
        %2811 = vmatprep.subr.mxu0 %v813
        %2812 = vmatpush1.msra.mxu0 %v812
        %2813 = vmatprep.subr.mxu0 %v823
        %2814 = vmatpush1.msra.mxu0 %v822
        %2815 = vmatprep.subr.mxu0 %v833
        %2816 = vmatpush1.msra.mxu0 %v832
        %2817 = vmatprep.subr.mxu0 %v843
        %2818 = vmatpush1.msra.mxu0 %v842
        %2819 = vmatprep.subr.mxu0 %v853
        %2820 = vmatpush1.msra.mxu0 %v852
        %2821 = vmatprep.subr.mxu0 %v863
        %2822 = vmatpush1.msra.mxu0 %v862
        %2823 = vmatprep.subr.mxu0 %v873
        %2824 = vmatpush1.msra.mxu0 %v872
        %2825 = vmatprep.subr.mxu0 %v883
        %2826 = vmatpush1.msra.mxu0 %v882
        %2827 = vmatprep.subr.mxu0 %v893
        %2828 = vmatpush1.msra.mxu0 %v892
        %2829 = vmatprep.subr.mxu0 %v903
        %2830 = vmatpush1.msra.mxu0 %v902
        %2831 = vmatprep.subr.mxu0 %v913
        %2832 = vmatpush1.msra.mxu0 %v912
        %2833 = vmatprep.subr.mxu0 %v923
        %2834 = vmatpush1.msra.mxu0 %v922
        %2835 = vmatprep.mubr.f32.mxu0 %v279
        %2836 = vmatmul.mubr.f32.gmra.mrb[0].mxu0 %v278
        %v2837 = vpop.f32.mrb[0].mxu0
        %v2838 = vadd.f32 %v2767, %v2837
        %v2839 = vpop.f32.mrb[0].mxu0
        %v2840 = vadd.f32 %v2769, %v2839
        %2841 = vdwg.mxu0
        %2842 = vmatprep.subr.mxu0 %v933
        %2843 = vmatpush1.msra.mxu0 %v932
        %2844 = vmatprep.subr.mxu0 %v943
        %2845 = vmatpush1.msra.mxu0 %v942
        %2846 = vmatprep.subr.mxu0 %v953
        %2847 = vmatpush1.msra.mxu0 %v952
        %2848 = vmatprep.subr.mxu0 %v963
        %2849 = vmatpush1.msra.mxu0 %v962
        %2850 = vmatprep.subr.mxu0 %v973
        %2851 = vmatpush1.msra.mxu0 %v972
        %2852 = vmatprep.subr.mxu0 %v983
        %2853 = vmatpush1.msra.mxu0 %v982
        %2854 = vmatprep.subr.mxu0 %v993
        %2855 = vmatpush1.msra.mxu0 %v992
        %2856 = vmatprep.subr.mxu0 %v1003
        %2857 = vmatpush1.msra.mxu0 %v1002
        %2858 = vmatprep.subr.mxu0 %v1013
        %2859 = vmatpush1.msra.mxu0 %v1012
        %2860 = vmatprep.subr.mxu0 %v1023
        %2861 = vmatpush1.msra.mxu0 %v1022
        %2862 = vmatprep.subr.mxu0 %v1033
        %2863 = vmatpush1.msra.mxu0 %v1032
        %2864 = vmatprep.subr.mxu0 %v1043
        %2865 = vmatpush1.msra.mxu0 %v1042
        %2866 = vmatprep.subr.mxu0 %v1053
        %2867 = vmatpush1.msra.mxu0 %v1052
        %2868 = vmatprep.subr.mxu0 %v1063
        %2869 = vmatpush1.msra.mxu0 %v1062
        %2870 = vmatprep.subr.mxu0 %v1073
        %2871 = vmatpush1.msra.mxu0 %v1072
        %2872 = vmatprep.subr.mxu0 %v1083
        %2873 = vmatpush1.msra.mxu0 %v1082
        %2874 = vmatprep.subr.mxu0 %v1093
        %2875 = vmatpush1.msra.mxu0 %v1092
        %2876 = vmatprep.subr.mxu0 %v1103
        %2877 = vmatpush1.msra.mxu0 %v1102
        %2878 = vmatprep.subr.mxu0 %v1113
        %2879 = vmatpush1.msra.mxu0 %v1112
        %2880 = vmatprep.subr.mxu0 %v1123
        %2881 = vmatpush1.msra.mxu0 %v1122
        %2882 = vmatprep.subr.mxu0 %v1133
        %2883 = vmatpush1.msra.mxu0 %v1132
        %2884 = vmatprep.subr.mxu0 %v1143
        %2885 = vmatpush1.msra.mxu0 %v1142
        %2886 = vmatprep.subr.mxu0 %v1153
        %2887 = vmatpush1.msra.mxu0 %v1152
        %2888 = vmatprep.subr.mxu0 %v1163
        %2889 = vmatpush1.msra.mxu0 %v1162
        %2890 = vmatprep.subr.mxu0 %v1173
        %2891 = vmatpush1.msra.mxu0 %v1172
        %2892 = vmatprep.subr.mxu0 %v1183
        %2893 = vmatpush1.msra.mxu0 %v1182
        %2894 = vmatprep.subr.mxu0 %v1193
        %2895 = vmatpush1.msra.mxu0 %v1192
        %2896 = vmatprep.subr.mxu0 %v1203
        %2897 = vmatpush1.msra.mxu0 %v1202
        %2898 = vmatprep.subr.mxu0 %v1213
        %2899 = vmatpush1.msra.mxu0 %v1212
        %2900 = vmatprep.subr.mxu0 %v1223
        %2901 = vmatpush1.msra.mxu0 %v1222
        %2902 = vmatprep.subr.mxu0 %v1233
        %2903 = vmatpush1.msra.mxu0 %v1232
        %2904 = vmatprep.subr.mxu0 %v1243
        %2905 = vmatpush1.msra.mxu0 %v1242
        %2906 = vmatprep.mubr.f32.mxu0 %v281
        %2907 = vmatmul.mubr.f32.gmra.mrb[0].mxu0 %v280
        %v2908 = vpop.f32.mrb[0].mxu0
        %v2909 = vadd.f32 %v2838, %v2908
        %v2910 = vpop.f32.mrb[0].mxu0
        %v2911 = vadd.f32 %v2840, %v2910
        %2912 = vdwg.mxu0
        %2913 = vmatprep.subr.mxu0 %v1253
        %2914 = vmatpush1.msra.mxu0 %v1252
        %2915 = vmatprep.subr.mxu0 %v1263
        %2916 = vmatpush1.msra.mxu0 %v1262
        %2917 = vmatprep.subr.mxu0 %v1273
        %2918 = vmatpush1.msra.mxu0 %v1272
        %2919 = vmatprep.subr.mxu0 %v1283
        %2920 = vmatpush1.msra.mxu0 %v1282
        %2921 = vmatprep.subr.mxu0 %v1293
        %2922 = vmatpush1.msra.mxu0 %v1292
        %2923 = vmatprep.subr.mxu0 %v1303
        %2924 = vmatpush1.msra.mxu0 %v1302
        %2925 = vmatprep.subr.mxu0 %v1313
        %2926 = vmatpush1.msra.mxu0 %v1312
        %2927 = vmatprep.subr.mxu0 %v1323
        %2928 = vmatpush1.msra.mxu0 %v1322
        %2929 = vmatprep.subr.mxu0 %v1333
        %2930 = vmatpush1.msra.mxu0 %v1332
        %2931 = vmatprep.subr.mxu0 %v1343
        %2932 = vmatpush1.msra.mxu0 %v1342
        %2933 = vmatprep.subr.mxu0 %v1353
        %2934 = vmatpush1.msra.mxu0 %v1352
        %2935 = vmatprep.subr.mxu0 %v1363
        %2936 = vmatpush1.msra.mxu0 %v1362
        %2937 = vmatprep.subr.mxu0 %v1373
        %2938 = vmatpush1.msra.mxu0 %v1372
        %2939 = vmatprep.subr.mxu0 %v1383
        %2940 = vmatpush1.msra.mxu0 %v1382
        %2941 = vmatprep.subr.mxu0 %v1393
        %2942 = vmatpush1.msra.mxu0 %v1392
        %2943 = vmatprep.subr.mxu0 %v1403
        %2944 = vmatpush1.msra.mxu0 %v1402
        %2945 = vmatprep.subr.mxu0 %v1413
        %2946 = vmatpush1.msra.mxu0 %v1412
        %2947 = vmatprep.subr.mxu0 %v1423
        %2948 = vmatpush1.msra.mxu0 %v1422
        %2949 = vmatprep.subr.mxu0 %v1433
        %2950 = vmatpush1.msra.mxu0 %v1432
        %2951 = vmatprep.subr.mxu0 %v1443
        %2952 = vmatpush1.msra.mxu0 %v1442
        %2953 = vmatprep.subr.mxu0 %v1453
        %2954 = vmatpush1.msra.mxu0 %v1452
        %2955 = vmatprep.subr.mxu0 %v1463
        %2956 = vmatpush1.msra.mxu0 %v1462
        %2957 = vmatprep.subr.mxu0 %v1473
        %2958 = vmatpush1.msra.mxu0 %v1472
        %2959 = vmatprep.subr.mxu0 %v1483
        %2960 = vmatpush1.msra.mxu0 %v1482
        %2961 = vmatprep.subr.mxu0 %v1493
        %2962 = vmatpush1.msra.mxu0 %v1492
        %2963 = vmatprep.subr.mxu0 %v1503
        %2964 = vmatpush1.msra.mxu0 %v1502
        %2965 = vmatprep.subr.mxu0 %v1513
        %2966 = vmatpush1.msra.mxu0 %v1512
        %2967 = vmatprep.subr.mxu0 %v1523
        %2968 = vmatpush1.msra.mxu0 %v1522
        %2969 = vmatprep.subr.mxu0 %v1533
        %2970 = vmatpush1.msra.mxu0 %v1532
        %2971 = vmatprep.subr.mxu0 %v1543
        %2972 = vmatpush1.msra.mxu0 %v1542
        %2973 = vmatprep.subr.mxu0 %v1553
        %2974 = vmatpush1.msra.mxu0 %v1552
        %2975 = vmatprep.subr.mxu0 %v1563
        %2976 = vmatpush1.msra.mxu0 %v1562
        %2977 = vmatprep.mubr.f32.mxu0 %v283
        %2978 = vmatmul.mubr.f32.gmra.mrb[0].mxu0 %v282
        %v2979 = vpop.f32.mrb[0].mxu0
        %v2980 = vadd.f32 %v2909, %v2979
        %v2981 = vpop.f32.mrb[0].mxu0
        %v2982 = vadd.f32 %v2911, %v2981
        %2983 = vdwg.mxu0
        %v2984 = vadd.f32 %v266, %v1844
        %v2985 = vadd.f32 %v267, %v1846
        %v2986 = vadd.f32 %v268, %v2128
        %v2987 = vadd.f32 %v269, %v2130
        %v2988 = vadd.f32 %v270, %v2412
        %v2989 = vadd.f32 %v271, %v2414
        %v2990 = vadd.f32 %v272, %v2696
        %v2991 = vadd.f32 %v273, %v2698
        %v2992 = vadd.f32 %v274, %v2980
        %v2993 = vadd.f32 %v275, %v2982
        %2994 = vst [vmem:[#allocation2] sm:$0xff] %v2984
        %2995 = vst [vmem:[#allocation2 + $0x8] sm:$0xff] %v2985
        %2996 = vst [vmem:[#allocation2 + $0x10] sm:$0xff] %v2986
        %2997 = vst [vmem:[#allocation2 + $0x18] sm:$0xff] %v2987
        %2998 = vst [vmem:[#allocation2 + $0x20] sm:$0xff] %v2988
        %2999 = vst [vmem:[#allocation2 + $0x28] sm:$0xff] %v2989
        %3000 = vst [vmem:[#allocation2 + $0x30] sm:$0xff] %v2990
        %3001 = vst [vmem:[#allocation2 + $0x38] sm:$0xff] %v2991
        %3002 = vst [vmem:[#allocation2 + $0x40] sm:$0xff] %v2992
        %3003 = vst [vmem:[#allocation2 + $0x48] sm:$0xff] %v2993
        %p3004 = scmp.eq.s32.totalorder %s22, 19
        // Predicated region
        $region41: #{bsl_multinet_seblock_ln_forward.2} parent=31 // pred_check
          %p3005 = pneg %p3004
        $region42: #{bsl_multinet_seblock_ln_forward.2} parent=31 // pred_check_branch
          %3007 = sbr.rel (%p3005) target = $region44
        $region43: #{bsl_multinet_seblock_ln_forward.2} parent=31 // pred_region
          %v3008 = vld [vmem:[#allocation2] sm:$0xff]
          %v3009 = vld [vmem:[#allocation2 + $0x8] sm:$0xff]
          %v3010 = vld [vmem:[#allocation2 + $0x10] sm:$0xff]
          %v3011 = vld [vmem:[#allocation2 + $0x18] sm:$0xff]
          %v3012 = vld [vmem:[#allocation2 + $0x20] sm:$0xff]
          %v3013 = vld [vmem:[#allocation2 + $0x28] sm:$0xff]
          %v3014 = vld [vmem:[#allocation2 + $0x30] sm:$0xff]
          %v3015 = vld [vmem:[#allocation2 + $0x38] sm:$0xff]
          %v3016 = vld [vmem:[#allocation2 + $0x40] sm:$0xff]
          %v3017 = vld [vmem:[#allocation2 + $0x48] sm:$0xff]
          %v3018 = vld [vmem:[%s244] sm:$0xff]
          %v3019 = vld [vmem:[%s244 + $0x8] sm:$0x3]
          %v3022 = vlaneseq
          %v3023 = vshrl.u32 %v3022, 7
          %v3024 = vsub.s32 0, %v3023
          %v3025 = vrot.slane %v3018, %v3024
          %v3026 = vlaneseq
          %v3027 = vshrl.u32 %v3026, 7
          %v3028 = vsub.s32 1, %v3027
          %v3029 = vrot.slane %v3018, %v3028
          %v3030 = vlaneseq
          %v3031 = vshrl.u32 %v3030, 7
          %v3032 = vsub.s32 2, %v3031
          %v3033 = vrot.slane %v3018, %v3032
          %v3034 = vlaneseq
          %v3035 = vshrl.u32 %v3034, 7
          %v3036 = vsub.s32 3, %v3035
          %v3037 = vrot.slane %v3018, %v3036
          %v3038 = vlaneseq
          %v3039 = vshrl.u32 %v3038, 7
          %v3040 = vsub.s32 4, %v3039
          %v3041 = vrot.slane %v3018, %v3040
          %v3042 = vlaneseq
          %v3043 = vshrl.u32 %v3042, 7
          %v3044 = vsub.s32 5, %v3043
          %v3045 = vrot.slane %v3018, %v3044
          %v3046 = vlaneseq
          %v3047 = vshrl.u32 %v3046, 7
          %v3048 = vsub.s32 6, %v3047
          %v3049 = vrot.slane %v3018, %v3048
          %v3050 = vlaneseq
          %v3051 = vshrl.u32 %v3050, 7
          %v3052 = vsub.s32 7, %v3051
          %v3053 = vrot.slane %v3018, %v3052
          %v3054 = vlaneseq
          %v3055 = vshrl.u32 %v3054, 7
          %v3056 = vsub.s32 0, %v3055
          %v3057 = vrot.slane %v3019, %v3056
          %v3058 = vlaneseq
          %v3059 = vshrl.u32 %v3058, 7
          %v3060 = vsub.s32 1, %v3059
          %v3061 = vrot.slane %v3019, %v3060
          %v3072 = vadd.f32 %v3008, %v3025
          %v3073 = vadd.f32 %v3009, %v3029
          %v3074 = vadd.f32 %v3010, %v3033
          %v3075 = vadd.f32 %v3011, %v3037
          %v3076 = vadd.f32 %v3012, %v3041
          %v3077 = vadd.f32 %v3013, %v3045
          %v3078 = vadd.f32 %v3014, %v3049
          %v3079 = vadd.f32 %v3015, %v3053
          %v3080 = vadd.f32 %v3016, %v3057
          %v3081 = vadd.f32 %v3017, %v3061
          %v3082 = vmax.f32 %v3072, 0.0
          %v3083 = vmax.f32 %v3073, 0.0
          %v3084 = vmax.f32 %v3074, 0.0
          %v3085 = vmax.f32 %v3075, 0.0
          %v3086 = vmax.f32 %v3076, 0.0
          %v3087 = vmax.f32 %v3077, 0.0
          %v3088 = vmax.f32 %v3078, 0.0
          %v3089 = vmax.f32 %v3079, 0.0
          %v3090 = vmax.f32 %v3080, 0.0
          %v3091 = vmax.f32 %v3081, 0.0
          %3092 = vst [vmem:[%s250] sm:$0xff] %v3082
          %3093 = vst [vmem:[%s250 + $0x8] sm:$0xff] %v3083
          %3094 = vst [vmem:[%s250 + $0x10] sm:$0xff] %v3084
          %3095 = vst [vmem:[%s250 + $0x18] sm:$0xff] %v3085
          %3096 = vst [vmem:[%s250 + $0x20] sm:$0xff] %v3086
          %3097 = vst [vmem:[%s250 + $0x28] sm:$0xff] %v3087
          %3098 = vst [vmem:[%s250 + $0x30] sm:$0xff] %v3088
          %3099 = vst [vmem:[%s250 + $0x38] sm:$0xff] %v3089
          %3100 = vst [vmem:[%s250 + $0x40] sm:$0xff] %v3090
          %3101 = vst [vmem:[%s250 + $0x48] sm:$0xff] %v3091
        $region44: #{bsl_multinet_seblock_ln_forward.2} parent=31 // pred_fallthru
          _
        %s3102 = smul.u32 10, %s21
        %p3103 = scmp.lt.s32.totalorder %s3102, 19
        %s3104 = scalar_select %p3103, %s3102, 19
        %s3105 = smul.addr %s3104, 8
        %s3106 = scalar_lea.vmem %s3, %s3105
        // Predicated region
        $region45: #{bsl_multinet_seblock_ln_forward.2} parent=31 // pred_check
          %p3107 = pneg %p127
        $region46: #{bsl_multinet_seblock_ln_forward.2} parent=31 // pred_check_branch
          %3109 = sbr.rel (%p3107) target = $region48
        $region47: #{bsl_multinet_seblock_ln_forward.2} parent=31 // pred_region
          %s3110 = smul.u32 10, %s21
        $region48: #{bsl_multinet_seblock_ln_forward.2} parent=31 // pred_fallthru
          _
      $region32: #{bsl_multinet_seblock_ln_forward.2} parent=5 // pred_fallthru
        _
      %p3111 = scmp.le.s32.totalorder 2, %s12
      // Predicated region
      $region49: #{bsl_multinet_seblock_ln_forward.2} parent=5 // pred_check
        %p3112 = pneg %p3111
      $region50: #{bsl_multinet_seblock_ln_forward.2} parent=5 // pred_check_branch
        %3114 = sbr.rel (%p3112) target = $region52
      $region51: #{bsl_multinet_seblock_ln_forward.2} parent=5 // pred_region
        %s3115 = ssub.s32 %s12, 2
        // Predicated region
        $region53: #{bsl_multinet_seblock_ln_forward.2} parent=51 // pred_check
          %p3116 = pneg %p133
        $region54: #{bsl_multinet_seblock_ln_forward.2} parent=51 // pred_check_branch
          %3118 = sbr.rel (%p3116) target = $region56
        $region55: #{bsl_multinet_seblock_ln_forward.2} parent=51 // pred_region
          %s3119 = smul.u32 10, %s23
          %p3120 = scmp.lt.s32.totalorder %s3119, 19
          %s3121 = scalar_select %p3120, %s3119, 19
          %s3122 = smul.addr %s3121, 8
          %s3123 = scalar_lea.vmem %s3, %s3122
        $region56: #{bsl_multinet_seblock_ln_forward.2} parent=51 // pred_fallthru
          _
      $region52: #{bsl_multinet_seblock_ln_forward.2} parent=5 // pred_fallthru
        _
    $region6: #{bsl_multinet_seblock_ln_forward.2} parent=1 // loop_footer
      %s16 = sadd.s32 1, %s12
    $region7: #{bsl_multinet_seblock_ln_forward.2} parent=1 // loop_footer_branch
      %11 = sbr.rel target = $region3
    $region8: #{bsl_multinet_seblock_ln_forward.2} parent=1 // loop_exit
      _
    %3124 = vsyncpa [#allocation4], 1
    %s3125 = scalar_lea.sflag [#allocation4], 1
    %3126 = vsyncpa %s3125, 1

// kernel: bsl_multinet_seblock_ln_forward.3
$region0: #{bsl_multinet_seblock_ln_forward.3}
  #allocation0 [shape = 'u32[]', space=smem, size = 0x4, offset = 0x4, fixed_abs, tag = 'smem constant byte address 0x4 - core index']
  #allocation1 [shape = 'u32[144,128]{1,0:T(1,128)}', space=vmem, size = 0x12000, scoped, tag = 'internal scratch']
  #allocation2 [shape = 'f32[8,16]{1,0:T(8,128)}', space=vmem, size = 0x1000, scoped, tag = 'scratch operand']
  %s0 = inlined_call_operand.vmem [shape: f32[8,20480], index: 0, kind: input, shape index: {}]
  %s1 = inlined_call_operand.vmem [shape: f32[8,2560], index: 1, kind: input, shape index: {}]
  %s2 = inlined_call_operand.hbm [shape: f32[2560,20480], index: 2, kind: input, shape index: {}]
  %s3 = inlined_call_operand.vmem [shape: f32[1,20480], index: 3, kind: input, shape index: {}]
  %s4 = inlined_call_operand.vmem [shape: f32[20480,16], index: 4, kind: input, shape index: {}]
  %s5 = inlined_call_operand.vmem [shape: f32[1,16], index: 5, kind: input, shape index: {}]
  %s6 = inlined_call_operand.vmem [shape: f32[16,128], index: 6, kind: input, shape index: {}]
  %s7 = inlined_call_operand.vmem [shape: f32[1,128], index: 7, kind: input, shape index: {}]
  %s8 = inlined_call_operand.vmem [shape: f32[8,128], index: 8, kind: output, shape index: {}]
  %s9 = sld [smem:[#allocation0]]
  $region77: #{bsl_multinet_seblock_ln_forward.3} parent=0
    _
  %s11 = ssub.s32 1, %s9
  %s12 = scalar_select 0, %s11, %s9
  $region1: #{bsl_multinet_seblock_ln_forward.3} parent=0
    #allocation3 [shape = 'u8[20971520]{0}', space=vmem, size = 0x1400000, scoped, tag = 'input window, operand 2']
    #allocation4 [shape = 's32[2]{0}', space=sflag, size = 0x8, scoped, tag = 'scoped memory for bsl_multinet_seblock_ln_forward.3']
    %13 = vsyncpa [#allocation4], 0
    %s14 = scalar_lea.sflag [#allocation4], 1
    %15 = vsyncpa %s14, 0
    loop: start=0, step=1, limit=22
    $region2: #{bsl_multinet_seblock_ln_forward.3} parent=1 // loop_pre_header
      _
    $region3: #{bsl_multinet_seblock_ln_forward.3} parent=1 // loop_header
      %s17 = sphi 0, %s21
      %p18 = scmp.ge.s32.totalorder %s17, 22
      %s27 = sphi 0, %s29
      %s30 = sphi 0, %s27
      %s31 = sphi 0, %s30
      %s47 = sphi 0, %s31
      %s51 = sphi 0, %s51
      %s53 = sphi 0, %s51
      %s54 = sphi 0, %s53
      %s68 = sphi 0, %s54
      %s74 = sphi 0, %s76
      %s77 = sphi 0, %s74
      %s78 = sphi 0, %s77
      %s94 = sphi 0, %s78
      %s100 = sphi 0, %s102
      %s103 = sphi 0, %s100
      %s104 = sphi 0, %s103
      %s120 = sphi 0, %s104
      %s126 = sphi 0, %s128
      %s129 = sphi 0, %s126
      %s130 = sphi 0, %s129
      %s146 = sphi 0, %s130
      %s150 = sphi 0, %s150
      %s152 = sphi 0, %s150
      %s153 = sphi 0, %s152
      %s167 = sphi 0, %s153
      %s171 = sphi 0, %s171
      %s173 = sphi 0, %s171
      %s174 = sphi 0, %s173
      %s188 = sphi 0, %s174
      %s192 = sphi 0, %s192
      %s194 = sphi 0, %s192
      %s195 = sphi 0, %s194
      %s209 = sphi 0, %s195
      %s213 = sphi 0, %s213
      %s215 = sphi 0, %s213
      %s216 = sphi 0, %s215
      %s230 = sphi 0, %s216
    $region4: #{bsl_multinet_seblock_ln_forward.3} parent=1 // loop_header_branch
      %20 = sbr.rel (%p18) target = $region8
    $region5: #{bsl_multinet_seblock_ln_forward.3} parent=1 // loop_body
      %s22 = ssub.s32 %s17, 1
      %s23 = ssub.s32 %s17, 2
      %s24 = sadd.s32 %s17, 1
      %s25 = ssub.s32 %s17, %s24
      %p26 = scmp.eq.s32.totalorder %s25, 0
      %s28 = sadd.s32 %s27, 1
      %s29 = scalar_select %p26, %s27, %s28
      %p32 = pneg %p26
      %p33 = scmp.eq.s32.totalorder %s17, 19
      %p34 = por %p32, %p33
      %p35 = scmp.ne.s32.totalorder %s27, %s30
      %p36 = scmp.eq.s32.totalorder %s17, 0
      %p37 = por %p35, %p36
      %p38 = scmp.ne.s32.totalorder %s27, %s30
      %p39 = scmp.eq.s32.totalorder %s22, 19
      %p40 = por %p38, %p39
      %p41 = scmp.ne.s32.totalorder %s30, %s31
      %p42 = scmp.eq.s32.totalorder %s22, 0
      %p43 = por %p41, %p42
      %p44 = scmp.ne.s32.totalorder %s30, %s31
      %p45 = scmp.eq.s32.totalorder %s23, 19
      %p46 = por %p44, %p45
      %p48 = scmp.ne.s32.totalorder %s31, %s47
      %p49 = scmp.eq.s32.totalorder %s23, 0
      %p50 = por %p48, %p49
      %s52 = sadd.s32 %s51, 1
      %p55 = scmp.eq.s32.totalorder %s17, 19
      %p56 = scmp.ne.s32.totalorder %s51, %s53
      %p57 = scmp.eq.s32.totalorder %s17, 0
      %p58 = por %p56, %p57
      %p59 = scmp.ne.s32.totalorder %s51, %s53
      %p60 = scmp.eq.s32.totalorder %s22, 19
      %p61 = por %p59, %p60
      %p62 = scmp.ne.s32.totalorder %s53, %s54
      %p63 = scmp.eq.s32.totalorder %s22, 0
      %p64 = por %p62, %p63
      %p65 = scmp.ne.s32.totalorder %s53, %s54
      %p66 = scmp.eq.s32.totalorder %s23, 19
      %p67 = por %p65, %p66
      %p69 = scmp.ne.s32.totalorder %s54, %s68
      %p70 = scmp.eq.s32.totalorder %s23, 0
      %p71 = por %p69, %p70
      %s72 = ssub.s32 %s17, %s24
      %p73 = scmp.eq.s32.totalorder %s72, 0
      %s75 = sadd.s32 %s74, 1
      %s76 = scalar_select %p73, %s74, %s75
      %p79 = pneg %p73
      %p80 = scmp.eq.s32.totalorder %s17, 19
      %p81 = por %p79, %p80
      %p82 = scmp.ne.s32.totalorder %s74, %s77
      %p83 = scmp.eq.s32.totalorder %s17, 0
      %p84 = por %p82, %p83
      %p85 = scmp.ne.s32.totalorder %s74, %s77
      %p86 = scmp.eq.s32.totalorder %s22, 19
      %p87 = por %p85, %p86
      %p88 = scmp.ne.s32.totalorder %s77, %s78
      %p89 = scmp.eq.s32.totalorder %s22, 0
      %p90 = por %p88, %p89
      %p91 = scmp.ne.s32.totalorder %s77, %s78
      %p92 = scmp.eq.s32.totalorder %s23, 19
      %p93 = por %p91, %p92
      %p95 = scmp.ne.s32.totalorder %s78, %s94
      %p96 = scmp.eq.s32.totalorder %s23, 0
      %p97 = por %p95, %p96
      %s98 = ssub.s32 %s17, %s24
      %p99 = scmp.eq.s32.totalorder %s98, 0
      %s101 = sadd.s32 %s100, 1
      %s102 = scalar_select %p99, %s100, %s101
      %p105 = pneg %p99
      %p106 = scmp.eq.s32.totalorder %s17, 19
      %p107 = por %p105, %p106
      %p108 = scmp.ne.s32.totalorder %s100, %s103
      %p109 = scmp.eq.s32.totalorder %s17, 0
      %p110 = por %p108, %p109
      %p111 = scmp.ne.s32.totalorder %s100, %s103
      %p112 = scmp.eq.s32.totalorder %s22, 19
      %p113 = por %p111, %p112
      %p114 = scmp.ne.s32.totalorder %s103, %s104
      %p115 = scmp.eq.s32.totalorder %s22, 0
      %p116 = por %p114, %p115
      %p117 = scmp.ne.s32.totalorder %s103, %s104
      %p118 = scmp.eq.s32.totalorder %s23, 19
      %p119 = por %p117, %p118
      %p121 = scmp.ne.s32.totalorder %s104, %s120
      %p122 = scmp.eq.s32.totalorder %s23, 0
      %p123 = por %p121, %p122
      %s124 = ssub.s32 %s17, %s24
      %p125 = scmp.eq.s32.totalorder %s124, 0
      %s127 = sadd.s32 %s126, 1
      %s128 = scalar_select %p125, %s126, %s127
      %p131 = pneg %p125
      %p132 = scmp.eq.s32.totalorder %s17, 19
      %p133 = por %p131, %p132
      %p134 = scmp.ne.s32.totalorder %s126, %s129
      %p135 = scmp.eq.s32.totalorder %s17, 0
      %p136 = por %p134, %p135
      %p137 = scmp.ne.s32.totalorder %s126, %s129
      %p138 = scmp.eq.s32.totalorder %s22, 19
      %p139 = por %p137, %p138
      %p140 = scmp.ne.s32.totalorder %s129, %s130
      %p141 = scmp.eq.s32.totalorder %s22, 0
      %p142 = por %p140, %p141
      %p143 = scmp.ne.s32.totalorder %s129, %s130
      %p144 = scmp.eq.s32.totalorder %s23, 19
      %p145 = por %p143, %p144
      %p147 = scmp.ne.s32.totalorder %s130, %s146
      %p148 = scmp.eq.s32.totalorder %s23, 0
      %p149 = por %p147, %p148
      %s151 = sadd.s32 %s150, 1
      %p154 = scmp.eq.s32.totalorder %s17, 19
      %p155 = scmp.ne.s32.totalorder %s150, %s152
      %p156 = scmp.eq.s32.totalorder %s17, 0
      %p157 = por %p155, %p156
      %p158 = scmp.ne.s32.totalorder %s150, %s152
      %p159 = scmp.eq.s32.totalorder %s22, 19
      %p160 = por %p158, %p159
      %p161 = scmp.ne.s32.totalorder %s152, %s153
      %p162 = scmp.eq.s32.totalorder %s22, 0
      %p163 = por %p161, %p162
      %p164 = scmp.ne.s32.totalorder %s152, %s153
      %p165 = scmp.eq.s32.totalorder %s23, 19
      %p166 = por %p164, %p165
      %p168 = scmp.ne.s32.totalorder %s153, %s167
      %p169 = scmp.eq.s32.totalorder %s23, 0
      %p170 = por %p168, %p169
      %s172 = sadd.s32 %s171, 1
      %p175 = scmp.eq.s32.totalorder %s17, 19
      %p176 = scmp.ne.s32.totalorder %s171, %s173
      %p177 = scmp.eq.s32.totalorder %s17, 0
      %p178 = por %p176, %p177
      %p179 = scmp.ne.s32.totalorder %s171, %s173
      %p180 = scmp.eq.s32.totalorder %s22, 19
      %p181 = por %p179, %p180
      %p182 = scmp.ne.s32.totalorder %s173, %s174
      %p183 = scmp.eq.s32.totalorder %s22, 0
      %p184 = por %p182, %p183
      %p185 = scmp.ne.s32.totalorder %s173, %s174
      %p186 = scmp.eq.s32.totalorder %s23, 19
      %p187 = por %p185, %p186
      %p189 = scmp.ne.s32.totalorder %s174, %s188
      %p190 = scmp.eq.s32.totalorder %s23, 0
      %p191 = por %p189, %p190
      %s193 = sadd.s32 %s192, 1
      %p196 = scmp.eq.s32.totalorder %s17, 19
      %p197 = scmp.ne.s32.totalorder %s192, %s194
      %p198 = scmp.eq.s32.totalorder %s17, 0
      %p199 = por %p197, %p198
      %p200 = scmp.ne.s32.totalorder %s192, %s194
      %p201 = scmp.eq.s32.totalorder %s22, 19
      %p202 = por %p200, %p201
      %p203 = scmp.ne.s32.totalorder %s194, %s195
      %p204 = scmp.eq.s32.totalorder %s22, 0
      %p205 = por %p203, %p204
      %p206 = scmp.ne.s32.totalorder %s194, %s195
      %p207 = scmp.eq.s32.totalorder %s23, 19
      %p208 = por %p206, %p207
      %p210 = scmp.ne.s32.totalorder %s195, %s209
      %p211 = scmp.eq.s32.totalorder %s23, 0
      %p212 = por %p210, %p211
      %s214 = sadd.s32 %s213, 1
      %p217 = scmp.eq.s32.totalorder %s17, 19
      %p218 = scmp.ne.s32.totalorder %s213, %s215
      %p219 = scmp.eq.s32.totalorder %s17, 0
      %p220 = por %p218, %p219
      %p221 = scmp.ne.s32.totalorder %s213, %s215
      %p222 = scmp.eq.s32.totalorder %s22, 19
      %p223 = por %p221, %p222
      %p224 = scmp.ne.s32.totalorder %s215, %s216
      %p225 = scmp.eq.s32.totalorder %s22, 0
      %p226 = por %p224, %p225
      %p227 = scmp.ne.s32.totalorder %s215, %s216
      %p228 = scmp.eq.s32.totalorder %s23, 19
      %p229 = por %p227, %p228
      %p231 = scmp.ne.s32.totalorder %s216, %s230
      %p232 = scmp.eq.s32.totalorder %s23, 0
      %p233 = por %p231, %p232
      %p234 = scmp.le.s32.totalorder 1, %s17
      %p235 = scmp.lt.s32.totalorder %s17, 21
      %p236 = pnand %p234, %p235
      %p237 = pneg %p236
      // Predicated region
      $region9: #{bsl_multinet_seblock_ln_forward.3} parent=5 // pred_check
        _
      $region10: #{bsl_multinet_seblock_ln_forward.3} parent=5 // pred_check_branch
        %239 = sbr.rel (%p236) target = $region12
      $region11: #{bsl_multinet_seblock_ln_forward.3} parent=5 // pred_region
        %s240 = ssub.s32 %s17, 1
        // Predicated region
        $region13: #{bsl_multinet_seblock_ln_forward.3} parent=11 // pred_check
          %p241 = pneg %p64
        $region14: #{bsl_multinet_seblock_ln_forward.3} parent=11 // pred_check_branch
          %243 = sbr.rel (%p241) target = $region16
        $region15: #{bsl_multinet_seblock_ln_forward.3} parent=11 // pred_region
          _
        $region16: #{bsl_multinet_seblock_ln_forward.3} parent=11 // pred_fallthru
          _
        // Predicated region
        $region17: #{bsl_multinet_seblock_ln_forward.3} parent=11 // pred_check
          %p244 = pneg %p163
        $region18: #{bsl_multinet_seblock_ln_forward.3} parent=11 // pred_check_branch
          %246 = sbr.rel (%p244) target = $region20
        $region19: #{bsl_multinet_seblock_ln_forward.3} parent=11 // pred_region
          _
        $region20: #{bsl_multinet_seblock_ln_forward.3} parent=11 // pred_fallthru
          _
        // Predicated region
        $region21: #{bsl_multinet_seblock_ln_forward.3} parent=11 // pred_check
          %p247 = pneg %p184
        $region22: #{bsl_multinet_seblock_ln_forward.3} parent=11 // pred_check_branch
          %249 = sbr.rel (%p247) target = $region24
        $region23: #{bsl_multinet_seblock_ln_forward.3} parent=11 // pred_region
          _
        $region24: #{bsl_multinet_seblock_ln_forward.3} parent=11 // pred_fallthru
          _
        // Predicated region
        $region25: #{bsl_multinet_seblock_ln_forward.3} parent=11 // pred_check
          %p250 = pneg %p205
        $region26: #{bsl_multinet_seblock_ln_forward.3} parent=11 // pred_check_branch
          %252 = sbr.rel (%p250) target = $region28
        $region27: #{bsl_multinet_seblock_ln_forward.3} parent=11 // pred_region
          _
        $region28: #{bsl_multinet_seblock_ln_forward.3} parent=11 // pred_fallthru
          _
      $region12: #{bsl_multinet_seblock_ln_forward.3} parent=5 // pred_fallthru
        _
      %p253 = scmp.lt.s32.totalorder %s17, 20
      // Predicated region
      $region29: #{bsl_multinet_seblock_ln_forward.3} parent=5 // pred_check
        %p254 = pneg %p253
      $region30: #{bsl_multinet_seblock_ln_forward.3} parent=5 // pred_check_branch
        %256 = sbr.rel (%p254) target = $region32
      $region31: #{bsl_multinet_seblock_ln_forward.3} parent=5 // pred_region
        // Predicated region
        $region33: #{bsl_multinet_seblock_ln_forward.3} parent=31 // pred_check
          %p257 = pneg %p37
        $region34: #{bsl_multinet_seblock_ln_forward.3} parent=31 // pred_check_branch
          %259 = sbr.rel (%p257) target = $region36
        $region35: #{bsl_multinet_seblock_ln_forward.3} parent=31 // pred_region
          %s260 = smul.u32 8, %s17
          %p261 = scmp.lt.s32.totalorder %s260, 159
          %s262 = scalar_select %p261, %s260, 159
          %s263 = smul.addr %s262, 8
          %s264 = scalar_lea.vmem %s0, %s263
          %s265 = smul.u32 8, %s17
        $region36: #{bsl_multinet_seblock_ln_forward.3} parent=31 // pred_fallthru
          _
        // Predicated region
        $region37: #{bsl_multinet_seblock_ln_forward.3} parent=31 // pred_check
          %p266 = pneg %p84
        $region38: #{bsl_multinet_seblock_ln_forward.3} parent=31 // pred_check_branch
          %268 = sbr.rel (%p266) target = $region40
        $region39: #{bsl_multinet_seblock_ln_forward.3} parent=31 // pred_region
          %s269 = sand.u32 %s74, 1
          %s270 = scalar_lea.sflag [#allocation4], %s269
          %s271 = sand.u32 %s74, 1
          %s272 = smul.addr %s271, 20480
          %s273 = scalar_lea.vmem [#allocation3], %s272
          %s274 = smul.u32 8, %s17
          %s276 = ssub.s32 327680, 327680
          %277 = vsyncadd %s270, %s276
          %s278 = smul.addr %s274, 128
          %s279 = scalar_lea.hbm %s2, %s278
          %s280 = sshll.u32 %s273, 4
          %s281 = int_to_ptr.vmem [resolvable:$true] %s280
          %286 = dma.hbm_to_vmem [thread:$0]  %s279, 327680, %s281, %s270, 20480, 1024, 64
        $region40: #{bsl_multinet_seblock_ln_forward.3} parent=31 // pred_fallthru
          _
        // Predicated region
        $region41: #{bsl_multinet_seblock_ln_forward.3} parent=31 // pred_check
          %p287 = pneg %p110
        $region42: #{bsl_multinet_seblock_ln_forward.3} parent=31 // pred_check_branch
          %289 = sbr.rel (%p287) target = $region44
        $region43: #{bsl_multinet_seblock_ln_forward.3} parent=31 // pred_region
          %s290 = smul.u32 8, %s17
          %p291 = scmp.lt.s32.totalorder %s290, 159
          %s292 = scalar_select %p291, %s290, 159
          %s293 = scalar_lea.vmem %s3, %s292
          %s294 = smul.u32 8, %s17
        $region44: #{bsl_multinet_seblock_ln_forward.3} parent=31 // pred_fallthru
          _
        // Predicated region
        $region45: #{bsl_multinet_seblock_ln_forward.3} parent=31 // pred_check
          %p295 = pneg %p136
        $region46: #{bsl_multinet_seblock_ln_forward.3} parent=31 // pred_check_branch
          %297 = sbr.rel (%p295) target = $region48
        $region47: #{bsl_multinet_seblock_ln_forward.3} parent=31 // pred_region
          %s298 = smul.u32 128, %s17
          %p299 = scmp.lt.s32.totalorder %s298, 2559
          %s300 = scalar_select %p299, %s298, 2559
          %s301 = smul.addr %s300, 8
          %s302 = scalar_lea.vmem %s4, %s301
          %s303 = smul.u32 128, %s17
        $region48: #{bsl_multinet_seblock_ln_forward.3} parent=31 // pred_fallthru
          _
      $region32: #{bsl_multinet_seblock_ln_forward.3} parent=5 // pred_fallthru
        _
      %p304 = scmp.le.s32.totalorder 1, %s17
      %p305 = scmp.lt.s32.totalorder %s17, 21
      %p306 = pnand %p304, %p305
      %p307 = pneg %p306
      // Predicated region
      $region49: #{bsl_multinet_seblock_ln_forward.3} parent=5 // pred_check
        _
      $region50: #{bsl_multinet_seblock_ln_forward.3} parent=5 // pred_check_branch
        %309 = sbr.rel (%p306) target = $region52
      $region51: #{bsl_multinet_seblock_ln_forward.3} parent=5 // pred_region
        %s310 = ssub.s32 %s17, 1
        %s311 = sand.u32 %s77, 1
        %s312 = scalar_lea.sflag [#allocation4], %s311
        %s313 = sand.u32 %s77, 1
        %s314 = smul.addr %s313, 20480
        %s315 = scalar_lea.vmem [#allocation3], %s314
        // Predicated region
        $region53: #{bsl_multinet_seblock_ln_forward.3} parent=51 // pred_check
          %p316 = pneg %p90
        $region54: #{bsl_multinet_seblock_ln_forward.3} parent=51 // pred_check_branch
          %318 = sbr.rel (%p316) target = $region56
        $region55: #{bsl_multinet_seblock_ln_forward.3} parent=51 // pred_region
          %319 = dma.done %s312, 327680
        $region56: #{bsl_multinet_seblock_ln_forward.3} parent=51 // pred_fallthru
          _
        %s320 = smul.u32 8, %s22
        %p321 = scmp.lt.s32.totalorder %s320, 159
        %s322 = scalar_select %p321, %s320, 159
        %s323 = smul.addr %s322, 8
        %s324 = scalar_lea.vmem %s0, %s323
        %p325 = pneg %p43
        %p326 = pneg %p40
        %p327 = pneg %p64
        %p328 = pneg %p61
        %s329 = sand.u32 %s77, 1
        %s330 = scalar_lea.sflag [#allocation4], %s329
        %s331 = sand.u32 %s77, 1
        %s332 = smul.addr %s331, 20480
        %s333 = scalar_lea.vmem [#allocation3], %s332
        %p334 = pneg %p90
        %p335 = pneg %p87
        %s336 = smul.u32 8, %s22
        %p337 = scmp.lt.s32.totalorder %s336, 159
        %s338 = scalar_select %p337, %s336, 159
        %s339 = scalar_lea.vmem %s3, %s338
        %p340 = pneg %p116
        %p341 = pneg %p113
        %s342 = smul.u32 128, %s22
        %p343 = scmp.lt.s32.totalorder %s342, 2559
        %s344 = scalar_select %p343, %s342, 2559
        %s345 = smul.addr %s344, 8
        %s346 = scalar_lea.vmem %s4, %s345
        %p347 = pneg %p142
        %p348 = pneg %p139
        %p349 = pneg %p163
        %p350 = pneg %p160
        %p351 = pneg %p184
        %p352 = pneg %p181
        %p353 = pneg %p205
        %p354 = pneg %p202
        %p355 = pneg %p226
        %p356 = pneg %p223
        %s357 = smul.u32 8, %s22
        %p358 = scmp.lt.s32.totalorder %s357, 159
        %s359 = scalar_select %p358, %s357, 159
        %s360 = smul.addr %s359, 8
        %s361 = scalar_lea.vmem %s0, %s360
        %s362 = smul.u32 8, %s22
        %s363 = smul.u32 8, %s22
        %s364 = smul.u32 8, %s22
        %p365 = scmp.lt.s32.totalorder %s364, 159
        %s366 = scalar_select %p365, %s364, 159
        %s367 = scalar_lea.vmem %s3, %s366
        %s368 = smul.u32 8, %s22
        %s369 = smul.u32 128, %s22
        %p370 = scmp.lt.s32.totalorder %s369, 2559
        %s371 = scalar_select %p370, %s369, 2559
        %s372 = smul.addr %s371, 8
        %s373 = scalar_lea.vmem %s4, %s372
        %s374 = smul.u32 128, %s22
        %p375 = scmp.eq.s32.totalorder %s22, 0
        // Predicated region
        $region57: #{bsl_multinet_seblock_ln_forward.3} parent=51 // pred_check
          %p376 = pneg %p375
        $region58: #{bsl_multinet_seblock_ln_forward.3} parent=51 // pred_check_branch
          %378 = sbr.rel (%p376) target = $region60
        $region59: #{bsl_multinet_seblock_ln_forward.3} parent=51 // pred_region
          %vm379 = vcmask 130048
          %380 = vst.msk [vmem:[#allocation2] sm:$0xff] %vm379, 0.0
        $region60: #{bsl_multinet_seblock_ln_forward.3} parent=51 // pred_fallthru
          _
        %v381 = vld [vmem:[%s1] sm:$0xff]
        %v382 = vld [vmem:[%s1 + $0x8] sm:$0xff]
        %v383 = vld [vmem:[%s1 + $0x10] sm:$0xff]
        %v384 = vld [vmem:[%s1 + $0x18] sm:$0xff]
        %v385 = vld [vmem:[%s1 + $0x20] sm:$0xff]
        %v386 = vld [vmem:[%s1 + $0x28] sm:$0xff]
        %v387 = vld [vmem:[%s1 + $0x30] sm:$0xff]
        %v388 = vld [vmem:[%s1 + $0x38] sm:$0xff]
        %v389 = vld [vmem:[%s1 + $0x40] sm:$0xff]
        %v390 = vld [vmem:[%s1 + $0x48] sm:$0xff]
        %v391 = vld [vmem:[%s1 + $0x50] sm:$0xff]
        %v392 = vld [vmem:[%s1 + $0x58] sm:$0xff]
        %v393 = vld [vmem:[%s1 + $0x60] sm:$0xff]
        %v394 = vld [vmem:[%s1 + $0x68] sm:$0xff]
        %v395 = vld [vmem:[%s1 + $0x70] sm:$0xff]
        %v396 = vld [vmem:[%s1 + $0x78] sm:$0xff]
        %v397 = vld [vmem:[%s1 + $0x80] sm:$0xff]
        %v398 = vld [vmem:[%s1 + $0x88] sm:$0xff]
        %v399 = vld [vmem:[%s1 + $0x90] sm:$0xff]
        %v400 = vld [vmem:[%s1 + $0x98] sm:$0xff]
        %v401 = vld [vmem:[%s315] sm:$0xff]
        %v402 = vld [vmem:[%s315 + $0x8] sm:$0xff]
        %v403 = vld [vmem:[%s315 + $0x10] sm:$0xff]
        %v404 = vld [vmem:[%s315 + $0x18] sm:$0xff]
        %v405 = vld [vmem:[%s315 + $0x20] sm:$0xff]
        %v406 = vld [vmem:[%s315 + $0x28] sm:$0xff]
        %v407 = vld [vmem:[%s315 + $0x30] sm:$0xff]
        %v408 = vld [vmem:[%s315 + $0x38] sm:$0xff]
        %v409 = vld [vmem:[%s315 + $0x40] sm:$0xff]
        %v410 = vld [vmem:[%s315 + $0x48] sm:$0xff]
        %v411 = vld [vmem:[%s315 + $0x50] sm:$0xff]
        %v412 = vld [vmem:[%s315 + $0x58] sm:$0xff]
        %v413 = vld [vmem:[%s315 + $0x60] sm:$0xff]
        %v414 = vld [vmem:[%s315 + $0x68] sm:$0xff]
        %v415 = vld [vmem:[%s315 + $0x70] sm:$0xff]
        %v416 = vld [vmem:[%s315 + $0x78] sm:$0xff]
        %v417 = vld [vmem:[%s315 + $0x80] sm:$0xff]
        %v418 = vld [vmem:[%s315 + $0x88] sm:$0xff]
        %v419 = vld [vmem:[%s315 + $0x90] sm:$0xff]
        %v420 = vld [vmem:[%s315 + $0x98] sm:$0xff]
        %v421 = vld [vmem:[%s315 + $0xa0] sm:$0xff]
        %v422 = vld [vmem:[%s315 + $0xa8] sm:$0xff]
        %v423 = vld [vmem:[%s315 + $0xb0] sm:$0xff]
        %v424 = vld [vmem:[%s315 + $0xb8] sm:$0xff]
        %v425 = vld [vmem:[%s315 + $0xc0] sm:$0xff]
        %v426 = vld [vmem:[%s315 + $0xc8] sm:$0xff]
        %v427 = vld [vmem:[%s315 + $0xd0] sm:$0xff]
        %v428 = vld [vmem:[%s315 + $0xd8] sm:$0xff]
        %v429 = vld [vmem:[%s315 + $0xe0] sm:$0xff]
        %v430 = vld [vmem:[%s315 + $0xe8] sm:$0xff]
        %v431 = vld [vmem:[%s315 + $0xf0] sm:$0xff]
        %v432 = vld [vmem:[%s315 + $0xf8] sm:$0xff]
        %v433 = vld [vmem:[%s315 + $0x100] sm:$0xff]
        %v434 = vld [vmem:[%s315 + $0x108] sm:$0xff]
        %v435 = vld [vmem:[%s315 + $0x110] sm:$0xff]
        %v436 = vld [vmem:[%s315 + $0x118] sm:$0xff]
        %v437 = vld [vmem:[%s315 + $0x120] sm:$0xff]
        %v438 = vld [vmem:[%s315 + $0x128] sm:$0xff]
        %v439 = vld [vmem:[%s315 + $0x130] sm:$0xff]
        %v440 = vld [vmem:[%s315 + $0x138] sm:$0xff]
        %v441 = vld [vmem:[%s315 + $0x140] sm:$0xff]
        %v442 = vld [vmem:[%s315 + $0x148] sm:$0xff]
        %v443 = vld [vmem:[%s315 + $0x150] sm:$0xff]
        %v444 = vld [vmem:[%s315 + $0x158] sm:$0xff]
        %v445 = vld [vmem:[%s315 + $0x160] sm:$0xff]
        %v446 = vld [vmem:[%s315 + $0x168] sm:$0xff]
        %v447 = vld [vmem:[%s315 + $0x170] sm:$0xff]
        %v448 = vld [vmem:[%s315 + $0x178] sm:$0xff]
        %v449 = vld [vmem:[%s315 + $0x180] sm:$0xff]
        %v450 = vld [vmem:[%s315 + $0x188] sm:$0xff]
        %v451 = vld [vmem:[%s315 + $0x190] sm:$0xff]
        %v452 = vld [vmem:[%s315 + $0x198] sm:$0xff]
        %v453 = vld [vmem:[%s315 + $0x1a0] sm:$0xff]
        %v454 = vld [vmem:[%s315 + $0x1a8] sm:$0xff]
        %v455 = vld [vmem:[%s315 + $0x1b0] sm:$0xff]
        %v456 = vld [vmem:[%s315 + $0x1b8] sm:$0xff]
        %v457 = vld [vmem:[%s315 + $0x1c0] sm:$0xff]
        %v458 = vld [vmem:[%s315 + $0x1c8] sm:$0xff]
        %v459 = vld [vmem:[%s315 + $0x1d0] sm:$0xff]
        %v460 = vld [vmem:[%s315 + $0x1d8] sm:$0xff]
        %v461 = vld [vmem:[%s315 + $0x1e0] sm:$0xff]
        %v462 = vld [vmem:[%s315 + $0x1e8] sm:$0xff]
        %v463 = vld [vmem:[%s315 + $0x1f0] sm:$0xff]
        %v464 = vld [vmem:[%s315 + $0x1f8] sm:$0xff]
        %v465 = vld [vmem:[%s315 + $0x200] sm:$0xff]
        %v466 = vld [vmem:[%s315 + $0x208] sm:$0xff]
        %v467 = vld [vmem:[%s315 + $0x210] sm:$0xff]
        %v468 = vld [vmem:[%s315 + $0x218] sm:$0xff]
        %v469 = vld [vmem:[%s315 + $0x220] sm:$0xff]
        %v470 = vld [vmem:[%s315 + $0x228] sm:$0xff]
        %v471 = vld [vmem:[%s315 + $0x230] sm:$0xff]
        %v472 = vld [vmem:[%s315 + $0x238] sm:$0xff]
        %v473 = vld [vmem:[%s315 + $0x240] sm:$0xff]
        %v474 = vld [vmem:[%s315 + $0x248] sm:$0xff]
        %v475 = vld [vmem:[%s315 + $0x250] sm:$0xff]
        %v476 = vld [vmem:[%s315 + $0x258] sm:$0xff]
        %v477 = vld [vmem:[%s315 + $0x260] sm:$0xff]
        %v478 = vld [vmem:[%s315 + $0x268] sm:$0xff]
        %v479 = vld [vmem:[%s315 + $0x270] sm:$0xff]
        %v480 = vld [vmem:[%s315 + $0x278] sm:$0xff]
        %v481 = vld [vmem:[%s315 + $0x280] sm:$0xff]
        %v482 = vld [vmem:[%s315 + $0x288] sm:$0xff]
        %v483 = vld [vmem:[%s315 + $0x290] sm:$0xff]
        %v484 = vld [vmem:[%s315 + $0x298] sm:$0xff]
        %v485 = vld [vmem:[%s315 + $0x2a0] sm:$0xff]
        %v486 = vld [vmem:[%s315 + $0x2a8] sm:$0xff]
        %v487 = vld [vmem:[%s315 + $0x2b0] sm:$0xff]
        %v488 = vld [vmem:[%s315 + $0x2b8] sm:$0xff]
        %v489 = vld [vmem:[%s315 + $0x2c0] sm:$0xff]
        %v490 = vld [vmem:[%s315 + $0x2c8] sm:$0xff]
        %v491 = vld [vmem:[%s315 + $0x2d0] sm:$0xff]
        %v492 = vld [vmem:[%s315 + $0x2d8] sm:$0xff]
        %v493 = vld [vmem:[%s315 + $0x2e0] sm:$0xff]
        %v494 = vld [vmem:[%s315 + $0x2e8] sm:$0xff]
        %v495 = vld [vmem:[%s315 + $0x2f0] sm:$0xff]
        %v496 = vld [vmem:[%s315 + $0x2f8] sm:$0xff]
        %v497 = vld [vmem:[%s315 + $0x300] sm:$0xff]
        %v498 = vld [vmem:[%s315 + $0x308] sm:$0xff]
        %v499 = vld [vmem:[%s315 + $0x310] sm:$0xff]
        %v500 = vld [vmem:[%s315 + $0x318] sm:$0xff]
        %v501 = vld [vmem:[%s315 + $0x320] sm:$0xff]
        %v502 = vld [vmem:[%s315 + $0x328] sm:$0xff]
        %v503 = vld [vmem:[%s315 + $0x330] sm:$0xff]
        %v504 = vld [vmem:[%s315 + $0x338] sm:$0xff]
        %v505 = vld [vmem:[%s315 + $0x340] sm:$0xff]
        %v506 = vld [vmem:[%s315 + $0x348] sm:$0xff]
        %v507 = vld [vmem:[%s315 + $0x350] sm:$0xff]
        %v508 = vld [vmem:[%s315 + $0x358] sm:$0xff]
        %v509 = vld [vmem:[%s315 + $0x360] sm:$0xff]
        %v510 = vld [vmem:[%s315 + $0x368] sm:$0xff]
        %v511 = vld [vmem:[%s315 + $0x370] sm:$0xff]
        %v512 = vld [vmem:[%s315 + $0x378] sm:$0xff]
        %v513 = vld [vmem:[%s315 + $0x380] sm:$0xff]
        %v514 = vld [vmem:[%s315 + $0x388] sm:$0xff]
        %v515 = vld [vmem:[%s315 + $0x390] sm:$0xff]
        %v516 = vld [vmem:[%s315 + $0x398] sm:$0xff]
        %v517 = vld [vmem:[%s315 + $0x3a0] sm:$0xff]
        %v518 = vld [vmem:[%s315 + $0x3a8] sm:$0xff]
        %v519 = vld [vmem:[%s315 + $0x3b0] sm:$0xff]
        %v520 = vld [vmem:[%s315 + $0x3b8] sm:$0xff]
        %v521 = vld [vmem:[%s315 + $0x3c0] sm:$0xff]
        %v522 = vld [vmem:[%s315 + $0x3c8] sm:$0xff]
        %v523 = vld [vmem:[%s315 + $0x3d0] sm:$0xff]
        %v524 = vld [vmem:[%s315 + $0x3d8] sm:$0xff]
        %v525 = vld [vmem:[%s315 + $0x3e0] sm:$0xff]
        %v526 = vld [vmem:[%s315 + $0x3e8] sm:$0xff]
        %v527 = vld [vmem:[%s315 + $0x3f0] sm:$0xff]
        %v528 = vld [vmem:[%s315 + $0x3f8] sm:$0xff]
        %v529 = vld [vmem:[%s315 + $0x400] sm:$0xff]
        %v530 = vld [vmem:[%s315 + $0x408] sm:$0xff]
        %v531 = vld [vmem:[%s315 + $0x410] sm:$0xff]
        %v532 = vld [vmem:[%s315 + $0x418] sm:$0xff]
        %v533 = vld [vmem:[%s315 + $0x420] sm:$0xff]
        %v534 = vld [vmem:[%s315 + $0x428] sm:$0xff]
        %v535 = vld [vmem:[%s315 + $0x430] sm:$0xff]
        %v536 = vld [vmem:[%s315 + $0x438] sm:$0xff]
        %v537 = vld [vmem:[%s315 + $0x440] sm:$0xff]
        %v538 = vld [vmem:[%s315 + $0x448] sm:$0xff]
        %v539 = vld [vmem:[%s315 + $0x450] sm:$0xff]
        %v540 = vld [vmem:[%s315 + $0x458] sm:$0xff]
        %v541 = vld [vmem:[%s315 + $0x460] sm:$0xff]
        %v542 = vld [vmem:[%s315 + $0x468] sm:$0xff]
        %v543 = vld [vmem:[%s315 + $0x470] sm:$0xff]
        %v544 = vld [vmem:[%s315 + $0x478] sm:$0xff]
        %v545 = vld [vmem:[%s315 + $0x480] sm:$0xff]
        %v546 = vld [vmem:[%s315 + $0x488] sm:$0xff]
        %v547 = vld [vmem:[%s315 + $0x490] sm:$0xff]
        %v548 = vld [vmem:[%s315 + $0x498] sm:$0xff]
        %v549 = vld [vmem:[%s315 + $0x4a0] sm:$0xff]
        %v550 = vld [vmem:[%s315 + $0x4a8] sm:$0xff]
        %v551 = vld [vmem:[%s315 + $0x4b0] sm:$0xff]
        %v552 = vld [vmem:[%s315 + $0x4b8] sm:$0xff]
        %v553 = vld [vmem:[%s315 + $0x4c0] sm:$0xff]
        %v554 = vld [vmem:[%s315 + $0x4c8] sm:$0xff]
        %v555 = vld [vmem:[%s315 + $0x4d0] sm:$0xff]
        %v556 = vld [vmem:[%s315 + $0x4d8] sm:$0xff]
        %v557 = vld [vmem:[%s315 + $0x4e0] sm:$0xff]
        %v558 = vld [vmem:[%s315 + $0x4e8] sm:$0xff]
        %v559 = vld [vmem:[%s315 + $0x4f0] sm:$0xff]
        %v560 = vld [vmem:[%s315 + $0x4f8] sm:$0xff]
        %v561 = vld [vmem:[%s315 + $0x500] sm:$0xff]
        %v562 = vld [vmem:[%s315 + $0x508] sm:$0xff]
        %v563 = vld [vmem:[%s315 + $0x510] sm:$0xff]
        %v564 = vld [vmem:[%s315 + $0x518] sm:$0xff]
        %v565 = vld [vmem:[%s315 + $0x520] sm:$0xff]
        %v566 = vld [vmem:[%s315 + $0x528] sm:$0xff]
        %v567 = vld [vmem:[%s315 + $0x530] sm:$0xff]
        %v568 = vld [vmem:[%s315 + $0x538] sm:$0xff]
        %v569 = vld [vmem:[%s315 + $0x540] sm:$0xff]
        %v570 = vld [vmem:[%s315 + $0x548] sm:$0xff]
        %v571 = vld [vmem:[%s315 + $0x550] sm:$0xff]
        %v572 = vld [vmem:[%s315 + $0x558] sm:$0xff]
        %v573 = vld [vmem:[%s315 + $0x560] sm:$0xff]
        %v574 = vld [vmem:[%s315 + $0x568] sm:$0xff]
        %v575 = vld [vmem:[%s315 + $0x570] sm:$0xff]
        %v576 = vld [vmem:[%s315 + $0x578] sm:$0xff]
        %v577 = vld [vmem:[%s315 + $0x580] sm:$0xff]
        %v578 = vld [vmem:[%s315 + $0x588] sm:$0xff]
        %v579 = vld [vmem:[%s315 + $0x590] sm:$0xff]
        %v580 = vld [vmem:[%s315 + $0x598] sm:$0xff]
        %v581 = vld [vmem:[%s315 + $0x5a0] sm:$0xff]
        %v582 = vld [vmem:[%s315 + $0x5a8] sm:$0xff]
        %v583 = vld [vmem:[%s315 + $0x5b0] sm:$0xff]
        %v584 = vld [vmem:[%s315 + $0x5b8] sm:$0xff]
        %v585 = vld [vmem:[%s315 + $0x5c0] sm:$0xff]
        %v586 = vld [vmem:[%s315 + $0x5c8] sm:$0xff]
        %v587 = vld [vmem:[%s315 + $0x5d0] sm:$0xff]
        %v588 = vld [vmem:[%s315 + $0x5d8] sm:$0xff]
        %v589 = vld [vmem:[%s315 + $0x5e0] sm:$0xff]
        %v590 = vld [vmem:[%s315 + $0x5e8] sm:$0xff]
        %v591 = vld [vmem:[%s315 + $0x5f0] sm:$0xff]
        %v592 = vld [vmem:[%s315 + $0x5f8] sm:$0xff]
        %v593 = vld [vmem:[%s315 + $0x600] sm:$0xff]
        %v594 = vld [vmem:[%s315 + $0x608] sm:$0xff]
        %v595 = vld [vmem:[%s315 + $0x610] sm:$0xff]
        %v596 = vld [vmem:[%s315 + $0x618] sm:$0xff]
        %v597 = vld [vmem:[%s315 + $0x620] sm:$0xff]
        %v598 = vld [vmem:[%s315 + $0x628] sm:$0xff]
        %v599 = vld [vmem:[%s315 + $0x630] sm:$0xff]
        %v600 = vld [vmem:[%s315 + $0x638] sm:$0xff]
        %v601 = vld [vmem:[%s315 + $0x640] sm:$0xff]
        %v602 = vld [vmem:[%s315 + $0x648] sm:$0xff]
        %v603 = vld [vmem:[%s315 + $0x650] sm:$0xff]
        %v604 = vld [vmem:[%s315 + $0x658] sm:$0xff]
        %v605 = vld [vmem:[%s315 + $0x660] sm:$0xff]
        %v606 = vld [vmem:[%s315 + $0x668] sm:$0xff]
        %v607 = vld [vmem:[%s315 + $0x670] sm:$0xff]
        %v608 = vld [vmem:[%s315 + $0x678] sm:$0xff]
        %v609 = vld [vmem:[%s315 + $0x680] sm:$0xff]
        %v610 = vld [vmem:[%s315 + $0x688] sm:$0xff]
        %v611 = vld [vmem:[%s315 + $0x690] sm:$0xff]
        %v612 = vld [vmem:[%s315 + $0x698] sm:$0xff]
        %v613 = vld [vmem:[%s315 + $0x6a0] sm:$0xff]
        %v614 = vld [vmem:[%s315 + $0x6a8] sm:$0xff]
        %v615 = vld [vmem:[%s315 + $0x6b0] sm:$0xff]
        %v616 = vld [vmem:[%s315 + $0x6b8] sm:$0xff]
        %v617 = vld [vmem:[%s315 + $0x6c0] sm:$0xff]
        %v618 = vld [vmem:[%s315 + $0x6c8] sm:$0xff]
        %v619 = vld [vmem:[%s315 + $0x6d0] sm:$0xff]
        %v620 = vld [vmem:[%s315 + $0x6d8] sm:$0xff]
        %v621 = vld [vmem:[%s315 + $0x6e0] sm:$0xff]
        %v622 = vld [vmem:[%s315 + $0x6e8] sm:$0xff]
        %v623 = vld [vmem:[%s315 + $0x6f0] sm:$0xff]
        %v624 = vld [vmem:[%s315 + $0x6f8] sm:$0xff]
        %v625 = vld [vmem:[%s315 + $0x700] sm:$0xff]
        %v626 = vld [vmem:[%s315 + $0x708] sm:$0xff]
        %v627 = vld [vmem:[%s315 + $0x710] sm:$0xff]
        %v628 = vld [vmem:[%s315 + $0x718] sm:$0xff]
        %v629 = vld [vmem:[%s315 + $0x720] sm:$0xff]
        %v630 = vld [vmem:[%s315 + $0x728] sm:$0xff]
        %v631 = vld [vmem:[%s315 + $0x730] sm:$0xff]
        %v632 = vld [vmem:[%s315 + $0x738] sm:$0xff]
        %v633 = vld [vmem:[%s315 + $0x740] sm:$0xff]
        %v634 = vld [vmem:[%s315 + $0x748] sm:$0xff]
        %v635 = vld [vmem:[%s315 + $0x750] sm:$0xff]
        %v636 = vld [vmem:[%s315 + $0x758] sm:$0xff]
        %v637 = vld [vmem:[%s315 + $0x760] sm:$0xff]
        %v638 = vld [vmem:[%s315 + $0x768] sm:$0xff]
        %v639 = vld [vmem:[%s315 + $0x770] sm:$0xff]
        %v640 = vld [vmem:[%s315 + $0x778] sm:$0xff]
        %v641 = vld [vmem:[%s315 + $0x780] sm:$0xff]
        %v642 = vld [vmem:[%s315 + $0x788] sm:$0xff]
        %v643 = vld [vmem:[%s315 + $0x790] sm:$0xff]
        %v644 = vld [vmem:[%s315 + $0x798] sm:$0xff]
        %v645 = vld [vmem:[%s315 + $0x7a0] sm:$0xff]
        %v646 = vld [vmem:[%s315 + $0x7a8] sm:$0xff]
        %v647 = vld [vmem:[%s315 + $0x7b0] sm:$0xff]
        %v648 = vld [vmem:[%s315 + $0x7b8] sm:$0xff]
        %v649 = vld [vmem:[%s315 + $0x7c0] sm:$0xff]
        %v650 = vld [vmem:[%s315 + $0x7c8] sm:$0xff]
        %v651 = vld [vmem:[%s315 + $0x7d0] sm:$0xff]
        %v652 = vld [vmem:[%s315 + $0x7d8] sm:$0xff]
        %v653 = vld [vmem:[%s315 + $0x7e0] sm:$0xff]
        %v654 = vld [vmem:[%s315 + $0x7e8] sm:$0xff]
        %v655 = vld [vmem:[%s315 + $0x7f0] sm:$0xff]
        %v656 = vld [vmem:[%s315 + $0x7f8] sm:$0xff]
        %v657 = vld [vmem:[%s315 + $0x800] sm:$0xff]
        %v658 = vld [vmem:[%s315 + $0x808] sm:$0xff]
        %v659 = vld [vmem:[%s315 + $0x810] sm:$0xff]
        %v660 = vld [vmem:[%s315 + $0x818] sm:$0xff]
        %v661 = vld [vmem:[%s315 + $0x820] sm:$0xff]
        %v662 = vld [vmem:[%s315 + $0x828] sm:$0xff]
        %v663 = vld [vmem:[%s315 + $0x830] sm:$0xff]
        %v664 = vld [vmem:[%s315 + $0x838] sm:$0xff]
        %v665 = vld [vmem:[%s315 + $0x840] sm:$0xff]
        %v666 = vld [vmem:[%s315 + $0x848] sm:$0xff]
        %v667 = vld [vmem:[%s315 + $0x850] sm:$0xff]
        %v668 = vld [vmem:[%s315 + $0x858] sm:$0xff]
        %v669 = vld [vmem:[%s315 + $0x860] sm:$0xff]
        %v670 = vld [vmem:[%s315 + $0x868] sm:$0xff]
        %v671 = vld [vmem:[%s315 + $0x870] sm:$0xff]
        %v672 = vld [vmem:[%s315 + $0x878] sm:$0xff]
        %v673 = vld [vmem:[%s315 + $0x880] sm:$0xff]
        %v674 = vld [vmem:[%s315 + $0x888] sm:$0xff]
        %v675 = vld [vmem:[%s315 + $0x890] sm:$0xff]
        %v676 = vld [vmem:[%s315 + $0x898] sm:$0xff]
        %v677 = vld [vmem:[%s315 + $0x8a0] sm:$0xff]
        %v678 = vld [vmem:[%s315 + $0x8a8] sm:$0xff]
        %v679 = vld [vmem:[%s315 + $0x8b0] sm:$0xff]
        %v680 = vld [vmem:[%s315 + $0x8b8] sm:$0xff]
        %v681 = vld [vmem:[%s315 + $0x8c0] sm:$0xff]
        %v682 = vld [vmem:[%s315 + $0x8c8] sm:$0xff]
        %v683 = vld [vmem:[%s315 + $0x8d0] sm:$0xff]
        %v684 = vld [vmem:[%s315 + $0x8d8] sm:$0xff]
        %v685 = vld [vmem:[%s315 + $0x8e0] sm:$0xff]
        %v686 = vld [vmem:[%s315 + $0x8e8] sm:$0xff]
        %v687 = vld [vmem:[%s315 + $0x8f0] sm:$0xff]
        %v688 = vld [vmem:[%s315 + $0x8f8] sm:$0xff]
        %v689 = vld [vmem:[%s315 + $0x900] sm:$0xff]
        %v690 = vld [vmem:[%s315 + $0x908] sm:$0xff]
        %v691 = vld [vmem:[%s315 + $0x910] sm:$0xff]
        %v692 = vld [vmem:[%s315 + $0x918] sm:$0xff]
        %v693 = vld [vmem:[%s315 + $0x920] sm:$0xff]
        %v694 = vld [vmem:[%s315 + $0x928] sm:$0xff]
        %v695 = vld [vmem:[%s315 + $0x930] sm:$0xff]
        %v696 = vld [vmem:[%s315 + $0x938] sm:$0xff]
        %v697 = vld [vmem:[%s315 + $0x940] sm:$0xff]
        %v698 = vld [vmem:[%s315 + $0x948] sm:$0xff]
        %v699 = vld [vmem:[%s315 + $0x950] sm:$0xff]
        %v700 = vld [vmem:[%s315 + $0x958] sm:$0xff]
        %v701 = vld [vmem:[%s315 + $0x960] sm:$0xff]
        %v702 = vld [vmem:[%s315 + $0x968] sm:$0xff]
        %v703 = vld [vmem:[%s315 + $0x970] sm:$0xff]
        %v704 = vld [vmem:[%s315 + $0x978] sm:$0xff]
        %v705 = vld [vmem:[%s315 + $0x980] sm:$0xff]
        %v706 = vld [vmem:[%s315 + $0x988] sm:$0xff]
        %v707 = vld [vmem:[%s315 + $0x990] sm:$0xff]
        %v708 = vld [vmem:[%s315 + $0x998] sm:$0xff]
        %v709 = vld [vmem:[%s315 + $0x9a0] sm:$0xff]
        %v710 = vld [vmem:[%s315 + $0x9a8] sm:$0xff]
        %v711 = vld [vmem:[%s315 + $0x9b0] sm:$0xff]
        %v712 = vld [vmem:[%s315 + $0x9b8] sm:$0xff]
        %v713 = vld [vmem:[%s315 + $0x9c0] sm:$0xff]
        %v714 = vld [vmem:[%s315 + $0x9c8] sm:$0xff]
        %v715 = vld [vmem:[%s315 + $0x9d0] sm:$0xff]
        %v716 = vld [vmem:[%s315 + $0x9d8] sm:$0xff]
        %v717 = vld [vmem:[%s315 + $0x9e0] sm:$0xff]
        %v718 = vld [vmem:[%s315 + $0x9e8] sm:$0xff]
        %v719 = vld [vmem:[%s315 + $0x9f0] sm:$0xff]
        %v720 = vld [vmem:[%s315 + $0x9f8] sm:$0xff]
        %v721 = vld [vmem:[%s315 + $0xa00] sm:$0xff]
        %v722 = vld [vmem:[%s315 + $0xa08] sm:$0xff]
        %v723 = vld [vmem:[%s315 + $0xa10] sm:$0xff]
        %v724 = vld [vmem:[%s315 + $0xa18] sm:$0xff]
        %v725 = vld [vmem:[%s315 + $0xa20] sm:$0xff]
        %v726 = vld [vmem:[%s315 + $0xa28] sm:$0xff]
        %v727 = vld [vmem:[%s315 + $0xa30] sm:$0xff]
        %v728 = vld [vmem:[%s315 + $0xa38] sm:$0xff]
        %v729 = vld [vmem:[%s315 + $0xa40] sm:$0xff]
        %v730 = vld [vmem:[%s315 + $0xa48] sm:$0xff]
        %v731 = vld [vmem:[%s315 + $0xa50] sm:$0xff]
        %v732 = vld [vmem:[%s315 + $0xa58] sm:$0xff]
        %v733 = vld [vmem:[%s315 + $0xa60] sm:$0xff]
        %v734 = vld [vmem:[%s315 + $0xa68] sm:$0xff]
        %v735 = vld [vmem:[%s315 + $0xa70] sm:$0xff]
        %v736 = vld [vmem:[%s315 + $0xa78] sm:$0xff]
        %v737 = vld [vmem:[%s315 + $0xa80] sm:$0xff]
        %v738 = vld [vmem:[%s315 + $0xa88] sm:$0xff]
        %v739 = vld [vmem:[%s315 + $0xa90] sm:$0xff]
        %v740 = vld [vmem:[%s315 + $0xa98] sm:$0xff]
        %v741 = vld [vmem:[%s315 + $0xaa0] sm:$0xff]
        %v742 = vld [vmem:[%s315 + $0xaa8] sm:$0xff]
        %v743 = vld [vmem:[%s315 + $0xab0] sm:$0xff]
        %v744 = vld [vmem:[%s315 + $0xab8] sm:$0xff]
        %v745 = vld [vmem:[%s315 + $0xac0] sm:$0xff]
        %v746 = vld [vmem:[%s315 + $0xac8] sm:$0xff]
        %v747 = vld [vmem:[%s315 + $0xad0] sm:$0xff]
        %v748 = vld [vmem:[%s315 + $0xad8] sm:$0xff]
        %v749 = vld [vmem:[%s315 + $0xae0] sm:$0xff]
        %v750 = vld [vmem:[%s315 + $0xae8] sm:$0xff]
        %v751 = vld [vmem:[%s315 + $0xaf0] sm:$0xff]
        %v752 = vld [vmem:[%s315 + $0xaf8] sm:$0xff]
        %v753 = vld [vmem:[%s315 + $0xb00] sm:$0xff]
        %v754 = vld [vmem:[%s315 + $0xb08] sm:$0xff]
        %v755 = vld [vmem:[%s315 + $0xb10] sm:$0xff]
        %v756 = vld [vmem:[%s315 + $0xb18] sm:$0xff]
        %v757 = vld [vmem:[%s315 + $0xb20] sm:$0xff]
        %v758 = vld [vmem:[%s315 + $0xb28] sm:$0xff]
        %v759 = vld [vmem:[%s315 + $0xb30] sm:$0xff]
        %v760 = vld [vmem:[%s315 + $0xb38] sm:$0xff]
        %v761 = vld [vmem:[%s315 + $0xb40] sm:$0xff]
        %v762 = vld [vmem:[%s315 + $0xb48] sm:$0xff]
        %v763 = vld [vmem:[%s315 + $0xb50] sm:$0xff]
        %v764 = vld [vmem:[%s315 + $0xb58] sm:$0xff]
        %v765 = vld [vmem:[%s315 + $0xb60] sm:$0xff]
        %v766 = vld [vmem:[%s315 + $0xb68] sm:$0xff]
        %v767 = vld [vmem:[%s315 + $0xb70] sm:$0xff]
        %v768 = vld [vmem:[%s315 + $0xb78] sm:$0xff]
        %v769 = vld [vmem:[%s315 + $0xb80] sm:$0xff]
        %v770 = vld [vmem:[%s315 + $0xb88] sm:$0xff]
        %v771 = vld [vmem:[%s315 + $0xb90] sm:$0xff]
        %v772 = vld [vmem:[%s315 + $0xb98] sm:$0xff]
        %v773 = vld [vmem:[%s315 + $0xba0] sm:$0xff]
        %v774 = vld [vmem:[%s315 + $0xba8] sm:$0xff]
        %v775 = vld [vmem:[%s315 + $0xbb0] sm:$0xff]
        %v776 = vld [vmem:[%s315 + $0xbb8] sm:$0xff]
        %v777 = vld [vmem:[%s315 + $0xbc0] sm:$0xff]
        %v778 = vld [vmem:[%s315 + $0xbc8] sm:$0xff]
        %v779 = vld [vmem:[%s315 + $0xbd0] sm:$0xff]
        %v780 = vld [vmem:[%s315 + $0xbd8] sm:$0xff]
        %v781 = vld [vmem:[%s315 + $0xbe0] sm:$0xff]
        %v782 = vld [vmem:[%s315 + $0xbe8] sm:$0xff]
        %v783 = vld [vmem:[%s315 + $0xbf0] sm:$0xff]
        %v784 = vld [vmem:[%s315 + $0xbf8] sm:$0xff]
        %v785 = vld [vmem:[%s315 + $0xc00] sm:$0xff]
        %v786 = vld [vmem:[%s315 + $0xc08] sm:$0xff]
        %v787 = vld [vmem:[%s315 + $0xc10] sm:$0xff]
        %v788 = vld [vmem:[%s315 + $0xc18] sm:$0xff]
        %v789 = vld [vmem:[%s315 + $0xc20] sm:$0xff]
        %v790 = vld [vmem:[%s315 + $0xc28] sm:$0xff]
        %v791 = vld [vmem:[%s315 + $0xc30] sm:$0xff]
        %v792 = vld [vmem:[%s315 + $0xc38] sm:$0xff]
        %v793 = vld [vmem:[%s315 + $0xc40] sm:$0xff]
        %v794 = vld [vmem:[%s315 + $0xc48] sm:$0xff]
        %v795 = vld [vmem:[%s315 + $0xc50] sm:$0xff]
        %v796 = vld [vmem:[%s315 + $0xc58] sm:$0xff]
        %v797 = vld [vmem:[%s315 + $0xc60] sm:$0xff]
        %v798 = vld [vmem:[%s315 + $0xc68] sm:$0xff]
        %v799 = vld [vmem:[%s315 + $0xc70] sm:$0xff]
        %v800 = vld [vmem:[%s315 + $0xc78] sm:$0xff]
        %v801 = vld [vmem:[%s315 + $0xc80] sm:$0xff]
        %v802 = vld [vmem:[%s315 + $0xc88] sm:$0xff]
        %v803 = vld [vmem:[%s315 + $0xc90] sm:$0xff]
        %v804 = vld [vmem:[%s315 + $0xc98] sm:$0xff]
        %v805 = vld [vmem:[%s315 + $0xca0] sm:$0xff]
        %v806 = vld [vmem:[%s315 + $0xca8] sm:$0xff]
        %v807 = vld [vmem:[%s315 + $0xcb0] sm:$0xff]
        %v808 = vld [vmem:[%s315 + $0xcb8] sm:$0xff]
        %v809 = vld [vmem:[%s315 + $0xcc0] sm:$0xff]
        %v810 = vld [vmem:[%s315 + $0xcc8] sm:$0xff]
        %v811 = vld [vmem:[%s315 + $0xcd0] sm:$0xff]
        %v812 = vld [vmem:[%s315 + $0xcd8] sm:$0xff]
        %v813 = vld [vmem:[%s315 + $0xce0] sm:$0xff]
        %v814 = vld [vmem:[%s315 + $0xce8] sm:$0xff]
        %v815 = vld [vmem:[%s315 + $0xcf0] sm:$0xff]
        %v816 = vld [vmem:[%s315 + $0xcf8] sm:$0xff]
        %v817 = vld [vmem:[%s315 + $0xd00] sm:$0xff]
        %v818 = vld [vmem:[%s315 + $0xd08] sm:$0xff]
        %v819 = vld [vmem:[%s315 + $0xd10] sm:$0xff]
        %v820 = vld [vmem:[%s315 + $0xd18] sm:$0xff]
        %v821 = vld [vmem:[%s315 + $0xd20] sm:$0xff]
        %v822 = vld [vmem:[%s315 + $0xd28] sm:$0xff]
        %v823 = vld [vmem:[%s315 + $0xd30] sm:$0xff]
        %v824 = vld [vmem:[%s315 + $0xd38] sm:$0xff]
        %v825 = vld [vmem:[%s315 + $0xd40] sm:$0xff]
        %v826 = vld [vmem:[%s315 + $0xd48] sm:$0xff]
        %v827 = vld [vmem:[%s315 + $0xd50] sm:$0xff]
        %v828 = vld [vmem:[%s315 + $0xd58] sm:$0xff]
        %v829 = vld [vmem:[%s315 + $0xd60] sm:$0xff]
        %v830 = vld [vmem:[%s315 + $0xd68] sm:$0xff]
        %v831 = vld [vmem:[%s315 + $0xd70] sm:$0xff]
        %v832 = vld [vmem:[%s315 + $0xd78] sm:$0xff]
        %v833 = vld [vmem:[%s315 + $0xd80] sm:$0xff]
        %v834 = vld [vmem:[%s315 + $0xd88] sm:$0xff]
        %v835 = vld [vmem:[%s315 + $0xd90] sm:$0xff]
        %v836 = vld [vmem:[%s315 + $0xd98] sm:$0xff]
        %v837 = vld [vmem:[%s315 + $0xda0] sm:$0xff]
        %v838 = vld [vmem:[%s315 + $0xda8] sm:$0xff]
        %v839 = vld [vmem:[%s315 + $0xdb0] sm:$0xff]
        %v840 = vld [vmem:[%s315 + $0xdb8] sm:$0xff]
        %v841 = vld [vmem:[%s315 + $0xdc0] sm:$0xff]
        %v842 = vld [vmem:[%s315 + $0xdc8] sm:$0xff]
        %v843 = vld [vmem:[%s315 + $0xdd0] sm:$0xff]
        %v844 = vld [vmem:[%s315 + $0xdd8] sm:$0xff]
        %v845 = vld [vmem:[%s315 + $0xde0] sm:$0xff]
        %v846 = vld [vmem:[%s315 + $0xde8] sm:$0xff]
        %v847 = vld [vmem:[%s315 + $0xdf0] sm:$0xff]
        %v848 = vld [vmem:[%s315 + $0xdf8] sm:$0xff]
        %v849 = vld [vmem:[%s315 + $0xe00] sm:$0xff]
        %v850 = vld [vmem:[%s315 + $0xe08] sm:$0xff]
        %v851 = vld [vmem:[%s315 + $0xe10] sm:$0xff]
        %v852 = vld [vmem:[%s315 + $0xe18] sm:$0xff]
        %v853 = vld [vmem:[%s315 + $0xe20] sm:$0xff]
        %v854 = vld [vmem:[%s315 + $0xe28] sm:$0xff]
        %v855 = vld [vmem:[%s315 + $0xe30] sm:$0xff]
        %v856 = vld [vmem:[%s315 + $0xe38] sm:$0xff]
        %v857 = vld [vmem:[%s315 + $0xe40] sm:$0xff]
        %v858 = vld [vmem:[%s315 + $0xe48] sm:$0xff]
        %v859 = vld [vmem:[%s315 + $0xe50] sm:$0xff]
        %v860 = vld [vmem:[%s315 + $0xe58] sm:$0xff]
        %v861 = vld [vmem:[%s315 + $0xe60] sm:$0xff]
        %v862 = vld [vmem:[%s315 + $0xe68] sm:$0xff]
        %v863 = vld [vmem:[%s315 + $0xe70] sm:$0xff]
        %v864 = vld [vmem:[%s315 + $0xe78] sm:$0xff]
        %v865 = vld [vmem:[%s315 + $0xe80] sm:$0xff]
        %v866 = vld [vmem:[%s315 + $0xe88] sm:$0xff]
        %v867 = vld [vmem:[%s315 + $0xe90] sm:$0xff]
        %v868 = vld [vmem:[%s315 + $0xe98] sm:$0xff]
        %v869 = vld [vmem:[%s315 + $0xea0] sm:$0xff]
        %v870 = vld [vmem:[%s315 + $0xea8] sm:$0xff]
        %v871 = vld [vmem:[%s315 + $0xeb0] sm:$0xff]
        %v872 = vld [vmem:[%s315 + $0xeb8] sm:$0xff]
        %v873 = vld [vmem:[%s315 + $0xec0] sm:$0xff]
        %v874 = vld [vmem:[%s315 + $0xec8] sm:$0xff]
        %v875 = vld [vmem:[%s315 + $0xed0] sm:$0xff]
        %v876 = vld [vmem:[%s315 + $0xed8] sm:$0xff]
        %v877 = vld [vmem:[%s315 + $0xee0] sm:$0xff]
        %v878 = vld [vmem:[%s315 + $0xee8] sm:$0xff]
        %v879 = vld [vmem:[%s315 + $0xef0] sm:$0xff]
        %v880 = vld [vmem:[%s315 + $0xef8] sm:$0xff]
        %v881 = vld [vmem:[%s315 + $0xf00] sm:$0xff]
        %v882 = vld [vmem:[%s315 + $0xf08] sm:$0xff]
        %v883 = vld [vmem:[%s315 + $0xf10] sm:$0xff]
        %v884 = vld [vmem:[%s315 + $0xf18] sm:$0xff]
        %v885 = vld [vmem:[%s315 + $0xf20] sm:$0xff]
        %v886 = vld [vmem:[%s315 + $0xf28] sm:$0xff]
        %v887 = vld [vmem:[%s315 + $0xf30] sm:$0xff]
        %v888 = vld [vmem:[%s315 + $0xf38] sm:$0xff]
        %v889 = vld [vmem:[%s315 + $0xf40] sm:$0xff]
        %v890 = vld [vmem:[%s315 + $0xf48] sm:$0xff]
        %v891 = vld [vmem:[%s315 + $0xf50] sm:$0xff]
        %v892 = vld [vmem:[%s315 + $0xf58] sm:$0xff]
        %v893 = vld [vmem:[%s315 + $0xf60] sm:$0xff]
        %v894 = vld [vmem:[%s315 + $0xf68] sm:$0xff]
        %v895 = vld [vmem:[%s315 + $0xf70] sm:$0xff]
        %v896 = vld [vmem:[%s315 + $0xf78] sm:$0xff]
        %v897 = vld [vmem:[%s315 + $0xf80] sm:$0xff]
        %v898 = vld [vmem:[%s315 + $0xf88] sm:$0xff]
        %v899 = vld [vmem:[%s315 + $0xf90] sm:$0xff]
        %v900 = vld [vmem:[%s315 + $0xf98] sm:$0xff]
        %v901 = vld [vmem:[%s315 + $0xfa0] sm:$0xff]
        %v902 = vld [vmem:[%s315 + $0xfa8] sm:$0xff]
        %v903 = vld [vmem:[%s315 + $0xfb0] sm:$0xff]
        %v904 = vld [vmem:[%s315 + $0xfb8] sm:$0xff]
        %v905 = vld [vmem:[%s315 + $0xfc0] sm:$0xff]
        %v906 = vld [vmem:[%s315 + $0xfc8] sm:$0xff]
        %v907 = vld [vmem:[%s315 + $0xfd0] sm:$0xff]
        %v908 = vld [vmem:[%s315 + $0xfd8] sm:$0xff]
        %v909 = vld [vmem:[%s315 + $0xfe0] sm:$0xff]
        %v910 = vld [vmem:[%s315 + $0xfe8] sm:$0xff]
        %v911 = vld [vmem:[%s315 + $0xff0] sm:$0xff]
        %v912 = vld [vmem:[%s315 + $0xff8] sm:$0xff]
        %v913 = vld [vmem:[%s315 + $0x1000] sm:$0xff]
        %v914 = vld [vmem:[%s315 + $0x1008] sm:$0xff]
        %v915 = vld [vmem:[%s315 + $0x1010] sm:$0xff]
        %v916 = vld [vmem:[%s315 + $0x1018] sm:$0xff]
        %v917 = vld [vmem:[%s315 + $0x1020] sm:$0xff]
        %v918 = vld [vmem:[%s315 + $0x1028] sm:$0xff]
        %v919 = vld [vmem:[%s315 + $0x1030] sm:$0xff]
        %v920 = vld [vmem:[%s315 + $0x1038] sm:$0xff]
        %v921 = vld [vmem:[%s315 + $0x1040] sm:$0xff]
        %v922 = vld [vmem:[%s315 + $0x1048] sm:$0xff]
        %v923 = vld [vmem:[%s315 + $0x1050] sm:$0xff]
        %v924 = vld [vmem:[%s315 + $0x1058] sm:$0xff]
        %v925 = vld [vmem:[%s315 + $0x1060] sm:$0xff]
        %v926 = vld [vmem:[%s315 + $0x1068] sm:$0xff]
        %v927 = vld [vmem:[%s315 + $0x1070] sm:$0xff]
        %v928 = vld [vmem:[%s315 + $0x1078] sm:$0xff]
        %v929 = vld [vmem:[%s315 + $0x1080] sm:$0xff]
        %v930 = vld [vmem:[%s315 + $0x1088] sm:$0xff]
        %v931 = vld [vmem:[%s315 + $0x1090] sm:$0xff]
        %v932 = vld [vmem:[%s315 + $0x1098] sm:$0xff]
        %v933 = vld [vmem:[%s315 + $0x10a0] sm:$0xff]
        %v934 = vld [vmem:[%s315 + $0x10a8] sm:$0xff]
        %v935 = vld [vmem:[%s315 + $0x10b0] sm:$0xff]
        %v936 = vld [vmem:[%s315 + $0x10b8] sm:$0xff]
        %v937 = vld [vmem:[%s315 + $0x10c0] sm:$0xff]
        %v938 = vld [vmem:[%s315 + $0x10c8] sm:$0xff]
        %v939 = vld [vmem:[%s315 + $0x10d0] sm:$0xff]
        %v940 = vld [vmem:[%s315 + $0x10d8] sm:$0xff]
        %v941 = vld [vmem:[%s315 + $0x10e0] sm:$0xff]
        %v942 = vld [vmem:[%s315 + $0x10e8] sm:$0xff]
        %v943 = vld [vmem:[%s315 + $0x10f0] sm:$0xff]
        %v944 = vld [vmem:[%s315 + $0x10f8] sm:$0xff]
        %v945 = vld [vmem:[%s315 + $0x1100] sm:$0xff]
        %v946 = vld [vmem:[%s315 + $0x1108] sm:$0xff]
        %v947 = vld [vmem:[%s315 + $0x1110] sm:$0xff]
        %v948 = vld [vmem:[%s315 + $0x1118] sm:$0xff]
        %v949 = vld [vmem:[%s315 + $0x1120] sm:$0xff]
        %v950 = vld [vmem:[%s315 + $0x1128] sm:$0xff]
        %v951 = vld [vmem:[%s315 + $0x1130] sm:$0xff]
        %v952 = vld [vmem:[%s315 + $0x1138] sm:$0xff]
        %v953 = vld [vmem:[%s315 + $0x1140] sm:$0xff]
        %v954 = vld [vmem:[%s315 + $0x1148] sm:$0xff]
        %v955 = vld [vmem:[%s315 + $0x1150] sm:$0xff]
        %v956 = vld [vmem:[%s315 + $0x1158] sm:$0xff]
        %v957 = vld [vmem:[%s315 + $0x1160] sm:$0xff]
        %v958 = vld [vmem:[%s315 + $0x1168] sm:$0xff]
        %v959 = vld [vmem:[%s315 + $0x1170] sm:$0xff]
        %v960 = vld [vmem:[%s315 + $0x1178] sm:$0xff]
        %v961 = vld [vmem:[%s315 + $0x1180] sm:$0xff]
        %v962 = vld [vmem:[%s315 + $0x1188] sm:$0xff]
        %v963 = vld [vmem:[%s315 + $0x1190] sm:$0xff]
        %v964 = vld [vmem:[%s315 + $0x1198] sm:$0xff]
        %v965 = vld [vmem:[%s315 + $0x11a0] sm:$0xff]
        %v966 = vld [vmem:[%s315 + $0x11a8] sm:$0xff]
        %v967 = vld [vmem:[%s315 + $0x11b0] sm:$0xff]
        %v968 = vld [vmem:[%s315 + $0x11b8] sm:$0xff]
        %v969 = vld [vmem:[%s315 + $0x11c0] sm:$0xff]
        %v970 = vld [vmem:[%s315 + $0x11c8] sm:$0xff]
        %v971 = vld [vmem:[%s315 + $0x11d0] sm:$0xff]
        %v972 = vld [vmem:[%s315 + $0x11d8] sm:$0xff]
        %v973 = vld [vmem:[%s315 + $0x11e0] sm:$0xff]
        %v974 = vld [vmem:[%s315 + $0x11e8] sm:$0xff]
        %v975 = vld [vmem:[%s315 + $0x11f0] sm:$0xff]
        %v976 = vld [vmem:[%s315 + $0x11f8] sm:$0xff]
        %v977 = vld [vmem:[%s315 + $0x1200] sm:$0xff]
        %v978 = vld [vmem:[%s315 + $0x1208] sm:$0xff]
        %v979 = vld [vmem:[%s315 + $0x1210] sm:$0xff]
        %v980 = vld [vmem:[%s315 + $0x1218] sm:$0xff]
        %v981 = vld [vmem:[%s315 + $0x1220] sm:$0xff]
        %v982 = vld [vmem:[%s315 + $0x1228] sm:$0xff]
        %v983 = vld [vmem:[%s315 + $0x1230] sm:$0xff]
        %v984 = vld [vmem:[%s315 + $0x1238] sm:$0xff]
        %v985 = vld [vmem:[%s315 + $0x1240] sm:$0xff]
        %v986 = vld [vmem:[%s315 + $0x1248] sm:$0xff]
        %v987 = vld [vmem:[%s315 + $0x1250] sm:$0xff]
        %v988 = vld [vmem:[%s315 + $0x1258] sm:$0xff]
        %v989 = vld [vmem:[%s315 + $0x1260] sm:$0xff]
        %v990 = vld [vmem:[%s315 + $0x1268] sm:$0xff]
        %v991 = vld [vmem:[%s315 + $0x1270] sm:$0xff]
        %v992 = vld [vmem:[%s315 + $0x1278] sm:$0xff]
        %v993 = vld [vmem:[%s315 + $0x1280] sm:$0xff]
        %v994 = vld [vmem:[%s315 + $0x1288] sm:$0xff]
        %v995 = vld [vmem:[%s315 + $0x1290] sm:$0xff]
        %v996 = vld [vmem:[%s315 + $0x1298] sm:$0xff]
        %v997 = vld [vmem:[%s315 + $0x12a0] sm:$0xff]
        %v998 = vld [vmem:[%s315 + $0x12a8] sm:$0xff]
        %v999 = vld [vmem:[%s315 + $0x12b0] sm:$0xff]
        %v1000 = vld [vmem:[%s315 + $0x12b8] sm:$0xff]
        %v1001 = vld [vmem:[%s315 + $0x12c0] sm:$0xff]
        %v1002 = vld [vmem:[%s315 + $0x12c8] sm:$0xff]
        %v1003 = vld [vmem:[%s315 + $0x12d0] sm:$0xff]
        %v1004 = vld [vmem:[%s315 + $0x12d8] sm:$0xff]
        %v1005 = vld [vmem:[%s315 + $0x12e0] sm:$0xff]
        %v1006 = vld [vmem:[%s315 + $0x12e8] sm:$0xff]
        %v1007 = vld [vmem:[%s315 + $0x12f0] sm:$0xff]
        %v1008 = vld [vmem:[%s315 + $0x12f8] sm:$0xff]
        %v1009 = vld [vmem:[%s315 + $0x1300] sm:$0xff]
        %v1010 = vld [vmem:[%s315 + $0x1308] sm:$0xff]
        %v1011 = vld [vmem:[%s315 + $0x1310] sm:$0xff]
        %v1012 = vld [vmem:[%s315 + $0x1318] sm:$0xff]
        %v1013 = vld [vmem:[%s315 + $0x1320] sm:$0xff]
        %v1014 = vld [vmem:[%s315 + $0x1328] sm:$0xff]
        %v1015 = vld [vmem:[%s315 + $0x1330] sm:$0xff]
        %v1016 = vld [vmem:[%s315 + $0x1338] sm:$0xff]
        %v1017 = vld [vmem:[%s315 + $0x1340] sm:$0xff]
        %v1018 = vld [vmem:[%s315 + $0x1348] sm:$0xff]
        %v1019 = vld [vmem:[%s315 + $0x1350] sm:$0xff]
        %v1020 = vld [vmem:[%s315 + $0x1358] sm:$0xff]
        %v1021 = vld [vmem:[%s315 + $0x1360] sm:$0xff]
        %v1022 = vld [vmem:[%s315 + $0x1368] sm:$0xff]
        %v1023 = vld [vmem:[%s315 + $0x1370] sm:$0xff]
        %v1024 = vld [vmem:[%s315 + $0x1378] sm:$0xff]
        %v1025 = vld [vmem:[%s315 + $0x1380] sm:$0xff]
        %v1026 = vld [vmem:[%s315 + $0x1388] sm:$0xff]
        %v1027 = vld [vmem:[%s315 + $0x1390] sm:$0xff]
        %v1028 = vld [vmem:[%s315 + $0x1398] sm:$0xff]
        %v1029 = vld [vmem:[%s315 + $0x13a0] sm:$0xff]
        %v1030 = vld [vmem:[%s315 + $0x13a8] sm:$0xff]
        %v1031 = vld [vmem:[%s315 + $0x13b0] sm:$0xff]
        %v1032 = vld [vmem:[%s315 + $0x13b8] sm:$0xff]
        %v1033 = vld [vmem:[%s315 + $0x13c0] sm:$0xff]
        %v1034 = vld [vmem:[%s315 + $0x13c8] sm:$0xff]
        %v1035 = vld [vmem:[%s315 + $0x13d0] sm:$0xff]
        %v1036 = vld [vmem:[%s315 + $0x13d8] sm:$0xff]
        %v1037 = vld [vmem:[%s315 + $0x13e0] sm:$0xff]
        %v1038 = vld [vmem:[%s315 + $0x13e8] sm:$0xff]
        %v1039 = vld [vmem:[%s315 + $0x13f0] sm:$0xff]
        %v1040 = vld [vmem:[%s315 + $0x13f8] sm:$0xff]
        %v1041 = vld [vmem:[%s315 + $0x1400] sm:$0xff]
        %v1042 = vld [vmem:[%s315 + $0x1408] sm:$0xff]
        %v1043 = vld [vmem:[%s315 + $0x1410] sm:$0xff]
        %v1044 = vld [vmem:[%s315 + $0x1418] sm:$0xff]
        %v1045 = vld [vmem:[%s315 + $0x1420] sm:$0xff]
        %v1046 = vld [vmem:[%s315 + $0x1428] sm:$0xff]
        %v1047 = vld [vmem:[%s315 + $0x1430] sm:$0xff]
        %v1048 = vld [vmem:[%s315 + $0x1438] sm:$0xff]
        %v1049 = vld [vmem:[%s315 + $0x1440] sm:$0xff]
        %v1050 = vld [vmem:[%s315 + $0x1448] sm:$0xff]
        %v1051 = vld [vmem:[%s315 + $0x1450] sm:$0xff]
        %v1052 = vld [vmem:[%s315 + $0x1458] sm:$0xff]
        %v1053 = vld [vmem:[%s315 + $0x1460] sm:$0xff]
        %v1054 = vld [vmem:[%s315 + $0x1468] sm:$0xff]
        %v1055 = vld [vmem:[%s315 + $0x1470] sm:$0xff]
        %v1056 = vld [vmem:[%s315 + $0x1478] sm:$0xff]
        %v1057 = vld [vmem:[%s315 + $0x1480] sm:$0xff]
        %v1058 = vld [vmem:[%s315 + $0x1488] sm:$0xff]
        %v1059 = vld [vmem:[%s315 + $0x1490] sm:$0xff]
        %v1060 = vld [vmem:[%s315 + $0x1498] sm:$0xff]
        %v1061 = vld [vmem:[%s315 + $0x14a0] sm:$0xff]
        %v1062 = vld [vmem:[%s315 + $0x14a8] sm:$0xff]
        %v1063 = vld [vmem:[%s315 + $0x14b0] sm:$0xff]
        %v1064 = vld [vmem:[%s315 + $0x14b8] sm:$0xff]
        %v1065 = vld [vmem:[%s315 + $0x14c0] sm:$0xff]
        %v1066 = vld [vmem:[%s315 + $0x14c8] sm:$0xff]
        %v1067 = vld [vmem:[%s315 + $0x14d0] sm:$0xff]
        %v1068 = vld [vmem:[%s315 + $0x14d8] sm:$0xff]
        %v1069 = vld [vmem:[%s315 + $0x14e0] sm:$0xff]
        %v1070 = vld [vmem:[%s315 + $0x14e8] sm:$0xff]
        %v1071 = vld [vmem:[%s315 + $0x14f0] sm:$0xff]
        %v1072 = vld [vmem:[%s315 + $0x14f8] sm:$0xff]
        %v1073 = vld [vmem:[%s315 + $0x1500] sm:$0xff]
        %v1074 = vld [vmem:[%s315 + $0x1508] sm:$0xff]
        %v1075 = vld [vmem:[%s315 + $0x1510] sm:$0xff]
        %v1076 = vld [vmem:[%s315 + $0x1518] sm:$0xff]
        %v1077 = vld [vmem:[%s315 + $0x1520] sm:$0xff]
        %v1078 = vld [vmem:[%s315 + $0x1528] sm:$0xff]
        %v1079 = vld [vmem:[%s315 + $0x1530] sm:$0xff]
        %v1080 = vld [vmem:[%s315 + $0x1538] sm:$0xff]
        %v1081 = vld [vmem:[%s315 + $0x1540] sm:$0xff]
        %v1082 = vld [vmem:[%s315 + $0x1548] sm:$0xff]
        %v1083 = vld [vmem:[%s315 + $0x1550] sm:$0xff]
        %v1084 = vld [vmem:[%s315 + $0x1558] sm:$0xff]
        %v1085 = vld [vmem:[%s315 + $0x1560] sm:$0xff]
        %v1086 = vld [vmem:[%s315 + $0x1568] sm:$0xff]
        %v1087 = vld [vmem:[%s315 + $0x1570] sm:$0xff]
        %v1088 = vld [vmem:[%s315 + $0x1578] sm:$0xff]
        %v1089 = vld [vmem:[%s315 + $0x1580] sm:$0xff]
        %v1090 = vld [vmem:[%s315 + $0x1588] sm:$0xff]
        %v1091 = vld [vmem:[%s315 + $0x1590] sm:$0xff]
        %v1092 = vld [vmem:[%s315 + $0x1598] sm:$0xff]
        %v1093 = vld [vmem:[%s315 + $0x15a0] sm:$0xff]
        %v1094 = vld [vmem:[%s315 + $0x15a8] sm:$0xff]
        %v1095 = vld [vmem:[%s315 + $0x15b0] sm:$0xff]
        %v1096 = vld [vmem:[%s315 + $0x15b8] sm:$0xff]
        %v1097 = vld [vmem:[%s315 + $0x15c0] sm:$0xff]
        %v1098 = vld [vmem:[%s315 + $0x15c8] sm:$0xff]
        %v1099 = vld [vmem:[%s315 + $0x15d0] sm:$0xff]
        %v1100 = vld [vmem:[%s315 + $0x15d8] sm:$0xff]
        %v1101 = vld [vmem:[%s315 + $0x15e0] sm:$0xff]
        %v1102 = vld [vmem:[%s315 + $0x15e8] sm:$0xff]
        %v1103 = vld [vmem:[%s315 + $0x15f0] sm:$0xff]
        %v1104 = vld [vmem:[%s315 + $0x15f8] sm:$0xff]
        %v1105 = vld [vmem:[%s315 + $0x1600] sm:$0xff]
        %v1106 = vld [vmem:[%s315 + $0x1608] sm:$0xff]
        %v1107 = vld [vmem:[%s315 + $0x1610] sm:$0xff]
        %v1108 = vld [vmem:[%s315 + $0x1618] sm:$0xff]
        %v1109 = vld [vmem:[%s315 + $0x1620] sm:$0xff]
        %v1110 = vld [vmem:[%s315 + $0x1628] sm:$0xff]
        %v1111 = vld [vmem:[%s315 + $0x1630] sm:$0xff]
        %v1112 = vld [vmem:[%s315 + $0x1638] sm:$0xff]
        %v1113 = vld [vmem:[%s315 + $0x1640] sm:$0xff]
        %v1114 = vld [vmem:[%s315 + $0x1648] sm:$0xff]
        %v1115 = vld [vmem:[%s315 + $0x1650] sm:$0xff]
        %v1116 = vld [vmem:[%s315 + $0x1658] sm:$0xff]
        %v1117 = vld [vmem:[%s315 + $0x1660] sm:$0xff]
        %v1118 = vld [vmem:[%s315 + $0x1668] sm:$0xff]
        %v1119 = vld [vmem:[%s315 + $0x1670] sm:$0xff]
        %v1120 = vld [vmem:[%s315 + $0x1678] sm:$0xff]
        %v1121 = vld [vmem:[%s315 + $0x1680] sm:$0xff]
        %v1122 = vld [vmem:[%s315 + $0x1688] sm:$0xff]
        %v1123 = vld [vmem:[%s315 + $0x1690] sm:$0xff]
        %v1124 = vld [vmem:[%s315 + $0x1698] sm:$0xff]
        %v1125 = vld [vmem:[%s315 + $0x16a0] sm:$0xff]
        %v1126 = vld [vmem:[%s315 + $0x16a8] sm:$0xff]
        %v1127 = vld [vmem:[%s315 + $0x16b0] sm:$0xff]
        %v1128 = vld [vmem:[%s315 + $0x16b8] sm:$0xff]
        %v1129 = vld [vmem:[%s315 + $0x16c0] sm:$0xff]
        %v1130 = vld [vmem:[%s315 + $0x16c8] sm:$0xff]
        %v1131 = vld [vmem:[%s315 + $0x16d0] sm:$0xff]
        %v1132 = vld [vmem:[%s315 + $0x16d8] sm:$0xff]
        %v1133 = vld [vmem:[%s315 + $0x16e0] sm:$0xff]
        %v1134 = vld [vmem:[%s315 + $0x16e8] sm:$0xff]
        %v1135 = vld [vmem:[%s315 + $0x16f0] sm:$0xff]
        %v1136 = vld [vmem:[%s315 + $0x16f8] sm:$0xff]
        %v1137 = vld [vmem:[%s315 + $0x1700] sm:$0xff]
        %v1138 = vld [vmem:[%s315 + $0x1708] sm:$0xff]
        %v1139 = vld [vmem:[%s315 + $0x1710] sm:$0xff]
        %v1140 = vld [vmem:[%s315 + $0x1718] sm:$0xff]
        %v1141 = vld [vmem:[%s315 + $0x1720] sm:$0xff]
        %v1142 = vld [vmem:[%s315 + $0x1728] sm:$0xff]
        %v1143 = vld [vmem:[%s315 + $0x1730] sm:$0xff]
        %v1144 = vld [vmem:[%s315 + $0x1738] sm:$0xff]
        %v1145 = vld [vmem:[%s315 + $0x1740] sm:$0xff]
        %v1146 = vld [vmem:[%s315 + $0x1748] sm:$0xff]
        %v1147 = vld [vmem:[%s315 + $0x1750] sm:$0xff]
        %v1148 = vld [vmem:[%s315 + $0x1758] sm:$0xff]
        %v1149 = vld [vmem:[%s315 + $0x1760] sm:$0xff]
        %v1150 = vld [vmem:[%s315 + $0x1768] sm:$0xff]
        %v1151 = vld [vmem:[%s315 + $0x1770] sm:$0xff]
        %v1152 = vld [vmem:[%s315 + $0x1778] sm:$0xff]
        %v1153 = vld [vmem:[%s315 + $0x1780] sm:$0xff]
        %v1154 = vld [vmem:[%s315 + $0x1788] sm:$0xff]
        %v1155 = vld [vmem:[%s315 + $0x1790] sm:$0xff]
        %v1156 = vld [vmem:[%s315 + $0x1798] sm:$0xff]
        %v1157 = vld [vmem:[%s315 + $0x17a0] sm:$0xff]
        %v1158 = vld [vmem:[%s315 + $0x17a8] sm:$0xff]
        %v1159 = vld [vmem:[%s315 + $0x17b0] sm:$0xff]
        %v1160 = vld [vmem:[%s315 + $0x17b8] sm:$0xff]
        %v1161 = vld [vmem:[%s315 + $0x17c0] sm:$0xff]
        %v1162 = vld [vmem:[%s315 + $0x17c8] sm:$0xff]
        %v1163 = vld [vmem:[%s315 + $0x17d0] sm:$0xff]
        %v1164 = vld [vmem:[%s315 + $0x17d8] sm:$0xff]
        %v1165 = vld [vmem:[%s315 + $0x17e0] sm:$0xff]
        %v1166 = vld [vmem:[%s315 + $0x17e8] sm:$0xff]
        %v1167 = vld [vmem:[%s315 + $0x17f0] sm:$0xff]
        %v1168 = vld [vmem:[%s315 + $0x17f8] sm:$0xff]
        %v1169 = vld [vmem:[%s315 + $0x1800] sm:$0xff]
        %v1170 = vld [vmem:[%s315 + $0x1808] sm:$0xff]
        %v1171 = vld [vmem:[%s315 + $0x1810] sm:$0xff]
        %v1172 = vld [vmem:[%s315 + $0x1818] sm:$0xff]
        %v1173 = vld [vmem:[%s315 + $0x1820] sm:$0xff]
        %v1174 = vld [vmem:[%s315 + $0x1828] sm:$0xff]
        %v1175 = vld [vmem:[%s315 + $0x1830] sm:$0xff]
        %v1176 = vld [vmem:[%s315 + $0x1838] sm:$0xff]
        %v1177 = vld [vmem:[%s315 + $0x1840] sm:$0xff]
        %v1178 = vld [vmem:[%s315 + $0x1848] sm:$0xff]
        %v1179 = vld [vmem:[%s315 + $0x1850] sm:$0xff]
        %v1180 = vld [vmem:[%s315 + $0x1858] sm:$0xff]
        %v1181 = vld [vmem:[%s315 + $0x1860] sm:$0xff]
        %v1182 = vld [vmem:[%s315 + $0x1868] sm:$0xff]
        %v1183 = vld [vmem:[%s315 + $0x1870] sm:$0xff]
        %v1184 = vld [vmem:[%s315 + $0x1878] sm:$0xff]
        %v1185 = vld [vmem:[%s315 + $0x1880] sm:$0xff]
        %v1186 = vld [vmem:[%s315 + $0x1888] sm:$0xff]
        %v1187 = vld [vmem:[%s315 + $0x1890] sm:$0xff]
        %v1188 = vld [vmem:[%s315 + $0x1898] sm:$0xff]
        %v1189 = vld [vmem:[%s315 + $0x18a0] sm:$0xff]
        %v1190 = vld [vmem:[%s315 + $0x18a8] sm:$0xff]
        %v1191 = vld [vmem:[%s315 + $0x18b0] sm:$0xff]
        %v1192 = vld [vmem:[%s315 + $0x18b8] sm:$0xff]
        %v1193 = vld [vmem:[%s315 + $0x18c0] sm:$0xff]
        %v1194 = vld [vmem:[%s315 + $0x18c8] sm:$0xff]
        %v1195 = vld [vmem:[%s315 + $0x18d0] sm:$0xff]
        %v1196 = vld [vmem:[%s315 + $0x18d8] sm:$0xff]
        %v1197 = vld [vmem:[%s315 + $0x18e0] sm:$0xff]
        %v1198 = vld [vmem:[%s315 + $0x18e8] sm:$0xff]
        %v1199 = vld [vmem:[%s315 + $0x18f0] sm:$0xff]
        %v1200 = vld [vmem:[%s315 + $0x18f8] sm:$0xff]
        %v1201 = vld [vmem:[%s315 + $0x1900] sm:$0xff]
        %v1202 = vld [vmem:[%s315 + $0x1908] sm:$0xff]
        %v1203 = vld [vmem:[%s315 + $0x1910] sm:$0xff]
        %v1204 = vld [vmem:[%s315 + $0x1918] sm:$0xff]
        %v1205 = vld [vmem:[%s315 + $0x1920] sm:$0xff]
        %v1206 = vld [vmem:[%s315 + $0x1928] sm:$0xff]
        %v1207 = vld [vmem:[%s315 + $0x1930] sm:$0xff]
        %v1208 = vld [vmem:[%s315 + $0x1938] sm:$0xff]
        %v1209 = vld [vmem:[%s315 + $0x1940] sm:$0xff]
        %v1210 = vld [vmem:[%s315 + $0x1948] sm:$0xff]
        %v1211 = vld [vmem:[%s315 + $0x1950] sm:$0xff]
        %v1212 = vld [vmem:[%s315 + $0x1958] sm:$0xff]
        %v1213 = vld [vmem:[%s315 + $0x1960] sm:$0xff]
        %v1214 = vld [vmem:[%s315 + $0x1968] sm:$0xff]
        %v1215 = vld [vmem:[%s315 + $0x1970] sm:$0xff]
        %v1216 = vld [vmem:[%s315 + $0x1978] sm:$0xff]
        %v1217 = vld [vmem:[%s315 + $0x1980] sm:$0xff]
        %v1218 = vld [vmem:[%s315 + $0x1988] sm:$0xff]
        %v1219 = vld [vmem:[%s315 + $0x1990] sm:$0xff]
        %v1220 = vld [vmem:[%s315 + $0x1998] sm:$0xff]
        %v1221 = vld [vmem:[%s315 + $0x19a0] sm:$0xff]
        %v1222 = vld [vmem:[%s315 + $0x19a8] sm:$0xff]
        %v1223 = vld [vmem:[%s315 + $0x19b0] sm:$0xff]
        %v1224 = vld [vmem:[%s315 + $0x19b8] sm:$0xff]
        %v1225 = vld [vmem:[%s315 + $0x19c0] sm:$0xff]
        %v1226 = vld [vmem:[%s315 + $0x19c8] sm:$0xff]
        %v1227 = vld [vmem:[%s315 + $0x19d0] sm:$0xff]
        %v1228 = vld [vmem:[%s315 + $0x19d8] sm:$0xff]
        %v1229 = vld [vmem:[%s315 + $0x19e0] sm:$0xff]
        %v1230 = vld [vmem:[%s315 + $0x19e8] sm:$0xff]
        %v1231 = vld [vmem:[%s315 + $0x19f0] sm:$0xff]
        %v1232 = vld [vmem:[%s315 + $0x19f8] sm:$0xff]
        %v1233 = vld [vmem:[%s315 + $0x1a00] sm:$0xff]
        %v1234 = vld [vmem:[%s315 + $0x1a08] sm:$0xff]
        %v1235 = vld [vmem:[%s315 + $0x1a10] sm:$0xff]
        %v1236 = vld [vmem:[%s315 + $0x1a18] sm:$0xff]
        %v1237 = vld [vmem:[%s315 + $0x1a20] sm:$0xff]
        %v1238 = vld [vmem:[%s315 + $0x1a28] sm:$0xff]
        %v1239 = vld [vmem:[%s315 + $0x1a30] sm:$0xff]
        %v1240 = vld [vmem:[%s315 + $0x1a38] sm:$0xff]
        %v1241 = vld [vmem:[%s315 + $0x1a40] sm:$0xff]
        %v1242 = vld [vmem:[%s315 + $0x1a48] sm:$0xff]
        %v1243 = vld [vmem:[%s315 + $0x1a50] sm:$0xff]
        %v1244 = vld [vmem:[%s315 + $0x1a58] sm:$0xff]
        %v1245 = vld [vmem:[%s315 + $0x1a60] sm:$0xff]
        %v1246 = vld [vmem:[%s315 + $0x1a68] sm:$0xff]
        %v1247 = vld [vmem:[%s315 + $0x1a70] sm:$0xff]
        %v1248 = vld [vmem:[%s315 + $0x1a78] sm:$0xff]
        %v1249 = vld [vmem:[%s315 + $0x1a80] sm:$0xff]
        %v1250 = vld [vmem:[%s315 + $0x1a88] sm:$0xff]
        %v1251 = vld [vmem:[%s315 + $0x1a90] sm:$0xff]
        %v1252 = vld [vmem:[%s315 + $0x1a98] sm:$0xff]
        %v1253 = vld [vmem:[%s315 + $0x1aa0] sm:$0xff]
        %v1254 = vld [vmem:[%s315 + $0x1aa8] sm:$0xff]
        %v1255 = vld [vmem:[%s315 + $0x1ab0] sm:$0xff]
        %v1256 = vld [vmem:[%s315 + $0x1ab8] sm:$0xff]
        %v1257 = vld [vmem:[%s315 + $0x1ac0] sm:$0xff]
        %v1258 = vld [vmem:[%s315 + $0x1ac8] sm:$0xff]
        %v1259 = vld [vmem:[%s315 + $0x1ad0] sm:$0xff]
        %v1260 = vld [vmem:[%s315 + $0x1ad8] sm:$0xff]
        %v1261 = vld [vmem:[%s315 + $0x1ae0] sm:$0xff]
        %v1262 = vld [vmem:[%s315 + $0x1ae8] sm:$0xff]
        %v1263 = vld [vmem:[%s315 + $0x1af0] sm:$0xff]
        %v1264 = vld [vmem:[%s315 + $0x1af8] sm:$0xff]
        %v1265 = vld [vmem:[%s315 + $0x1b00] sm:$0xff]
        %v1266 = vld [vmem:[%s315 + $0x1b08] sm:$0xff]
        %v1267 = vld [vmem:[%s315 + $0x1b10] sm:$0xff]
        %v1268 = vld [vmem:[%s315 + $0x1b18] sm:$0xff]
        %v1269 = vld [vmem:[%s315 + $0x1b20] sm:$0xff]
        %v1270 = vld [vmem:[%s315 + $0x1b28] sm:$0xff]
        %v1271 = vld [vmem:[%s315 + $0x1b30] sm:$0xff]
        %v1272 = vld [vmem:[%s315 + $0x1b38] sm:$0xff]
        %v1273 = vld [vmem:[%s315 + $0x1b40] sm:$0xff]
        %v1274 = vld [vmem:[%s315 + $0x1b48] sm:$0xff]
        %v1275 = vld [vmem:[%s315 + $0x1b50] sm:$0xff]
        %v1276 = vld [vmem:[%s315 + $0x1b58] sm:$0xff]
        %v1277 = vld [vmem:[%s315 + $0x1b60] sm:$0xff]
        %v1278 = vld [vmem:[%s315 + $0x1b68] sm:$0xff]
        %v1279 = vld [vmem:[%s315 + $0x1b70] sm:$0xff]
        %v1280 = vld [vmem:[%s315 + $0x1b78] sm:$0xff]
        %v1281 = vld [vmem:[%s315 + $0x1b80] sm:$0xff]
        %v1282 = vld [vmem:[%s315 + $0x1b88] sm:$0xff]
        %v1283 = vld [vmem:[%s315 + $0x1b90] sm:$0xff]
        %v1284 = vld [vmem:[%s315 + $0x1b98] sm:$0xff]
        %v1285 = vld [vmem:[%s315 + $0x1ba0] sm:$0xff]
        %v1286 = vld [vmem:[%s315 + $0x1ba8] sm:$0xff]
        %v1287 = vld [vmem:[%s315 + $0x1bb0] sm:$0xff]
        %v1288 = vld [vmem:[%s315 + $0x1bb8] sm:$0xff]
        %v1289 = vld [vmem:[%s315 + $0x1bc0] sm:$0xff]
        %v1290 = vld [vmem:[%s315 + $0x1bc8] sm:$0xff]
        %v1291 = vld [vmem:[%s315 + $0x1bd0] sm:$0xff]
        %v1292 = vld [vmem:[%s315 + $0x1bd8] sm:$0xff]
        %v1293 = vld [vmem:[%s315 + $0x1be0] sm:$0xff]
        %v1294 = vld [vmem:[%s315 + $0x1be8] sm:$0xff]
        %v1295 = vld [vmem:[%s315 + $0x1bf0] sm:$0xff]
        %v1296 = vld [vmem:[%s315 + $0x1bf8] sm:$0xff]
        %v1297 = vld [vmem:[%s315 + $0x1c00] sm:$0xff]
        %v1298 = vld [vmem:[%s315 + $0x1c08] sm:$0xff]
        %v1299 = vld [vmem:[%s315 + $0x1c10] sm:$0xff]
        %v1300 = vld [vmem:[%s315 + $0x1c18] sm:$0xff]
        %v1301 = vld [vmem:[%s315 + $0x1c20] sm:$0xff]
        %v1302 = vld [vmem:[%s315 + $0x1c28] sm:$0xff]
        %v1303 = vld [vmem:[%s315 + $0x1c30] sm:$0xff]
        %v1304 = vld [vmem:[%s315 + $0x1c38] sm:$0xff]
        %v1305 = vld [vmem:[%s315 + $0x1c40] sm:$0xff]
        %v1306 = vld [vmem:[%s315 + $0x1c48] sm:$0xff]
        %v1307 = vld [vmem:[%s315 + $0x1c50] sm:$0xff]
        %v1308 = vld [vmem:[%s315 + $0x1c58] sm:$0xff]
        %v1309 = vld [vmem:[%s315 + $0x1c60] sm:$0xff]
        %v1310 = vld [vmem:[%s315 + $0x1c68] sm:$0xff]
        %v1311 = vld [vmem:[%s315 + $0x1c70] sm:$0xff]
        %v1312 = vld [vmem:[%s315 + $0x1c78] sm:$0xff]
        %v1313 = vld [vmem:[%s315 + $0x1c80] sm:$0xff]
        %v1314 = vld [vmem:[%s315 + $0x1c88] sm:$0xff]
        %v1315 = vld [vmem:[%s315 + $0x1c90] sm:$0xff]
        %v1316 = vld [vmem:[%s315 + $0x1c98] sm:$0xff]
        %v1317 = vld [vmem:[%s315 + $0x1ca0] sm:$0xff]
        %v1318 = vld [vmem:[%s315 + $0x1ca8] sm:$0xff]
        %v1319 = vld [vmem:[%s315 + $0x1cb0] sm:$0xff]
        %v1320 = vld [vmem:[%s315 + $0x1cb8] sm:$0xff]
        %v1321 = vld [vmem:[%s315 + $0x1cc0] sm:$0xff]
        %v1322 = vld [vmem:[%s315 + $0x1cc8] sm:$0xff]
        %v1323 = vld [vmem:[%s315 + $0x1cd0] sm:$0xff]
        %v1324 = vld [vmem:[%s315 + $0x1cd8] sm:$0xff]
        %v1325 = vld [vmem:[%s315 + $0x1ce0] sm:$0xff]
        %v1326 = vld [vmem:[%s315 + $0x1ce8] sm:$0xff]
        %v1327 = vld [vmem:[%s315 + $0x1cf0] sm:$0xff]
        %v1328 = vld [vmem:[%s315 + $0x1cf8] sm:$0xff]
        %v1329 = vld [vmem:[%s315 + $0x1d00] sm:$0xff]
        %v1330 = vld [vmem:[%s315 + $0x1d08] sm:$0xff]
        %v1331 = vld [vmem:[%s315 + $0x1d10] sm:$0xff]
        %v1332 = vld [vmem:[%s315 + $0x1d18] sm:$0xff]
        %v1333 = vld [vmem:[%s315 + $0x1d20] sm:$0xff]
        %v1334 = vld [vmem:[%s315 + $0x1d28] sm:$0xff]
        %v1335 = vld [vmem:[%s315 + $0x1d30] sm:$0xff]
        %v1336 = vld [vmem:[%s315 + $0x1d38] sm:$0xff]
        %v1337 = vld [vmem:[%s315 + $0x1d40] sm:$0xff]
        %v1338 = vld [vmem:[%s315 + $0x1d48] sm:$0xff]
        %v1339 = vld [vmem:[%s315 + $0x1d50] sm:$0xff]
        %v1340 = vld [vmem:[%s315 + $0x1d58] sm:$0xff]
        %v1341 = vld [vmem:[%s315 + $0x1d60] sm:$0xff]
        %v1342 = vld [vmem:[%s315 + $0x1d68] sm:$0xff]
        %v1343 = vld [vmem:[%s315 + $0x1d70] sm:$0xff]
        %v1344 = vld [vmem:[%s315 + $0x1d78] sm:$0xff]
        %v1345 = vld [vmem:[%s315 + $0x1d80] sm:$0xff]
        %v1346 = vld [vmem:[%s315 + $0x1d88] sm:$0xff]
        %v1347 = vld [vmem:[%s315 + $0x1d90] sm:$0xff]
        %v1348 = vld [vmem:[%s315 + $0x1d98] sm:$0xff]
        %v1349 = vld [vmem:[%s315 + $0x1da0] sm:$0xff]
        %v1350 = vld [vmem:[%s315 + $0x1da8] sm:$0xff]
        %v1351 = vld [vmem:[%s315 + $0x1db0] sm:$0xff]
        %v1352 = vld [vmem:[%s315 + $0x1db8] sm:$0xff]
        %v1353 = vld [vmem:[%s315 + $0x1dc0] sm:$0xff]
        %v1354 = vld [vmem:[%s315 + $0x1dc8] sm:$0xff]
        %v1355 = vld [vmem:[%s315 + $0x1dd0] sm:$0xff]
        %v1356 = vld [vmem:[%s315 + $0x1dd8] sm:$0xff]
        %v1357 = vld [vmem:[%s315 + $0x1de0] sm:$0xff]
        %v1358 = vld [vmem:[%s315 + $0x1de8] sm:$0xff]
        %v1359 = vld [vmem:[%s315 + $0x1df0] sm:$0xff]
        %v1360 = vld [vmem:[%s315 + $0x1df8] sm:$0xff]
        %v1361 = vld [vmem:[%s315 + $0x1e00] sm:$0xff]
        %v1362 = vld [vmem:[%s315 + $0x1e08] sm:$0xff]
        %v1363 = vld [vmem:[%s315 + $0x1e10] sm:$0xff]
        %v1364 = vld [vmem:[%s315 + $0x1e18] sm:$0xff]
        %v1365 = vld [vmem:[%s315 + $0x1e20] sm:$0xff]
        %v1366 = vld [vmem:[%s315 + $0x1e28] sm:$0xff]
        %v1367 = vld [vmem:[%s315 + $0x1e30] sm:$0xff]
        %v1368 = vld [vmem:[%s315 + $0x1e38] sm:$0xff]
        %v1369 = vld [vmem:[%s315 + $0x1e40] sm:$0xff]
        %v1370 = vld [vmem:[%s315 + $0x1e48] sm:$0xff]
        %v1371 = vld [vmem:[%s315 + $0x1e50] sm:$0xff]
        %v1372 = vld [vmem:[%s315 + $0x1e58] sm:$0xff]
        %v1373 = vld [vmem:[%s315 + $0x1e60] sm:$0xff]
        %v1374 = vld [vmem:[%s315 + $0x1e68] sm:$0xff]
        %v1375 = vld [vmem:[%s315 + $0x1e70] sm:$0xff]
        %v1376 = vld [vmem:[%s315 + $0x1e78] sm:$0xff]
        %v1377 = vld [vmem:[%s315 + $0x1e80] sm:$0xff]
        %v1378 = vld [vmem:[%s315 + $0x1e88] sm:$0xff]
        %v1379 = vld [vmem:[%s315 + $0x1e90] sm:$0xff]
        %v1380 = vld [vmem:[%s315 + $0x1e98] sm:$0xff]
        %v1381 = vld [vmem:[%s315 + $0x1ea0] sm:$0xff]
        %v1382 = vld [vmem:[%s315 + $0x1ea8] sm:$0xff]
        %v1383 = vld [vmem:[%s315 + $0x1eb0] sm:$0xff]
        %v1384 = vld [vmem:[%s315 + $0x1eb8] sm:$0xff]
        %v1385 = vld [vmem:[%s315 + $0x1ec0] sm:$0xff]
        %v1386 = vld [vmem:[%s315 + $0x1ec8] sm:$0xff]
        %v1387 = vld [vmem:[%s315 + $0x1ed0] sm:$0xff]
        %v1388 = vld [vmem:[%s315 + $0x1ed8] sm:$0xff]
        %v1389 = vld [vmem:[%s315 + $0x1ee0] sm:$0xff]
        %v1390 = vld [vmem:[%s315 + $0x1ee8] sm:$0xff]
        %v1391 = vld [vmem:[%s315 + $0x1ef0] sm:$0xff]
        %v1392 = vld [vmem:[%s315 + $0x1ef8] sm:$0xff]
        %v1393 = vld [vmem:[%s315 + $0x1f00] sm:$0xff]
        %v1394 = vld [vmem:[%s315 + $0x1f08] sm:$0xff]
        %v1395 = vld [vmem:[%s315 + $0x1f10] sm:$0xff]
        %v1396 = vld [vmem:[%s315 + $0x1f18] sm:$0xff]
        %v1397 = vld [vmem:[%s315 + $0x1f20] sm:$0xff]
        %v1398 = vld [vmem:[%s315 + $0x1f28] sm:$0xff]
        %v1399 = vld [vmem:[%s315 + $0x1f30] sm:$0xff]
        %v1400 = vld [vmem:[%s315 + $0x1f38] sm:$0xff]
        %v1401 = vld [vmem:[%s315 + $0x1f40] sm:$0xff]
        %v1402 = vld [vmem:[%s315 + $0x1f48] sm:$0xff]
        %v1403 = vld [vmem:[%s315 + $0x1f50] sm:$0xff]
        %v1404 = vld [vmem:[%s315 + $0x1f58] sm:$0xff]
        %v1405 = vld [vmem:[%s315 + $0x1f60] sm:$0xff]
        %v1406 = vld [vmem:[%s315 + $0x1f68] sm:$0xff]
        %v1407 = vld [vmem:[%s315 + $0x1f70] sm:$0xff]
        %v1408 = vld [vmem:[%s315 + $0x1f78] sm:$0xff]
        %v1409 = vld [vmem:[%s315 + $0x1f80] sm:$0xff]
        %v1410 = vld [vmem:[%s315 + $0x1f88] sm:$0xff]
        %v1411 = vld [vmem:[%s315 + $0x1f90] sm:$0xff]
        %v1412 = vld [vmem:[%s315 + $0x1f98] sm:$0xff]
        %v1413 = vld [vmem:[%s315 + $0x1fa0] sm:$0xff]
        %v1414 = vld [vmem:[%s315 + $0x1fa8] sm:$0xff]
        %v1415 = vld [vmem:[%s315 + $0x1fb0] sm:$0xff]
        %v1416 = vld [vmem:[%s315 + $0x1fb8] sm:$0xff]
        %v1417 = vld [vmem:[%s315 + $0x1fc0] sm:$0xff]
        %v1418 = vld [vmem:[%s315 + $0x1fc8] sm:$0xff]
        %v1419 = vld [vmem:[%s315 + $0x1fd0] sm:$0xff]
        %v1420 = vld [vmem:[%s315 + $0x1fd8] sm:$0xff]
        %v1421 = vld [vmem:[%s315 + $0x1fe0] sm:$0xff]
        %v1422 = vld [vmem:[%s315 + $0x1fe8] sm:$0xff]
        %v1423 = vld [vmem:[%s315 + $0x1ff0] sm:$0xff]
        %v1424 = vld [vmem:[%s315 + $0x1ff8] sm:$0xff]
        %v1425 = vld [vmem:[%s315 + $0x2000] sm:$0xff]
        %v1426 = vld [vmem:[%s315 + $0x2008] sm:$0xff]
        %v1427 = vld [vmem:[%s315 + $0x2010] sm:$0xff]
        %v1428 = vld [vmem:[%s315 + $0x2018] sm:$0xff]
        %v1429 = vld [vmem:[%s315 + $0x2020] sm:$0xff]
        %v1430 = vld [vmem:[%s315 + $0x2028] sm:$0xff]
        %v1431 = vld [vmem:[%s315 + $0x2030] sm:$0xff]
        %v1432 = vld [vmem:[%s315 + $0x2038] sm:$0xff]
        %v1433 = vld [vmem:[%s315 + $0x2040] sm:$0xff]
        %v1434 = vld [vmem:[%s315 + $0x2048] sm:$0xff]
        %v1435 = vld [vmem:[%s315 + $0x2050] sm:$0xff]
        %v1436 = vld [vmem:[%s315 + $0x2058] sm:$0xff]
        %v1437 = vld [vmem:[%s315 + $0x2060] sm:$0xff]
        %v1438 = vld [vmem:[%s315 + $0x2068] sm:$0xff]
        %v1439 = vld [vmem:[%s315 + $0x2070] sm:$0xff]
        %v1440 = vld [vmem:[%s315 + $0x2078] sm:$0xff]
        %v1441 = vld [vmem:[%s315 + $0x2080] sm:$0xff]
        %v1442 = vld [vmem:[%s315 + $0x2088] sm:$0xff]
        %v1443 = vld [vmem:[%s315 + $0x2090] sm:$0xff]
        %v1444 = vld [vmem:[%s315 + $0x2098] sm:$0xff]
        %v1445 = vld [vmem:[%s315 + $0x20a0] sm:$0xff]
        %v1446 = vld [vmem:[%s315 + $0x20a8] sm:$0xff]
        %v1447 = vld [vmem:[%s315 + $0x20b0] sm:$0xff]
        %v1448 = vld [vmem:[%s315 + $0x20b8] sm:$0xff]
        %v1449 = vld [vmem:[%s315 + $0x20c0] sm:$0xff]
        %v1450 = vld [vmem:[%s315 + $0x20c8] sm:$0xff]
        %v1451 = vld [vmem:[%s315 + $0x20d0] sm:$0xff]
        %v1452 = vld [vmem:[%s315 + $0x20d8] sm:$0xff]
        %v1453 = vld [vmem:[%s315 + $0x20e0] sm:$0xff]
        %v1454 = vld [vmem:[%s315 + $0x20e8] sm:$0xff]
        %v1455 = vld [vmem:[%s315 + $0x20f0] sm:$0xff]
        %v1456 = vld [vmem:[%s315 + $0x20f8] sm:$0xff]
        %v1457 = vld [vmem:[%s315 + $0x2100] sm:$0xff]
        %v1458 = vld [vmem:[%s315 + $0x2108] sm:$0xff]
        %v1459 = vld [vmem:[%s315 + $0x2110] sm:$0xff]
        %v1460 = vld [vmem:[%s315 + $0x2118] sm:$0xff]
        %v1461 = vld [vmem:[%s315 + $0x2120] sm:$0xff]
        %v1462 = vld [vmem:[%s315 + $0x2128] sm:$0xff]
        %v1463 = vld [vmem:[%s315 + $0x2130] sm:$0xff]
        %v1464 = vld [vmem:[%s315 + $0x2138] sm:$0xff]
        %v1465 = vld [vmem:[%s315 + $0x2140] sm:$0xff]
        %v1466 = vld [vmem:[%s315 + $0x2148] sm:$0xff]
        %v1467 = vld [vmem:[%s315 + $0x2150] sm:$0xff]
        %v1468 = vld [vmem:[%s315 + $0x2158] sm:$0xff]
        %v1469 = vld [vmem:[%s315 + $0x2160] sm:$0xff]
        %v1470 = vld [vmem:[%s315 + $0x2168] sm:$0xff]
        %v1471 = vld [vmem:[%s315 + $0x2170] sm:$0xff]
        %v1472 = vld [vmem:[%s315 + $0x2178] sm:$0xff]
        %v1473 = vld [vmem:[%s315 + $0x2180] sm:$0xff]
        %v1474 = vld [vmem:[%s315 + $0x2188] sm:$0xff]
        %v1475 = vld [vmem:[%s315 + $0x2190] sm:$0xff]
        %v1476 = vld [vmem:[%s315 + $0x2198] sm:$0xff]
        %v1477 = vld [vmem:[%s315 + $0x21a0] sm:$0xff]
        %v1478 = vld [vmem:[%s315 + $0x21a8] sm:$0xff]
        %v1479 = vld [vmem:[%s315 + $0x21b0] sm:$0xff]
        %v1480 = vld [vmem:[%s315 + $0x21b8] sm:$0xff]
        %v1481 = vld [vmem:[%s315 + $0x21c0] sm:$0xff]
        %v1482 = vld [vmem:[%s315 + $0x21c8] sm:$0xff]
        %v1483 = vld [vmem:[%s315 + $0x21d0] sm:$0xff]
        %v1484 = vld [vmem:[%s315 + $0x21d8] sm:$0xff]
        %v1485 = vld [vmem:[%s315 + $0x21e0] sm:$0xff]
        %v1486 = vld [vmem:[%s315 + $0x21e8] sm:$0xff]
        %v1487 = vld [vmem:[%s315 + $0x21f0] sm:$0xff]
        %v1488 = vld [vmem:[%s315 + $0x21f8] sm:$0xff]
        %v1489 = vld [vmem:[%s315 + $0x2200] sm:$0xff]
        %v1490 = vld [vmem:[%s315 + $0x2208] sm:$0xff]
        %v1491 = vld [vmem:[%s315 + $0x2210] sm:$0xff]
        %v1492 = vld [vmem:[%s315 + $0x2218] sm:$0xff]
        %v1493 = vld [vmem:[%s315 + $0x2220] sm:$0xff]
        %v1494 = vld [vmem:[%s315 + $0x2228] sm:$0xff]
        %v1495 = vld [vmem:[%s315 + $0x2230] sm:$0xff]
        %v1496 = vld [vmem:[%s315 + $0x2238] sm:$0xff]
        %v1497 = vld [vmem:[%s315 + $0x2240] sm:$0xff]
        %v1498 = vld [vmem:[%s315 + $0x2248] sm:$0xff]
        %v1499 = vld [vmem:[%s315 + $0x2250] sm:$0xff]
        %v1500 = vld [vmem:[%s315 + $0x2258] sm:$0xff]
        %v1501 = vld [vmem:[%s315 + $0x2260] sm:$0xff]
        %v1502 = vld [vmem:[%s315 + $0x2268] sm:$0xff]
        %v1503 = vld [vmem:[%s315 + $0x2270] sm:$0xff]
        %v1504 = vld [vmem:[%s315 + $0x2278] sm:$0xff]
        %v1505 = vld [vmem:[%s315 + $0x2280] sm:$0xff]
        %v1506 = vld [vmem:[%s315 + $0x2288] sm:$0xff]
        %v1507 = vld [vmem:[%s315 + $0x2290] sm:$0xff]
        %v1508 = vld [vmem:[%s315 + $0x2298] sm:$0xff]
        %v1509 = vld [vmem:[%s315 + $0x22a0] sm:$0xff]
        %v1510 = vld [vmem:[%s315 + $0x22a8] sm:$0xff]
        %v1511 = vld [vmem:[%s315 + $0x22b0] sm:$0xff]
        %v1512 = vld [vmem:[%s315 + $0x22b8] sm:$0xff]
        %v1513 = vld [vmem:[%s315 + $0x22c0] sm:$0xff]
        %v1514 = vld [vmem:[%s315 + $0x22c8] sm:$0xff]
        %v1515 = vld [vmem:[%s315 + $0x22d0] sm:$0xff]
        %v1516 = vld [vmem:[%s315 + $0x22d8] sm:$0xff]
        %v1517 = vld [vmem:[%s315 + $0x22e0] sm:$0xff]
        %v1518 = vld [vmem:[%s315 + $0x22e8] sm:$0xff]
        %v1519 = vld [vmem:[%s315 + $0x22f0] sm:$0xff]
        %v1520 = vld [vmem:[%s315 + $0x22f8] sm:$0xff]
        %v1521 = vld [vmem:[%s315 + $0x2300] sm:$0xff]
        %v1522 = vld [vmem:[%s315 + $0x2308] sm:$0xff]
        %v1523 = vld [vmem:[%s315 + $0x2310] sm:$0xff]
        %v1524 = vld [vmem:[%s315 + $0x2318] sm:$0xff]
        %v1525 = vld [vmem:[%s315 + $0x2320] sm:$0xff]
        %v1526 = vld [vmem:[%s315 + $0x2328] sm:$0xff]
        %v1527 = vld [vmem:[%s315 + $0x2330] sm:$0xff]
        %v1528 = vld [vmem:[%s315 + $0x2338] sm:$0xff]
        %v1529 = vld [vmem:[%s315 + $0x2340] sm:$0xff]
        %v1530 = vld [vmem:[%s315 + $0x2348] sm:$0xff]
        %v1531 = vld [vmem:[%s315 + $0x2350] sm:$0xff]
        %v1532 = vld [vmem:[%s315 + $0x2358] sm:$0xff]
        %v1533 = vld [vmem:[%s315 + $0x2360] sm:$0xff]
        %v1534 = vld [vmem:[%s315 + $0x2368] sm:$0xff]
        %v1535 = vld [vmem:[%s315 + $0x2370] sm:$0xff]
        %v1536 = vld [vmem:[%s315 + $0x2378] sm:$0xff]
        %v1537 = vld [vmem:[%s315 + $0x2380] sm:$0xff]
        %v1538 = vld [vmem:[%s315 + $0x2388] sm:$0xff]
        %v1539 = vld [vmem:[%s315 + $0x2390] sm:$0xff]
        %v1540 = vld [vmem:[%s315 + $0x2398] sm:$0xff]
        %v1541 = vld [vmem:[%s315 + $0x23a0] sm:$0xff]
        %v1542 = vld [vmem:[%s315 + $0x23a8] sm:$0xff]
        %v1543 = vld [vmem:[%s315 + $0x23b0] sm:$0xff]
        %v1544 = vld [vmem:[%s315 + $0x23b8] sm:$0xff]
        %v1545 = vld [vmem:[%s315 + $0x23c0] sm:$0xff]
        %v1546 = vld [vmem:[%s315 + $0x23c8] sm:$0xff]
        %v1547 = vld [vmem:[%s315 + $0x23d0] sm:$0xff]
        %v1548 = vld [vmem:[%s315 + $0x23d8] sm:$0xff]
        %v1549 = vld [vmem:[%s315 + $0x23e0] sm:$0xff]
        %v1550 = vld [vmem:[%s315 + $0x23e8] sm:$0xff]
        %v1551 = vld [vmem:[%s315 + $0x23f0] sm:$0xff]
        %v1552 = vld [vmem:[%s315 + $0x23f8] sm:$0xff]
        %v1553 = vld [vmem:[%s315 + $0x2400] sm:$0xff]
        %v1554 = vld [vmem:[%s315 + $0x2408] sm:$0xff]
        %v1555 = vld [vmem:[%s315 + $0x2410] sm:$0xff]
        %v1556 = vld [vmem:[%s315 + $0x2418] sm:$0xff]
        %v1557 = vld [vmem:[%s315 + $0x2420] sm:$0xff]
        %v1558 = vld [vmem:[%s315 + $0x2428] sm:$0xff]
        %v1559 = vld [vmem:[%s315 + $0x2430] sm:$0xff]
        %v1560 = vld [vmem:[%s315 + $0x2438] sm:$0xff]
        %v1561 = vld [vmem:[%s315 + $0x2440] sm:$0xff]
        %v1562 = vld [vmem:[%s315 + $0x2448] sm:$0xff]
        %v1563 = vld [vmem:[%s315 + $0x2450] sm:$0xff]
        %v1564 = vld [vmem:[%s315 + $0x2458] sm:$0xff]
        %v1565 = vld [vmem:[%s315 + $0x2460] sm:$0xff]
        %v1566 = vld [vmem:[%s315 + $0x2468] sm:$0xff]
        %v1567 = vld [vmem:[%s315 + $0x2470] sm:$0xff]
        %v1568 = vld [vmem:[%s315 + $0x2478] sm:$0xff]
        %v1569 = vld [vmem:[%s315 + $0x2480] sm:$0xff]
        %v1570 = vld [vmem:[%s315 + $0x2488] sm:$0xff]
        %v1571 = vld [vmem:[%s315 + $0x2490] sm:$0xff]
        %v1572 = vld [vmem:[%s315 + $0x2498] sm:$0xff]
        %v1573 = vld [vmem:[%s315 + $0x24a0] sm:$0xff]
        %v1574 = vld [vmem:[%s315 + $0x24a8] sm:$0xff]
        %v1575 = vld [vmem:[%s315 + $0x24b0] sm:$0xff]
        %v1576 = vld [vmem:[%s315 + $0x24b8] sm:$0xff]
        %v1577 = vld [vmem:[%s315 + $0x24c0] sm:$0xff]
        %v1578 = vld [vmem:[%s315 + $0x24c8] sm:$0xff]
        %v1579 = vld [vmem:[%s315 + $0x24d0] sm:$0xff]
        %v1580 = vld [vmem:[%s315 + $0x24d8] sm:$0xff]
        %v1581 = vld [vmem:[%s315 + $0x24e0] sm:$0xff]
        %v1582 = vld [vmem:[%s315 + $0x24e8] sm:$0xff]
        %v1583 = vld [vmem:[%s315 + $0x24f0] sm:$0xff]
        %v1584 = vld [vmem:[%s315 + $0x24f8] sm:$0xff]
        %v1585 = vld [vmem:[%s315 + $0x2500] sm:$0xff]
        %v1586 = vld [vmem:[%s315 + $0x2508] sm:$0xff]
        %v1587 = vld [vmem:[%s315 + $0x2510] sm:$0xff]
        %v1588 = vld [vmem:[%s315 + $0x2518] sm:$0xff]
        %v1589 = vld [vmem:[%s315 + $0x2520] sm:$0xff]
        %v1590 = vld [vmem:[%s315 + $0x2528] sm:$0xff]
        %v1591 = vld [vmem:[%s315 + $0x2530] sm:$0xff]
        %v1592 = vld [vmem:[%s315 + $0x2538] sm:$0xff]
        %v1593 = vld [vmem:[%s315 + $0x2540] sm:$0xff]
        %v1594 = vld [vmem:[%s315 + $0x2548] sm:$0xff]
        %v1595 = vld [vmem:[%s315 + $0x2550] sm:$0xff]
        %v1596 = vld [vmem:[%s315 + $0x2558] sm:$0xff]
        %v1597 = vld [vmem:[%s315 + $0x2560] sm:$0xff]
        %v1598 = vld [vmem:[%s315 + $0x2568] sm:$0xff]
        %v1599 = vld [vmem:[%s315 + $0x2570] sm:$0xff]
        %v1600 = vld [vmem:[%s315 + $0x2578] sm:$0xff]
        %v1601 = vld [vmem:[%s315 + $0x2580] sm:$0xff]
        %v1602 = vld [vmem:[%s315 + $0x2588] sm:$0xff]
        %v1603 = vld [vmem:[%s315 + $0x2590] sm:$0xff]
        %v1604 = vld [vmem:[%s315 + $0x2598] sm:$0xff]
        %v1605 = vld [vmem:[%s315 + $0x25a0] sm:$0xff]
        %v1606 = vld [vmem:[%s315 + $0x25a8] sm:$0xff]
        %v1607 = vld [vmem:[%s315 + $0x25b0] sm:$0xff]
        %v1608 = vld [vmem:[%s315 + $0x25b8] sm:$0xff]
        %v1609 = vld [vmem:[%s315 + $0x25c0] sm:$0xff]
        %v1610 = vld [vmem:[%s315 + $0x25c8] sm:$0xff]
        %v1611 = vld [vmem:[%s315 + $0x25d0] sm:$0xff]
        %v1612 = vld [vmem:[%s315 + $0x25d8] sm:$0xff]
        %v1613 = vld [vmem:[%s315 + $0x25e0] sm:$0xff]
        %v1614 = vld [vmem:[%s315 + $0x25e8] sm:$0xff]
        %v1615 = vld [vmem:[%s315 + $0x25f0] sm:$0xff]
        %v1616 = vld [vmem:[%s315 + $0x25f8] sm:$0xff]
        %v1617 = vld [vmem:[%s315 + $0x2600] sm:$0xff]
        %v1618 = vld [vmem:[%s315 + $0x2608] sm:$0xff]
        %v1619 = vld [vmem:[%s315 + $0x2610] sm:$0xff]
        %v1620 = vld [vmem:[%s315 + $0x2618] sm:$0xff]
        %v1621 = vld [vmem:[%s315 + $0x2620] sm:$0xff]
        %v1622 = vld [vmem:[%s315 + $0x2628] sm:$0xff]
        %v1623 = vld [vmem:[%s315 + $0x2630] sm:$0xff]
        %v1624 = vld [vmem:[%s315 + $0x2638] sm:$0xff]
        %v1625 = vld [vmem:[%s315 + $0x2640] sm:$0xff]
        %v1626 = vld [vmem:[%s315 + $0x2648] sm:$0xff]
        %v1627 = vld [vmem:[%s315 + $0x2650] sm:$0xff]
        %v1628 = vld [vmem:[%s315 + $0x2658] sm:$0xff]
        %v1629 = vld [vmem:[%s315 + $0x2660] sm:$0xff]
        %v1630 = vld [vmem:[%s315 + $0x2668] sm:$0xff]
        %v1631 = vld [vmem:[%s315 + $0x2670] sm:$0xff]
        %v1632 = vld [vmem:[%s315 + $0x2678] sm:$0xff]
        %v1633 = vld [vmem:[%s315 + $0x2680] sm:$0xff]
        %v1634 = vld [vmem:[%s315 + $0x2688] sm:$0xff]
        %v1635 = vld [vmem:[%s315 + $0x2690] sm:$0xff]
        %v1636 = vld [vmem:[%s315 + $0x2698] sm:$0xff]
        %v1637 = vld [vmem:[%s315 + $0x26a0] sm:$0xff]
        %v1638 = vld [vmem:[%s315 + $0x26a8] sm:$0xff]
        %v1639 = vld [vmem:[%s315 + $0x26b0] sm:$0xff]
        %v1640 = vld [vmem:[%s315 + $0x26b8] sm:$0xff]
        %v1641 = vld [vmem:[%s315 + $0x26c0] sm:$0xff]
        %v1642 = vld [vmem:[%s315 + $0x26c8] sm:$0xff]
        %v1643 = vld [vmem:[%s315 + $0x26d0] sm:$0xff]
        %v1644 = vld [vmem:[%s315 + $0x26d8] sm:$0xff]
        %v1645 = vld [vmem:[%s315 + $0x26e0] sm:$0xff]
        %v1646 = vld [vmem:[%s315 + $0x26e8] sm:$0xff]
        %v1647 = vld [vmem:[%s315 + $0x26f0] sm:$0xff]
        %v1648 = vld [vmem:[%s315 + $0x26f8] sm:$0xff]
        %v1649 = vld [vmem:[%s315 + $0x2700] sm:$0xff]
        %v1650 = vld [vmem:[%s315 + $0x2708] sm:$0xff]
        %v1651 = vld [vmem:[%s315 + $0x2710] sm:$0xff]
        %v1652 = vld [vmem:[%s315 + $0x2718] sm:$0xff]
        %v1653 = vld [vmem:[%s315 + $0x2720] sm:$0xff]
        %v1654 = vld [vmem:[%s315 + $0x2728] sm:$0xff]
        %v1655 = vld [vmem:[%s315 + $0x2730] sm:$0xff]
        %v1656 = vld [vmem:[%s315 + $0x2738] sm:$0xff]
        %v1657 = vld [vmem:[%s315 + $0x2740] sm:$0xff]
        %v1658 = vld [vmem:[%s315 + $0x2748] sm:$0xff]
        %v1659 = vld [vmem:[%s315 + $0x2750] sm:$0xff]
        %v1660 = vld [vmem:[%s315 + $0x2758] sm:$0xff]
        %v1661 = vld [vmem:[%s315 + $0x2760] sm:$0xff]
        %v1662 = vld [vmem:[%s315 + $0x2768] sm:$0xff]
        %v1663 = vld [vmem:[%s315 + $0x2770] sm:$0xff]
        %v1664 = vld [vmem:[%s315 + $0x2778] sm:$0xff]
        %v1665 = vld [vmem:[%s315 + $0x2780] sm:$0xff]
        %v1666 = vld [vmem:[%s315 + $0x2788] sm:$0xff]
        %v1667 = vld [vmem:[%s315 + $0x2790] sm:$0xff]
        %v1668 = vld [vmem:[%s315 + $0x2798] sm:$0xff]
        %v1669 = vld [vmem:[%s315 + $0x27a0] sm:$0xff]
        %v1670 = vld [vmem:[%s315 + $0x27a8] sm:$0xff]
        %v1671 = vld [vmem:[%s315 + $0x27b0] sm:$0xff]
        %v1672 = vld [vmem:[%s315 + $0x27b8] sm:$0xff]
        %v1673 = vld [vmem:[%s315 + $0x27c0] sm:$0xff]
        %v1674 = vld [vmem:[%s315 + $0x27c8] sm:$0xff]
        %v1675 = vld [vmem:[%s315 + $0x27d0] sm:$0xff]
        %v1676 = vld [vmem:[%s315 + $0x27d8] sm:$0xff]
        %v1677 = vld [vmem:[%s315 + $0x27e0] sm:$0xff]
        %v1678 = vld [vmem:[%s315 + $0x27e8] sm:$0xff]
        %v1679 = vld [vmem:[%s315 + $0x27f0] sm:$0xff]
        %v1680 = vld [vmem:[%s315 + $0x27f8] sm:$0xff]
        %v1681 = vld [vmem:[%s315 + $0x2800] sm:$0xff]
        %v1682 = vld [vmem:[%s315 + $0x2808] sm:$0xff]
        %v1683 = vld [vmem:[%s315 + $0x2810] sm:$0xff]
        %v1684 = vld [vmem:[%s315 + $0x2818] sm:$0xff]
        %v1685 = vld [vmem:[%s315 + $0x2820] sm:$0xff]
        %v1686 = vld [vmem:[%s315 + $0x2828] sm:$0xff]
        %v1687 = vld [vmem:[%s315 + $0x2830] sm:$0xff]
        %v1688 = vld [vmem:[%s315 + $0x2838] sm:$0xff]
        %v1689 = vld [vmem:[%s315 + $0x2840] sm:$0xff]
        %v1690 = vld [vmem:[%s315 + $0x2848] sm:$0xff]
        %v1691 = vld [vmem:[%s315 + $0x2850] sm:$0xff]
        %v1692 = vld [vmem:[%s315 + $0x2858] sm:$0xff]
        %v1693 = vld [vmem:[%s315 + $0x2860] sm:$0xff]
        %v1694 = vld [vmem:[%s315 + $0x2868] sm:$0xff]
        %v1695 = vld [vmem:[%s315 + $0x2870] sm:$0xff]
        %v1696 = vld [vmem:[%s315 + $0x2878] sm:$0xff]
        %v1697 = vld [vmem:[%s315 + $0x2880] sm:$0xff]
        %v1698 = vld [vmem:[%s315 + $0x2888] sm:$0xff]
        %v1699 = vld [vmem:[%s315 + $0x2890] sm:$0xff]
        %v1700 = vld [vmem:[%s315 + $0x2898] sm:$0xff]
        %v1701 = vld [vmem:[%s315 + $0x28a0] sm:$0xff]
        %v1702 = vld [vmem:[%s315 + $0x28a8] sm:$0xff]
        %v1703 = vld [vmem:[%s315 + $0x28b0] sm:$0xff]
        %v1704 = vld [vmem:[%s315 + $0x28b8] sm:$0xff]
        %v1705 = vld [vmem:[%s315 + $0x28c0] sm:$0xff]
        %v1706 = vld [vmem:[%s315 + $0x28c8] sm:$0xff]
        %v1707 = vld [vmem:[%s315 + $0x28d0] sm:$0xff]
        %v1708 = vld [vmem:[%s315 + $0x28d8] sm:$0xff]
        %v1709 = vld [vmem:[%s315 + $0x28e0] sm:$0xff]
        %v1710 = vld [vmem:[%s315 + $0x28e8] sm:$0xff]
        %v1711 = vld [vmem:[%s315 + $0x28f0] sm:$0xff]
        %v1712 = vld [vmem:[%s315 + $0x28f8] sm:$0xff]
        %v1713 = vld [vmem:[%s315 + $0x2900] sm:$0xff]
        %v1714 = vld [vmem:[%s315 + $0x2908] sm:$0xff]
        %v1715 = vld [vmem:[%s315 + $0x2910] sm:$0xff]
        %v1716 = vld [vmem:[%s315 + $0x2918] sm:$0xff]
        %v1717 = vld [vmem:[%s315 + $0x2920] sm:$0xff]
        %v1718 = vld [vmem:[%s315 + $0x2928] sm:$0xff]
        %v1719 = vld [vmem:[%s315 + $0x2930] sm:$0xff]
        %v1720 = vld [vmem:[%s315 + $0x2938] sm:$0xff]
        %v1721 = vld [vmem:[%s315 + $0x2940] sm:$0xff]
        %v1722 = vld [vmem:[%s315 + $0x2948] sm:$0xff]
        %v1723 = vld [vmem:[%s315 + $0x2950] sm:$0xff]
        %v1724 = vld [vmem:[%s315 + $0x2958] sm:$0xff]
        %v1725 = vld [vmem:[%s315 + $0x2960] sm:$0xff]
        %v1726 = vld [vmem:[%s315 + $0x2968] sm:$0xff]
        %v1727 = vld [vmem:[%s315 + $0x2970] sm:$0xff]
        %v1728 = vld [vmem:[%s315 + $0x2978] sm:$0xff]
        %v1729 = vld [vmem:[%s315 + $0x2980] sm:$0xff]
        %v1730 = vld [vmem:[%s315 + $0x2988] sm:$0xff]
        %v1731 = vld [vmem:[%s315 + $0x2990] sm:$0xff]
        %v1732 = vld [vmem:[%s315 + $0x2998] sm:$0xff]
        %v1733 = vld [vmem:[%s315 + $0x29a0] sm:$0xff]
        %v1734 = vld [vmem:[%s315 + $0x29a8] sm:$0xff]
        %v1735 = vld [vmem:[%s315 + $0x29b0] sm:$0xff]
        %v1736 = vld [vmem:[%s315 + $0x29b8] sm:$0xff]
        %v1737 = vld [vmem:[%s315 + $0x29c0] sm:$0xff]
        %v1738 = vld [vmem:[%s315 + $0x29c8] sm:$0xff]
        %v1739 = vld [vmem:[%s315 + $0x29d0] sm:$0xff]
        %v1740 = vld [vmem:[%s315 + $0x29d8] sm:$0xff]
        %v1741 = vld [vmem:[%s315 + $0x29e0] sm:$0xff]
        %v1742 = vld [vmem:[%s315 + $0x29e8] sm:$0xff]
        %v1743 = vld [vmem:[%s315 + $0x29f0] sm:$0xff]
        %v1744 = vld [vmem:[%s315 + $0x29f8] sm:$0xff]
        %v1745 = vld [vmem:[%s315 + $0x2a00] sm:$0xff]
        %v1746 = vld [vmem:[%s315 + $0x2a08] sm:$0xff]
        %v1747 = vld [vmem:[%s315 + $0x2a10] sm:$0xff]
        %v1748 = vld [vmem:[%s315 + $0x2a18] sm:$0xff]
        %v1749 = vld [vmem:[%s315 + $0x2a20] sm:$0xff]
        %v1750 = vld [vmem:[%s315 + $0x2a28] sm:$0xff]
        %v1751 = vld [vmem:[%s315 + $0x2a30] sm:$0xff]
        %v1752 = vld [vmem:[%s315 + $0x2a38] sm:$0xff]
        %v1753 = vld [vmem:[%s315 + $0x2a40] sm:$0xff]
        %v1754 = vld [vmem:[%s315 + $0x2a48] sm:$0xff]
        %v1755 = vld [vmem:[%s315 + $0x2a50] sm:$0xff]
        %v1756 = vld [vmem:[%s315 + $0x2a58] sm:$0xff]
        %v1757 = vld [vmem:[%s315 + $0x2a60] sm:$0xff]
        %v1758 = vld [vmem:[%s315 + $0x2a68] sm:$0xff]
        %v1759 = vld [vmem:[%s315 + $0x2a70] sm:$0xff]
        %v1760 = vld [vmem:[%s315 + $0x2a78] sm:$0xff]
        %v1761 = vld [vmem:[%s315 + $0x2a80] sm:$0xff]
        %v1762 = vld [vmem:[%s315 + $0x2a88] sm:$0xff]
        %v1763 = vld [vmem:[%s315 + $0x2a90] sm:$0xff]
        %v1764 = vld [vmem:[%s315 + $0x2a98] sm:$0xff]
        %v1765 = vld [vmem:[%s315 + $0x2aa0] sm:$0xff]
        %v1766 = vld [vmem:[%s315 + $0x2aa8] sm:$0xff]
        %v1767 = vld [vmem:[%s315 + $0x2ab0] sm:$0xff]
        %v1768 = vld [vmem:[%s315 + $0x2ab8] sm:$0xff]
        %v1769 = vld [vmem:[%s315 + $0x2ac0] sm:$0xff]
        %v1770 = vld [vmem:[%s315 + $0x2ac8] sm:$0xff]
        %v1771 = vld [vmem:[%s315 + $0x2ad0] sm:$0xff]
        %v1772 = vld [vmem:[%s315 + $0x2ad8] sm:$0xff]
        %v1773 = vld [vmem:[%s315 + $0x2ae0] sm:$0xff]
        %v1774 = vld [vmem:[%s315 + $0x2ae8] sm:$0xff]
        %v1775 = vld [vmem:[%s315 + $0x2af0] sm:$0xff]
        %v1776 = vld [vmem:[%s315 + $0x2af8] sm:$0xff]
        %v1777 = vld [vmem:[%s315 + $0x2b00] sm:$0xff]
        %v1778 = vld [vmem:[%s315 + $0x2b08] sm:$0xff]
        %v1779 = vld [vmem:[%s315 + $0x2b10] sm:$0xff]
        %v1780 = vld [vmem:[%s315 + $0x2b18] sm:$0xff]
        %v1781 = vld [vmem:[%s315 + $0x2b20] sm:$0xff]
        %v1782 = vld [vmem:[%s315 + $0x2b28] sm:$0xff]
        %v1783 = vld [vmem:[%s315 + $0x2b30] sm:$0xff]
        %v1784 = vld [vmem:[%s315 + $0x2b38] sm:$0xff]
        %v1785 = vld [vmem:[%s315 + $0x2b40] sm:$0xff]
        %v1786 = vld [vmem:[%s315 + $0x2b48] sm:$0xff]
        %v1787 = vld [vmem:[%s315 + $0x2b50] sm:$0xff]
        %v1788 = vld [vmem:[%s315 + $0x2b58] sm:$0xff]
        %v1789 = vld [vmem:[%s315 + $0x2b60] sm:$0xff]
        %v1790 = vld [vmem:[%s315 + $0x2b68] sm:$0xff]
        %v1791 = vld [vmem:[%s315 + $0x2b70] sm:$0xff]
        %v1792 = vld [vmem:[%s315 + $0x2b78] sm:$0xff]
        %v1793 = vld [vmem:[%s315 + $0x2b80] sm:$0xff]
        %v1794 = vld [vmem:[%s315 + $0x2b88] sm:$0xff]
        %v1795 = vld [vmem:[%s315 + $0x2b90] sm:$0xff]
        %v1796 = vld [vmem:[%s315 + $0x2b98] sm:$0xff]
        %v1797 = vld [vmem:[%s315 + $0x2ba0] sm:$0xff]
        %v1798 = vld [vmem:[%s315 + $0x2ba8] sm:$0xff]
        %v1799 = vld [vmem:[%s315 + $0x2bb0] sm:$0xff]
        %v1800 = vld [vmem:[%s315 + $0x2bb8] sm:$0xff]
        %v1801 = vld [vmem:[%s315 + $0x2bc0] sm:$0xff]
        %v1802 = vld [vmem:[%s315 + $0x2bc8] sm:$0xff]
        %v1803 = vld [vmem:[%s315 + $0x2bd0] sm:$0xff]
        %v1804 = vld [vmem:[%s315 + $0x2bd8] sm:$0xff]
        %v1805 = vld [vmem:[%s315 + $0x2be0] sm:$0xff]
        %v1806 = vld [vmem:[%s315 + $0x2be8] sm:$0xff]
        %v1807 = vld [vmem:[%s315 + $0x2bf0] sm:$0xff]
        %v1808 = vld [vmem:[%s315 + $0x2bf8] sm:$0xff]
        %v1809 = vld [vmem:[%s315 + $0x2c00] sm:$0xff]
        %v1810 = vld [vmem:[%s315 + $0x2c08] sm:$0xff]
        %v1811 = vld [vmem:[%s315 + $0x2c10] sm:$0xff]
        %v1812 = vld [vmem:[%s315 + $0x2c18] sm:$0xff]
        %v1813 = vld [vmem:[%s315 + $0x2c20] sm:$0xff]
        %v1814 = vld [vmem:[%s315 + $0x2c28] sm:$0xff]
        %v1815 = vld [vmem:[%s315 + $0x2c30] sm:$0xff]
        %v1816 = vld [vmem:[%s315 + $0x2c38] sm:$0xff]
        %v1817 = vld [vmem:[%s315 + $0x2c40] sm:$0xff]
        %v1818 = vld [vmem:[%s315 + $0x2c48] sm:$0xff]
        %v1819 = vld [vmem:[%s315 + $0x2c50] sm:$0xff]
        %v1820 = vld [vmem:[%s315 + $0x2c58] sm:$0xff]
        %v1821 = vld [vmem:[%s315 + $0x2c60] sm:$0xff]
        %v1822 = vld [vmem:[%s315 + $0x2c68] sm:$0xff]
        %v1823 = vld [vmem:[%s315 + $0x2c70] sm:$0xff]
        %v1824 = vld [vmem:[%s315 + $0x2c78] sm:$0xff]
        %v1825 = vld [vmem:[%s315 + $0x2c80] sm:$0xff]
        %v1826 = vld [vmem:[%s315 + $0x2c88] sm:$0xff]
        %v1827 = vld [vmem:[%s315 + $0x2c90] sm:$0xff]
        %v1828 = vld [vmem:[%s315 + $0x2c98] sm:$0xff]
        %v1829 = vld [vmem:[%s315 + $0x2ca0] sm:$0xff]
        %v1830 = vld [vmem:[%s315 + $0x2ca8] sm:$0xff]
        %v1831 = vld [vmem:[%s315 + $0x2cb0] sm:$0xff]
        %v1832 = vld [vmem:[%s315 + $0x2cb8] sm:$0xff]
        %v1833 = vld [vmem:[%s315 + $0x2cc0] sm:$0xff]
        %v1834 = vld [vmem:[%s315 + $0x2cc8] sm:$0xff]
        %v1835 = vld [vmem:[%s315 + $0x2cd0] sm:$0xff]
        %v1836 = vld [vmem:[%s315 + $0x2cd8] sm:$0xff]
        %v1837 = vld [vmem:[%s315 + $0x2ce0] sm:$0xff]
        %v1838 = vld [vmem:[%s315 + $0x2ce8] sm:$0xff]
        %v1839 = vld [vmem:[%s315 + $0x2cf0] sm:$0xff]
        %v1840 = vld [vmem:[%s315 + $0x2cf8] sm:$0xff]
        %v1841 = vld [vmem:[%s315 + $0x2d00] sm:$0xff]
        %v1842 = vld [vmem:[%s315 + $0x2d08] sm:$0xff]
        %v1843 = vld [vmem:[%s315 + $0x2d10] sm:$0xff]
        %v1844 = vld [vmem:[%s315 + $0x2d18] sm:$0xff]
        %v1845 = vld [vmem:[%s315 + $0x2d20] sm:$0xff]
        %v1846 = vld [vmem:[%s315 + $0x2d28] sm:$0xff]
        %v1847 = vld [vmem:[%s315 + $0x2d30] sm:$0xff]
        %v1848 = vld [vmem:[%s315 + $0x2d38] sm:$0xff]
        %v1849 = vld [vmem:[%s315 + $0x2d40] sm:$0xff]
        %v1850 = vld [vmem:[%s315 + $0x2d48] sm:$0xff]
        %v1851 = vld [vmem:[%s315 + $0x2d50] sm:$0xff]
        %v1852 = vld [vmem:[%s315 + $0x2d58] sm:$0xff]
        %v1853 = vld [vmem:[%s315 + $0x2d60] sm:$0xff]
        %v1854 = vld [vmem:[%s315 + $0x2d68] sm:$0xff]
        %v1855 = vld [vmem:[%s315 + $0x2d70] sm:$0xff]
        %v1856 = vld [vmem:[%s315 + $0x2d78] sm:$0xff]
        %v1857 = vld [vmem:[%s315 + $0x2d80] sm:$0xff]
        %v1858 = vld [vmem:[%s315 + $0x2d88] sm:$0xff]
        %v1859 = vld [vmem:[%s315 + $0x2d90] sm:$0xff]
        %v1860 = vld [vmem:[%s315 + $0x2d98] sm:$0xff]
        %v1861 = vld [vmem:[%s315 + $0x2da0] sm:$0xff]
        %v1862 = vld [vmem:[%s315 + $0x2da8] sm:$0xff]
        %v1863 = vld [vmem:[%s315 + $0x2db0] sm:$0xff]
        %v1864 = vld [vmem:[%s315 + $0x2db8] sm:$0xff]
        %v1865 = vld [vmem:[%s315 + $0x2dc0] sm:$0xff]
        %v1866 = vld [vmem:[%s315 + $0x2dc8] sm:$0xff]
        %v1867 = vld [vmem:[%s315 + $0x2dd0] sm:$0xff]
        %v1868 = vld [vmem:[%s315 + $0x2dd8] sm:$0xff]
        %v1869 = vld [vmem:[%s315 + $0x2de0] sm:$0xff]
        %v1870 = vld [vmem:[%s315 + $0x2de8] sm:$0xff]
        %v1871 = vld [vmem:[%s315 + $0x2df0] sm:$0xff]
        %v1872 = vld [vmem:[%s315 + $0x2df8] sm:$0xff]
        %v1873 = vld [vmem:[%s315 + $0x2e00] sm:$0xff]
        %v1874 = vld [vmem:[%s315 + $0x2e08] sm:$0xff]
        %v1875 = vld [vmem:[%s315 + $0x2e10] sm:$0xff]
        %v1876 = vld [vmem:[%s315 + $0x2e18] sm:$0xff]
        %v1877 = vld [vmem:[%s315 + $0x2e20] sm:$0xff]
        %v1878 = vld [vmem:[%s315 + $0x2e28] sm:$0xff]
        %v1879 = vld [vmem:[%s315 + $0x2e30] sm:$0xff]
        %v1880 = vld [vmem:[%s315 + $0x2e38] sm:$0xff]
        %v1881 = vld [vmem:[%s315 + $0x2e40] sm:$0xff]
        %v1882 = vld [vmem:[%s315 + $0x2e48] sm:$0xff]
        %v1883 = vld [vmem:[%s315 + $0x2e50] sm:$0xff]
        %v1884 = vld [vmem:[%s315 + $0x2e58] sm:$0xff]
        %v1885 = vld [vmem:[%s315 + $0x2e60] sm:$0xff]
        %v1886 = vld [vmem:[%s315 + $0x2e68] sm:$0xff]
        %v1887 = vld [vmem:[%s315 + $0x2e70] sm:$0xff]
        %v1888 = vld [vmem:[%s315 + $0x2e78] sm:$0xff]
        %v1889 = vld [vmem:[%s315 + $0x2e80] sm:$0xff]
        %v1890 = vld [vmem:[%s315 + $0x2e88] sm:$0xff]
        %v1891 = vld [vmem:[%s315 + $0x2e90] sm:$0xff]
        %v1892 = vld [vmem:[%s315 + $0x2e98] sm:$0xff]
        %v1893 = vld [vmem:[%s315 + $0x2ea0] sm:$0xff]
        %v1894 = vld [vmem:[%s315 + $0x2ea8] sm:$0xff]
        %v1895 = vld [vmem:[%s315 + $0x2eb0] sm:$0xff]
        %v1896 = vld [vmem:[%s315 + $0x2eb8] sm:$0xff]
        %v1897 = vld [vmem:[%s315 + $0x2ec0] sm:$0xff]
        %v1898 = vld [vmem:[%s315 + $0x2ec8] sm:$0xff]
        %v1899 = vld [vmem:[%s315 + $0x2ed0] sm:$0xff]
        %v1900 = vld [vmem:[%s315 + $0x2ed8] sm:$0xff]
        %v1901 = vld [vmem:[%s315 + $0x2ee0] sm:$0xff]
        %v1902 = vld [vmem:[%s315 + $0x2ee8] sm:$0xff]
        %v1903 = vld [vmem:[%s315 + $0x2ef0] sm:$0xff]
        %v1904 = vld [vmem:[%s315 + $0x2ef8] sm:$0xff]
        %v1905 = vld [vmem:[%s315 + $0x2f00] sm:$0xff]
        %v1906 = vld [vmem:[%s315 + $0x2f08] sm:$0xff]
        %v1907 = vld [vmem:[%s315 + $0x2f10] sm:$0xff]
        %v1908 = vld [vmem:[%s315 + $0x2f18] sm:$0xff]
        %v1909 = vld [vmem:[%s315 + $0x2f20] sm:$0xff]
        %v1910 = vld [vmem:[%s315 + $0x2f28] sm:$0xff]
        %v1911 = vld [vmem:[%s315 + $0x2f30] sm:$0xff]
        %v1912 = vld [vmem:[%s315 + $0x2f38] sm:$0xff]
        %v1913 = vld [vmem:[%s315 + $0x2f40] sm:$0xff]
        %v1914 = vld [vmem:[%s315 + $0x2f48] sm:$0xff]
        %v1915 = vld [vmem:[%s315 + $0x2f50] sm:$0xff]
        %v1916 = vld [vmem:[%s315 + $0x2f58] sm:$0xff]
        %v1917 = vld [vmem:[%s315 + $0x2f60] sm:$0xff]
        %v1918 = vld [vmem:[%s315 + $0x2f68] sm:$0xff]
        %v1919 = vld [vmem:[%s315 + $0x2f70] sm:$0xff]
        %v1920 = vld [vmem:[%s315 + $0x2f78] sm:$0xff]
        %v1921 = vld [vmem:[%s315 + $0x2f80] sm:$0xff]
        %v1922 = vld [vmem:[%s315 + $0x2f88] sm:$0xff]
        %v1923 = vld [vmem:[%s315 + $0x2f90] sm:$0xff]
        %v1924 = vld [vmem:[%s315 + $0x2f98] sm:$0xff]
        %v1925 = vld [vmem:[%s315 + $0x2fa0] sm:$0xff]
        %v1926 = vld [vmem:[%s315 + $0x2fa8] sm:$0xff]
        %v1927 = vld [vmem:[%s315 + $0x2fb0] sm:$0xff]
        %v1928 = vld [vmem:[%s315 + $0x2fb8] sm:$0xff]
        %v1929 = vld [vmem:[%s315 + $0x2fc0] sm:$0xff]
        %v1930 = vld [vmem:[%s315 + $0x2fc8] sm:$0xff]
        %v1931 = vld [vmem:[%s315 + $0x2fd0] sm:$0xff]
        %v1932 = vld [vmem:[%s315 + $0x2fd8] sm:$0xff]
        %v1933 = vld [vmem:[%s315 + $0x2fe0] sm:$0xff]
        %v1934 = vld [vmem:[%s315 + $0x2fe8] sm:$0xff]
        %v1935 = vld [vmem:[%s315 + $0x2ff0] sm:$0xff]
        %v1936 = vld [vmem:[%s315 + $0x2ff8] sm:$0xff]
        %v1937 = vld [vmem:[%s315 + $0x3000] sm:$0xff]
        %v1938 = vld [vmem:[%s315 + $0x3008] sm:$0xff]
        %v1939 = vld [vmem:[%s315 + $0x3010] sm:$0xff]
        %v1940 = vld [vmem:[%s315 + $0x3018] sm:$0xff]
        %v1941 = vld [vmem:[%s315 + $0x3020] sm:$0xff]
        %v1942 = vld [vmem:[%s315 + $0x3028] sm:$0xff]
        %v1943 = vld [vmem:[%s315 + $0x3030] sm:$0xff]
        %v1944 = vld [vmem:[%s315 + $0x3038] sm:$0xff]
        %v1945 = vld [vmem:[%s315 + $0x3040] sm:$0xff]
        %v1946 = vld [vmem:[%s315 + $0x3048] sm:$0xff]
        %v1947 = vld [vmem:[%s315 + $0x3050] sm:$0xff]
        %v1948 = vld [vmem:[%s315 + $0x3058] sm:$0xff]
        %v1949 = vld [vmem:[%s315 + $0x3060] sm:$0xff]
        %v1950 = vld [vmem:[%s315 + $0x3068] sm:$0xff]
        %v1951 = vld [vmem:[%s315 + $0x3070] sm:$0xff]
        %v1952 = vld [vmem:[%s315 + $0x3078] sm:$0xff]
        %v1953 = vld [vmem:[%s315 + $0x3080] sm:$0xff]
        %v1954 = vld [vmem:[%s315 + $0x3088] sm:$0xff]
        %v1955 = vld [vmem:[%s315 + $0x3090] sm:$0xff]
        %v1956 = vld [vmem:[%s315 + $0x3098] sm:$0xff]
        %v1957 = vld [vmem:[%s315 + $0x30a0] sm:$0xff]
        %v1958 = vld [vmem:[%s315 + $0x30a8] sm:$0xff]
        %v1959 = vld [vmem:[%s315 + $0x30b0] sm:$0xff]
        %v1960 = vld [vmem:[%s315 + $0x30b8] sm:$0xff]
        %v1961 = vld [vmem:[%s315 + $0x30c0] sm:$0xff]
        %v1962 = vld [vmem:[%s315 + $0x30c8] sm:$0xff]
        %v1963 = vld [vmem:[%s315 + $0x30d0] sm:$0xff]
        %v1964 = vld [vmem:[%s315 + $0x30d8] sm:$0xff]
        %v1965 = vld [vmem:[%s315 + $0x30e0] sm:$0xff]
        %v1966 = vld [vmem:[%s315 + $0x30e8] sm:$0xff]
        %v1967 = vld [vmem:[%s315 + $0x30f0] sm:$0xff]
        %v1968 = vld [vmem:[%s315 + $0x30f8] sm:$0xff]
        %v1969 = vld [vmem:[%s315 + $0x3100] sm:$0xff]
        %v1970 = vld [vmem:[%s315 + $0x3108] sm:$0xff]
        %v1971 = vld [vmem:[%s315 + $0x3110] sm:$0xff]
        %v1972 = vld [vmem:[%s315 + $0x3118] sm:$0xff]
        %v1973 = vld [vmem:[%s315 + $0x3120] sm:$0xff]
        %v1974 = vld [vmem:[%s315 + $0x3128] sm:$0xff]
        %v1975 = vld [vmem:[%s315 + $0x3130] sm:$0xff]
        %v1976 = vld [vmem:[%s315 + $0x3138] sm:$0xff]
        %v1977 = vld [vmem:[%s315 + $0x3140] sm:$0xff]
        %v1978 = vld [vmem:[%s315 + $0x3148] sm:$0xff]
        %v1979 = vld [vmem:[%s315 + $0x3150] sm:$0xff]
        %v1980 = vld [vmem:[%s315 + $0x3158] sm:$0xff]
        %v1981 = vld [vmem:[%s315 + $0x3160] sm:$0xff]
        %v1982 = vld [vmem:[%s315 + $0x3168] sm:$0xff]
        %v1983 = vld [vmem:[%s315 + $0x3170] sm:$0xff]
        %v1984 = vld [vmem:[%s315 + $0x3178] sm:$0xff]
        %v1985 = vld [vmem:[%s315 + $0x3180] sm:$0xff]
        %v1986 = vld [vmem:[%s315 + $0x3188] sm:$0xff]
        %v1987 = vld [vmem:[%s315 + $0x3190] sm:$0xff]
        %v1988 = vld [vmem:[%s315 + $0x3198] sm:$0xff]
        %v1989 = vld [vmem:[%s315 + $0x31a0] sm:$0xff]
        %v1990 = vld [vmem:[%s315 + $0x31a8] sm:$0xff]
        %v1991 = vld [vmem:[%s315 + $0x31b0] sm:$0xff]
        %v1992 = vld [vmem:[%s315 + $0x31b8] sm:$0xff]
        %v1993 = vld [vmem:[%s315 + $0x31c0] sm:$0xff]
        %v1994 = vld [vmem:[%s315 + $0x31c8] sm:$0xff]
        %v1995 = vld [vmem:[%s315 + $0x31d0] sm:$0xff]
        %v1996 = vld [vmem:[%s315 + $0x31d8] sm:$0xff]
        %v1997 = vld [vmem:[%s315 + $0x31e0] sm:$0xff]
        %v1998 = vld [vmem:[%s315 + $0x31e8] sm:$0xff]
        %v1999 = vld [vmem:[%s315 + $0x31f0] sm:$0xff]
        %v2000 = vld [vmem:[%s315 + $0x31f8] sm:$0xff]
        %v2001 = vld [vmem:[%s315 + $0x3200] sm:$0xff]
        %v2002 = vld [vmem:[%s315 + $0x3208] sm:$0xff]
        %v2003 = vld [vmem:[%s315 + $0x3210] sm:$0xff]
        %v2004 = vld [vmem:[%s315 + $0x3218] sm:$0xff]
        %v2005 = vld [vmem:[%s315 + $0x3220] sm:$0xff]
        %v2006 = vld [vmem:[%s315 + $0x3228] sm:$0xff]
        %v2007 = vld [vmem:[%s315 + $0x3230] sm:$0xff]
        %v2008 = vld [vmem:[%s315 + $0x3238] sm:$0xff]
        %v2009 = vld [vmem:[%s315 + $0x3240] sm:$0xff]
        %v2010 = vld [vmem:[%s315 + $0x3248] sm:$0xff]
        %v2011 = vld [vmem:[%s315 + $0x3250] sm:$0xff]
        %v2012 = vld [vmem:[%s315 + $0x3258] sm:$0xff]
        %v2013 = vld [vmem:[%s315 + $0x3260] sm:$0xff]
        %v2014 = vld [vmem:[%s315 + $0x3268] sm:$0xff]
        %v2015 = vld [vmem:[%s315 + $0x3270] sm:$0xff]
        %v2016 = vld [vmem:[%s315 + $0x3278] sm:$0xff]
        %v2017 = vld [vmem:[%s315 + $0x3280] sm:$0xff]
        %v2018 = vld [vmem:[%s315 + $0x3288] sm:$0xff]
        %v2019 = vld [vmem:[%s315 + $0x3290] sm:$0xff]
        %v2020 = vld [vmem:[%s315 + $0x3298] sm:$0xff]
        %v2021 = vld [vmem:[%s315 + $0x32a0] sm:$0xff]
        %v2022 = vld [vmem:[%s315 + $0x32a8] sm:$0xff]
        %v2023 = vld [vmem:[%s315 + $0x32b0] sm:$0xff]
        %v2024 = vld [vmem:[%s315 + $0x32b8] sm:$0xff]
        %v2025 = vld [vmem:[%s315 + $0x32c0] sm:$0xff]
        %v2026 = vld [vmem:[%s315 + $0x32c8] sm:$0xff]
        %v2027 = vld [vmem:[%s315 + $0x32d0] sm:$0xff]
        %v2028 = vld [vmem:[%s315 + $0x32d8] sm:$0xff]
        %v2029 = vld [vmem:[%s315 + $0x32e0] sm:$0xff]
        %v2030 = vld [vmem:[%s315 + $0x32e8] sm:$0xff]
        %v2031 = vld [vmem:[%s315 + $0x32f0] sm:$0xff]
        %v2032 = vld [vmem:[%s315 + $0x32f8] sm:$0xff]
        %v2033 = vld [vmem:[%s315 + $0x3300] sm:$0xff]
        %v2034 = vld [vmem:[%s315 + $0x3308] sm:$0xff]
        %v2035 = vld [vmem:[%s315 + $0x3310] sm:$0xff]
        %v2036 = vld [vmem:[%s315 + $0x3318] sm:$0xff]
        %v2037 = vld [vmem:[%s315 + $0x3320] sm:$0xff]
        %v2038 = vld [vmem:[%s315 + $0x3328] sm:$0xff]
        %v2039 = vld [vmem:[%s315 + $0x3330] sm:$0xff]
        %v2040 = vld [vmem:[%s315 + $0x3338] sm:$0xff]
        %v2041 = vld [vmem:[%s315 + $0x3340] sm:$0xff]
        %v2042 = vld [vmem:[%s315 + $0x3348] sm:$0xff]
        %v2043 = vld [vmem:[%s315 + $0x3350] sm:$0xff]
        %v2044 = vld [vmem:[%s315 + $0x3358] sm:$0xff]
        %v2045 = vld [vmem:[%s315 + $0x3360] sm:$0xff]
        %v2046 = vld [vmem:[%s315 + $0x3368] sm:$0xff]
        %v2047 = vld [vmem:[%s315 + $0x3370] sm:$0xff]
        %v2048 = vld [vmem:[%s315 + $0x3378] sm:$0xff]
        %v2049 = vld [vmem:[%s315 + $0x3380] sm:$0xff]
        %v2050 = vld [vmem:[%s315 + $0x3388] sm:$0xff]
        %v2051 = vld [vmem:[%s315 + $0x3390] sm:$0xff]
        %v2052 = vld [vmem:[%s315 + $0x3398] sm:$0xff]
        %v2053 = vld [vmem:[%s315 + $0x33a0] sm:$0xff]
        %v2054 = vld [vmem:[%s315 + $0x33a8] sm:$0xff]
        %v2055 = vld [vmem:[%s315 + $0x33b0] sm:$0xff]
        %v2056 = vld [vmem:[%s315 + $0x33b8] sm:$0xff]
        %v2057 = vld [vmem:[%s315 + $0x33c0] sm:$0xff]
        %v2058 = vld [vmem:[%s315 + $0x33c8] sm:$0xff]
        %v2059 = vld [vmem:[%s315 + $0x33d0] sm:$0xff]
        %v2060 = vld [vmem:[%s315 + $0x33d8] sm:$0xff]
        %v2061 = vld [vmem:[%s315 + $0x33e0] sm:$0xff]
        %v2062 = vld [vmem:[%s315 + $0x33e8] sm:$0xff]
        %v2063 = vld [vmem:[%s315 + $0x33f0] sm:$0xff]
        %v2064 = vld [vmem:[%s315 + $0x33f8] sm:$0xff]
        %v2065 = vld [vmem:[%s315 + $0x3400] sm:$0xff]
        %v2066 = vld [vmem:[%s315 + $0x3408] sm:$0xff]
        %v2067 = vld [vmem:[%s315 + $0x3410] sm:$0xff]
        %v2068 = vld [vmem:[%s315 + $0x3418] sm:$0xff]
        %v2069 = vld [vmem:[%s315 + $0x3420] sm:$0xff]
        %v2070 = vld [vmem:[%s315 + $0x3428] sm:$0xff]
        %v2071 = vld [vmem:[%s315 + $0x3430] sm:$0xff]
        %v2072 = vld [vmem:[%s315 + $0x3438] sm:$0xff]
        %v2073 = vld [vmem:[%s315 + $0x3440] sm:$0xff]
        %v2074 = vld [vmem:[%s315 + $0x3448] sm:$0xff]
        %v2075 = vld [vmem:[%s315 + $0x3450] sm:$0xff]
        %v2076 = vld [vmem:[%s315 + $0x3458] sm:$0xff]
        %v2077 = vld [vmem:[%s315 + $0x3460] sm:$0xff]
        %v2078 = vld [vmem:[%s315 + $0x3468] sm:$0xff]
        %v2079 = vld [vmem:[%s315 + $0x3470] sm:$0xff]
        %v2080 = vld [vmem:[%s315 + $0x3478] sm:$0xff]
        %v2081 = vld [vmem:[%s315 + $0x3480] sm:$0xff]
        %v2082 = vld [vmem:[%s315 + $0x3488] sm:$0xff]
        %v2083 = vld [vmem:[%s315 + $0x3490] sm:$0xff]
        %v2084 = vld [vmem:[%s315 + $0x3498] sm:$0xff]
        %v2085 = vld [vmem:[%s315 + $0x34a0] sm:$0xff]
        %v2086 = vld [vmem:[%s315 + $0x34a8] sm:$0xff]
        %v2087 = vld [vmem:[%s315 + $0x34b0] sm:$0xff]
        %v2088 = vld [vmem:[%s315 + $0x34b8] sm:$0xff]
        %v2089 = vld [vmem:[%s315 + $0x34c0] sm:$0xff]
        %v2090 = vld [vmem:[%s315 + $0x34c8] sm:$0xff]
        %v2091 = vld [vmem:[%s315 + $0x34d0] sm:$0xff]
        %v2092 = vld [vmem:[%s315 + $0x34d8] sm:$0xff]
        %v2093 = vld [vmem:[%s315 + $0x34e0] sm:$0xff]
        %v2094 = vld [vmem:[%s315 + $0x34e8] sm:$0xff]
        %v2095 = vld [vmem:[%s315 + $0x34f0] sm:$0xff]
        %v2096 = vld [vmem:[%s315 + $0x34f8] sm:$0xff]
        %v2097 = vld [vmem:[%s315 + $0x3500] sm:$0xff]
        %v2098 = vld [vmem:[%s315 + $0x3508] sm:$0xff]
        %v2099 = vld [vmem:[%s315 + $0x3510] sm:$0xff]
        %v2100 = vld [vmem:[%s315 + $0x3518] sm:$0xff]
        %v2101 = vld [vmem:[%s315 + $0x3520] sm:$0xff]
        %v2102 = vld [vmem:[%s315 + $0x3528] sm:$0xff]
        %v2103 = vld [vmem:[%s315 + $0x3530] sm:$0xff]
        %v2104 = vld [vmem:[%s315 + $0x3538] sm:$0xff]
        %v2105 = vld [vmem:[%s315 + $0x3540] sm:$0xff]
        %v2106 = vld [vmem:[%s315 + $0x3548] sm:$0xff]
        %v2107 = vld [vmem:[%s315 + $0x3550] sm:$0xff]
        %v2108 = vld [vmem:[%s315 + $0x3558] sm:$0xff]
        %v2109 = vld [vmem:[%s315 + $0x3560] sm:$0xff]
        %v2110 = vld [vmem:[%s315 + $0x3568] sm:$0xff]
        %v2111 = vld [vmem:[%s315 + $0x3570] sm:$0xff]
        %v2112 = vld [vmem:[%s315 + $0x3578] sm:$0xff]
        %v2113 = vld [vmem:[%s315 + $0x3580] sm:$0xff]
        %v2114 = vld [vmem:[%s315 + $0x3588] sm:$0xff]
        %v2115 = vld [vmem:[%s315 + $0x3590] sm:$0xff]
        %v2116 = vld [vmem:[%s315 + $0x3598] sm:$0xff]
        %v2117 = vld [vmem:[%s315 + $0x35a0] sm:$0xff]
        %v2118 = vld [vmem:[%s315 + $0x35a8] sm:$0xff]
        %v2119 = vld [vmem:[%s315 + $0x35b0] sm:$0xff]
        %v2120 = vld [vmem:[%s315 + $0x35b8] sm:$0xff]
        %v2121 = vld [vmem:[%s315 + $0x35c0] sm:$0xff]
        %v2122 = vld [vmem:[%s315 + $0x35c8] sm:$0xff]
        %v2123 = vld [vmem:[%s315 + $0x35d0] sm:$0xff]
        %v2124 = vld [vmem:[%s315 + $0x35d8] sm:$0xff]
        %v2125 = vld [vmem:[%s315 + $0x35e0] sm:$0xff]
        %v2126 = vld [vmem:[%s315 + $0x35e8] sm:$0xff]
        %v2127 = vld [vmem:[%s315 + $0x35f0] sm:$0xff]
        %v2128 = vld [vmem:[%s315 + $0x35f8] sm:$0xff]
        %v2129 = vld [vmem:[%s315 + $0x3600] sm:$0xff]
        %v2130 = vld [vmem:[%s315 + $0x3608] sm:$0xff]
        %v2131 = vld [vmem:[%s315 + $0x3610] sm:$0xff]
        %v2132 = vld [vmem:[%s315 + $0x3618] sm:$0xff]
        %v2133 = vld [vmem:[%s315 + $0x3620] sm:$0xff]
        %v2134 = vld [vmem:[%s315 + $0x3628] sm:$0xff]
        %v2135 = vld [vmem:[%s315 + $0x3630] sm:$0xff]
        %v2136 = vld [vmem:[%s315 + $0x3638] sm:$0xff]
        %v2137 = vld [vmem:[%s315 + $0x3640] sm:$0xff]
        %v2138 = vld [vmem:[%s315 + $0x3648] sm:$0xff]
        %v2139 = vld [vmem:[%s315 + $0x3650] sm:$0xff]
        %v2140 = vld [vmem:[%s315 + $0x3658] sm:$0xff]
        %v2141 = vld [vmem:[%s315 + $0x3660] sm:$0xff]
        %v2142 = vld [vmem:[%s315 + $0x3668] sm:$0xff]
        %v2143 = vld [vmem:[%s315 + $0x3670] sm:$0xff]
        %v2144 = vld [vmem:[%s315 + $0x3678] sm:$0xff]
        %v2145 = vld [vmem:[%s315 + $0x3680] sm:$0xff]
        %v2146 = vld [vmem:[%s315 + $0x3688] sm:$0xff]
        %v2147 = vld [vmem:[%s315 + $0x3690] sm:$0xff]
        %v2148 = vld [vmem:[%s315 + $0x3698] sm:$0xff]
        %v2149 = vld [vmem:[%s315 + $0x36a0] sm:$0xff]
        %v2150 = vld [vmem:[%s315 + $0x36a8] sm:$0xff]
        %v2151 = vld [vmem:[%s315 + $0x36b0] sm:$0xff]
        %v2152 = vld [vmem:[%s315 + $0x36b8] sm:$0xff]
        %v2153 = vld [vmem:[%s315 + $0x36c0] sm:$0xff]
        %v2154 = vld [vmem:[%s315 + $0x36c8] sm:$0xff]
        %v2155 = vld [vmem:[%s315 + $0x36d0] sm:$0xff]
        %v2156 = vld [vmem:[%s315 + $0x36d8] sm:$0xff]
        %v2157 = vld [vmem:[%s315 + $0x36e0] sm:$0xff]
        %v2158 = vld [vmem:[%s315 + $0x36e8] sm:$0xff]
        %v2159 = vld [vmem:[%s315 + $0x36f0] sm:$0xff]
        %v2160 = vld [vmem:[%s315 + $0x36f8] sm:$0xff]
        %v2161 = vld [vmem:[%s315 + $0x3700] sm:$0xff]
        %v2162 = vld [vmem:[%s315 + $0x3708] sm:$0xff]
        %v2163 = vld [vmem:[%s315 + $0x3710] sm:$0xff]
        %v2164 = vld [vmem:[%s315 + $0x3718] sm:$0xff]
        %v2165 = vld [vmem:[%s315 + $0x3720] sm:$0xff]
        %v2166 = vld [vmem:[%s315 + $0x3728] sm:$0xff]
        %v2167 = vld [vmem:[%s315 + $0x3730] sm:$0xff]
        %v2168 = vld [vmem:[%s315 + $0x3738] sm:$0xff]
        %v2169 = vld [vmem:[%s315 + $0x3740] sm:$0xff]
        %v2170 = vld [vmem:[%s315 + $0x3748] sm:$0xff]
        %v2171 = vld [vmem:[%s315 + $0x3750] sm:$0xff]
        %v2172 = vld [vmem:[%s315 + $0x3758] sm:$0xff]
        %v2173 = vld [vmem:[%s315 + $0x3760] sm:$0xff]
        %v2174 = vld [vmem:[%s315 + $0x3768] sm:$0xff]
        %v2175 = vld [vmem:[%s315 + $0x3770] sm:$0xff]
        %v2176 = vld [vmem:[%s315 + $0x3778] sm:$0xff]
        %v2177 = vld [vmem:[%s315 + $0x3780] sm:$0xff]
        %v2178 = vld [vmem:[%s315 + $0x3788] sm:$0xff]
        %v2179 = vld [vmem:[%s315 + $0x3790] sm:$0xff]
        %v2180 = vld [vmem:[%s315 + $0x3798] sm:$0xff]
        %v2181 = vld [vmem:[%s315 + $0x37a0] sm:$0xff]
        %v2182 = vld [vmem:[%s315 + $0x37a8] sm:$0xff]
        %v2183 = vld [vmem:[%s315 + $0x37b0] sm:$0xff]
        %v2184 = vld [vmem:[%s315 + $0x37b8] sm:$0xff]
        %v2185 = vld [vmem:[%s315 + $0x37c0] sm:$0xff]
        %v2186 = vld [vmem:[%s315 + $0x37c8] sm:$0xff]
        %v2187 = vld [vmem:[%s315 + $0x37d0] sm:$0xff]
        %v2188 = vld [vmem:[%s315 + $0x37d8] sm:$0xff]
        %v2189 = vld [vmem:[%s315 + $0x37e0] sm:$0xff]
        %v2190 = vld [vmem:[%s315 + $0x37e8] sm:$0xff]
        %v2191 = vld [vmem:[%s315 + $0x37f0] sm:$0xff]
        %v2192 = vld [vmem:[%s315 + $0x37f8] sm:$0xff]
        %v2193 = vld [vmem:[%s315 + $0x3800] sm:$0xff]
        %v2194 = vld [vmem:[%s315 + $0x3808] sm:$0xff]
        %v2195 = vld [vmem:[%s315 + $0x3810] sm:$0xff]
        %v2196 = vld [vmem:[%s315 + $0x3818] sm:$0xff]
        %v2197 = vld [vmem:[%s315 + $0x3820] sm:$0xff]
        %v2198 = vld [vmem:[%s315 + $0x3828] sm:$0xff]
        %v2199 = vld [vmem:[%s315 + $0x3830] sm:$0xff]
        %v2200 = vld [vmem:[%s315 + $0x3838] sm:$0xff]
        %v2201 = vld [vmem:[%s315 + $0x3840] sm:$0xff]
        %v2202 = vld [vmem:[%s315 + $0x3848] sm:$0xff]
        %v2203 = vld [vmem:[%s315 + $0x3850] sm:$0xff]
        %v2204 = vld [vmem:[%s315 + $0x3858] sm:$0xff]
        %v2205 = vld [vmem:[%s315 + $0x3860] sm:$0xff]
        %v2206 = vld [vmem:[%s315 + $0x3868] sm:$0xff]
        %v2207 = vld [vmem:[%s315 + $0x3870] sm:$0xff]
        %v2208 = vld [vmem:[%s315 + $0x3878] sm:$0xff]
        %v2209 = vld [vmem:[%s315 + $0x3880] sm:$0xff]
        %v2210 = vld [vmem:[%s315 + $0x3888] sm:$0xff]
        %v2211 = vld [vmem:[%s315 + $0x3890] sm:$0xff]
        %v2212 = vld [vmem:[%s315 + $0x3898] sm:$0xff]
        %v2213 = vld [vmem:[%s315 + $0x38a0] sm:$0xff]
        %v2214 = vld [vmem:[%s315 + $0x38a8] sm:$0xff]
        %v2215 = vld [vmem:[%s315 + $0x38b0] sm:$0xff]
        %v2216 = vld [vmem:[%s315 + $0x38b8] sm:$0xff]
        %v2217 = vld [vmem:[%s315 + $0x38c0] sm:$0xff]
        %v2218 = vld [vmem:[%s315 + $0x38c8] sm:$0xff]
        %v2219 = vld [vmem:[%s315 + $0x38d0] sm:$0xff]
        %v2220 = vld [vmem:[%s315 + $0x38d8] sm:$0xff]
        %v2221 = vld [vmem:[%s315 + $0x38e0] sm:$0xff]
        %v2222 = vld [vmem:[%s315 + $0x38e8] sm:$0xff]
        %v2223 = vld [vmem:[%s315 + $0x38f0] sm:$0xff]
        %v2224 = vld [vmem:[%s315 + $0x38f8] sm:$0xff]
        %v2225 = vld [vmem:[%s315 + $0x3900] sm:$0xff]
        %v2226 = vld [vmem:[%s315 + $0x3908] sm:$0xff]
        %v2227 = vld [vmem:[%s315 + $0x3910] sm:$0xff]
        %v2228 = vld [vmem:[%s315 + $0x3918] sm:$0xff]
        %v2229 = vld [vmem:[%s315 + $0x3920] sm:$0xff]
        %v2230 = vld [vmem:[%s315 + $0x3928] sm:$0xff]
        %v2231 = vld [vmem:[%s315 + $0x3930] sm:$0xff]
        %v2232 = vld [vmem:[%s315 + $0x3938] sm:$0xff]
        %v2233 = vld [vmem:[%s315 + $0x3940] sm:$0xff]
        %v2234 = vld [vmem:[%s315 + $0x3948] sm:$0xff]
        %v2235 = vld [vmem:[%s315 + $0x3950] sm:$0xff]
        %v2236 = vld [vmem:[%s315 + $0x3958] sm:$0xff]
        %v2237 = vld [vmem:[%s315 + $0x3960] sm:$0xff]
        %v2238 = vld [vmem:[%s315 + $0x3968] sm:$0xff]
        %v2239 = vld [vmem:[%s315 + $0x3970] sm:$0xff]
        %v2240 = vld [vmem:[%s315 + $0x3978] sm:$0xff]
        %v2241 = vld [vmem:[%s315 + $0x3980] sm:$0xff]
        %v2242 = vld [vmem:[%s315 + $0x3988] sm:$0xff]
        %v2243 = vld [vmem:[%s315 + $0x3990] sm:$0xff]
        %v2244 = vld [vmem:[%s315 + $0x3998] sm:$0xff]
        %v2245 = vld [vmem:[%s315 + $0x39a0] sm:$0xff]
        %v2246 = vld [vmem:[%s315 + $0x39a8] sm:$0xff]
        %v2247 = vld [vmem:[%s315 + $0x39b0] sm:$0xff]
        %v2248 = vld [vmem:[%s315 + $0x39b8] sm:$0xff]
        %v2249 = vld [vmem:[%s315 + $0x39c0] sm:$0xff]
        %v2250 = vld [vmem:[%s315 + $0x39c8] sm:$0xff]
        %v2251 = vld [vmem:[%s315 + $0x39d0] sm:$0xff]
        %v2252 = vld [vmem:[%s315 + $0x39d8] sm:$0xff]
        %v2253 = vld [vmem:[%s315 + $0x39e0] sm:$0xff]
        %v2254 = vld [vmem:[%s315 + $0x39e8] sm:$0xff]
        %v2255 = vld [vmem:[%s315 + $0x39f0] sm:$0xff]
        %v2256 = vld [vmem:[%s315 + $0x39f8] sm:$0xff]
        %v2257 = vld [vmem:[%s315 + $0x3a00] sm:$0xff]
        %v2258 = vld [vmem:[%s315 + $0x3a08] sm:$0xff]
        %v2259 = vld [vmem:[%s315 + $0x3a10] sm:$0xff]
        %v2260 = vld [vmem:[%s315 + $0x3a18] sm:$0xff]
        %v2261 = vld [vmem:[%s315 + $0x3a20] sm:$0xff]
        %v2262 = vld [vmem:[%s315 + $0x3a28] sm:$0xff]
        %v2263 = vld [vmem:[%s315 + $0x3a30] sm:$0xff]
        %v2264 = vld [vmem:[%s315 + $0x3a38] sm:$0xff]
        %v2265 = vld [vmem:[%s315 + $0x3a40] sm:$0xff]
        %v2266 = vld [vmem:[%s315 + $0x3a48] sm:$0xff]
        %v2267 = vld [vmem:[%s315 + $0x3a50] sm:$0xff]
        %v2268 = vld [vmem:[%s315 + $0x3a58] sm:$0xff]
        %v2269 = vld [vmem:[%s315 + $0x3a60] sm:$0xff]
        %v2270 = vld [vmem:[%s315 + $0x3a68] sm:$0xff]
        %v2271 = vld [vmem:[%s315 + $0x3a70] sm:$0xff]
        %v2272 = vld [vmem:[%s315 + $0x3a78] sm:$0xff]
        %v2273 = vld [vmem:[%s315 + $0x3a80] sm:$0xff]
        %v2274 = vld [vmem:[%s315 + $0x3a88] sm:$0xff]
        %v2275 = vld [vmem:[%s315 + $0x3a90] sm:$0xff]
        %v2276 = vld [vmem:[%s315 + $0x3a98] sm:$0xff]
        %v2277 = vld [vmem:[%s315 + $0x3aa0] sm:$0xff]
        %v2278 = vld [vmem:[%s315 + $0x3aa8] sm:$0xff]
        %v2279 = vld [vmem:[%s315 + $0x3ab0] sm:$0xff]
        %v2280 = vld [vmem:[%s315 + $0x3ab8] sm:$0xff]
        %v2281 = vld [vmem:[%s315 + $0x3ac0] sm:$0xff]
        %v2282 = vld [vmem:[%s315 + $0x3ac8] sm:$0xff]
        %v2283 = vld [vmem:[%s315 + $0x3ad0] sm:$0xff]
        %v2284 = vld [vmem:[%s315 + $0x3ad8] sm:$0xff]
        %v2285 = vld [vmem:[%s315 + $0x3ae0] sm:$0xff]
        %v2286 = vld [vmem:[%s315 + $0x3ae8] sm:$0xff]
        %v2287 = vld [vmem:[%s315 + $0x3af0] sm:$0xff]
        %v2288 = vld [vmem:[%s315 + $0x3af8] sm:$0xff]
        %v2289 = vld [vmem:[%s315 + $0x3b00] sm:$0xff]
        %v2290 = vld [vmem:[%s315 + $0x3b08] sm:$0xff]
        %v2291 = vld [vmem:[%s315 + $0x3b10] sm:$0xff]
        %v2292 = vld [vmem:[%s315 + $0x3b18] sm:$0xff]
        %v2293 = vld [vmem:[%s315 + $0x3b20] sm:$0xff]
        %v2294 = vld [vmem:[%s315 + $0x3b28] sm:$0xff]
        %v2295 = vld [vmem:[%s315 + $0x3b30] sm:$0xff]
        %v2296 = vld [vmem:[%s315 + $0x3b38] sm:$0xff]
        %v2297 = vld [vmem:[%s315 + $0x3b40] sm:$0xff]
        %v2298 = vld [vmem:[%s315 + $0x3b48] sm:$0xff]
        %v2299 = vld [vmem:[%s315 + $0x3b50] sm:$0xff]
        %v2300 = vld [vmem:[%s315 + $0x3b58] sm:$0xff]
        %v2301 = vld [vmem:[%s315 + $0x3b60] sm:$0xff]
        %v2302 = vld [vmem:[%s315 + $0x3b68] sm:$0xff]
        %v2303 = vld [vmem:[%s315 + $0x3b70] sm:$0xff]
        %v2304 = vld [vmem:[%s315 + $0x3b78] sm:$0xff]
        %v2305 = vld [vmem:[%s315 + $0x3b80] sm:$0xff]
        %v2306 = vld [vmem:[%s315 + $0x3b88] sm:$0xff]
        %v2307 = vld [vmem:[%s315 + $0x3b90] sm:$0xff]
        %v2308 = vld [vmem:[%s315 + $0x3b98] sm:$0xff]
        %v2309 = vld [vmem:[%s315 + $0x3ba0] sm:$0xff]
        %v2310 = vld [vmem:[%s315 + $0x3ba8] sm:$0xff]
        %v2311 = vld [vmem:[%s315 + $0x3bb0] sm:$0xff]
        %v2312 = vld [vmem:[%s315 + $0x3bb8] sm:$0xff]
        %v2313 = vld [vmem:[%s315 + $0x3bc0] sm:$0xff]
        %v2314 = vld [vmem:[%s315 + $0x3bc8] sm:$0xff]
        %v2315 = vld [vmem:[%s315 + $0x3bd0] sm:$0xff]
        %v2316 = vld [vmem:[%s315 + $0x3bd8] sm:$0xff]
        %v2317 = vld [vmem:[%s315 + $0x3be0] sm:$0xff]
        %v2318 = vld [vmem:[%s315 + $0x3be8] sm:$0xff]
        %v2319 = vld [vmem:[%s315 + $0x3bf0] sm:$0xff]
        %v2320 = vld [vmem:[%s315 + $0x3bf8] sm:$0xff]
        %v2321 = vld [vmem:[%s315 + $0x3c00] sm:$0xff]
        %v2322 = vld [vmem:[%s315 + $0x3c08] sm:$0xff]
        %v2323 = vld [vmem:[%s315 + $0x3c10] sm:$0xff]
        %v2324 = vld [vmem:[%s315 + $0x3c18] sm:$0xff]
        %v2325 = vld [vmem:[%s315 + $0x3c20] sm:$0xff]
        %v2326 = vld [vmem:[%s315 + $0x3c28] sm:$0xff]
        %v2327 = vld [vmem:[%s315 + $0x3c30] sm:$0xff]
        %v2328 = vld [vmem:[%s315 + $0x3c38] sm:$0xff]
        %v2329 = vld [vmem:[%s315 + $0x3c40] sm:$0xff]
        %v2330 = vld [vmem:[%s315 + $0x3c48] sm:$0xff]
        %v2331 = vld [vmem:[%s315 + $0x3c50] sm:$0xff]
        %v2332 = vld [vmem:[%s315 + $0x3c58] sm:$0xff]
        %v2333 = vld [vmem:[%s315 + $0x3c60] sm:$0xff]
        %v2334 = vld [vmem:[%s315 + $0x3c68] sm:$0xff]
        %v2335 = vld [vmem:[%s315 + $0x3c70] sm:$0xff]
        %v2336 = vld [vmem:[%s315 + $0x3c78] sm:$0xff]
        %v2337 = vld [vmem:[%s315 + $0x3c80] sm:$0xff]
        %v2338 = vld [vmem:[%s315 + $0x3c88] sm:$0xff]
        %v2339 = vld [vmem:[%s315 + $0x3c90] sm:$0xff]
        %v2340 = vld [vmem:[%s315 + $0x3c98] sm:$0xff]
        %v2341 = vld [vmem:[%s315 + $0x3ca0] sm:$0xff]
        %v2342 = vld [vmem:[%s315 + $0x3ca8] sm:$0xff]
        %v2343 = vld [vmem:[%s315 + $0x3cb0] sm:$0xff]
        %v2344 = vld [vmem:[%s315 + $0x3cb8] sm:$0xff]
        %v2345 = vld [vmem:[%s315 + $0x3cc0] sm:$0xff]
        %v2346 = vld [vmem:[%s315 + $0x3cc8] sm:$0xff]
        %v2347 = vld [vmem:[%s315 + $0x3cd0] sm:$0xff]
        %v2348 = vld [vmem:[%s315 + $0x3cd8] sm:$0xff]
        %v2349 = vld [vmem:[%s315 + $0x3ce0] sm:$0xff]
        %v2350 = vld [vmem:[%s315 + $0x3ce8] sm:$0xff]
        %v2351 = vld [vmem:[%s315 + $0x3cf0] sm:$0xff]
        %v2352 = vld [vmem:[%s315 + $0x3cf8] sm:$0xff]
        %v2353 = vld [vmem:[%s315 + $0x3d00] sm:$0xff]
        %v2354 = vld [vmem:[%s315 + $0x3d08] sm:$0xff]
        %v2355 = vld [vmem:[%s315 + $0x3d10] sm:$0xff]
        %v2356 = vld [vmem:[%s315 + $0x3d18] sm:$0xff]
        %v2357 = vld [vmem:[%s315 + $0x3d20] sm:$0xff]
        %v2358 = vld [vmem:[%s315 + $0x3d28] sm:$0xff]
        %v2359 = vld [vmem:[%s315 + $0x3d30] sm:$0xff]
        %v2360 = vld [vmem:[%s315 + $0x3d38] sm:$0xff]
        %v2361 = vld [vmem:[%s315 + $0x3d40] sm:$0xff]
        %v2362 = vld [vmem:[%s315 + $0x3d48] sm:$0xff]
        %v2363 = vld [vmem:[%s315 + $0x3d50] sm:$0xff]
        %v2364 = vld [vmem:[%s315 + $0x3d58] sm:$0xff]
        %v2365 = vld [vmem:[%s315 + $0x3d60] sm:$0xff]
        %v2366 = vld [vmem:[%s315 + $0x3d68] sm:$0xff]
        %v2367 = vld [vmem:[%s315 + $0x3d70] sm:$0xff]
        %v2368 = vld [vmem:[%s315 + $0x3d78] sm:$0xff]
        %v2369 = vld [vmem:[%s315 + $0x3d80] sm:$0xff]
        %v2370 = vld [vmem:[%s315 + $0x3d88] sm:$0xff]
        %v2371 = vld [vmem:[%s315 + $0x3d90] sm:$0xff]
        %v2372 = vld [vmem:[%s315 + $0x3d98] sm:$0xff]
        %v2373 = vld [vmem:[%s315 + $0x3da0] sm:$0xff]
        %v2374 = vld [vmem:[%s315 + $0x3da8] sm:$0xff]
        %v2375 = vld [vmem:[%s315 + $0x3db0] sm:$0xff]
        %v2376 = vld [vmem:[%s315 + $0x3db8] sm:$0xff]
        %v2377 = vld [vmem:[%s315 + $0x3dc0] sm:$0xff]
        %v2378 = vld [vmem:[%s315 + $0x3dc8] sm:$0xff]
        %v2379 = vld [vmem:[%s315 + $0x3dd0] sm:$0xff]
        %v2380 = vld [vmem:[%s315 + $0x3dd8] sm:$0xff]
        %v2381 = vld [vmem:[%s315 + $0x3de0] sm:$0xff]
        %v2382 = vld [vmem:[%s315 + $0x3de8] sm:$0xff]
        %v2383 = vld [vmem:[%s315 + $0x3df0] sm:$0xff]
        %v2384 = vld [vmem:[%s315 + $0x3df8] sm:$0xff]
        %v2385 = vld [vmem:[%s315 + $0x3e00] sm:$0xff]
        %v2386 = vld [vmem:[%s315 + $0x3e08] sm:$0xff]
        %v2387 = vld [vmem:[%s315 + $0x3e10] sm:$0xff]
        %v2388 = vld [vmem:[%s315 + $0x3e18] sm:$0xff]
        %v2389 = vld [vmem:[%s315 + $0x3e20] sm:$0xff]
        %v2390 = vld [vmem:[%s315 + $0x3e28] sm:$0xff]
        %v2391 = vld [vmem:[%s315 + $0x3e30] sm:$0xff]
        %v2392 = vld [vmem:[%s315 + $0x3e38] sm:$0xff]
        %v2393 = vld [vmem:[%s315 + $0x3e40] sm:$0xff]
        %v2394 = vld [vmem:[%s315 + $0x3e48] sm:$0xff]
        %v2395 = vld [vmem:[%s315 + $0x3e50] sm:$0xff]
        %v2396 = vld [vmem:[%s315 + $0x3e58] sm:$0xff]
        %v2397 = vld [vmem:[%s315 + $0x3e60] sm:$0xff]
        %v2398 = vld [vmem:[%s315 + $0x3e68] sm:$0xff]
        %v2399 = vld [vmem:[%s315 + $0x3e70] sm:$0xff]
        %v2400 = vld [vmem:[%s315 + $0x3e78] sm:$0xff]
        %v2401 = vld [vmem:[%s315 + $0x3e80] sm:$0xff]
        %v2402 = vld [vmem:[%s315 + $0x3e88] sm:$0xff]
        %v2403 = vld [vmem:[%s315 + $0x3e90] sm:$0xff]
        %v2404 = vld [vmem:[%s315 + $0x3e98] sm:$0xff]
        %v2405 = vld [vmem:[%s315 + $0x3ea0] sm:$0xff]
        %v2406 = vld [vmem:[%s315 + $0x3ea8] sm:$0xff]
        %v2407 = vld [vmem:[%s315 + $0x3eb0] sm:$0xff]
        %v2408 = vld [vmem:[%s315 + $0x3eb8] sm:$0xff]
        %v2409 = vld [vmem:[%s315 + $0x3ec0] sm:$0xff]
        %v2410 = vld [vmem:[%s315 + $0x3ec8] sm:$0xff]
        %v2411 = vld [vmem:[%s315 + $0x3ed0] sm:$0xff]
        %v2412 = vld [vmem:[%s315 + $0x3ed8] sm:$0xff]
        %v2413 = vld [vmem:[%s315 + $0x3ee0] sm:$0xff]
        %v2414 = vld [vmem:[%s315 + $0x3ee8] sm:$0xff]
        %v2415 = vld [vmem:[%s315 + $0x3ef0] sm:$0xff]
        %v2416 = vld [vmem:[%s315 + $0x3ef8] sm:$0xff]
        %v2417 = vld [vmem:[%s315 + $0x3f00] sm:$0xff]
        %v2418 = vld [vmem:[%s315 + $0x3f08] sm:$0xff]
        %v2419 = vld [vmem:[%s315 + $0x3f10] sm:$0xff]
        %v2420 = vld [vmem:[%s315 + $0x3f18] sm:$0xff]
        %v2421 = vld [vmem:[%s315 + $0x3f20] sm:$0xff]
        %v2422 = vld [vmem:[%s315 + $0x3f28] sm:$0xff]
        %v2423 = vld [vmem:[%s315 + $0x3f30] sm:$0xff]
        %v2424 = vld [vmem:[%s315 + $0x3f38] sm:$0xff]
        %v2425 = vld [vmem:[%s315 + $0x3f40] sm:$0xff]
        %v2426 = vld [vmem:[%s315 + $0x3f48] sm:$0xff]
        %v2427 = vld [vmem:[%s315 + $0x3f50] sm:$0xff]
        %v2428 = vld [vmem:[%s315 + $0x3f58] sm:$0xff]
        %v2429 = vld [vmem:[%s315 + $0x3f60] sm:$0xff]
        %v2430 = vld [vmem:[%s315 + $0x3f68] sm:$0xff]
        %v2431 = vld [vmem:[%s315 + $0x3f70] sm:$0xff]
        %v2432 = vld [vmem:[%s315 + $0x3f78] sm:$0xff]
        %v2433 = vld [vmem:[%s315 + $0x3f80] sm:$0xff]
        %v2434 = vld [vmem:[%s315 + $0x3f88] sm:$0xff]
        %v2435 = vld [vmem:[%s315 + $0x3f90] sm:$0xff]
        %v2436 = vld [vmem:[%s315 + $0x3f98] sm:$0xff]
        %v2437 = vld [vmem:[%s315 + $0x3fa0] sm:$0xff]
        %v2438 = vld [vmem:[%s315 + $0x3fa8] sm:$0xff]
        %v2439 = vld [vmem:[%s315 + $0x3fb0] sm:$0xff]
        %v2440 = vld [vmem:[%s315 + $0x3fb8] sm:$0xff]
        %v2441 = vld [vmem:[%s315 + $0x3fc0] sm:$0xff]
        %v2442 = vld [vmem:[%s315 + $0x3fc8] sm:$0xff]
        %v2443 = vld [vmem:[%s315 + $0x3fd0] sm:$0xff]
        %v2444 = vld [vmem:[%s315 + $0x3fd8] sm:$0xff]
        %v2445 = vld [vmem:[%s315 + $0x3fe0] sm:$0xff]
        %v2446 = vld [vmem:[%s315 + $0x3fe8] sm:$0xff]
        %v2447 = vld [vmem:[%s315 + $0x3ff0] sm:$0xff]
        %v2448 = vld [vmem:[%s315 + $0x3ff8] sm:$0xff]
        %v2449 = vld [vmem:[%s315 + $0x4000] sm:$0xff]
        %v2450 = vld [vmem:[%s315 + $0x4008] sm:$0xff]
        %v2451 = vld [vmem:[%s315 + $0x4010] sm:$0xff]
        %v2452 = vld [vmem:[%s315 + $0x4018] sm:$0xff]
        %v2453 = vld [vmem:[%s315 + $0x4020] sm:$0xff]
        %v2454 = vld [vmem:[%s315 + $0x4028] sm:$0xff]
        %v2455 = vld [vmem:[%s315 + $0x4030] sm:$0xff]
        %v2456 = vld [vmem:[%s315 + $0x4038] sm:$0xff]
        %v2457 = vld [vmem:[%s315 + $0x4040] sm:$0xff]
        %v2458 = vld [vmem:[%s315 + $0x4048] sm:$0xff]
        %v2459 = vld [vmem:[%s315 + $0x4050] sm:$0xff]
        %v2460 = vld [vmem:[%s315 + $0x4058] sm:$0xff]
        %v2461 = vld [vmem:[%s315 + $0x4060] sm:$0xff]
        %v2462 = vld [vmem:[%s315 + $0x4068] sm:$0xff]
        %v2463 = vld [vmem:[%s315 + $0x4070] sm:$0xff]
        %v2464 = vld [vmem:[%s315 + $0x4078] sm:$0xff]
        %v2465 = vld [vmem:[%s315 + $0x4080] sm:$0xff]
        %v2466 = vld [vmem:[%s315 + $0x4088] sm:$0xff]
        %v2467 = vld [vmem:[%s315 + $0x4090] sm:$0xff]
        %v2468 = vld [vmem:[%s315 + $0x4098] sm:$0xff]
        %v2469 = vld [vmem:[%s315 + $0x40a0] sm:$0xff]
        %v2470 = vld [vmem:[%s315 + $0x40a8] sm:$0xff]
        %v2471 = vld [vmem:[%s315 + $0x40b0] sm:$0xff]
        %v2472 = vld [vmem:[%s315 + $0x40b8] sm:$0xff]
        %v2473 = vld [vmem:[%s315 + $0x40c0] sm:$0xff]
        %v2474 = vld [vmem:[%s315 + $0x40c8] sm:$0xff]
        %v2475 = vld [vmem:[%s315 + $0x40d0] sm:$0xff]
        %v2476 = vld [vmem:[%s315 + $0x40d8] sm:$0xff]
        %v2477 = vld [vmem:[%s315 + $0x40e0] sm:$0xff]
        %v2478 = vld [vmem:[%s315 + $0x40e8] sm:$0xff]
        %v2479 = vld [vmem:[%s315 + $0x40f0] sm:$0xff]
        %v2480 = vld [vmem:[%s315 + $0x40f8] sm:$0xff]
        %v2481 = vld [vmem:[%s315 + $0x4100] sm:$0xff]
        %v2482 = vld [vmem:[%s315 + $0x4108] sm:$0xff]
        %v2483 = vld [vmem:[%s315 + $0x4110] sm:$0xff]
        %v2484 = vld [vmem:[%s315 + $0x4118] sm:$0xff]
        %v2485 = vld [vmem:[%s315 + $0x4120] sm:$0xff]
        %v2486 = vld [vmem:[%s315 + $0x4128] sm:$0xff]
        %v2487 = vld [vmem:[%s315 + $0x4130] sm:$0xff]
        %v2488 = vld [vmem:[%s315 + $0x4138] sm:$0xff]
        %v2489 = vld [vmem:[%s315 + $0x4140] sm:$0xff]
        %v2490 = vld [vmem:[%s315 + $0x4148] sm:$0xff]
        %v2491 = vld [vmem:[%s315 + $0x4150] sm:$0xff]
        %v2492 = vld [vmem:[%s315 + $0x4158] sm:$0xff]
        %v2493 = vld [vmem:[%s315 + $0x4160] sm:$0xff]
        %v2494 = vld [vmem:[%s315 + $0x4168] sm:$0xff]
        %v2495 = vld [vmem:[%s315 + $0x4170] sm:$0xff]
        %v2496 = vld [vmem:[%s315 + $0x4178] sm:$0xff]
        %v2497 = vld [vmem:[%s315 + $0x4180] sm:$0xff]
        %v2498 = vld [vmem:[%s315 + $0x4188] sm:$0xff]
        %v2499 = vld [vmem:[%s315 + $0x4190] sm:$0xff]
        %v2500 = vld [vmem:[%s315 + $0x4198] sm:$0xff]
        %v2501 = vld [vmem:[%s315 + $0x41a0] sm:$0xff]
        %v2502 = vld [vmem:[%s315 + $0x41a8] sm:$0xff]
        %v2503 = vld [vmem:[%s315 + $0x41b0] sm:$0xff]
        %v2504 = vld [vmem:[%s315 + $0x41b8] sm:$0xff]
        %v2505 = vld [vmem:[%s315 + $0x41c0] sm:$0xff]
        %v2506 = vld [vmem:[%s315 + $0x41c8] sm:$0xff]
        %v2507 = vld [vmem:[%s315 + $0x41d0] sm:$0xff]
        %v2508 = vld [vmem:[%s315 + $0x41d8] sm:$0xff]
        %v2509 = vld [vmem:[%s315 + $0x41e0] sm:$0xff]
        %v2510 = vld [vmem:[%s315 + $0x41e8] sm:$0xff]
        %v2511 = vld [vmem:[%s315 + $0x41f0] sm:$0xff]
        %v2512 = vld [vmem:[%s315 + $0x41f8] sm:$0xff]
        %v2513 = vld [vmem:[%s315 + $0x4200] sm:$0xff]
        %v2514 = vld [vmem:[%s315 + $0x4208] sm:$0xff]
        %v2515 = vld [vmem:[%s315 + $0x4210] sm:$0xff]
        %v2516 = vld [vmem:[%s315 + $0x4218] sm:$0xff]
        %v2517 = vld [vmem:[%s315 + $0x4220] sm:$0xff]
        %v2518 = vld [vmem:[%s315 + $0x4228] sm:$0xff]
        %v2519 = vld [vmem:[%s315 + $0x4230] sm:$0xff]
        %v2520 = vld [vmem:[%s315 + $0x4238] sm:$0xff]
        %v2521 = vld [vmem:[%s315 + $0x4240] sm:$0xff]
        %v2522 = vld [vmem:[%s315 + $0x4248] sm:$0xff]
        %v2523 = vld [vmem:[%s315 + $0x4250] sm:$0xff]
        %v2524 = vld [vmem:[%s315 + $0x4258] sm:$0xff]
        %v2525 = vld [vmem:[%s315 + $0x4260] sm:$0xff]
        %v2526 = vld [vmem:[%s315 + $0x4268] sm:$0xff]
        %v2527 = vld [vmem:[%s315 + $0x4270] sm:$0xff]
        %v2528 = vld [vmem:[%s315 + $0x4278] sm:$0xff]
        %v2529 = vld [vmem:[%s315 + $0x4280] sm:$0xff]
        %v2530 = vld [vmem:[%s315 + $0x4288] sm:$0xff]
        %v2531 = vld [vmem:[%s315 + $0x4290] sm:$0xff]
        %v2532 = vld [vmem:[%s315 + $0x4298] sm:$0xff]
        %v2533 = vld [vmem:[%s315 + $0x42a0] sm:$0xff]
        %v2534 = vld [vmem:[%s315 + $0x42a8] sm:$0xff]
        %v2535 = vld [vmem:[%s315 + $0x42b0] sm:$0xff]
        %v2536 = vld [vmem:[%s315 + $0x42b8] sm:$0xff]
        %v2537 = vld [vmem:[%s315 + $0x42c0] sm:$0xff]
        %v2538 = vld [vmem:[%s315 + $0x42c8] sm:$0xff]
        %v2539 = vld [vmem:[%s315 + $0x42d0] sm:$0xff]
        %v2540 = vld [vmem:[%s315 + $0x42d8] sm:$0xff]
        %v2541 = vld [vmem:[%s315 + $0x42e0] sm:$0xff]
        %v2542 = vld [vmem:[%s315 + $0x42e8] sm:$0xff]
        %v2543 = vld [vmem:[%s315 + $0x42f0] sm:$0xff]
        %v2544 = vld [vmem:[%s315 + $0x42f8] sm:$0xff]
        %v2545 = vld [vmem:[%s315 + $0x4300] sm:$0xff]
        %v2546 = vld [vmem:[%s315 + $0x4308] sm:$0xff]
        %v2547 = vld [vmem:[%s315 + $0x4310] sm:$0xff]
        %v2548 = vld [vmem:[%s315 + $0x4318] sm:$0xff]
        %v2549 = vld [vmem:[%s315 + $0x4320] sm:$0xff]
        %v2550 = vld [vmem:[%s315 + $0x4328] sm:$0xff]
        %v2551 = vld [vmem:[%s315 + $0x4330] sm:$0xff]
        %v2552 = vld [vmem:[%s315 + $0x4338] sm:$0xff]
        %v2553 = vld [vmem:[%s315 + $0x4340] sm:$0xff]
        %v2554 = vld [vmem:[%s315 + $0x4348] sm:$0xff]
        %v2555 = vld [vmem:[%s315 + $0x4350] sm:$0xff]
        %v2556 = vld [vmem:[%s315 + $0x4358] sm:$0xff]
        %v2557 = vld [vmem:[%s315 + $0x4360] sm:$0xff]
        %v2558 = vld [vmem:[%s315 + $0x4368] sm:$0xff]
        %v2559 = vld [vmem:[%s315 + $0x4370] sm:$0xff]
        %v2560 = vld [vmem:[%s315 + $0x4378] sm:$0xff]
        %v2561 = vld [vmem:[%s315 + $0x4380] sm:$0xff]
        %v2562 = vld [vmem:[%s315 + $0x4388] sm:$0xff]
        %v2563 = vld [vmem:[%s315 + $0x4390] sm:$0xff]
        %v2564 = vld [vmem:[%s315 + $0x4398] sm:$0xff]
        %v2565 = vld [vmem:[%s315 + $0x43a0] sm:$0xff]
        %v2566 = vld [vmem:[%s315 + $0x43a8] sm:$0xff]
        %v2567 = vld [vmem:[%s315 + $0x43b0] sm:$0xff]
        %v2568 = vld [vmem:[%s315 + $0x43b8] sm:$0xff]
        %v2569 = vld [vmem:[%s315 + $0x43c0] sm:$0xff]
        %v2570 = vld [vmem:[%s315 + $0x43c8] sm:$0xff]
        %v2571 = vld [vmem:[%s315 + $0x43d0] sm:$0xff]
        %v2572 = vld [vmem:[%s315 + $0x43d8] sm:$0xff]
        %v2573 = vld [vmem:[%s315 + $0x43e0] sm:$0xff]
        %v2574 = vld [vmem:[%s315 + $0x43e8] sm:$0xff]
        %v2575 = vld [vmem:[%s315 + $0x43f0] sm:$0xff]
        %v2576 = vld [vmem:[%s315 + $0x43f8] sm:$0xff]
        %v2577 = vld [vmem:[%s315 + $0x4400] sm:$0xff]
        %v2578 = vld [vmem:[%s315 + $0x4408] sm:$0xff]
        %v2579 = vld [vmem:[%s315 + $0x4410] sm:$0xff]
        %v2580 = vld [vmem:[%s315 + $0x4418] sm:$0xff]
        %v2581 = vld [vmem:[%s315 + $0x4420] sm:$0xff]
        %v2582 = vld [vmem:[%s315 + $0x4428] sm:$0xff]
        %v2583 = vld [vmem:[%s315 + $0x4430] sm:$0xff]
        %v2584 = vld [vmem:[%s315 + $0x4438] sm:$0xff]
        %v2585 = vld [vmem:[%s315 + $0x4440] sm:$0xff]
        %v2586 = vld [vmem:[%s315 + $0x4448] sm:$0xff]
        %v2587 = vld [vmem:[%s315 + $0x4450] sm:$0xff]
        %v2588 = vld [vmem:[%s315 + $0x4458] sm:$0xff]
        %v2589 = vld [vmem:[%s315 + $0x4460] sm:$0xff]
        %v2590 = vld [vmem:[%s315 + $0x4468] sm:$0xff]
        %v2591 = vld [vmem:[%s315 + $0x4470] sm:$0xff]
        %v2592 = vld [vmem:[%s315 + $0x4478] sm:$0xff]
        %v2593 = vld [vmem:[%s315 + $0x4480] sm:$0xff]
        %v2594 = vld [vmem:[%s315 + $0x4488] sm:$0xff]
        %v2595 = vld [vmem:[%s315 + $0x4490] sm:$0xff]
        %v2596 = vld [vmem:[%s315 + $0x4498] sm:$0xff]
        %v2597 = vld [vmem:[%s315 + $0x44a0] sm:$0xff]
        %v2598 = vld [vmem:[%s315 + $0x44a8] sm:$0xff]
        %v2599 = vld [vmem:[%s315 + $0x44b0] sm:$0xff]
        %v2600 = vld [vmem:[%s315 + $0x44b8] sm:$0xff]
        %v2601 = vld [vmem:[%s315 + $0x44c0] sm:$0xff]
        %v2602 = vld [vmem:[%s315 + $0x44c8] sm:$0xff]
        %v2603 = vld [vmem:[%s315 + $0x44d0] sm:$0xff]
        %v2604 = vld [vmem:[%s315 + $0x44d8] sm:$0xff]
        %v2605 = vld [vmem:[%s315 + $0x44e0] sm:$0xff]
        %v2606 = vld [vmem:[%s315 + $0x44e8] sm:$0xff]
        %v2607 = vld [vmem:[%s315 + $0x44f0] sm:$0xff]
        %v2608 = vld [vmem:[%s315 + $0x44f8] sm:$0xff]
        %v2609 = vld [vmem:[%s315 + $0x4500] sm:$0xff]
        %v2610 = vld [vmem:[%s315 + $0x4508] sm:$0xff]
        %v2611 = vld [vmem:[%s315 + $0x4510] sm:$0xff]
        %v2612 = vld [vmem:[%s315 + $0x4518] sm:$0xff]
        %v2613 = vld [vmem:[%s315 + $0x4520] sm:$0xff]
        %v2614 = vld [vmem:[%s315 + $0x4528] sm:$0xff]
        %v2615 = vld [vmem:[%s315 + $0x4530] sm:$0xff]
        %v2616 = vld [vmem:[%s315 + $0x4538] sm:$0xff]
        %v2617 = vld [vmem:[%s315 + $0x4540] sm:$0xff]
        %v2618 = vld [vmem:[%s315 + $0x4548] sm:$0xff]
        %v2619 = vld [vmem:[%s315 + $0x4550] sm:$0xff]
        %v2620 = vld [vmem:[%s315 + $0x4558] sm:$0xff]
        %v2621 = vld [vmem:[%s315 + $0x4560] sm:$0xff]
        %v2622 = vld [vmem:[%s315 + $0x4568] sm:$0xff]
        %v2623 = vld [vmem:[%s315 + $0x4570] sm:$0xff]
        %v2624 = vld [vmem:[%s315 + $0x4578] sm:$0xff]
        %v2625 = vld [vmem:[%s315 + $0x4580] sm:$0xff]
        %v2626 = vld [vmem:[%s315 + $0x4588] sm:$0xff]
        %v2627 = vld [vmem:[%s315 + $0x4590] sm:$0xff]
        %v2628 = vld [vmem:[%s315 + $0x4598] sm:$0xff]
        %v2629 = vld [vmem:[%s315 + $0x45a0] sm:$0xff]
        %v2630 = vld [vmem:[%s315 + $0x45a8] sm:$0xff]
        %v2631 = vld [vmem:[%s315 + $0x45b0] sm:$0xff]
        %v2632 = vld [vmem:[%s315 + $0x45b8] sm:$0xff]
        %v2633 = vld [vmem:[%s315 + $0x45c0] sm:$0xff]
        %v2634 = vld [vmem:[%s315 + $0x45c8] sm:$0xff]
        %v2635 = vld [vmem:[%s315 + $0x45d0] sm:$0xff]
        %v2636 = vld [vmem:[%s315 + $0x45d8] sm:$0xff]
        %v2637 = vld [vmem:[%s315 + $0x45e0] sm:$0xff]
        %v2638 = vld [vmem:[%s315 + $0x45e8] sm:$0xff]
        %v2639 = vld [vmem:[%s315 + $0x45f0] sm:$0xff]
        %v2640 = vld [vmem:[%s315 + $0x45f8] sm:$0xff]
        %v2641 = vld [vmem:[%s315 + $0x4600] sm:$0xff]
        %v2642 = vld [vmem:[%s315 + $0x4608] sm:$0xff]
        %v2643 = vld [vmem:[%s315 + $0x4610] sm:$0xff]
        %v2644 = vld [vmem:[%s315 + $0x4618] sm:$0xff]
        %v2645 = vld [vmem:[%s315 + $0x4620] sm:$0xff]
        %v2646 = vld [vmem:[%s315 + $0x4628] sm:$0xff]
        %v2647 = vld [vmem:[%s315 + $0x4630] sm:$0xff]
        %v2648 = vld [vmem:[%s315 + $0x4638] sm:$0xff]
        %v2649 = vld [vmem:[%s315 + $0x4640] sm:$0xff]
        %v2650 = vld [vmem:[%s315 + $0x4648] sm:$0xff]
        %v2651 = vld [vmem:[%s315 + $0x4650] sm:$0xff]
        %v2652 = vld [vmem:[%s315 + $0x4658] sm:$0xff]
        %v2653 = vld [vmem:[%s315 + $0x4660] sm:$0xff]
        %v2654 = vld [vmem:[%s315 + $0x4668] sm:$0xff]
        %v2655 = vld [vmem:[%s315 + $0x4670] sm:$0xff]
        %v2656 = vld [vmem:[%s315 + $0x4678] sm:$0xff]
        %v2657 = vld [vmem:[%s315 + $0x4680] sm:$0xff]
        %v2658 = vld [vmem:[%s315 + $0x4688] sm:$0xff]
        %v2659 = vld [vmem:[%s315 + $0x4690] sm:$0xff]
        %v2660 = vld [vmem:[%s315 + $0x4698] sm:$0xff]
        %v2661 = vld [vmem:[%s315 + $0x46a0] sm:$0xff]
        %v2662 = vld [vmem:[%s315 + $0x46a8] sm:$0xff]
        %v2663 = vld [vmem:[%s315 + $0x46b0] sm:$0xff]
        %v2664 = vld [vmem:[%s315 + $0x46b8] sm:$0xff]
        %v2665 = vld [vmem:[%s315 + $0x46c0] sm:$0xff]
        %v2666 = vld [vmem:[%s315 + $0x46c8] sm:$0xff]
        %v2667 = vld [vmem:[%s315 + $0x46d0] sm:$0xff]
        %v2668 = vld [vmem:[%s315 + $0x46d8] sm:$0xff]
        %v2669 = vld [vmem:[%s315 + $0x46e0] sm:$0xff]
        %v2670 = vld [vmem:[%s315 + $0x46e8] sm:$0xff]
        %v2671 = vld [vmem:[%s315 + $0x46f0] sm:$0xff]
        %v2672 = vld [vmem:[%s315 + $0x46f8] sm:$0xff]
        %v2673 = vld [vmem:[%s315 + $0x4700] sm:$0xff]
        %v2674 = vld [vmem:[%s315 + $0x4708] sm:$0xff]
        %v2675 = vld [vmem:[%s315 + $0x4710] sm:$0xff]
        %v2676 = vld [vmem:[%s315 + $0x4718] sm:$0xff]
        %v2677 = vld [vmem:[%s315 + $0x4720] sm:$0xff]
        %v2678 = vld [vmem:[%s315 + $0x4728] sm:$0xff]
        %v2679 = vld [vmem:[%s315 + $0x4730] sm:$0xff]
        %v2680 = vld [vmem:[%s315 + $0x4738] sm:$0xff]
        %v2681 = vld [vmem:[%s315 + $0x4740] sm:$0xff]
        %v2682 = vld [vmem:[%s315 + $0x4748] sm:$0xff]
        %v2683 = vld [vmem:[%s315 + $0x4750] sm:$0xff]
        %v2684 = vld [vmem:[%s315 + $0x4758] sm:$0xff]
        %v2685 = vld [vmem:[%s315 + $0x4760] sm:$0xff]
        %v2686 = vld [vmem:[%s315 + $0x4768] sm:$0xff]
        %v2687 = vld [vmem:[%s315 + $0x4770] sm:$0xff]
        %v2688 = vld [vmem:[%s315 + $0x4778] sm:$0xff]
        %v2689 = vld [vmem:[%s315 + $0x4780] sm:$0xff]
        %v2690 = vld [vmem:[%s315 + $0x4788] sm:$0xff]
        %v2691 = vld [vmem:[%s315 + $0x4790] sm:$0xff]
        %v2692 = vld [vmem:[%s315 + $0x4798] sm:$0xff]
        %v2693 = vld [vmem:[%s315 + $0x47a0] sm:$0xff]
        %v2694 = vld [vmem:[%s315 + $0x47a8] sm:$0xff]
        %v2695 = vld [vmem:[%s315 + $0x47b0] sm:$0xff]
        %v2696 = vld [vmem:[%s315 + $0x47b8] sm:$0xff]
        %v2697 = vld [vmem:[%s315 + $0x47c0] sm:$0xff]
        %v2698 = vld [vmem:[%s315 + $0x47c8] sm:$0xff]
        %v2699 = vld [vmem:[%s315 + $0x47d0] sm:$0xff]
        %v2700 = vld [vmem:[%s315 + $0x47d8] sm:$0xff]
        %v2701 = vld [vmem:[%s315 + $0x47e0] sm:$0xff]
        %v2702 = vld [vmem:[%s315 + $0x47e8] sm:$0xff]
        %v2703 = vld [vmem:[%s315 + $0x47f0] sm:$0xff]
        %v2704 = vld [vmem:[%s315 + $0x47f8] sm:$0xff]
        %v2705 = vld [vmem:[%s315 + $0x4800] sm:$0xff]
        %v2706 = vld [vmem:[%s315 + $0x4808] sm:$0xff]
        %v2707 = vld [vmem:[%s315 + $0x4810] sm:$0xff]
        %v2708 = vld [vmem:[%s315 + $0x4818] sm:$0xff]
        %v2709 = vld [vmem:[%s315 + $0x4820] sm:$0xff]
        %v2710 = vld [vmem:[%s315 + $0x4828] sm:$0xff]
        %v2711 = vld [vmem:[%s315 + $0x4830] sm:$0xff]
        %v2712 = vld [vmem:[%s315 + $0x4838] sm:$0xff]
        %v2713 = vld [vmem:[%s315 + $0x4840] sm:$0xff]
        %v2714 = vld [vmem:[%s315 + $0x4848] sm:$0xff]
        %v2715 = vld [vmem:[%s315 + $0x4850] sm:$0xff]
        %v2716 = vld [vmem:[%s315 + $0x4858] sm:$0xff]
        %v2717 = vld [vmem:[%s315 + $0x4860] sm:$0xff]
        %v2718 = vld [vmem:[%s315 + $0x4868] sm:$0xff]
        %v2719 = vld [vmem:[%s315 + $0x4870] sm:$0xff]
        %v2720 = vld [vmem:[%s315 + $0x4878] sm:$0xff]
        %v2721 = vld [vmem:[%s315 + $0x4880] sm:$0xff]
        %v2722 = vld [vmem:[%s315 + $0x4888] sm:$0xff]
        %v2723 = vld [vmem:[%s315 + $0x4890] sm:$0xff]
        %v2724 = vld [vmem:[%s315 + $0x4898] sm:$0xff]
        %v2725 = vld [vmem:[%s315 + $0x48a0] sm:$0xff]
        %v2726 = vld [vmem:[%s315 + $0x48a8] sm:$0xff]
        %v2727 = vld [vmem:[%s315 + $0x48b0] sm:$0xff]
        %v2728 = vld [vmem:[%s315 + $0x48b8] sm:$0xff]
        %v2729 = vld [vmem:[%s315 + $0x48c0] sm:$0xff]
        %v2730 = vld [vmem:[%s315 + $0x48c8] sm:$0xff]
        %v2731 = vld [vmem:[%s315 + $0x48d0] sm:$0xff]
        %v2732 = vld [vmem:[%s315 + $0x48d8] sm:$0xff]
        %v2733 = vld [vmem:[%s315 + $0x48e0] sm:$0xff]
        %v2734 = vld [vmem:[%s315 + $0x48e8] sm:$0xff]
        %v2735 = vld [vmem:[%s315 + $0x48f0] sm:$0xff]
        %v2736 = vld [vmem:[%s315 + $0x48f8] sm:$0xff]
        %v2737 = vld [vmem:[%s315 + $0x4900] sm:$0xff]
        %v2738 = vld [vmem:[%s315 + $0x4908] sm:$0xff]
        %v2739 = vld [vmem:[%s315 + $0x4910] sm:$0xff]
        %v2740 = vld [vmem:[%s315 + $0x4918] sm:$0xff]
        %v2741 = vld [vmem:[%s315 + $0x4920] sm:$0xff]
        %v2742 = vld [vmem:[%s315 + $0x4928] sm:$0xff]
        %v2743 = vld [vmem:[%s315 + $0x4930] sm:$0xff]
        %v2744 = vld [vmem:[%s315 + $0x4938] sm:$0xff]
        %v2745 = vld [vmem:[%s315 + $0x4940] sm:$0xff]
        %v2746 = vld [vmem:[%s315 + $0x4948] sm:$0xff]
        %v2747 = vld [vmem:[%s315 + $0x4950] sm:$0xff]
        %v2748 = vld [vmem:[%s315 + $0x4958] sm:$0xff]
        %v2749 = vld [vmem:[%s315 + $0x4960] sm:$0xff]
        %v2750 = vld [vmem:[%s315 + $0x4968] sm:$0xff]
        %v2751 = vld [vmem:[%s315 + $0x4970] sm:$0xff]
        %v2752 = vld [vmem:[%s315 + $0x4978] sm:$0xff]
        %v2753 = vld [vmem:[%s315 + $0x4980] sm:$0xff]
        %v2754 = vld [vmem:[%s315 + $0x4988] sm:$0xff]
        %v2755 = vld [vmem:[%s315 + $0x4990] sm:$0xff]
        %v2756 = vld [vmem:[%s315 + $0x4998] sm:$0xff]
        %v2757 = vld [vmem:[%s315 + $0x49a0] sm:$0xff]
        %v2758 = vld [vmem:[%s315 + $0x49a8] sm:$0xff]
        %v2759 = vld [vmem:[%s315 + $0x49b0] sm:$0xff]
        %v2760 = vld [vmem:[%s315 + $0x49b8] sm:$0xff]
        %v2761 = vld [vmem:[%s315 + $0x49c0] sm:$0xff]
        %v2762 = vld [vmem:[%s315 + $0x49c8] sm:$0xff]
        %v2763 = vld [vmem:[%s315 + $0x49d0] sm:$0xff]
        %v2764 = vld [vmem:[%s315 + $0x49d8] sm:$0xff]
        %v2765 = vld [vmem:[%s315 + $0x49e0] sm:$0xff]
        %v2766 = vld [vmem:[%s315 + $0x49e8] sm:$0xff]
        %v2767 = vld [vmem:[%s315 + $0x49f0] sm:$0xff]
        %v2768 = vld [vmem:[%s315 + $0x49f8] sm:$0xff]
        %v2769 = vld [vmem:[%s315 + $0x4a00] sm:$0xff]
        %v2770 = vld [vmem:[%s315 + $0x4a08] sm:$0xff]
        %v2771 = vld [vmem:[%s315 + $0x4a10] sm:$0xff]
        %v2772 = vld [vmem:[%s315 + $0x4a18] sm:$0xff]
        %v2773 = vld [vmem:[%s315 + $0x4a20] sm:$0xff]
        %v2774 = vld [vmem:[%s315 + $0x4a28] sm:$0xff]
        %v2775 = vld [vmem:[%s315 + $0x4a30] sm:$0xff]
        %v2776 = vld [vmem:[%s315 + $0x4a38] sm:$0xff]
        %v2777 = vld [vmem:[%s315 + $0x4a40] sm:$0xff]
        %v2778 = vld [vmem:[%s315 + $0x4a48] sm:$0xff]
        %v2779 = vld [vmem:[%s315 + $0x4a50] sm:$0xff]
        %v2780 = vld [vmem:[%s315 + $0x4a58] sm:$0xff]
        %v2781 = vld [vmem:[%s315 + $0x4a60] sm:$0xff]
        %v2782 = vld [vmem:[%s315 + $0x4a68] sm:$0xff]
        %v2783 = vld [vmem:[%s315 + $0x4a70] sm:$0xff]
        %v2784 = vld [vmem:[%s315 + $0x4a78] sm:$0xff]
        %v2785 = vld [vmem:[%s315 + $0x4a80] sm:$0xff]
        %v2786 = vld [vmem:[%s315 + $0x4a88] sm:$0xff]
        %v2787 = vld [vmem:[%s315 + $0x4a90] sm:$0xff]
        %v2788 = vld [vmem:[%s315 + $0x4a98] sm:$0xff]
        %v2789 = vld [vmem:[%s315 + $0x4aa0] sm:$0xff]
        %v2790 = vld [vmem:[%s315 + $0x4aa8] sm:$0xff]
        %v2791 = vld [vmem:[%s315 + $0x4ab0] sm:$0xff]
        %v2792 = vld [vmem:[%s315 + $0x4ab8] sm:$0xff]
        %v2793 = vld [vmem:[%s315 + $0x4ac0] sm:$0xff]
        %v2794 = vld [vmem:[%s315 + $0x4ac8] sm:$0xff]
        %v2795 = vld [vmem:[%s315 + $0x4ad0] sm:$0xff]
        %v2796 = vld [vmem:[%s315 + $0x4ad8] sm:$0xff]
        %v2797 = vld [vmem:[%s315 + $0x4ae0] sm:$0xff]
        %v2798 = vld [vmem:[%s315 + $0x4ae8] sm:$0xff]
        %v2799 = vld [vmem:[%s315 + $0x4af0] sm:$0xff]
        %v2800 = vld [vmem:[%s315 + $0x4af8] sm:$0xff]
        %v2801 = vld [vmem:[%s315 + $0x4b00] sm:$0xff]
        %v2802 = vld [vmem:[%s315 + $0x4b08] sm:$0xff]
        %v2803 = vld [vmem:[%s315 + $0x4b10] sm:$0xff]
        %v2804 = vld [vmem:[%s315 + $0x4b18] sm:$0xff]
        %v2805 = vld [vmem:[%s315 + $0x4b20] sm:$0xff]
        %v2806 = vld [vmem:[%s315 + $0x4b28] sm:$0xff]
        %v2807 = vld [vmem:[%s315 + $0x4b30] sm:$0xff]
        %v2808 = vld [vmem:[%s315 + $0x4b38] sm:$0xff]
        %v2809 = vld [vmem:[%s315 + $0x4b40] sm:$0xff]
        %v2810 = vld [vmem:[%s315 + $0x4b48] sm:$0xff]
        %v2811 = vld [vmem:[%s315 + $0x4b50] sm:$0xff]
        %v2812 = vld [vmem:[%s315 + $0x4b58] sm:$0xff]
        %v2813 = vld [vmem:[%s315 + $0x4b60] sm:$0xff]
        %v2814 = vld [vmem:[%s315 + $0x4b68] sm:$0xff]
        %v2815 = vld [vmem:[%s315 + $0x4b70] sm:$0xff]
        %v2816 = vld [vmem:[%s315 + $0x4b78] sm:$0xff]
        %v2817 = vld [vmem:[%s315 + $0x4b80] sm:$0xff]
        %v2818 = vld [vmem:[%s315 + $0x4b88] sm:$0xff]
        %v2819 = vld [vmem:[%s315 + $0x4b90] sm:$0xff]
        %v2820 = vld [vmem:[%s315 + $0x4b98] sm:$0xff]
        %v2821 = vld [vmem:[%s315 + $0x4ba0] sm:$0xff]
        %v2822 = vld [vmem:[%s315 + $0x4ba8] sm:$0xff]
        %v2823 = vld [vmem:[%s315 + $0x4bb0] sm:$0xff]
        %v2824 = vld [vmem:[%s315 + $0x4bb8] sm:$0xff]
        %v2825 = vld [vmem:[%s315 + $0x4bc0] sm:$0xff]
        %v2826 = vld [vmem:[%s315 + $0x4bc8] sm:$0xff]
        %v2827 = vld [vmem:[%s315 + $0x4bd0] sm:$0xff]
        %v2828 = vld [vmem:[%s315 + $0x4bd8] sm:$0xff]
        %v2829 = vld [vmem:[%s315 + $0x4be0] sm:$0xff]
        %v2830 = vld [vmem:[%s315 + $0x4be8] sm:$0xff]
        %v2831 = vld [vmem:[%s315 + $0x4bf0] sm:$0xff]
        %v2832 = vld [vmem:[%s315 + $0x4bf8] sm:$0xff]
        %v2833 = vld [vmem:[%s315 + $0x4c00] sm:$0xff]
        %v2834 = vld [vmem:[%s315 + $0x4c08] sm:$0xff]
        %v2835 = vld [vmem:[%s315 + $0x4c10] sm:$0xff]
        %v2836 = vld [vmem:[%s315 + $0x4c18] sm:$0xff]
        %v2837 = vld [vmem:[%s315 + $0x4c20] sm:$0xff]
        %v2838 = vld [vmem:[%s315 + $0x4c28] sm:$0xff]
        %v2839 = vld [vmem:[%s315 + $0x4c30] sm:$0xff]
        %v2840 = vld [vmem:[%s315 + $0x4c38] sm:$0xff]
        %v2841 = vld [vmem:[%s315 + $0x4c40] sm:$0xff]
        %v2842 = vld [vmem:[%s315 + $0x4c48] sm:$0xff]
        %v2843 = vld [vmem:[%s315 + $0x4c50] sm:$0xff]
        %v2844 = vld [vmem:[%s315 + $0x4c58] sm:$0xff]
        %v2845 = vld [vmem:[%s315 + $0x4c60] sm:$0xff]
        %v2846 = vld [vmem:[%s315 + $0x4c68] sm:$0xff]
        %v2847 = vld [vmem:[%s315 + $0x4c70] sm:$0xff]
        %v2848 = vld [vmem:[%s315 + $0x4c78] sm:$0xff]
        %v2849 = vld [vmem:[%s315 + $0x4c80] sm:$0xff]
        %v2850 = vld [vmem:[%s315 + $0x4c88] sm:$0xff]
        %v2851 = vld [vmem:[%s315 + $0x4c90] sm:$0xff]
        %v2852 = vld [vmem:[%s315 + $0x4c98] sm:$0xff]
        %v2853 = vld [vmem:[%s315 + $0x4ca0] sm:$0xff]
        %v2854 = vld [vmem:[%s315 + $0x4ca8] sm:$0xff]
        %v2855 = vld [vmem:[%s315 + $0x4cb0] sm:$0xff]
        %v2856 = vld [vmem:[%s315 + $0x4cb8] sm:$0xff]
        %v2857 = vld [vmem:[%s315 + $0x4cc0] sm:$0xff]
        %v2858 = vld [vmem:[%s315 + $0x4cc8] sm:$0xff]
        %v2859 = vld [vmem:[%s315 + $0x4cd0] sm:$0xff]
        %v2860 = vld [vmem:[%s315 + $0x4cd8] sm:$0xff]
        %v2861 = vld [vmem:[%s315 + $0x4ce0] sm:$0xff]
        %v2862 = vld [vmem:[%s315 + $0x4ce8] sm:$0xff]
        %v2863 = vld [vmem:[%s315 + $0x4cf0] sm:$0xff]
        %v2864 = vld [vmem:[%s315 + $0x4cf8] sm:$0xff]
        %v2865 = vld [vmem:[%s315 + $0x4d00] sm:$0xff]
        %v2866 = vld [vmem:[%s315 + $0x4d08] sm:$0xff]
        %v2867 = vld [vmem:[%s315 + $0x4d10] sm:$0xff]
        %v2868 = vld [vmem:[%s315 + $0x4d18] sm:$0xff]
        %v2869 = vld [vmem:[%s315 + $0x4d20] sm:$0xff]
        %v2870 = vld [vmem:[%s315 + $0x4d28] sm:$0xff]
        %v2871 = vld [vmem:[%s315 + $0x4d30] sm:$0xff]
        %v2872 = vld [vmem:[%s315 + $0x4d38] sm:$0xff]
        %v2873 = vld [vmem:[%s315 + $0x4d40] sm:$0xff]
        %v2874 = vld [vmem:[%s315 + $0x4d48] sm:$0xff]
        %v2875 = vld [vmem:[%s315 + $0x4d50] sm:$0xff]
        %v2876 = vld [vmem:[%s315 + $0x4d58] sm:$0xff]
        %v2877 = vld [vmem:[%s315 + $0x4d60] sm:$0xff]
        %v2878 = vld [vmem:[%s315 + $0x4d68] sm:$0xff]
        %v2879 = vld [vmem:[%s315 + $0x4d70] sm:$0xff]
        %v2880 = vld [vmem:[%s315 + $0x4d78] sm:$0xff]
        %v2881 = vld [vmem:[%s315 + $0x4d80] sm:$0xff]
        %v2882 = vld [vmem:[%s315 + $0x4d88] sm:$0xff]
        %v2883 = vld [vmem:[%s315 + $0x4d90] sm:$0xff]
        %v2884 = vld [vmem:[%s315 + $0x4d98] sm:$0xff]
        %v2885 = vld [vmem:[%s315 + $0x4da0] sm:$0xff]
        %v2886 = vld [vmem:[%s315 + $0x4da8] sm:$0xff]
        %v2887 = vld [vmem:[%s315 + $0x4db0] sm:$0xff]
        %v2888 = vld [vmem:[%s315 + $0x4db8] sm:$0xff]
        %v2889 = vld [vmem:[%s315 + $0x4dc0] sm:$0xff]
        %v2890 = vld [vmem:[%s315 + $0x4dc8] sm:$0xff]
        %v2891 = vld [vmem:[%s315 + $0x4dd0] sm:$0xff]
        %v2892 = vld [vmem:[%s315 + $0x4dd8] sm:$0xff]
        %v2893 = vld [vmem:[%s315 + $0x4de0] sm:$0xff]
        %v2894 = vld [vmem:[%s315 + $0x4de8] sm:$0xff]
        %v2895 = vld [vmem:[%s315 + $0x4df0] sm:$0xff]
        %v2896 = vld [vmem:[%s315 + $0x4df8] sm:$0xff]
        %v2897 = vld [vmem:[%s315 + $0x4e00] sm:$0xff]
        %v2898 = vld [vmem:[%s315 + $0x4e08] sm:$0xff]
        %v2899 = vld [vmem:[%s315 + $0x4e10] sm:$0xff]
        %v2900 = vld [vmem:[%s315 + $0x4e18] sm:$0xff]
        %v2901 = vld [vmem:[%s315 + $0x4e20] sm:$0xff]
        %v2902 = vld [vmem:[%s315 + $0x4e28] sm:$0xff]
        %v2903 = vld [vmem:[%s315 + $0x4e30] sm:$0xff]
        %v2904 = vld [vmem:[%s315 + $0x4e38] sm:$0xff]
        %v2905 = vld [vmem:[%s315 + $0x4e40] sm:$0xff]
        %v2906 = vld [vmem:[%s315 + $0x4e48] sm:$0xff]
        %v2907 = vld [vmem:[%s315 + $0x4e50] sm:$0xff]
        %v2908 = vld [vmem:[%s315 + $0x4e58] sm:$0xff]
        %v2909 = vld [vmem:[%s315 + $0x4e60] sm:$0xff]
        %v2910 = vld [vmem:[%s315 + $0x4e68] sm:$0xff]
        %v2911 = vld [vmem:[%s315 + $0x4e70] sm:$0xff]
        %v2912 = vld [vmem:[%s315 + $0x4e78] sm:$0xff]
        %v2913 = vld [vmem:[%s315 + $0x4e80] sm:$0xff]
        %v2914 = vld [vmem:[%s315 + $0x4e88] sm:$0xff]
        %v2915 = vld [vmem:[%s315 + $0x4e90] sm:$0xff]
        %v2916 = vld [vmem:[%s315 + $0x4e98] sm:$0xff]
        %v2917 = vld [vmem:[%s315 + $0x4ea0] sm:$0xff]
        %v2918 = vld [vmem:[%s315 + $0x4ea8] sm:$0xff]
        %v2919 = vld [vmem:[%s315 + $0x4eb0] sm:$0xff]
        %v2920 = vld [vmem:[%s315 + $0x4eb8] sm:$0xff]
        %v2921 = vld [vmem:[%s315 + $0x4ec0] sm:$0xff]
        %v2922 = vld [vmem:[%s315 + $0x4ec8] sm:$0xff]
        %v2923 = vld [vmem:[%s315 + $0x4ed0] sm:$0xff]
        %v2924 = vld [vmem:[%s315 + $0x4ed8] sm:$0xff]
        %v2925 = vld [vmem:[%s315 + $0x4ee0] sm:$0xff]
        %v2926 = vld [vmem:[%s315 + $0x4ee8] sm:$0xff]
        %v2927 = vld [vmem:[%s315 + $0x4ef0] sm:$0xff]
        %v2928 = vld [vmem:[%s315 + $0x4ef8] sm:$0xff]
        %v2929 = vld [vmem:[%s315 + $0x4f00] sm:$0xff]
        %v2930 = vld [vmem:[%s315 + $0x4f08] sm:$0xff]
        %v2931 = vld [vmem:[%s315 + $0x4f10] sm:$0xff]
        %v2932 = vld [vmem:[%s315 + $0x4f18] sm:$0xff]
        %v2933 = vld [vmem:[%s315 + $0x4f20] sm:$0xff]
        %v2934 = vld [vmem:[%s315 + $0x4f28] sm:$0xff]
        %v2935 = vld [vmem:[%s315 + $0x4f30] sm:$0xff]
        %v2936 = vld [vmem:[%s315 + $0x4f38] sm:$0xff]
        %v2937 = vld [vmem:[%s315 + $0x4f40] sm:$0xff]
        %v2938 = vld [vmem:[%s315 + $0x4f48] sm:$0xff]
        %v2939 = vld [vmem:[%s315 + $0x4f50] sm:$0xff]
        %v2940 = vld [vmem:[%s315 + $0x4f58] sm:$0xff]
        %v2941 = vld [vmem:[%s315 + $0x4f60] sm:$0xff]
        %v2942 = vld [vmem:[%s315 + $0x4f68] sm:$0xff]
        %v2943 = vld [vmem:[%s315 + $0x4f70] sm:$0xff]
        %v2944 = vld [vmem:[%s315 + $0x4f78] sm:$0xff]
        %v2945 = vld [vmem:[%s315 + $0x4f80] sm:$0xff]
        %v2946 = vld [vmem:[%s315 + $0x4f88] sm:$0xff]
        %v2947 = vld [vmem:[%s315 + $0x4f90] sm:$0xff]
        %v2948 = vld [vmem:[%s315 + $0x4f98] sm:$0xff]
        %v2949 = vld [vmem:[%s315 + $0x4fa0] sm:$0xff]
        %v2950 = vld [vmem:[%s315 + $0x4fa8] sm:$0xff]
        %v2951 = vld [vmem:[%s315 + $0x4fb0] sm:$0xff]
        %v2952 = vld [vmem:[%s315 + $0x4fb8] sm:$0xff]
        %v2953 = vld [vmem:[%s315 + $0x4fc0] sm:$0xff]
        %v2954 = vld [vmem:[%s315 + $0x4fc8] sm:$0xff]
        %v2955 = vld [vmem:[%s315 + $0x4fd0] sm:$0xff]
        %v2956 = vld [vmem:[%s315 + $0x4fd8] sm:$0xff]
        %v2957 = vld [vmem:[%s315 + $0x4fe0] sm:$0xff]
        %v2958 = vld [vmem:[%s315 + $0x4fe8] sm:$0xff]
        %v2959 = vld [vmem:[%s315 + $0x4ff0] sm:$0xff]
        %v2960 = vld [vmem:[%s315 + $0x4ff8] sm:$0xff]
        %v2961 = vld [vmem:[%s367] sm:$0xff]
        %v2963 = vlaneseq
        %v2964 = vshrl.u32 %v2963, 7
        %v2965 = vsub.s32 0, %v2964
        %v2966 = vrot.slane %v2961, %v2965
        %v2967 = vlaneseq
        %v2968 = vshrl.u32 %v2967, 7
        %v2969 = vsub.s32 1, %v2968
        %v2970 = vrot.slane %v2961, %v2969
        %v2971 = vlaneseq
        %v2972 = vshrl.u32 %v2971, 7
        %v2973 = vsub.s32 2, %v2972
        %v2974 = vrot.slane %v2961, %v2973
        %v2975 = vlaneseq
        %v2976 = vshrl.u32 %v2975, 7
        %v2977 = vsub.s32 3, %v2976
        %v2978 = vrot.slane %v2961, %v2977
        %v2979 = vlaneseq
        %v2980 = vshrl.u32 %v2979, 7
        %v2981 = vsub.s32 4, %v2980
        %v2982 = vrot.slane %v2961, %v2981
        %v2983 = vlaneseq
        %v2984 = vshrl.u32 %v2983, 7
        %v2985 = vsub.s32 5, %v2984
        %v2986 = vrot.slane %v2961, %v2985
        %v2987 = vlaneseq
        %v2988 = vshrl.u32 %v2987, 7
        %v2989 = vsub.s32 6, %v2988
        %v2990 = vrot.slane %v2961, %v2989
        %v2991 = vlaneseq
        %v2992 = vshrl.u32 %v2991, 7
        %v2993 = vsub.s32 7, %v2992
        %v2994 = vrot.slane %v2961, %v2993
        %3003 = vmatprep.subr.mxu0 %v402
        %3004 = vmatpush1.msra.mxu0 %v401
        %3005 = vmatprep.subr.mxu0 %v410
        %3006 = vmatpush1.msra.mxu0 %v409
        %3007 = vmatprep.subr.mxu0 %v418
        %3008 = vmatpush1.msra.mxu0 %v417
        %3009 = vmatprep.subr.mxu0 %v426
        %3010 = vmatpush1.msra.mxu0 %v425
        %3011 = vmatprep.subr.mxu0 %v434
        %3012 = vmatpush1.msra.mxu0 %v433
        %3013 = vmatprep.subr.mxu0 %v442
        %3014 = vmatpush1.msra.mxu0 %v441
        %3015 = vmatprep.subr.mxu0 %v450
        %3016 = vmatpush1.msra.mxu0 %v449
        %3017 = vmatprep.subr.mxu0 %v458
        %3018 = vmatpush1.msra.mxu0 %v457
        %3019 = vmatprep.subr.mxu0 %v466
        %3020 = vmatpush1.msra.mxu0 %v465
        %3021 = vmatprep.subr.mxu0 %v474
        %3022 = vmatpush1.msra.mxu0 %v473
        %3023 = vmatprep.subr.mxu0 %v482
        %3024 = vmatpush1.msra.mxu0 %v481
        %3025 = vmatprep.subr.mxu0 %v490
        %3026 = vmatpush1.msra.mxu0 %v489
        %3027 = vmatprep.subr.mxu0 %v498
        %3028 = vmatpush1.msra.mxu0 %v497
        %3029 = vmatprep.subr.mxu0 %v506
        %3030 = vmatpush1.msra.mxu0 %v505
        %3031 = vmatprep.subr.mxu0 %v514
        %3032 = vmatpush1.msra.mxu0 %v513
        %3033 = vmatprep.subr.mxu0 %v522
        %3034 = vmatpush1.msra.mxu0 %v521
        %3035 = vmatprep.subr.mxu0 %v530
        %3036 = vmatpush1.msra.mxu0 %v529
        %3037 = vmatprep.subr.mxu0 %v538
        %3038 = vmatpush1.msra.mxu0 %v537
        %3039 = vmatprep.subr.mxu0 %v546
        %3040 = vmatpush1.msra.mxu0 %v545
        %3041 = vmatprep.subr.mxu0 %v554
        %3042 = vmatpush1.msra.mxu0 %v553
        %3043 = vmatprep.subr.mxu0 %v562
        %3044 = vmatpush1.msra.mxu0 %v561
        %3045 = vmatprep.subr.mxu0 %v570
        %3046 = vmatpush1.msra.mxu0 %v569
        %3047 = vmatprep.subr.mxu0 %v578
        %3048 = vmatpush1.msra.mxu0 %v577
        %3049 = vmatprep.subr.mxu0 %v586
        %3050 = vmatpush1.msra.mxu0 %v585
        %3051 = vmatprep.subr.mxu0 %v594
        %3052 = vmatpush1.msra.mxu0 %v593
        %3053 = vmatprep.subr.mxu0 %v602
        %3054 = vmatpush1.msra.mxu0 %v601
        %3055 = vmatprep.subr.mxu0 %v610
        %3056 = vmatpush1.msra.mxu0 %v609
        %3057 = vmatprep.subr.mxu0 %v618
        %3058 = vmatpush1.msra.mxu0 %v617
        %3059 = vmatprep.subr.mxu0 %v626
        %3060 = vmatpush1.msra.mxu0 %v625
        %3061 = vmatprep.subr.mxu0 %v634
        %3062 = vmatpush1.msra.mxu0 %v633
        %3063 = vmatprep.subr.mxu0 %v642
        %3064 = vmatpush1.msra.mxu0 %v641
        %3065 = vmatprep.subr.mxu0 %v650
        %3066 = vmatpush1.msra.mxu0 %v649
        %3067 = vmatprep.mubr.f32.mxu0 %v382
        %3068 = vmatmul.mubr.f32.gmra.mrb[0].mxu0 %v381
        %v3069 = vpop.f32.mrb[0].mxu0
        %v3070 = vadd.f32 %v2966, %v3069
        %v3071 = vpop.f32.mrb[0].mxu0
        %v3072 = vadd.f32 %v2970, %v3071
        %3073 = vdwg.mxu0
        %3074 = vmatprep.subr.mxu0 %v658
        %3075 = vmatpush1.msra.mxu0 %v657
        %3076 = vmatprep.subr.mxu0 %v666
        %3077 = vmatpush1.msra.mxu0 %v665
        %3078 = vmatprep.subr.mxu0 %v674
        %3079 = vmatpush1.msra.mxu0 %v673
        %3080 = vmatprep.subr.mxu0 %v682
        %3081 = vmatpush1.msra.mxu0 %v681
        %3082 = vmatprep.subr.mxu0 %v690
        %3083 = vmatpush1.msra.mxu0 %v689
        %3084 = vmatprep.subr.mxu0 %v698
        %3085 = vmatpush1.msra.mxu0 %v697
        %3086 = vmatprep.subr.mxu0 %v706
        %3087 = vmatpush1.msra.mxu0 %v705
        %3088 = vmatprep.subr.mxu0 %v714
        %3089 = vmatpush1.msra.mxu0 %v713
        %3090 = vmatprep.subr.mxu0 %v722
        %3091 = vmatpush1.msra.mxu0 %v721
        %3092 = vmatprep.subr.mxu0 %v730
        %3093 = vmatpush1.msra.mxu0 %v729
        %3094 = vmatprep.subr.mxu0 %v738
        %3095 = vmatpush1.msra.mxu0 %v737
        %3096 = vmatprep.subr.mxu0 %v746
        %3097 = vmatpush1.msra.mxu0 %v745
        %3098 = vmatprep.subr.mxu0 %v754
        %3099 = vmatpush1.msra.mxu0 %v753
        %3100 = vmatprep.subr.mxu0 %v762
        %3101 = vmatpush1.msra.mxu0 %v761
        %3102 = vmatprep.subr.mxu0 %v770
        %3103 = vmatpush1.msra.mxu0 %v769
        %3104 = vmatprep.subr.mxu0 %v778
        %3105 = vmatpush1.msra.mxu0 %v777
        %3106 = vmatprep.subr.mxu0 %v786
        %3107 = vmatpush1.msra.mxu0 %v785
        %3108 = vmatprep.subr.mxu0 %v794
        %3109 = vmatpush1.msra.mxu0 %v793
        %3110 = vmatprep.subr.mxu0 %v802
        %3111 = vmatpush1.msra.mxu0 %v801
        %3112 = vmatprep.subr.mxu0 %v810
        %3113 = vmatpush1.msra.mxu0 %v809
        %3114 = vmatprep.subr.mxu0 %v818
        %3115 = vmatpush1.msra.mxu0 %v817
        %3116 = vmatprep.subr.mxu0 %v826
        %3117 = vmatpush1.msra.mxu0 %v825
        %3118 = vmatprep.subr.mxu0 %v834
        %3119 = vmatpush1.msra.mxu0 %v833
        %3120 = vmatprep.subr.mxu0 %v842
        %3121 = vmatpush1.msra.mxu0 %v841
        %3122 = vmatprep.subr.mxu0 %v850
        %3123 = vmatpush1.msra.mxu0 %v849
        %3124 = vmatprep.subr.mxu0 %v858
        %3125 = vmatpush1.msra.mxu0 %v857
        %3126 = vmatprep.subr.mxu0 %v866
        %3127 = vmatpush1.msra.mxu0 %v865
        %3128 = vmatprep.subr.mxu0 %v874
        %3129 = vmatpush1.msra.mxu0 %v873
        %3130 = vmatprep.subr.mxu0 %v882
        %3131 = vmatpush1.msra.mxu0 %v881
        %3132 = vmatprep.subr.mxu0 %v890
        %3133 = vmatpush1.msra.mxu0 %v889
        %3134 = vmatprep.subr.mxu0 %v898
        %3135 = vmatpush1.msra.mxu0 %v897
        %3136 = vmatprep.subr.mxu0 %v906
        %3137 = vmatpush1.msra.mxu0 %v905
        %3138 = vmatprep.mubr.f32.mxu0 %v384
        %3139 = vmatmul.mubr.f32.gmra.mrb[0].mxu0 %v383
        %v3140 = vpop.f32.mrb[0].mxu0
        %v3141 = vadd.f32 %v3070, %v3140
        %v3142 = vpop.f32.mrb[0].mxu0
        %v3143 = vadd.f32 %v3072, %v3142
        %3144 = vdwg.mxu0
        %3145 = vmatprep.subr.mxu0 %v914
        %3146 = vmatpush1.msra.mxu0 %v913
        %3147 = vmatprep.subr.mxu0 %v922
        %3148 = vmatpush1.msra.mxu0 %v921
        %3149 = vmatprep.subr.mxu0 %v930
        %3150 = vmatpush1.msra.mxu0 %v929
        %3151 = vmatprep.subr.mxu0 %v938
        %3152 = vmatpush1.msra.mxu0 %v937
        %3153 = vmatprep.subr.mxu0 %v946
        %3154 = vmatpush1.msra.mxu0 %v945
        %3155 = vmatprep.subr.mxu0 %v954
        %3156 = vmatpush1.msra.mxu0 %v953
        %3157 = vmatprep.subr.mxu0 %v962
        %3158 = vmatpush1.msra.mxu0 %v961
        %3159 = vmatprep.subr.mxu0 %v970
        %3160 = vmatpush1.msra.mxu0 %v969
        %3161 = vmatprep.subr.mxu0 %v978
        %3162 = vmatpush1.msra.mxu0 %v977
        %3163 = vmatprep.subr.mxu0 %v986
        %3164 = vmatpush1.msra.mxu0 %v985
        %3165 = vmatprep.subr.mxu0 %v994
        %3166 = vmatpush1.msra.mxu0 %v993
        %3167 = vmatprep.subr.mxu0 %v1002
        %3168 = vmatpush1.msra.mxu0 %v1001
        %3169 = vmatprep.subr.mxu0 %v1010
        %3170 = vmatpush1.msra.mxu0 %v1009
        %3171 = vmatprep.subr.mxu0 %v1018
        %3172 = vmatpush1.msra.mxu0 %v1017
        %3173 = vmatprep.subr.mxu0 %v1026
        %3174 = vmatpush1.msra.mxu0 %v1025
        %3175 = vmatprep.subr.mxu0 %v1034
        %3176 = vmatpush1.msra.mxu0 %v1033
        %3177 = vmatprep.subr.mxu0 %v1042
        %3178 = vmatpush1.msra.mxu0 %v1041
        %3179 = vmatprep.subr.mxu0 %v1050
        %3180 = vmatpush1.msra.mxu0 %v1049
        %3181 = vmatprep.subr.mxu0 %v1058
        %3182 = vmatpush1.msra.mxu0 %v1057
        %3183 = vmatprep.subr.mxu0 %v1066
        %3184 = vmatpush1.msra.mxu0 %v1065
        %3185 = vmatprep.subr.mxu0 %v1074
        %3186 = vmatpush1.msra.mxu0 %v1073
        %3187 = vmatprep.subr.mxu0 %v1082
        %3188 = vmatpush1.msra.mxu0 %v1081
        %3189 = vmatprep.subr.mxu0 %v1090
        %3190 = vmatpush1.msra.mxu0 %v1089
        %3191 = vmatprep.subr.mxu0 %v1098
        %3192 = vmatpush1.msra.mxu0 %v1097
        %3193 = vmatprep.subr.mxu0 %v1106
        %3194 = vmatpush1.msra.mxu0 %v1105
        %3195 = vmatprep.subr.mxu0 %v1114
        %3196 = vmatpush1.msra.mxu0 %v1113
        %3197 = vmatprep.subr.mxu0 %v1122
        %3198 = vmatpush1.msra.mxu0 %v1121
        %3199 = vmatprep.subr.mxu0 %v1130
        %3200 = vmatpush1.msra.mxu0 %v1129
        %3201 = vmatprep.subr.mxu0 %v1138
        %3202 = vmatpush1.msra.mxu0 %v1137
        %3203 = vmatprep.subr.mxu0 %v1146
        %3204 = vmatpush1.msra.mxu0 %v1145
        %3205 = vmatprep.subr.mxu0 %v1154
        %3206 = vmatpush1.msra.mxu0 %v1153
        %3207 = vmatprep.subr.mxu0 %v1162
        %3208 = vmatpush1.msra.mxu0 %v1161
        %3209 = vmatprep.mubr.f32.mxu0 %v386
        %3210 = vmatmul.mubr.f32.gmra.mrb[0].mxu0 %v385
        %v3211 = vpop.f32.mrb[0].mxu0
        %v3212 = vadd.f32 %v3141, %v3211
        %v3213 = vpop.f32.mrb[0].mxu0
        %v3214 = vadd.f32 %v3143, %v3213
        %3215 = vdwg.mxu0
        %3216 = vmatprep.subr.mxu0 %v1170
        %3217 = vmatpush1.msra.mxu0 %v1169
        %3218 = vmatprep.subr.mxu0 %v1178
        %3219 = vmatpush1.msra.mxu0 %v1177
        %3220 = vmatprep.subr.mxu0 %v1186
        %3221 = vmatpush1.msra.mxu0 %v1185
        %3222 = vmatprep.subr.mxu0 %v1194
        %3223 = vmatpush1.msra.mxu0 %v1193
        %3224 = vmatprep.subr.mxu0 %v1202
        %3225 = vmatpush1.msra.mxu0 %v1201
        %3226 = vmatprep.subr.mxu0 %v1210
        %3227 = vmatpush1.msra.mxu0 %v1209
        %3228 = vmatprep.subr.mxu0 %v1218
        %3229 = vmatpush1.msra.mxu0 %v1217
        %3230 = vmatprep.subr.mxu0 %v1226
        %3231 = vmatpush1.msra.mxu0 %v1225
        %3232 = vmatprep.subr.mxu0 %v1234
        %3233 = vmatpush1.msra.mxu0 %v1233
        %3234 = vmatprep.subr.mxu0 %v1242
        %3235 = vmatpush1.msra.mxu0 %v1241
        %3236 = vmatprep.subr.mxu0 %v1250
        %3237 = vmatpush1.msra.mxu0 %v1249
        %3238 = vmatprep.subr.mxu0 %v1258
        %3239 = vmatpush1.msra.mxu0 %v1257
        %3240 = vmatprep.subr.mxu0 %v1266
        %3241 = vmatpush1.msra.mxu0 %v1265
        %3242 = vmatprep.subr.mxu0 %v1274
        %3243 = vmatpush1.msra.mxu0 %v1273
        %3244 = vmatprep.subr.mxu0 %v1282
        %3245 = vmatpush1.msra.mxu0 %v1281
        %3246 = vmatprep.subr.mxu0 %v1290
        %3247 = vmatpush1.msra.mxu0 %v1289
        %3248 = vmatprep.subr.mxu0 %v1298
        %3249 = vmatpush1.msra.mxu0 %v1297
        %3250 = vmatprep.subr.mxu0 %v1306
        %3251 = vmatpush1.msra.mxu0 %v1305
        %3252 = vmatprep.subr.mxu0 %v1314
        %3253 = vmatpush1.msra.mxu0 %v1313
        %3254 = vmatprep.subr.mxu0 %v1322
        %3255 = vmatpush1.msra.mxu0 %v1321
        %3256 = vmatprep.subr.mxu0 %v1330
        %3257 = vmatpush1.msra.mxu0 %v1329
        %3258 = vmatprep.subr.mxu0 %v1338
        %3259 = vmatpush1.msra.mxu0 %v1337
        %3260 = vmatprep.subr.mxu0 %v1346
        %3261 = vmatpush1.msra.mxu0 %v1345
        %3262 = vmatprep.subr.mxu0 %v1354
        %3263 = vmatpush1.msra.mxu0 %v1353
        %3264 = vmatprep.subr.mxu0 %v1362
        %3265 = vmatpush1.msra.mxu0 %v1361
        %3266 = vmatprep.subr.mxu0 %v1370
        %3267 = vmatpush1.msra.mxu0 %v1369
        %3268 = vmatprep.subr.mxu0 %v1378
        %3269 = vmatpush1.msra.mxu0 %v1377
        %3270 = vmatprep.subr.mxu0 %v1386
        %3271 = vmatpush1.msra.mxu0 %v1385
        %3272 = vmatprep.subr.mxu0 %v1394
        %3273 = vmatpush1.msra.mxu0 %v1393
        %3274 = vmatprep.subr.mxu0 %v1402
        %3275 = vmatpush1.msra.mxu0 %v1401
        %3276 = vmatprep.subr.mxu0 %v1410
        %3277 = vmatpush1.msra.mxu0 %v1409
        %3278 = vmatprep.subr.mxu0 %v1418
        %3279 = vmatpush1.msra.mxu0 %v1417
        %3280 = vmatprep.mubr.f32.mxu0 %v388
        %3281 = vmatmul.mubr.f32.gmra.mrb[0].mxu0 %v387
        %v3282 = vpop.f32.mrb[0].mxu0
        %v3283 = vadd.f32 %v3212, %v3282
        %v3284 = vpop.f32.mrb[0].mxu0
        %v3285 = vadd.f32 %v3214, %v3284
        %3286 = vdwg.mxu0
        %3287 = vmatprep.subr.mxu0 %v1426
        %3288 = vmatpush1.msra.mxu0 %v1425
        %3289 = vmatprep.subr.mxu0 %v1434
        %3290 = vmatpush1.msra.mxu0 %v1433
        %3291 = vmatprep.subr.mxu0 %v1442
        %3292 = vmatpush1.msra.mxu0 %v1441
        %3293 = vmatprep.subr.mxu0 %v1450
        %3294 = vmatpush1.msra.mxu0 %v1449
        %3295 = vmatprep.subr.mxu0 %v1458
        %3296 = vmatpush1.msra.mxu0 %v1457
        %3297 = vmatprep.subr.mxu0 %v1466
        %3298 = vmatpush1.msra.mxu0 %v1465
        %3299 = vmatprep.subr.mxu0 %v1474
        %3300 = vmatpush1.msra.mxu0 %v1473
        %3301 = vmatprep.subr.mxu0 %v1482
        %3302 = vmatpush1.msra.mxu0 %v1481
        %3303 = vmatprep.subr.mxu0 %v1490
        %3304 = vmatpush1.msra.mxu0 %v1489
        %3305 = vmatprep.subr.mxu0 %v1498
        %3306 = vmatpush1.msra.mxu0 %v1497
        %3307 = vmatprep.subr.mxu0 %v1506
        %3308 = vmatpush1.msra.mxu0 %v1505
        %3309 = vmatprep.subr.mxu0 %v1514
        %3310 = vmatpush1.msra.mxu0 %v1513
        %3311 = vmatprep.subr.mxu0 %v1522
        %3312 = vmatpush1.msra.mxu0 %v1521
        %3313 = vmatprep.subr.mxu0 %v1530
        %3314 = vmatpush1.msra.mxu0 %v1529
        %3315 = vmatprep.subr.mxu0 %v1538
        %3316 = vmatpush1.msra.mxu0 %v1537
        %3317 = vmatprep.subr.mxu0 %v1546
        %3318 = vmatpush1.msra.mxu0 %v1545
        %3319 = vmatprep.subr.mxu0 %v1554
        %3320 = vmatpush1.msra.mxu0 %v1553
        %3321 = vmatprep.subr.mxu0 %v1562
        %3322 = vmatpush1.msra.mxu0 %v1561
        %3323 = vmatprep.subr.mxu0 %v1570
        %3324 = vmatpush1.msra.mxu0 %v1569
        %3325 = vmatprep.subr.mxu0 %v1578
        %3326 = vmatpush1.msra.mxu0 %v1577
        %3327 = vmatprep.subr.mxu0 %v1586
        %3328 = vmatpush1.msra.mxu0 %v1585
        %3329 = vmatprep.subr.mxu0 %v1594
        %3330 = vmatpush1.msra.mxu0 %v1593
        %3331 = vmatprep.subr.mxu0 %v1602
        %3332 = vmatpush1.msra.mxu0 %v1601
        %3333 = vmatprep.subr.mxu0 %v1610
        %3334 = vmatpush1.msra.mxu0 %v1609
        %3335 = vmatprep.subr.mxu0 %v1618
        %3336 = vmatpush1.msra.mxu0 %v1617
        %3337 = vmatprep.subr.mxu0 %v1626
        %3338 = vmatpush1.msra.mxu0 %v1625
        %3339 = vmatprep.subr.mxu0 %v1634
        %3340 = vmatpush1.msra.mxu0 %v1633
        %3341 = vmatprep.subr.mxu0 %v1642
        %3342 = vmatpush1.msra.mxu0 %v1641
        %3343 = vmatprep.subr.mxu0 %v1650
        %3344 = vmatpush1.msra.mxu0 %v1649
        %3345 = vmatprep.subr.mxu0 %v1658
        %3346 = vmatpush1.msra.mxu0 %v1657
        %3347 = vmatprep.subr.mxu0 %v1666
        %3348 = vmatpush1.msra.mxu0 %v1665
        %3349 = vmatprep.subr.mxu0 %v1674
        %3350 = vmatpush1.msra.mxu0 %v1673
        %3351 = vmatprep.mubr.f32.mxu0 %v390
        %3352 = vmatmul.mubr.f32.gmra.mrb[0].mxu0 %v389
        %v3353 = vpop.f32.mrb[0].mxu0
        %v3354 = vadd.f32 %v3283, %v3353
        %v3355 = vpop.f32.mrb[0].mxu0
        %v3356 = vadd.f32 %v3285, %v3355
        %3357 = vdwg.mxu0
        %3358 = vmatprep.subr.mxu0 %v1682
        %3359 = vmatpush1.msra.mxu0 %v1681
        %3360 = vmatprep.subr.mxu0 %v1690
        %3361 = vmatpush1.msra.mxu0 %v1689
        %3362 = vmatprep.subr.mxu0 %v1698
        %3363 = vmatpush1.msra.mxu0 %v1697
        %3364 = vmatprep.subr.mxu0 %v1706
        %3365 = vmatpush1.msra.mxu0 %v1705
        %3366 = vmatprep.subr.mxu0 %v1714
        %3367 = vmatpush1.msra.mxu0 %v1713
        %3368 = vmatprep.subr.mxu0 %v1722
        %3369 = vmatpush1.msra.mxu0 %v1721
        %3370 = vmatprep.subr.mxu0 %v1730
        %3371 = vmatpush1.msra.mxu0 %v1729
        %3372 = vmatprep.subr.mxu0 %v1738
        %3373 = vmatpush1.msra.mxu0 %v1737
        %3374 = vmatprep.subr.mxu0 %v1746
        %3375 = vmatpush1.msra.mxu0 %v1745
        %3376 = vmatprep.subr.mxu0 %v1754
        %3377 = vmatpush1.msra.mxu0 %v1753
        %3378 = vmatprep.subr.mxu0 %v1762
        %3379 = vmatpush1.msra.mxu0 %v1761
        %3380 = vmatprep.subr.mxu0 %v1770
        %3381 = vmatpush1.msra.mxu0 %v1769
        %3382 = vmatprep.subr.mxu0 %v1778
        %3383 = vmatpush1.msra.mxu0 %v1777
        %3384 = vmatprep.subr.mxu0 %v1786
        %3385 = vmatpush1.msra.mxu0 %v1785
        %3386 = vmatprep.subr.mxu0 %v1794
        %3387 = vmatpush1.msra.mxu0 %v1793
        %3388 = vmatprep.subr.mxu0 %v1802
        %3389 = vmatpush1.msra.mxu0 %v1801
        %3390 = vmatprep.subr.mxu0 %v1810
        %3391 = vmatpush1.msra.mxu0 %v1809
        %3392 = vmatprep.subr.mxu0 %v1818
        %3393 = vmatpush1.msra.mxu0 %v1817
        %3394 = vmatprep.subr.mxu0 %v1826
        %3395 = vmatpush1.msra.mxu0 %v1825
        %3396 = vmatprep.subr.mxu0 %v1834
        %3397 = vmatpush1.msra.mxu0 %v1833
        %3398 = vmatprep.subr.mxu0 %v1842
        %3399 = vmatpush1.msra.mxu0 %v1841
        %3400 = vmatprep.subr.mxu0 %v1850
        %3401 = vmatpush1.msra.mxu0 %v1849
        %3402 = vmatprep.subr.mxu0 %v1858
        %3403 = vmatpush1.msra.mxu0 %v1857
        %3404 = vmatprep.subr.mxu0 %v1866
        %3405 = vmatpush1.msra.mxu0 %v1865
        %3406 = vmatprep.subr.mxu0 %v1874
        %3407 = vmatpush1.msra.mxu0 %v1873
        %3408 = vmatprep.subr.mxu0 %v1882
        %3409 = vmatpush1.msra.mxu0 %v1881
        %3410 = vmatprep.subr.mxu0 %v1890
        %3411 = vmatpush1.msra.mxu0 %v1889
        %3412 = vmatprep.subr.mxu0 %v1898
        %3413 = vmatpush1.msra.mxu0 %v1897
        %3414 = vmatprep.subr.mxu0 %v1906
        %3415 = vmatpush1.msra.mxu0 %v1905
        %3416 = vmatprep.subr.mxu0 %v1914
        %3417 = vmatpush1.msra.mxu0 %v1913
        %3418 = vmatprep.subr.mxu0 %v1922
        %3419 = vmatpush1.msra.mxu0 %v1921
        %3420 = vmatprep.subr.mxu0 %v1930
        %3421 = vmatpush1.msra.mxu0 %v1929
        %3422 = vmatprep.mubr.f32.mxu0 %v392
        %3423 = vmatmul.mubr.f32.gmra.mrb[0].mxu0 %v391
        %v3424 = vpop.f32.mrb[0].mxu0
        %v3425 = vadd.f32 %v3354, %v3424
        %v3426 = vpop.f32.mrb[0].mxu0
        %v3427 = vadd.f32 %v3356, %v3426
        %3428 = vdwg.mxu0
        %3429 = vmatprep.subr.mxu0 %v1938
        %3430 = vmatpush1.msra.mxu0 %v1937
        %3431 = vmatprep.subr.mxu0 %v1946
        %3432 = vmatpush1.msra.mxu0 %v1945
        %3433 = vmatprep.subr.mxu0 %v1954
        %3434 = vmatpush1.msra.mxu0 %v1953
        %3435 = vmatprep.subr.mxu0 %v1962
        %3436 = vmatpush1.msra.mxu0 %v1961
        %3437 = vmatprep.subr.mxu0 %v1970
        %3438 = vmatpush1.msra.mxu0 %v1969
        %3439 = vmatprep.subr.mxu0 %v1978
        %3440 = vmatpush1.msra.mxu0 %v1977
        %3441 = vmatprep.subr.mxu0 %v1986
        %3442 = vmatpush1.msra.mxu0 %v1985
        %3443 = vmatprep.subr.mxu0 %v1994
        %3444 = vmatpush1.msra.mxu0 %v1993
        %3445 = vmatprep.subr.mxu0 %v2002
        %3446 = vmatpush1.msra.mxu0 %v2001
        %3447 = vmatprep.subr.mxu0 %v2010
        %3448 = vmatpush1.msra.mxu0 %v2009
        %3449 = vmatprep.subr.mxu0 %v2018
        %3450 = vmatpush1.msra.mxu0 %v2017
        %3451 = vmatprep.subr.mxu0 %v2026
        %3452 = vmatpush1.msra.mxu0 %v2025
        %3453 = vmatprep.subr.mxu0 %v2034
        %3454 = vmatpush1.msra.mxu0 %v2033
        %3455 = vmatprep.subr.mxu0 %v2042
        %3456 = vmatpush1.msra.mxu0 %v2041
        %3457 = vmatprep.subr.mxu0 %v2050
        %3458 = vmatpush1.msra.mxu0 %v2049
        %3459 = vmatprep.subr.mxu0 %v2058
        %3460 = vmatpush1.msra.mxu0 %v2057
        %3461 = vmatprep.subr.mxu0 %v2066
        %3462 = vmatpush1.msra.mxu0 %v2065
        %3463 = vmatprep.subr.mxu0 %v2074
        %3464 = vmatpush1.msra.mxu0 %v2073
        %3465 = vmatprep.subr.mxu0 %v2082
        %3466 = vmatpush1.msra.mxu0 %v2081
        %3467 = vmatprep.subr.mxu0 %v2090
        %3468 = vmatpush1.msra.mxu0 %v2089
        %3469 = vmatprep.subr.mxu0 %v2098
        %3470 = vmatpush1.msra.mxu0 %v2097
        %3471 = vmatprep.subr.mxu0 %v2106
        %3472 = vmatpush1.msra.mxu0 %v2105
        %3473 = vmatprep.subr.mxu0 %v2114
        %3474 = vmatpush1.msra.mxu0 %v2113
        %3475 = vmatprep.subr.mxu0 %v2122
        %3476 = vmatpush1.msra.mxu0 %v2121
        %3477 = vmatprep.subr.mxu0 %v2130
        %3478 = vmatpush1.msra.mxu0 %v2129
        %3479 = vmatprep.subr.mxu0 %v2138
        %3480 = vmatpush1.msra.mxu0 %v2137
        %3481 = vmatprep.subr.mxu0 %v2146
        %3482 = vmatpush1.msra.mxu0 %v2145
        %3483 = vmatprep.subr.mxu0 %v2154
        %3484 = vmatpush1.msra.mxu0 %v2153
        %3485 = vmatprep.subr.mxu0 %v2162
        %3486 = vmatpush1.msra.mxu0 %v2161
        %3487 = vmatprep.subr.mxu0 %v2170
        %3488 = vmatpush1.msra.mxu0 %v2169
        %3489 = vmatprep.subr.mxu0 %v2178
        %3490 = vmatpush1.msra.mxu0 %v2177
        %3491 = vmatprep.subr.mxu0 %v2186
        %3492 = vmatpush1.msra.mxu0 %v2185
        %3493 = vmatprep.mubr.f32.mxu0 %v394
        %3494 = vmatmul.mubr.f32.gmra.mrb[0].mxu0 %v393
        %v3495 = vpop.f32.mrb[0].mxu0
        %v3496 = vadd.f32 %v3425, %v3495
        %v3497 = vpop.f32.mrb[0].mxu0
        %v3498 = vadd.f32 %v3427, %v3497
        %3499 = vdwg.mxu0
        %3500 = vmatprep.subr.mxu0 %v2194
        %3501 = vmatpush1.msra.mxu0 %v2193
        %3502 = vmatprep.subr.mxu0 %v2202
        %3503 = vmatpush1.msra.mxu0 %v2201
        %3504 = vmatprep.subr.mxu0 %v2210
        %3505 = vmatpush1.msra.mxu0 %v2209
        %3506 = vmatprep.subr.mxu0 %v2218
        %3507 = vmatpush1.msra.mxu0 %v2217
        %3508 = vmatprep.subr.mxu0 %v2226
        %3509 = vmatpush1.msra.mxu0 %v2225
        %3510 = vmatprep.subr.mxu0 %v2234
        %3511 = vmatpush1.msra.mxu0 %v2233
        %3512 = vmatprep.subr.mxu0 %v2242
        %3513 = vmatpush1.msra.mxu0 %v2241
        %3514 = vmatprep.subr.mxu0 %v2250
        %3515 = vmatpush1.msra.mxu0 %v2249
        %3516 = vmatprep.subr.mxu0 %v2258
        %3517 = vmatpush1.msra.mxu0 %v2257
        %3518 = vmatprep.subr.mxu0 %v2266
        %3519 = vmatpush1.msra.mxu0 %v2265
        %3520 = vmatprep.subr.mxu0 %v2274
        %3521 = vmatpush1.msra.mxu0 %v2273
        %3522 = vmatprep.subr.mxu0 %v2282
        %3523 = vmatpush1.msra.mxu0 %v2281
        %3524 = vmatprep.subr.mxu0 %v2290
        %3525 = vmatpush1.msra.mxu0 %v2289
        %3526 = vmatprep.subr.mxu0 %v2298
        %3527 = vmatpush1.msra.mxu0 %v2297
        %3528 = vmatprep.subr.mxu0 %v2306
        %3529 = vmatpush1.msra.mxu0 %v2305
        %3530 = vmatprep.subr.mxu0 %v2314
        %3531 = vmatpush1.msra.mxu0 %v2313
        %3532 = vmatprep.subr.mxu0 %v2322
        %3533 = vmatpush1.msra.mxu0 %v2321
        %3534 = vmatprep.subr.mxu0 %v2330
        %3535 = vmatpush1.msra.mxu0 %v2329
        %3536 = vmatprep.subr.mxu0 %v2338
        %3537 = vmatpush1.msra.mxu0 %v2337
        %3538 = vmatprep.subr.mxu0 %v2346
        %3539 = vmatpush1.msra.mxu0 %v2345
        %3540 = vmatprep.subr.mxu0 %v2354
        %3541 = vmatpush1.msra.mxu0 %v2353
        %3542 = vmatprep.subr.mxu0 %v2362
        %3543 = vmatpush1.msra.mxu0 %v2361
        %3544 = vmatprep.subr.mxu0 %v2370
        %3545 = vmatpush1.msra.mxu0 %v2369
        %3546 = vmatprep.subr.mxu0 %v2378
        %3547 = vmatpush1.msra.mxu0 %v2377
        %3548 = vmatprep.subr.mxu0 %v2386
        %3549 = vmatpush1.msra.mxu0 %v2385
        %3550 = vmatprep.subr.mxu0 %v2394
        %3551 = vmatpush1.msra.mxu0 %v2393
        %3552 = vmatprep.subr.mxu0 %v2402
        %3553 = vmatpush1.msra.mxu0 %v2401
        %3554 = vmatprep.subr.mxu0 %v2410
        %3555 = vmatpush1.msra.mxu0 %v2409
        %3556 = vmatprep.subr.mxu0 %v2418
        %3557 = vmatpush1.msra.mxu0 %v2417
        %3558 = vmatprep.subr.mxu0 %v2426
        %3559 = vmatpush1.msra.mxu0 %v2425
        %3560 = vmatprep.subr.mxu0 %v2434
        %3561 = vmatpush1.msra.mxu0 %v2433
        %3562 = vmatprep.subr.mxu0 %v2442
        %3563 = vmatpush1.msra.mxu0 %v2441
        %3564 = vmatprep.mubr.f32.mxu0 %v396
        %3565 = vmatmul.mubr.f32.gmra.mrb[0].mxu0 %v395
        %v3566 = vpop.f32.mrb[0].mxu0
        %v3567 = vadd.f32 %v3496, %v3566
        %v3568 = vpop.f32.mrb[0].mxu0
        %v3569 = vadd.f32 %v3498, %v3568
        %3570 = vdwg.mxu0
        %3571 = vmatprep.subr.mxu0 %v2450
        %3572 = vmatpush1.msra.mxu0 %v2449
        %3573 = vmatprep.subr.mxu0 %v2458
        %3574 = vmatpush1.msra.mxu0 %v2457
        %3575 = vmatprep.subr.mxu0 %v2466
        %3576 = vmatpush1.msra.mxu0 %v2465
        %3577 = vmatprep.subr.mxu0 %v2474
        %3578 = vmatpush1.msra.mxu0 %v2473
        %3579 = vmatprep.subr.mxu0 %v2482
        %3580 = vmatpush1.msra.mxu0 %v2481
        %3581 = vmatprep.subr.mxu0 %v2490
        %3582 = vmatpush1.msra.mxu0 %v2489
        %3583 = vmatprep.subr.mxu0 %v2498
        %3584 = vmatpush1.msra.mxu0 %v2497
        %3585 = vmatprep.subr.mxu0 %v2506
        %3586 = vmatpush1.msra.mxu0 %v2505
        %3587 = vmatprep.subr.mxu0 %v2514
        %3588 = vmatpush1.msra.mxu0 %v2513
        %3589 = vmatprep.subr.mxu0 %v2522
        %3590 = vmatpush1.msra.mxu0 %v2521
        %3591 = vmatprep.subr.mxu0 %v2530
        %3592 = vmatpush1.msra.mxu0 %v2529
        %3593 = vmatprep.subr.mxu0 %v2538
        %3594 = vmatpush1.msra.mxu0 %v2537
        %3595 = vmatprep.subr.mxu0 %v2546
        %3596 = vmatpush1.msra.mxu0 %v2545
        %3597 = vmatprep.subr.mxu0 %v2554
        %3598 = vmatpush1.msra.mxu0 %v2553
        %3599 = vmatprep.subr.mxu0 %v2562
        %3600 = vmatpush1.msra.mxu0 %v2561
        %3601 = vmatprep.subr.mxu0 %v2570
        %3602 = vmatpush1.msra.mxu0 %v2569
        %3603 = vmatprep.subr.mxu0 %v2578
        %3604 = vmatpush1.msra.mxu0 %v2577
        %3605 = vmatprep.subr.mxu0 %v2586
        %3606 = vmatpush1.msra.mxu0 %v2585
        %3607 = vmatprep.subr.mxu0 %v2594
        %3608 = vmatpush1.msra.mxu0 %v2593
        %3609 = vmatprep.subr.mxu0 %v2602
        %3610 = vmatpush1.msra.mxu0 %v2601
        %3611 = vmatprep.subr.mxu0 %v2610
        %3612 = vmatpush1.msra.mxu0 %v2609
        %3613 = vmatprep.subr.mxu0 %v2618
        %3614 = vmatpush1.msra.mxu0 %v2617
        %3615 = vmatprep.subr.mxu0 %v2626
        %3616 = vmatpush1.msra.mxu0 %v2625
        %3617 = vmatprep.subr.mxu0 %v2634
        %3618 = vmatpush1.msra.mxu0 %v2633
        %3619 = vmatprep.subr.mxu0 %v2642
        %3620 = vmatpush1.msra.mxu0 %v2641
        %3621 = vmatprep.subr.mxu0 %v2650
        %3622 = vmatpush1.msra.mxu0 %v2649
        %3623 = vmatprep.subr.mxu0 %v2658
        %3624 = vmatpush1.msra.mxu0 %v2657
        %3625 = vmatprep.subr.mxu0 %v2666
        %3626 = vmatpush1.msra.mxu0 %v2665
        %3627 = vmatprep.subr.mxu0 %v2674
        %3628 = vmatpush1.msra.mxu0 %v2673
        %3629 = vmatprep.subr.mxu0 %v2682
        %3630 = vmatpush1.msra.mxu0 %v2681
        %3631 = vmatprep.subr.mxu0 %v2690
        %3632 = vmatpush1.msra.mxu0 %v2689
        %3633 = vmatprep.subr.mxu0 %v2698
        %3634 = vmatpush1.msra.mxu0 %v2697
        %3635 = vmatprep.mubr.f32.mxu0 %v398
        %3636 = vmatmul.mubr.f32.gmra.mrb[0].mxu0 %v397
        %v3637 = vpop.f32.mrb[0].mxu0
        %v3638 = vadd.f32 %v3567, %v3637
        %v3639 = vpop.f32.mrb[0].mxu0
        %v3640 = vadd.f32 %v3569, %v3639
        %3641 = vdwg.mxu0
        %3642 = vmatprep.subr.mxu0 %v2706
        %3643 = vmatpush1.msra.mxu0 %v2705
        %3644 = vmatprep.subr.mxu0 %v2714
        %3645 = vmatpush1.msra.mxu0 %v2713
        %3646 = vmatprep.subr.mxu0 %v2722
        %3647 = vmatpush1.msra.mxu0 %v2721
        %3648 = vmatprep.subr.mxu0 %v2730
        %3649 = vmatpush1.msra.mxu0 %v2729
        %3650 = vmatprep.subr.mxu0 %v2738
        %3651 = vmatpush1.msra.mxu0 %v2737
        %3652 = vmatprep.subr.mxu0 %v2746
        %3653 = vmatpush1.msra.mxu0 %v2745
        %3654 = vmatprep.subr.mxu0 %v2754
        %3655 = vmatpush1.msra.mxu0 %v2753
        %3656 = vmatprep.subr.mxu0 %v2762
        %3657 = vmatpush1.msra.mxu0 %v2761
        %3658 = vmatprep.subr.mxu0 %v2770
        %3659 = vmatpush1.msra.mxu0 %v2769
        %3660 = vmatprep.subr.mxu0 %v2778
        %3661 = vmatpush1.msra.mxu0 %v2777
        %3662 = vmatprep.subr.mxu0 %v2786
        %3663 = vmatpush1.msra.mxu0 %v2785
        %3664 = vmatprep.subr.mxu0 %v2794
        %3665 = vmatpush1.msra.mxu0 %v2793
        %3666 = vmatprep.subr.mxu0 %v2802
        %3667 = vmatpush1.msra.mxu0 %v2801
        %3668 = vmatprep.subr.mxu0 %v2810
        %3669 = vmatpush1.msra.mxu0 %v2809
        %3670 = vmatprep.subr.mxu0 %v2818
        %3671 = vmatpush1.msra.mxu0 %v2817
        %3672 = vmatprep.subr.mxu0 %v2826
        %3673 = vmatpush1.msra.mxu0 %v2825
        %3674 = vmatprep.subr.mxu0 %v2834
        %3675 = vmatpush1.msra.mxu0 %v2833
        %3676 = vmatprep.subr.mxu0 %v2842
        %3677 = vmatpush1.msra.mxu0 %v2841
        %3678 = vmatprep.subr.mxu0 %v2850
        %3679 = vmatpush1.msra.mxu0 %v2849
        %3680 = vmatprep.subr.mxu0 %v2858
        %3681 = vmatpush1.msra.mxu0 %v2857
        %3682 = vmatprep.subr.mxu0 %v2866
        %3683 = vmatpush1.msra.mxu0 %v2865
        %3684 = vmatprep.subr.mxu0 %v2874
        %3685 = vmatpush1.msra.mxu0 %v2873
        %3686 = vmatprep.subr.mxu0 %v2882
        %3687 = vmatpush1.msra.mxu0 %v2881
        %3688 = vmatprep.subr.mxu0 %v2890
        %3689 = vmatpush1.msra.mxu0 %v2889
        %3690 = vmatprep.subr.mxu0 %v2898
        %3691 = vmatpush1.msra.mxu0 %v2897
        %3692 = vmatprep.subr.mxu0 %v2906
        %3693 = vmatpush1.msra.mxu0 %v2905
        %3694 = vmatprep.subr.mxu0 %v2914
        %3695 = vmatpush1.msra.mxu0 %v2913
        %3696 = vmatprep.subr.mxu0 %v2922
        %3697 = vmatpush1.msra.mxu0 %v2921
        %3698 = vmatprep.subr.mxu0 %v2930
        %3699 = vmatpush1.msra.mxu0 %v2929
        %3700 = vmatprep.subr.mxu0 %v2938
        %3701 = vmatpush1.msra.mxu0 %v2937
        %3702 = vmatprep.subr.mxu0 %v2946
        %3703 = vmatpush1.msra.mxu0 %v2945
        %3704 = vmatprep.subr.mxu0 %v2954
        %3705 = vmatpush1.msra.mxu0 %v2953
        %3706 = vmatprep.mubr.f32.mxu0 %v400
        %3707 = vmatmul.mubr.f32.gmra.mrb[0].mxu0 %v399
        %v3708 = vpop.f32.mrb[0].mxu0
        %v3709 = vadd.f32 %v3638, %v3708
        %v3710 = vpop.f32.mrb[0].mxu0
        %v3711 = vadd.f32 %v3640, %v3710
        %3712 = vdwg.mxu0
        %3713 = vmatprep.subr.mxu0 %v404
        %3714 = vmatpush1.msra.mxu0 %v403
        %3715 = vmatprep.subr.mxu0 %v412
        %3716 = vmatpush1.msra.mxu0 %v411
        %3717 = vmatprep.subr.mxu0 %v420
        %3718 = vmatpush1.msra.mxu0 %v419
        %3719 = vmatprep.subr.mxu0 %v428
        %3720 = vmatpush1.msra.mxu0 %v427
        %3721 = vmatprep.subr.mxu0 %v436
        %3722 = vmatpush1.msra.mxu0 %v435
        %3723 = vmatprep.subr.mxu0 %v444
        %3724 = vmatpush1.msra.mxu0 %v443
        %3725 = vmatprep.subr.mxu0 %v452
        %3726 = vmatpush1.msra.mxu0 %v451
        %3727 = vmatprep.subr.mxu0 %v460
        %3728 = vmatpush1.msra.mxu0 %v459
        %3729 = vmatprep.subr.mxu0 %v468
        %3730 = vmatpush1.msra.mxu0 %v467
        %3731 = vmatprep.subr.mxu0 %v476
        %3732 = vmatpush1.msra.mxu0 %v475
        %3733 = vmatprep.subr.mxu0 %v484
        %3734 = vmatpush1.msra.mxu0 %v483
        %3735 = vmatprep.subr.mxu0 %v492
        %3736 = vmatpush1.msra.mxu0 %v491
        %3737 = vmatprep.subr.mxu0 %v500
        %3738 = vmatpush1.msra.mxu0 %v499
        %3739 = vmatprep.subr.mxu0 %v508
        %3740 = vmatpush1.msra.mxu0 %v507
        %3741 = vmatprep.subr.mxu0 %v516
        %3742 = vmatpush1.msra.mxu0 %v515
        %3743 = vmatprep.subr.mxu0 %v524
        %3744 = vmatpush1.msra.mxu0 %v523
        %3745 = vmatprep.subr.mxu0 %v532
        %3746 = vmatpush1.msra.mxu0 %v531
        %3747 = vmatprep.subr.mxu0 %v540
        %3748 = vmatpush1.msra.mxu0 %v539
        %3749 = vmatprep.subr.mxu0 %v548
        %3750 = vmatpush1.msra.mxu0 %v547
        %3751 = vmatprep.subr.mxu0 %v556
        %3752 = vmatpush1.msra.mxu0 %v555
        %3753 = vmatprep.subr.mxu0 %v564
        %3754 = vmatpush1.msra.mxu0 %v563
        %3755 = vmatprep.subr.mxu0 %v572
        %3756 = vmatpush1.msra.mxu0 %v571
        %3757 = vmatprep.subr.mxu0 %v580
        %3758 = vmatpush1.msra.mxu0 %v579
        %3759 = vmatprep.subr.mxu0 %v588
        %3760 = vmatpush1.msra.mxu0 %v587
        %3761 = vmatprep.subr.mxu0 %v596
        %3762 = vmatpush1.msra.mxu0 %v595
        %3763 = vmatprep.subr.mxu0 %v604
        %3764 = vmatpush1.msra.mxu0 %v603
        %3765 = vmatprep.subr.mxu0 %v612
        %3766 = vmatpush1.msra.mxu0 %v611
        %3767 = vmatprep.subr.mxu0 %v620
        %3768 = vmatpush1.msra.mxu0 %v619
        %3769 = vmatprep.subr.mxu0 %v628
        %3770 = vmatpush1.msra.mxu0 %v627
        %3771 = vmatprep.subr.mxu0 %v636
        %3772 = vmatpush1.msra.mxu0 %v635
        %3773 = vmatprep.subr.mxu0 %v644
        %3774 = vmatpush1.msra.mxu0 %v643
        %3775 = vmatprep.subr.mxu0 %v652
        %3776 = vmatpush1.msra.mxu0 %v651
        %3777 = vmatprep.mubr.f32.mxu0 %v382
        %3778 = vmatmul.mubr.f32.gmra.mrb[0].mxu0 %v381
        %v3779 = vpop.f32.mrb[0].mxu0
        %v3780 = vadd.f32 %v2974, %v3779
        %v3781 = vpop.f32.mrb[0].mxu0
        %v3782 = vadd.f32 %v2978, %v3781
        %3783 = vdwg.mxu0
        %3784 = vmatprep.subr.mxu0 %v660
        %3785 = vmatpush1.msra.mxu0 %v659
        %3786 = vmatprep.subr.mxu0 %v668
        %3787 = vmatpush1.msra.mxu0 %v667
        %3788 = vmatprep.subr.mxu0 %v676
        %3789 = vmatpush1.msra.mxu0 %v675
        %3790 = vmatprep.subr.mxu0 %v684
        %3791 = vmatpush1.msra.mxu0 %v683
        %3792 = vmatprep.subr.mxu0 %v692
        %3793 = vmatpush1.msra.mxu0 %v691
        %3794 = vmatprep.subr.mxu0 %v700
        %3795 = vmatpush1.msra.mxu0 %v699
        %3796 = vmatprep.subr.mxu0 %v708
        %3797 = vmatpush1.msra.mxu0 %v707
        %3798 = vmatprep.subr.mxu0 %v716
        %3799 = vmatpush1.msra.mxu0 %v715
        %3800 = vmatprep.subr.mxu0 %v724
        %3801 = vmatpush1.msra.mxu0 %v723
        %3802 = vmatprep.subr.mxu0 %v732
        %3803 = vmatpush1.msra.mxu0 %v731
        %3804 = vmatprep.subr.mxu0 %v740
        %3805 = vmatpush1.msra.mxu0 %v739
        %3806 = vmatprep.subr.mxu0 %v748
        %3807 = vmatpush1.msra.mxu0 %v747
        %3808 = vmatprep.subr.mxu0 %v756
        %3809 = vmatpush1.msra.mxu0 %v755
        %3810 = vmatprep.subr.mxu0 %v764
        %3811 = vmatpush1.msra.mxu0 %v763
        %3812 = vmatprep.subr.mxu0 %v772
        %3813 = vmatpush1.msra.mxu0 %v771
        %3814 = vmatprep.subr.mxu0 %v780
        %3815 = vmatpush1.msra.mxu0 %v779
        %3816 = vmatprep.subr.mxu0 %v788
        %3817 = vmatpush1.msra.mxu0 %v787
        %3818 = vmatprep.subr.mxu0 %v796
        %3819 = vmatpush1.msra.mxu0 %v795
        %3820 = vmatprep.subr.mxu0 %v804
        %3821 = vmatpush1.msra.mxu0 %v803
        %3822 = vmatprep.subr.mxu0 %v812
        %3823 = vmatpush1.msra.mxu0 %v811
        %3824 = vmatprep.subr.mxu0 %v820
        %3825 = vmatpush1.msra.mxu0 %v819
        %3826 = vmatprep.subr.mxu0 %v828
        %3827 = vmatpush1.msra.mxu0 %v827
        %3828 = vmatprep.subr.mxu0 %v836
        %3829 = vmatpush1.msra.mxu0 %v835
        %3830 = vmatprep.subr.mxu0 %v844
        %3831 = vmatpush1.msra.mxu0 %v843
        %3832 = vmatprep.subr.mxu0 %v852
        %3833 = vmatpush1.msra.mxu0 %v851
        %3834 = vmatprep.subr.mxu0 %v860
        %3835 = vmatpush1.msra.mxu0 %v859
        %3836 = vmatprep.subr.mxu0 %v868
        %3837 = vmatpush1.msra.mxu0 %v867
        %3838 = vmatprep.subr.mxu0 %v876
        %3839 = vmatpush1.msra.mxu0 %v875
        %3840 = vmatprep.subr.mxu0 %v884
        %3841 = vmatpush1.msra.mxu0 %v883
        %3842 = vmatprep.subr.mxu0 %v892
        %3843 = vmatpush1.msra.mxu0 %v891
        %3844 = vmatprep.subr.mxu0 %v900
        %3845 = vmatpush1.msra.mxu0 %v899
        %3846 = vmatprep.subr.mxu0 %v908
        %3847 = vmatpush1.msra.mxu0 %v907
        %3848 = vmatprep.mubr.f32.mxu0 %v384
        %3849 = vmatmul.mubr.f32.gmra.mrb[0].mxu0 %v383
        %v3850 = vpop.f32.mrb[0].mxu0
        %v3851 = vadd.f32 %v3780, %v3850
        %v3852 = vpop.f32.mrb[0].mxu0
        %v3853 = vadd.f32 %v3782, %v3852
        %3854 = vdwg.mxu0
        %3855 = vmatprep.subr.mxu0 %v916
        %3856 = vmatpush1.msra.mxu0 %v915
        %3857 = vmatprep.subr.mxu0 %v924
        %3858 = vmatpush1.msra.mxu0 %v923
        %3859 = vmatprep.subr.mxu0 %v932
        %3860 = vmatpush1.msra.mxu0 %v931
        %3861 = vmatprep.subr.mxu0 %v940
        %3862 = vmatpush1.msra.mxu0 %v939
        %3863 = vmatprep.subr.mxu0 %v948
        %3864 = vmatpush1.msra.mxu0 %v947
        %3865 = vmatprep.subr.mxu0 %v956
        %3866 = vmatpush1.msra.mxu0 %v955
        %3867 = vmatprep.subr.mxu0 %v964
        %3868 = vmatpush1.msra.mxu0 %v963
        %3869 = vmatprep.subr.mxu0 %v972
        %3870 = vmatpush1.msra.mxu0 %v971
        %3871 = vmatprep.subr.mxu0 %v980
        %3872 = vmatpush1.msra.mxu0 %v979
        %3873 = vmatprep.subr.mxu0 %v988
        %3874 = vmatpush1.msra.mxu0 %v987
        %3875 = vmatprep.subr.mxu0 %v996
        %3876 = vmatpush1.msra.mxu0 %v995
        %3877 = vmatprep.subr.mxu0 %v1004
        %3878 = vmatpush1.msra.mxu0 %v1003
        %3879 = vmatprep.subr.mxu0 %v1012
        %3880 = vmatpush1.msra.mxu0 %v1011
        %3881 = vmatprep.subr.mxu0 %v1020
        %3882 = vmatpush1.msra.mxu0 %v1019
        %3883 = vmatprep.subr.mxu0 %v1028
        %3884 = vmatpush1.msra.mxu0 %v1027
        %3885 = vmatprep.subr.mxu0 %v1036
        %3886 = vmatpush1.msra.mxu0 %v1035
        %3887 = vmatprep.subr.mxu0 %v1044
        %3888 = vmatpush1.msra.mxu0 %v1043
        %3889 = vmatprep.subr.mxu0 %v1052
        %3890 = vmatpush1.msra.mxu0 %v1051
        %3891 = vmatprep.subr.mxu0 %v1060
        %3892 = vmatpush1.msra.mxu0 %v1059
        %3893 = vmatprep.subr.mxu0 %v1068
        %3894 = vmatpush1.msra.mxu0 %v1067
        %3895 = vmatprep.subr.mxu0 %v1076
        %3896 = vmatpush1.msra.mxu0 %v1075
        %3897 = vmatprep.subr.mxu0 %v1084
        %3898 = vmatpush1.msra.mxu0 %v1083
        %3899 = vmatprep.subr.mxu0 %v1092
        %3900 = vmatpush1.msra.mxu0 %v1091
        %3901 = vmatprep.subr.mxu0 %v1100
        %3902 = vmatpush1.msra.mxu0 %v1099
        %3903 = vmatprep.subr.mxu0 %v1108
        %3904 = vmatpush1.msra.mxu0 %v1107
        %3905 = vmatprep.subr.mxu0 %v1116
        %3906 = vmatpush1.msra.mxu0 %v1115
        %3907 = vmatprep.subr.mxu0 %v1124
        %3908 = vmatpush1.msra.mxu0 %v1123
        %3909 = vmatprep.subr.mxu0 %v1132
        %3910 = vmatpush1.msra.mxu0 %v1131
        %3911 = vmatprep.subr.mxu0 %v1140
        %3912 = vmatpush1.msra.mxu0 %v1139
        %3913 = vmatprep.subr.mxu0 %v1148
        %3914 = vmatpush1.msra.mxu0 %v1147
        %3915 = vmatprep.subr.mxu0 %v1156
        %3916 = vmatpush1.msra.mxu0 %v1155
        %3917 = vmatprep.subr.mxu0 %v1164
        %3918 = vmatpush1.msra.mxu0 %v1163
        %3919 = vmatprep.mubr.f32.mxu0 %v386
        %3920 = vmatmul.mubr.f32.gmra.mrb[0].mxu0 %v385
        %v3921 = vpop.f32.mrb[0].mxu0
        %v3922 = vadd.f32 %v3851, %v3921
        %v3923 = vpop.f32.mrb[0].mxu0
        %v3924 = vadd.f32 %v3853, %v3923
        %3925 = vdwg.mxu0
        %3926 = vmatprep.subr.mxu0 %v1172
        %3927 = vmatpush1.msra.mxu0 %v1171
        %3928 = vmatprep.subr.mxu0 %v1180
        %3929 = vmatpush1.msra.mxu0 %v1179
        %3930 = vmatprep.subr.mxu0 %v1188
        %3931 = vmatpush1.msra.mxu0 %v1187
        %3932 = vmatprep.subr.mxu0 %v1196
        %3933 = vmatpush1.msra.mxu0 %v1195
        %3934 = vmatprep.subr.mxu0 %v1204
        %3935 = vmatpush1.msra.mxu0 %v1203
        %3936 = vmatprep.subr.mxu0 %v1212
        %3937 = vmatpush1.msra.mxu0 %v1211
        %3938 = vmatprep.subr.mxu0 %v1220
        %3939 = vmatpush1.msra.mxu0 %v1219
        %3940 = vmatprep.subr.mxu0 %v1228
        %3941 = vmatpush1.msra.mxu0 %v1227
        %3942 = vmatprep.subr.mxu0 %v1236
        %3943 = vmatpush1.msra.mxu0 %v1235
        %3944 = vmatprep.subr.mxu0 %v1244
        %3945 = vmatpush1.msra.mxu0 %v1243
        %3946 = vmatprep.subr.mxu0 %v1252
        %3947 = vmatpush1.msra.mxu0 %v1251
        %3948 = vmatprep.subr.mxu0 %v1260
        %3949 = vmatpush1.msra.mxu0 %v1259
        %3950 = vmatprep.subr.mxu0 %v1268
        %3951 = vmatpush1.msra.mxu0 %v1267
        %3952 = vmatprep.subr.mxu0 %v1276
        %3953 = vmatpush1.msra.mxu0 %v1275
        %3954 = vmatprep.subr.mxu0 %v1284
        %3955 = vmatpush1.msra.mxu0 %v1283
        %3956 = vmatprep.subr.mxu0 %v1292
        %3957 = vmatpush1.msra.mxu0 %v1291
        %3958 = vmatprep.subr.mxu0 %v1300
        %3959 = vmatpush1.msra.mxu0 %v1299
        %3960 = vmatprep.subr.mxu0 %v1308
        %3961 = vmatpush1.msra.mxu0 %v1307
        %3962 = vmatprep.subr.mxu0 %v1316
        %3963 = vmatpush1.msra.mxu0 %v1315
        %3964 = vmatprep.subr.mxu0 %v1324
        %3965 = vmatpush1.msra.mxu0 %v1323
        %3966 = vmatprep.subr.mxu0 %v1332
        %3967 = vmatpush1.msra.mxu0 %v1331
        %3968 = vmatprep.subr.mxu0 %v1340
        %3969 = vmatpush1.msra.mxu0 %v1339
        %3970 = vmatprep.subr.mxu0 %v1348
        %3971 = vmatpush1.msra.mxu0 %v1347
        %3972 = vmatprep.subr.mxu0 %v1356
        %3973 = vmatpush1.msra.mxu0 %v1355
        %3974 = vmatprep.subr.mxu0 %v1364
        %3975 = vmatpush1.msra.mxu0 %v1363
        %3976 = vmatprep.subr.mxu0 %v1372
        %3977 = vmatpush1.msra.mxu0 %v1371
        %3978 = vmatprep.subr.mxu0 %v1380
        %3979 = vmatpush1.msra.mxu0 %v1379
        %3980 = vmatprep.subr.mxu0 %v1388
        %3981 = vmatpush1.msra.mxu0 %v1387
        %3982 = vmatprep.subr.mxu0 %v1396
        %3983 = vmatpush1.msra.mxu0 %v1395
        %3984 = vmatprep.subr.mxu0 %v1404
        %3985 = vmatpush1.msra.mxu0 %v1403
        %3986 = vmatprep.subr.mxu0 %v1412
        %3987 = vmatpush1.msra.mxu0 %v1411
        %3988 = vmatprep.subr.mxu0 %v1420
        %3989 = vmatpush1.msra.mxu0 %v1419
        %3990 = vmatprep.mubr.f32.mxu0 %v388
        %3991 = vmatmul.mubr.f32.gmra.mrb[0].mxu0 %v387
        %v3992 = vpop.f32.mrb[0].mxu0
        %v3993 = vadd.f32 %v3922, %v3992
        %v3994 = vpop.f32.mrb[0].mxu0
        %v3995 = vadd.f32 %v3924, %v3994
        %3996 = vdwg.mxu0
        %3997 = vmatprep.subr.mxu0 %v1428
        %3998 = vmatpush1.msra.mxu0 %v1427
        %3999 = vmatprep.subr.mxu0 %v1436
        %4000 = vmatpush1.msra.mxu0 %v1435
        %4001 = vmatprep.subr.mxu0 %v1444
        %4002 = vmatpush1.msra.mxu0 %v1443
        %4003 = vmatprep.subr.mxu0 %v1452
        %4004 = vmatpush1.msra.mxu0 %v1451
        %4005 = vmatprep.subr.mxu0 %v1460
        %4006 = vmatpush1.msra.mxu0 %v1459
        %4007 = vmatprep.subr.mxu0 %v1468
        %4008 = vmatpush1.msra.mxu0 %v1467
        %4009 = vmatprep.subr.mxu0 %v1476
        %4010 = vmatpush1.msra.mxu0 %v1475
        %4011 = vmatprep.subr.mxu0 %v1484
        %4012 = vmatpush1.msra.mxu0 %v1483
        %4013 = vmatprep.subr.mxu0 %v1492
        %4014 = vmatpush1.msra.mxu0 %v1491
        %4015 = vmatprep.subr.mxu0 %v1500
        %4016 = vmatpush1.msra.mxu0 %v1499
        %4017 = vmatprep.subr.mxu0 %v1508
        %4018 = vmatpush1.msra.mxu0 %v1507
        %4019 = vmatprep.subr.mxu0 %v1516
        %4020 = vmatpush1.msra.mxu0 %v1515
        %4021 = vmatprep.subr.mxu0 %v1524
        %4022 = vmatpush1.msra.mxu0 %v1523
        %4023 = vmatprep.subr.mxu0 %v1532
        %4024 = vmatpush1.msra.mxu0 %v1531
        %4025 = vmatprep.subr.mxu0 %v1540
        %4026 = vmatpush1.msra.mxu0 %v1539
        %4027 = vmatprep.subr.mxu0 %v1548
        %4028 = vmatpush1.msra.mxu0 %v1547
        %4029 = vmatprep.subr.mxu0 %v1556
        %4030 = vmatpush1.msra.mxu0 %v1555
        %4031 = vmatprep.subr.mxu0 %v1564
        %4032 = vmatpush1.msra.mxu0 %v1563
        %4033 = vmatprep.subr.mxu0 %v1572
        %4034 = vmatpush1.msra.mxu0 %v1571
        %4035 = vmatprep.subr.mxu0 %v1580
        %4036 = vmatpush1.msra.mxu0 %v1579
        %4037 = vmatprep.subr.mxu0 %v1588
        %4038 = vmatpush1.msra.mxu0 %v1587
        %4039 = vmatprep.subr.mxu0 %v1596
        %4040 = vmatpush1.msra.mxu0 %v1595
        %4041 = vmatprep.subr.mxu0 %v1604
        %4042 = vmatpush1.msra.mxu0 %v1603
        %4043 = vmatprep.subr.mxu0 %v1612
        %4044 = vmatpush1.msra.mxu0 %v1611
        %4045 = vmatprep.subr.mxu0 %v1620
        %4046 = vmatpush1.msra.mxu0 %v1619
        %4047 = vmatprep.subr.mxu0 %v1628
        %4048 = vmatpush1.msra.mxu0 %v1627
        %4049 = vmatprep.subr.mxu0 %v1636
        %4050 = vmatpush1.msra.mxu0 %v1635
        %4051 = vmatprep.subr.mxu0 %v1644
        %4052 = vmatpush1.msra.mxu0 %v1643
        %4053 = vmatprep.subr.mxu0 %v1652
        %4054 = vmatpush1.msra.mxu0 %v1651
        %4055 = vmatprep.subr.mxu0 %v1660
        %4056 = vmatpush1.msra.mxu0 %v1659
        %4057 = vmatprep.subr.mxu0 %v1668
        %4058 = vmatpush1.msra.mxu0 %v1667
        %4059 = vmatprep.subr.mxu0 %v1676
        %4060 = vmatpush1.msra.mxu0 %v1675
        %4061 = vmatprep.mubr.f32.mxu0 %v390
        %4062 = vmatmul.mubr.f32.gmra.mrb[0].mxu0 %v389
        %v4063 = vpop.f32.mrb[0].mxu0
        %v4064 = vadd.f32 %v3993, %v4063
        %v4065 = vpop.f32.mrb[0].mxu0
        %v4066 = vadd.f32 %v3995, %v4065
        %4067 = vdwg.mxu0
        %4068 = vmatprep.subr.mxu0 %v1684
        %4069 = vmatpush1.msra.mxu0 %v1683
        %4070 = vmatprep.subr.mxu0 %v1692
        %4071 = vmatpush1.msra.mxu0 %v1691
        %4072 = vmatprep.subr.mxu0 %v1700
        %4073 = vmatpush1.msra.mxu0 %v1699
        %4074 = vmatprep.subr.mxu0 %v1708
        %4075 = vmatpush1.msra.mxu0 %v1707
        %4076 = vmatprep.subr.mxu0 %v1716
        %4077 = vmatpush1.msra.mxu0 %v1715
        %4078 = vmatprep.subr.mxu0 %v1724
        %4079 = vmatpush1.msra.mxu0 %v1723
        %4080 = vmatprep.subr.mxu0 %v1732
        %4081 = vmatpush1.msra.mxu0 %v1731
        %4082 = vmatprep.subr.mxu0 %v1740
        %4083 = vmatpush1.msra.mxu0 %v1739
        %4084 = vmatprep.subr.mxu0 %v1748
        %4085 = vmatpush1.msra.mxu0 %v1747
        %4086 = vmatprep.subr.mxu0 %v1756
        %4087 = vmatpush1.msra.mxu0 %v1755
        %4088 = vmatprep.subr.mxu0 %v1764
        %4089 = vmatpush1.msra.mxu0 %v1763
        %4090 = vmatprep.subr.mxu0 %v1772
        %4091 = vmatpush1.msra.mxu0 %v1771
        %4092 = vmatprep.subr.mxu0 %v1780
        %4093 = vmatpush1.msra.mxu0 %v1779
        %4094 = vmatprep.subr.mxu0 %v1788
        %4095 = vmatpush1.msra.mxu0 %v1787
        %4096 = vmatprep.subr.mxu0 %v1796
        %4097 = vmatpush1.msra.mxu0 %v1795
        %4098 = vmatprep.subr.mxu0 %v1804
        %4099 = vmatpush1.msra.mxu0 %v1803
        %4100 = vmatprep.subr.mxu0 %v1812
        %4101 = vmatpush1.msra.mxu0 %v1811
        %4102 = vmatprep.subr.mxu0 %v1820
        %4103 = vmatpush1.msra.mxu0 %v1819
        %4104 = vmatprep.subr.mxu0 %v1828
        %4105 = vmatpush1.msra.mxu0 %v1827
        %4106 = vmatprep.subr.mxu0 %v1836
        %4107 = vmatpush1.msra.mxu0 %v1835
        %4108 = vmatprep.subr.mxu0 %v1844
        %4109 = vmatpush1.msra.mxu0 %v1843
        %4110 = vmatprep.subr.mxu0 %v1852
        %4111 = vmatpush1.msra.mxu0 %v1851
        %4112 = vmatprep.subr.mxu0 %v1860
        %4113 = vmatpush1.msra.mxu0 %v1859
        %4114 = vmatprep.subr.mxu0 %v1868
        %4115 = vmatpush1.msra.mxu0 %v1867
        %4116 = vmatprep.subr.mxu0 %v1876
        %4117 = vmatpush1.msra.mxu0 %v1875
        %4118 = vmatprep.subr.mxu0 %v1884
        %4119 = vmatpush1.msra.mxu0 %v1883
        %4120 = vmatprep.subr.mxu0 %v1892
        %4121 = vmatpush1.msra.mxu0 %v1891
        %4122 = vmatprep.subr.mxu0 %v1900
        %4123 = vmatpush1.msra.mxu0 %v1899
        %4124 = vmatprep.subr.mxu0 %v1908
        %4125 = vmatpush1.msra.mxu0 %v1907
        %4126 = vmatprep.subr.mxu0 %v1916
        %4127 = vmatpush1.msra.mxu0 %v1915
        %4128 = vmatprep.subr.mxu0 %v1924
        %4129 = vmatpush1.msra.mxu0 %v1923
        %4130 = vmatprep.subr.mxu0 %v1932
        %4131 = vmatpush1.msra.mxu0 %v1931
        %4132 = vmatprep.mubr.f32.mxu0 %v392
        %4133 = vmatmul.mubr.f32.gmra.mrb[0].mxu0 %v391
        %v4134 = vpop.f32.mrb[0].mxu0
        %v4135 = vadd.f32 %v4064, %v4134
        %v4136 = vpop.f32.mrb[0].mxu0
        %v4137 = vadd.f32 %v4066, %v4136
        %4138 = vdwg.mxu0
        %4139 = vmatprep.subr.mxu0 %v1940
        %4140 = vmatpush1.msra.mxu0 %v1939
        %4141 = vmatprep.subr.mxu0 %v1948
        %4142 = vmatpush1.msra.mxu0 %v1947
        %4143 = vmatprep.subr.mxu0 %v1956
        %4144 = vmatpush1.msra.mxu0 %v1955
        %4145 = vmatprep.subr.mxu0 %v1964
        %4146 = vmatpush1.msra.mxu0 %v1963
        %4147 = vmatprep.subr.mxu0 %v1972
        %4148 = vmatpush1.msra.mxu0 %v1971
        %4149 = vmatprep.subr.mxu0 %v1980
        %4150 = vmatpush1.msra.mxu0 %v1979
        %4151 = vmatprep.subr.mxu0 %v1988
        %4152 = vmatpush1.msra.mxu0 %v1987
        %4153 = vmatprep.subr.mxu0 %v1996
        %4154 = vmatpush1.msra.mxu0 %v1995
        %4155 = vmatprep.subr.mxu0 %v2004
        %4156 = vmatpush1.msra.mxu0 %v2003
        %4157 = vmatprep.subr.mxu0 %v2012
        %4158 = vmatpush1.msra.mxu0 %v2011
        %4159 = vmatprep.subr.mxu0 %v2020
        %4160 = vmatpush1.msra.mxu0 %v2019
        %4161 = vmatprep.subr.mxu0 %v2028
        %4162 = vmatpush1.msra.mxu0 %v2027
        %4163 = vmatprep.subr.mxu0 %v2036
        %4164 = vmatpush1.msra.mxu0 %v2035
        %4165 = vmatprep.subr.mxu0 %v2044
        %4166 = vmatpush1.msra.mxu0 %v2043
        %4167 = vmatprep.subr.mxu0 %v2052
        %4168 = vmatpush1.msra.mxu0 %v2051
        %4169 = vmatprep.subr.mxu0 %v2060
        %4170 = vmatpush1.msra.mxu0 %v2059
        %4171 = vmatprep.subr.mxu0 %v2068
        %4172 = vmatpush1.msra.mxu0 %v2067
        %4173 = vmatprep.subr.mxu0 %v2076
        %4174 = vmatpush1.msra.mxu0 %v2075
        %4175 = vmatprep.subr.mxu0 %v2084
        %4176 = vmatpush1.msra.mxu0 %v2083
        %4177 = vmatprep.subr.mxu0 %v2092
        %4178 = vmatpush1.msra.mxu0 %v2091
        %4179 = vmatprep.subr.mxu0 %v2100
        %4180 = vmatpush1.msra.mxu0 %v2099
        %4181 = vmatprep.subr.mxu0 %v2108
        %4182 = vmatpush1.msra.mxu0 %v2107
        %4183 = vmatprep.subr.mxu0 %v2116
        %4184 = vmatpush1.msra.mxu0 %v2115
        %4185 = vmatprep.subr.mxu0 %v2124
        %4186 = vmatpush1.msra.mxu0 %v2123
        %4187 = vmatprep.subr.mxu0 %v2132
        %4188 = vmatpush1.msra.mxu0 %v2131
        %4189 = vmatprep.subr.mxu0 %v2140
        %4190 = vmatpush1.msra.mxu0 %v2139
        %4191 = vmatprep.subr.mxu0 %v2148
        %4192 = vmatpush1.msra.mxu0 %v2147
        %4193 = vmatprep.subr.mxu0 %v2156
        %4194 = vmatpush1.msra.mxu0 %v2155
        %4195 = vmatprep.subr.mxu0 %v2164
        %4196 = vmatpush1.msra.mxu0 %v2163
        %4197 = vmatprep.subr.mxu0 %v2172
        %4198 = vmatpush1.msra.mxu0 %v2171
        %4199 = vmatprep.subr.mxu0 %v2180
        %4200 = vmatpush1.msra.mxu0 %v2179
        %4201 = vmatprep.subr.mxu0 %v2188
        %4202 = vmatpush1.msra.mxu0 %v2187
        %4203 = vmatprep.mubr.f32.mxu0 %v394
        %4204 = vmatmul.mubr.f32.gmra.mrb[0].mxu0 %v393
        %v4205 = vpop.f32.mrb[0].mxu0
        %v4206 = vadd.f32 %v4135, %v4205
        %v4207 = vpop.f32.mrb[0].mxu0
        %v4208 = vadd.f32 %v4137, %v4207
        %4209 = vdwg.mxu0
        %4210 = vmatprep.subr.mxu0 %v2196
        %4211 = vmatpush1.msra.mxu0 %v2195
        %4212 = vmatprep.subr.mxu0 %v2204
        %4213 = vmatpush1.msra.mxu0 %v2203
        %4214 = vmatprep.subr.mxu0 %v2212
        %4215 = vmatpush1.msra.mxu0 %v2211
        %4216 = vmatprep.subr.mxu0 %v2220
        %4217 = vmatpush1.msra.mxu0 %v2219
        %4218 = vmatprep.subr.mxu0 %v2228
        %4219 = vmatpush1.msra.mxu0 %v2227
        %4220 = vmatprep.subr.mxu0 %v2236
        %4221 = vmatpush1.msra.mxu0 %v2235
        %4222 = vmatprep.subr.mxu0 %v2244
        %4223 = vmatpush1.msra.mxu0 %v2243
        %4224 = vmatprep.subr.mxu0 %v2252
        %4225 = vmatpush1.msra.mxu0 %v2251
        %4226 = vmatprep.subr.mxu0 %v2260
        %4227 = vmatpush1.msra.mxu0 %v2259
        %4228 = vmatprep.subr.mxu0 %v2268
        %4229 = vmatpush1.msra.mxu0 %v2267
        %4230 = vmatprep.subr.mxu0 %v2276
        %4231 = vmatpush1.msra.mxu0 %v2275
        %4232 = vmatprep.subr.mxu0 %v2284
        %4233 = vmatpush1.msra.mxu0 %v2283
        %4234 = vmatprep.subr.mxu0 %v2292
        %4235 = vmatpush1.msra.mxu0 %v2291
        %4236 = vmatprep.subr.mxu0 %v2300
        %4237 = vmatpush1.msra.mxu0 %v2299
        %4238 = vmatprep.subr.mxu0 %v2308
        %4239 = vmatpush1.msra.mxu0 %v2307
        %4240 = vmatprep.subr.mxu0 %v2316
        %4241 = vmatpush1.msra.mxu0 %v2315
        %4242 = vmatprep.subr.mxu0 %v2324
        %4243 = vmatpush1.msra.mxu0 %v2323
        %4244 = vmatprep.subr.mxu0 %v2332
        %4245 = vmatpush1.msra.mxu0 %v2331
        %4246 = vmatprep.subr.mxu0 %v2340
        %4247 = vmatpush1.msra.mxu0 %v2339
        %4248 = vmatprep.subr.mxu0 %v2348
        %4249 = vmatpush1.msra.mxu0 %v2347
        %4250 = vmatprep.subr.mxu0 %v2356
        %4251 = vmatpush1.msra.mxu0 %v2355
        %4252 = vmatprep.subr.mxu0 %v2364
        %4253 = vmatpush1.msra.mxu0 %v2363
        %4254 = vmatprep.subr.mxu0 %v2372
        %4255 = vmatpush1.msra.mxu0 %v2371
        %4256 = vmatprep.subr.mxu0 %v2380
        %4257 = vmatpush1.msra.mxu0 %v2379
        %4258 = vmatprep.subr.mxu0 %v2388
        %4259 = vmatpush1.msra.mxu0 %v2387
        %4260 = vmatprep.subr.mxu0 %v2396
        %4261 = vmatpush1.msra.mxu0 %v2395
        %4262 = vmatprep.subr.mxu0 %v2404
        %4263 = vmatpush1.msra.mxu0 %v2403
        %4264 = vmatprep.subr.mxu0 %v2412
        %4265 = vmatpush1.msra.mxu0 %v2411
        %4266 = vmatprep.subr.mxu0 %v2420
        %4267 = vmatpush1.msra.mxu0 %v2419
        %4268 = vmatprep.subr.mxu0 %v2428
        %4269 = vmatpush1.msra.mxu0 %v2427
        %4270 = vmatprep.subr.mxu0 %v2436
        %4271 = vmatpush1.msra.mxu0 %v2435
        %4272 = vmatprep.subr.mxu0 %v2444
        %4273 = vmatpush1.msra.mxu0 %v2443
        %4274 = vmatprep.mubr.f32.mxu0 %v396
        %4275 = vmatmul.mubr.f32.gmra.mrb[0].mxu0 %v395
        %v4276 = vpop.f32.mrb[0].mxu0
        %v4277 = vadd.f32 %v4206, %v4276
        %v4278 = vpop.f32.mrb[0].mxu0
        %v4279 = vadd.f32 %v4208, %v4278
        %4280 = vdwg.mxu0
        %4281 = vmatprep.subr.mxu0 %v2452
        %4282 = vmatpush1.msra.mxu0 %v2451
        %4283 = vmatprep.subr.mxu0 %v2460
        %4284 = vmatpush1.msra.mxu0 %v2459
        %4285 = vmatprep.subr.mxu0 %v2468
        %4286 = vmatpush1.msra.mxu0 %v2467
        %4287 = vmatprep.subr.mxu0 %v2476
        %4288 = vmatpush1.msra.mxu0 %v2475
        %4289 = vmatprep.subr.mxu0 %v2484
        %4290 = vmatpush1.msra.mxu0 %v2483
        %4291 = vmatprep.subr.mxu0 %v2492
        %4292 = vmatpush1.msra.mxu0 %v2491
        %4293 = vmatprep.subr.mxu0 %v2500
        %4294 = vmatpush1.msra.mxu0 %v2499
        %4295 = vmatprep.subr.mxu0 %v2508
        %4296 = vmatpush1.msra.mxu0 %v2507
        %4297 = vmatprep.subr.mxu0 %v2516
        %4298 = vmatpush1.msra.mxu0 %v2515
        %4299 = vmatprep.subr.mxu0 %v2524
        %4300 = vmatpush1.msra.mxu0 %v2523
        %4301 = vmatprep.subr.mxu0 %v2532
        %4302 = vmatpush1.msra.mxu0 %v2531
        %4303 = vmatprep.subr.mxu0 %v2540
        %4304 = vmatpush1.msra.mxu0 %v2539
        %4305 = vmatprep.subr.mxu0 %v2548
        %4306 = vmatpush1.msra.mxu0 %v2547
        %4307 = vmatprep.subr.mxu0 %v2556
        %4308 = vmatpush1.msra.mxu0 %v2555
        %4309 = vmatprep.subr.mxu0 %v2564
        %4310 = vmatpush1.msra.mxu0 %v2563
        %4311 = vmatprep.subr.mxu0 %v2572
        %4312 = vmatpush1.msra.mxu0 %v2571
        %4313 = vmatprep.subr.mxu0 %v2580
        %4314 = vmatpush1.msra.mxu0 %v2579
        %4315 = vmatprep.subr.mxu0 %v2588
        %4316 = vmatpush1.msra.mxu0 %v2587
        %4317 = vmatprep.subr.mxu0 %v2596
        %4318 = vmatpush1.msra.mxu0 %v2595
        %4319 = vmatprep.subr.mxu0 %v2604
        %4320 = vmatpush1.msra.mxu0 %v2603
        %4321 = vmatprep.subr.mxu0 %v2612
        %4322 = vmatpush1.msra.mxu0 %v2611
        %4323 = vmatprep.subr.mxu0 %v2620
        %4324 = vmatpush1.msra.mxu0 %v2619
        %4325 = vmatprep.subr.mxu0 %v2628
        %4326 = vmatpush1.msra.mxu0 %v2627
        %4327 = vmatprep.subr.mxu0 %v2636
        %4328 = vmatpush1.msra.mxu0 %v2635
        %4329 = vmatprep.subr.mxu0 %v2644
        %4330 = vmatpush1.msra.mxu0 %v2643
        %4331 = vmatprep.subr.mxu0 %v2652
        %4332 = vmatpush1.msra.mxu0 %v2651
        %4333 = vmatprep.subr.mxu0 %v2660
        %4334 = vmatpush1.msra.mxu0 %v2659
        %4335 = vmatprep.subr.mxu0 %v2668
        %4336 = vmatpush1.msra.mxu0 %v2667
        %4337 = vmatprep.subr.mxu0 %v2676
        %4338 = vmatpush1.msra.mxu0 %v2675
        %4339 = vmatprep.subr.mxu0 %v2684
        %4340 = vmatpush1.msra.mxu0 %v2683
        %4341 = vmatprep.subr.mxu0 %v2692
        %4342 = vmatpush1.msra.mxu0 %v2691
        %4343 = vmatprep.subr.mxu0 %v2700
        %4344 = vmatpush1.msra.mxu0 %v2699
        %4345 = vmatprep.mubr.f32.mxu0 %v398
        %4346 = vmatmul.mubr.f32.gmra.mrb[0].mxu0 %v397
        %v4347 = vpop.f32.mrb[0].mxu0
        %v4348 = vadd.f32 %v4277, %v4347
        %v4349 = vpop.f32.mrb[0].mxu0
        %v4350 = vadd.f32 %v4279, %v4349
        %4351 = vdwg.mxu0
        %4352 = vmatprep.subr.mxu0 %v2708
        %4353 = vmatpush1.msra.mxu0 %v2707
        %4354 = vmatprep.subr.mxu0 %v2716
        %4355 = vmatpush1.msra.mxu0 %v2715
        %4356 = vmatprep.subr.mxu0 %v2724
        %4357 = vmatpush1.msra.mxu0 %v2723
        %4358 = vmatprep.subr.mxu0 %v2732
        %4359 = vmatpush1.msra.mxu0 %v2731
        %4360 = vmatprep.subr.mxu0 %v2740
        %4361 = vmatpush1.msra.mxu0 %v2739
        %4362 = vmatprep.subr.mxu0 %v2748
        %4363 = vmatpush1.msra.mxu0 %v2747
        %4364 = vmatprep.subr.mxu0 %v2756
        %4365 = vmatpush1.msra.mxu0 %v2755
        %4366 = vmatprep.subr.mxu0 %v2764
        %4367 = vmatpush1.msra.mxu0 %v2763
        %4368 = vmatprep.subr.mxu0 %v2772
        %4369 = vmatpush1.msra.mxu0 %v2771
        %4370 = vmatprep.subr.mxu0 %v2780
        %4371 = vmatpush1.msra.mxu0 %v2779
        %4372 = vmatprep.subr.mxu0 %v2788
        %4373 = vmatpush1.msra.mxu0 %v2787
        %4374 = vmatprep.subr.mxu0 %v2796
        %4375 = vmatpush1.msra.mxu0 %v2795
        %4376 = vmatprep.subr.mxu0 %v2804
        %4377 = vmatpush1.msra.mxu0 %v2803
        %4378 = vmatprep.subr.mxu0 %v2812
        %4379 = vmatpush1.msra.mxu0 %v2811
        %4380 = vmatprep.subr.mxu0 %v2820
        %4381 = vmatpush1.msra.mxu0 %v2819
        %4382 = vmatprep.subr.mxu0 %v2828
        %4383 = vmatpush1.msra.mxu0 %v2827
        %4384 = vmatprep.subr.mxu0 %v2836
        %4385 = vmatpush1.msra.mxu0 %v2835
        %4386 = vmatprep.subr.mxu0 %v2844
        %4387 = vmatpush1.msra.mxu0 %v2843
        %4388 = vmatprep.subr.mxu0 %v2852
        %4389 = vmatpush1.msra.mxu0 %v2851
        %4390 = vmatprep.subr.mxu0 %v2860
        %4391 = vmatpush1.msra.mxu0 %v2859
        %4392 = vmatprep.subr.mxu0 %v2868
        %4393 = vmatpush1.msra.mxu0 %v2867
        %4394 = vmatprep.subr.mxu0 %v2876
        %4395 = vmatpush1.msra.mxu0 %v2875
        %4396 = vmatprep.subr.mxu0 %v2884
        %4397 = vmatpush1.msra.mxu0 %v2883
        %4398 = vmatprep.subr.mxu0 %v2892
        %4399 = vmatpush1.msra.mxu0 %v2891
        %4400 = vmatprep.subr.mxu0 %v2900
        %4401 = vmatpush1.msra.mxu0 %v2899
        %4402 = vmatprep.subr.mxu0 %v2908
        %4403 = vmatpush1.msra.mxu0 %v2907
        %4404 = vmatprep.subr.mxu0 %v2916
        %4405 = vmatpush1.msra.mxu0 %v2915
        %4406 = vmatprep.subr.mxu0 %v2924
        %4407 = vmatpush1.msra.mxu0 %v2923
        %4408 = vmatprep.subr.mxu0 %v2932
        %4409 = vmatpush1.msra.mxu0 %v2931
        %4410 = vmatprep.subr.mxu0 %v2940
        %4411 = vmatpush1.msra.mxu0 %v2939
        %4412 = vmatprep.subr.mxu0 %v2948
        %4413 = vmatpush1.msra.mxu0 %v2947
        %4414 = vmatprep.subr.mxu0 %v2956
        %4415 = vmatpush1.msra.mxu0 %v2955
        %4416 = vmatprep.mubr.f32.mxu0 %v400
        %4417 = vmatmul.mubr.f32.gmra.mrb[0].mxu0 %v399
        %v4418 = vpop.f32.mrb[0].mxu0
        %v4419 = vadd.f32 %v4348, %v4418
        %v4420 = vpop.f32.mrb[0].mxu0
        %v4421 = vadd.f32 %v4350, %v4420
        %4422 = vdwg.mxu0
        %4423 = vmatprep.subr.mxu0 %v406
        %4424 = vmatpush1.msra.mxu0 %v405
        %4425 = vmatprep.subr.mxu0 %v414
        %4426 = vmatpush1.msra.mxu0 %v413
        %4427 = vmatprep.subr.mxu0 %v422
        %4428 = vmatpush1.msra.mxu0 %v421
        %4429 = vmatprep.subr.mxu0 %v430
        %4430 = vmatpush1.msra.mxu0 %v429
        %4431 = vmatprep.subr.mxu0 %v438
        %4432 = vmatpush1.msra.mxu0 %v437
        %4433 = vmatprep.subr.mxu0 %v446
        %4434 = vmatpush1.msra.mxu0 %v445
        %4435 = vmatprep.subr.mxu0 %v454
        %4436 = vmatpush1.msra.mxu0 %v453
        %4437 = vmatprep.subr.mxu0 %v462
        %4438 = vmatpush1.msra.mxu0 %v461
        %4439 = vmatprep.subr.mxu0 %v470
        %4440 = vmatpush1.msra.mxu0 %v469
        %4441 = vmatprep.subr.mxu0 %v478
        %4442 = vmatpush1.msra.mxu0 %v477
        %4443 = vmatprep.subr.mxu0 %v486
        %4444 = vmatpush1.msra.mxu0 %v485
        %4445 = vmatprep.subr.mxu0 %v494
        %4446 = vmatpush1.msra.mxu0 %v493
        %4447 = vmatprep.subr.mxu0 %v502
        %4448 = vmatpush1.msra.mxu0 %v501
        %4449 = vmatprep.subr.mxu0 %v510
        %4450 = vmatpush1.msra.mxu0 %v509
        %4451 = vmatprep.subr.mxu0 %v518
        %4452 = vmatpush1.msra.mxu0 %v517
        %4453 = vmatprep.subr.mxu0 %v526
        %4454 = vmatpush1.msra.mxu0 %v525
        %4455 = vmatprep.subr.mxu0 %v534
        %4456 = vmatpush1.msra.mxu0 %v533
        %4457 = vmatprep.subr.mxu0 %v542
        %4458 = vmatpush1.msra.mxu0 %v541
        %4459 = vmatprep.subr.mxu0 %v550
        %4460 = vmatpush1.msra.mxu0 %v549
        %4461 = vmatprep.subr.mxu0 %v558
        %4462 = vmatpush1.msra.mxu0 %v557
        %4463 = vmatprep.subr.mxu0 %v566
        %4464 = vmatpush1.msra.mxu0 %v565
        %4465 = vmatprep.subr.mxu0 %v574
        %4466 = vmatpush1.msra.mxu0 %v573
        %4467 = vmatprep.subr.mxu0 %v582
        %4468 = vmatpush1.msra.mxu0 %v581
        %4469 = vmatprep.subr.mxu0 %v590
        %4470 = vmatpush1.msra.mxu0 %v589
        %4471 = vmatprep.subr.mxu0 %v598
        %4472 = vmatpush1.msra.mxu0 %v597
        %4473 = vmatprep.subr.mxu0 %v606
        %4474 = vmatpush1.msra.mxu0 %v605
        %4475 = vmatprep.subr.mxu0 %v614
        %4476 = vmatpush1.msra.mxu0 %v613
        %4477 = vmatprep.subr.mxu0 %v622
        %4478 = vmatpush1.msra.mxu0 %v621
        %4479 = vmatprep.subr.mxu0 %v630
        %4480 = vmatpush1.msra.mxu0 %v629
        %4481 = vmatprep.subr.mxu0 %v638
        %4482 = vmatpush1.msra.mxu0 %v637
        %4483 = vmatprep.subr.mxu0 %v646
        %4484 = vmatpush1.msra.mxu0 %v645
        %4485 = vmatprep.subr.mxu0 %v654
        %4486 = vmatpush1.msra.mxu0 %v653
        %4487 = vmatprep.mubr.f32.mxu0 %v382
        %4488 = vmatmul.mubr.f32.gmra.mrb[0].mxu0 %v381
        %v4489 = vpop.f32.mrb[0].mxu0
        %v4490 = vadd.f32 %v2982, %v4489
        %v4491 = vpop.f32.mrb[0].mxu0
        %v4492 = vadd.f32 %v2986, %v4491
        %4493 = vdwg.mxu0
        %4494 = vmatprep.subr.mxu0 %v662
        %4495 = vmatpush1.msra.mxu0 %v661
        %4496 = vmatprep.subr.mxu0 %v670
        %4497 = vmatpush1.msra.mxu0 %v669
        %4498 = vmatprep.subr.mxu0 %v678
        %4499 = vmatpush1.msra.mxu0 %v677
        %4500 = vmatprep.subr.mxu0 %v686
        %4501 = vmatpush1.msra.mxu0 %v685
        %4502 = vmatprep.subr.mxu0 %v694
        %4503 = vmatpush1.msra.mxu0 %v693
        %4504 = vmatprep.subr.mxu0 %v702
        %4505 = vmatpush1.msra.mxu0 %v701
        %4506 = vmatprep.subr.mxu0 %v710
        %4507 = vmatpush1.msra.mxu0 %v709
        %4508 = vmatprep.subr.mxu0 %v718
        %4509 = vmatpush1.msra.mxu0 %v717
        %4510 = vmatprep.subr.mxu0 %v726
        %4511 = vmatpush1.msra.mxu0 %v725
        %4512 = vmatprep.subr.mxu0 %v734
        %4513 = vmatpush1.msra.mxu0 %v733
        %4514 = vmatprep.subr.mxu0 %v742
        %4515 = vmatpush1.msra.mxu0 %v741
        %4516 = vmatprep.subr.mxu0 %v750
        %4517 = vmatpush1.msra.mxu0 %v749
        %4518 = vmatprep.subr.mxu0 %v758
        %4519 = vmatpush1.msra.mxu0 %v757
        %4520 = vmatprep.subr.mxu0 %v766
        %4521 = vmatpush1.msra.mxu0 %v765
        %4522 = vmatprep.subr.mxu0 %v774
        %4523 = vmatpush1.msra.mxu0 %v773
        %4524 = vmatprep.subr.mxu0 %v782
        %4525 = vmatpush1.msra.mxu0 %v781
        %4526 = vmatprep.subr.mxu0 %v790
        %4527 = vmatpush1.msra.mxu0 %v789
        %4528 = vmatprep.subr.mxu0 %v798
        %4529 = vmatpush1.msra.mxu0 %v797
        %4530 = vmatprep.subr.mxu0 %v806
        %4531 = vmatpush1.msra.mxu0 %v805
        %4532 = vmatprep.subr.mxu0 %v814
        %4533 = vmatpush1.msra.mxu0 %v813
        %4534 = vmatprep.subr.mxu0 %v822
        %4535 = vmatpush1.msra.mxu0 %v821
        %4536 = vmatprep.subr.mxu0 %v830
        %4537 = vmatpush1.msra.mxu0 %v829
        %4538 = vmatprep.subr.mxu0 %v838
        %4539 = vmatpush1.msra.mxu0 %v837
        %4540 = vmatprep.subr.mxu0 %v846
        %4541 = vmatpush1.msra.mxu0 %v845
        %4542 = vmatprep.subr.mxu0 %v854
        %4543 = vmatpush1.msra.mxu0 %v853
        %4544 = vmatprep.subr.mxu0 %v862
        %4545 = vmatpush1.msra.mxu0 %v861
        %4546 = vmatprep.subr.mxu0 %v870
        %4547 = vmatpush1.msra.mxu0 %v869
        %4548 = vmatprep.subr.mxu0 %v878
        %4549 = vmatpush1.msra.mxu0 %v877
        %4550 = vmatprep.subr.mxu0 %v886
        %4551 = vmatpush1.msra.mxu0 %v885
        %4552 = vmatprep.subr.mxu0 %v894
        %4553 = vmatpush1.msra.mxu0 %v893
        %4554 = vmatprep.subr.mxu0 %v902
        %4555 = vmatpush1.msra.mxu0 %v901
        %4556 = vmatprep.subr.mxu0 %v910
        %4557 = vmatpush1.msra.mxu0 %v909
        %4558 = vmatprep.mubr.f32.mxu0 %v384
        %4559 = vmatmul.mubr.f32.gmra.mrb[0].mxu0 %v383
        %v4560 = vpop.f32.mrb[0].mxu0
        %v4561 = vadd.f32 %v4490, %v4560
        %v4562 = vpop.f32.mrb[0].mxu0
        %v4563 = vadd.f32 %v4492, %v4562
        %4564 = vdwg.mxu0
        %4565 = vmatprep.subr.mxu0 %v918
        %4566 = vmatpush1.msra.mxu0 %v917
        %4567 = vmatprep.subr.mxu0 %v926
        %4568 = vmatpush1.msra.mxu0 %v925
        %4569 = vmatprep.subr.mxu0 %v934
        %4570 = vmatpush1.msra.mxu0 %v933
        %4571 = vmatprep.subr.mxu0 %v942
        %4572 = vmatpush1.msra.mxu0 %v941
        %4573 = vmatprep.subr.mxu0 %v950
        %4574 = vmatpush1.msra.mxu0 %v949
        %4575 = vmatprep.subr.mxu0 %v958
        %4576 = vmatpush1.msra.mxu0 %v957
        %4577 = vmatprep.subr.mxu0 %v966
        %4578 = vmatpush1.msra.mxu0 %v965
        %4579 = vmatprep.subr.mxu0 %v974
        %4580 = vmatpush1.msra.mxu0 %v973
        %4581 = vmatprep.subr.mxu0 %v982
        %4582 = vmatpush1.msra.mxu0 %v981
        %4583 = vmatprep.subr.mxu0 %v990
        %4584 = vmatpush1.msra.mxu0 %v989
        %4585 = vmatprep.subr.mxu0 %v998
        %4586 = vmatpush1.msra.mxu0 %v997
        %4587 = vmatprep.subr.mxu0 %v1006
        %4588 = vmatpush1.msra.mxu0 %v1005
        %4589 = vmatprep.subr.mxu0 %v1014
        %4590 = vmatpush1.msra.mxu0 %v1013
        %4591 = vmatprep.subr.mxu0 %v1022
        %4592 = vmatpush1.msra.mxu0 %v1021
        %4593 = vmatprep.subr.mxu0 %v1030
        %4594 = vmatpush1.msra.mxu0 %v1029
        %4595 = vmatprep.subr.mxu0 %v1038
        %4596 = vmatpush1.msra.mxu0 %v1037
        %4597 = vmatprep.subr.mxu0 %v1046
        %4598 = vmatpush1.msra.mxu0 %v1045
        %4599 = vmatprep.subr.mxu0 %v1054
        %4600 = vmatpush1.msra.mxu0 %v1053
        %4601 = vmatprep.subr.mxu0 %v1062
        %4602 = vmatpush1.msra.mxu0 %v1061
        %4603 = vmatprep.subr.mxu0 %v1070
        %4604 = vmatpush1.msra.mxu0 %v1069
        %4605 = vmatprep.subr.mxu0 %v1078
        %4606 = vmatpush1.msra.mxu0 %v1077
        %4607 = vmatprep.subr.mxu0 %v1086
        %4608 = vmatpush1.msra.mxu0 %v1085
        %4609 = vmatprep.subr.mxu0 %v1094
        %4610 = vmatpush1.msra.mxu0 %v1093
        %4611 = vmatprep.subr.mxu0 %v1102
        %4612 = vmatpush1.msra.mxu0 %v1101
        %4613 = vmatprep.subr.mxu0 %v1110
        %4614 = vmatpush1.msra.mxu0 %v1109
        %4615 = vmatprep.subr.mxu0 %v1118
        %4616 = vmatpush1.msra.mxu0 %v1117
        %4617 = vmatprep.subr.mxu0 %v1126
        %4618 = vmatpush1.msra.mxu0 %v1125
        %4619 = vmatprep.subr.mxu0 %v1134
        %4620 = vmatpush1.msra.mxu0 %v1133
        %4621 = vmatprep.subr.mxu0 %v1142
        %4622 = vmatpush1.msra.mxu0 %v1141
        %4623 = vmatprep.subr.mxu0 %v1150
        %4624 = vmatpush1.msra.mxu0 %v1149
        %4625 = vmatprep.subr.mxu0 %v1158
        %4626 = vmatpush1.msra.mxu0 %v1157
        %4627 = vmatprep.subr.mxu0 %v1166
        %4628 = vmatpush1.msra.mxu0 %v1165
        %4629 = vmatprep.mubr.f32.mxu0 %v386
        %4630 = vmatmul.mubr.f32.gmra.mrb[0].mxu0 %v385
        %v4631 = vpop.f32.mrb[0].mxu0
        %v4632 = vadd.f32 %v4561, %v4631
        %v4633 = vpop.f32.mrb[0].mxu0
        %v4634 = vadd.f32 %v4563, %v4633
        %4635 = vdwg.mxu0
        %4636 = vmatprep.subr.mxu0 %v1174
        %4637 = vmatpush1.msra.mxu0 %v1173
        %4638 = vmatprep.subr.mxu0 %v1182
        %4639 = vmatpush1.msra.mxu0 %v1181
        %4640 = vmatprep.subr.mxu0 %v1190
        %4641 = vmatpush1.msra.mxu0 %v1189
        %4642 = vmatprep.subr.mxu0 %v1198
        %4643 = vmatpush1.msra.mxu0 %v1197
        %4644 = vmatprep.subr.mxu0 %v1206
        %4645 = vmatpush1.msra.mxu0 %v1205
        %4646 = vmatprep.subr.mxu0 %v1214
        %4647 = vmatpush1.msra.mxu0 %v1213
        %4648 = vmatprep.subr.mxu0 %v1222
        %4649 = vmatpush1.msra.mxu0 %v1221
        %4650 = vmatprep.subr.mxu0 %v1230
        %4651 = vmatpush1.msra.mxu0 %v1229
        %4652 = vmatprep.subr.mxu0 %v1238
        %4653 = vmatpush1.msra.mxu0 %v1237
        %4654 = vmatprep.subr.mxu0 %v1246
        %4655 = vmatpush1.msra.mxu0 %v1245
        %4656 = vmatprep.subr.mxu0 %v1254
        %4657 = vmatpush1.msra.mxu0 %v1253
        %4658 = vmatprep.subr.mxu0 %v1262
        %4659 = vmatpush1.msra.mxu0 %v1261
        %4660 = vmatprep.subr.mxu0 %v1270
        %4661 = vmatpush1.msra.mxu0 %v1269
        %4662 = vmatprep.subr.mxu0 %v1278
        %4663 = vmatpush1.msra.mxu0 %v1277
        %4664 = vmatprep.subr.mxu0 %v1286
        %4665 = vmatpush1.msra.mxu0 %v1285
        %4666 = vmatprep.subr.mxu0 %v1294
        %4667 = vmatpush1.msra.mxu0 %v1293
        %4668 = vmatprep.subr.mxu0 %v1302
        %4669 = vmatpush1.msra.mxu0 %v1301
        %4670 = vmatprep.subr.mxu0 %v1310
        %4671 = vmatpush1.msra.mxu0 %v1309
        %4672 = vmatprep.subr.mxu0 %v1318
        %4673 = vmatpush1.msra.mxu0 %v1317
        %4674 = vmatprep.subr.mxu0 %v1326
        %4675 = vmatpush1.msra.mxu0 %v1325
        %4676 = vmatprep.subr.mxu0 %v1334
        %4677 = vmatpush1.msra.mxu0 %v1333
        %4678 = vmatprep.subr.mxu0 %v1342
        %4679 = vmatpush1.msra.mxu0 %v1341
        %4680 = vmatprep.subr.mxu0 %v1350
        %4681 = vmatpush1.msra.mxu0 %v1349
        %4682 = vmatprep.subr.mxu0 %v1358
        %4683 = vmatpush1.msra.mxu0 %v1357
        %4684 = vmatprep.subr.mxu0 %v1366
        %4685 = vmatpush1.msra.mxu0 %v1365
        %4686 = vmatprep.subr.mxu0 %v1374
        %4687 = vmatpush1.msra.mxu0 %v1373
        %4688 = vmatprep.subr.mxu0 %v1382
        %4689 = vmatpush1.msra.mxu0 %v1381
        %4690 = vmatprep.subr.mxu0 %v1390
        %4691 = vmatpush1.msra.mxu0 %v1389
        %4692 = vmatprep.subr.mxu0 %v1398
        %4693 = vmatpush1.msra.mxu0 %v1397
        %4694 = vmatprep.subr.mxu0 %v1406
        %4695 = vmatpush1.msra.mxu0 %v1405
        %4696 = vmatprep.subr.mxu0 %v1414
        %4697 = vmatpush1.msra.mxu0 %v1413
        %4698 = vmatprep.subr.mxu0 %v1422
        %4699 = vmatpush1.msra.mxu0 %v1421
        %4700 = vmatprep.mubr.f32.mxu0 %v388
        %4701 = vmatmul.mubr.f32.gmra.mrb[0].mxu0 %v387
        %v4702 = vpop.f32.mrb[0].mxu0
        %v4703 = vadd.f32 %v4632, %v4702
        %v4704 = vpop.f32.mrb[0].mxu0
        %v4705 = vadd.f32 %v4634, %v4704
        %4706 = vdwg.mxu0
        %4707 = vmatprep.subr.mxu0 %v1430
        %4708 = vmatpush1.msra.mxu0 %v1429
        %4709 = vmatprep.subr.mxu0 %v1438
        %4710 = vmatpush1.msra.mxu0 %v1437
        %4711 = vmatprep.subr.mxu0 %v1446
        %4712 = vmatpush1.msra.mxu0 %v1445
        %4713 = vmatprep.subr.mxu0 %v1454
        %4714 = vmatpush1.msra.mxu0 %v1453
        %4715 = vmatprep.subr.mxu0 %v1462
        %4716 = vmatpush1.msra.mxu0 %v1461
        %4717 = vmatprep.subr.mxu0 %v1470
        %4718 = vmatpush1.msra.mxu0 %v1469
        %4719 = vmatprep.subr.mxu0 %v1478
        %4720 = vmatpush1.msra.mxu0 %v1477
        %4721 = vmatprep.subr.mxu0 %v1486
        %4722 = vmatpush1.msra.mxu0 %v1485
        %4723 = vmatprep.subr.mxu0 %v1494
        %4724 = vmatpush1.msra.mxu0 %v1493
        %4725 = vmatprep.subr.mxu0 %v1502
        %4726 = vmatpush1.msra.mxu0 %v1501
        %4727 = vmatprep.subr.mxu0 %v1510
        %4728 = vmatpush1.msra.mxu0 %v1509
        %4729 = vmatprep.subr.mxu0 %v1518
        %4730 = vmatpush1.msra.mxu0 %v1517
        %4731 = vmatprep.subr.mxu0 %v1526
        %4732 = vmatpush1.msra.mxu0 %v1525
        %4733 = vmatprep.subr.mxu0 %v1534
        %4734 = vmatpush1.msra.mxu0 %v1533
        %4735 = vmatprep.subr.mxu0 %v1542
        %4736 = vmatpush1.msra.mxu0 %v1541
        %4737 = vmatprep.subr.mxu0 %v1550
        %4738 = vmatpush1.msra.mxu0 %v1549
        %4739 = vmatprep.subr.mxu0 %v1558
        %4740 = vmatpush1.msra.mxu0 %v1557
        %4741 = vmatprep.subr.mxu0 %v1566
        %4742 = vmatpush1.msra.mxu0 %v1565
        %4743 = vmatprep.subr.mxu0 %v1574
        %4744 = vmatpush1.msra.mxu0 %v1573
        %4745 = vmatprep.subr.mxu0 %v1582
        %4746 = vmatpush1.msra.mxu0 %v1581
        %4747 = vmatprep.subr.mxu0 %v1590
        %4748 = vmatpush1.msra.mxu0 %v1589
        %4749 = vmatprep.subr.mxu0 %v1598
        %4750 = vmatpush1.msra.mxu0 %v1597
        %4751 = vmatprep.subr.mxu0 %v1606
        %4752 = vmatpush1.msra.mxu0 %v1605
        %4753 = vmatprep.subr.mxu0 %v1614
        %4754 = vmatpush1.msra.mxu0 %v1613
        %4755 = vmatprep.subr.mxu0 %v1622
        %4756 = vmatpush1.msra.mxu0 %v1621
        %4757 = vmatprep.subr.mxu0 %v1630
        %4758 = vmatpush1.msra.mxu0 %v1629
        %4759 = vmatprep.subr.mxu0 %v1638
        %4760 = vmatpush1.msra.mxu0 %v1637
        %4761 = vmatprep.subr.mxu0 %v1646
        %4762 = vmatpush1.msra.mxu0 %v1645
        %4763 = vmatprep.subr.mxu0 %v1654
        %4764 = vmatpush1.msra.mxu0 %v1653
        %4765 = vmatprep.subr.mxu0 %v1662
        %4766 = vmatpush1.msra.mxu0 %v1661
        %4767 = vmatprep.subr.mxu0 %v1670
        %4768 = vmatpush1.msra.mxu0 %v1669
        %4769 = vmatprep.subr.mxu0 %v1678
        %4770 = vmatpush1.msra.mxu0 %v1677
        %4771 = vmatprep.mubr.f32.mxu0 %v390
        %4772 = vmatmul.mubr.f32.gmra.mrb[0].mxu0 %v389
        %v4773 = vpop.f32.mrb[0].mxu0
        %v4774 = vadd.f32 %v4703, %v4773
        %v4775 = vpop.f32.mrb[0].mxu0
        %v4776 = vadd.f32 %v4705, %v4775
        %4777 = vdwg.mxu0
        %4778 = vmatprep.subr.mxu0 %v1686
        %4779 = vmatpush1.msra.mxu0 %v1685
        %4780 = vmatprep.subr.mxu0 %v1694
        %4781 = vmatpush1.msra.mxu0 %v1693
        %4782 = vmatprep.subr.mxu0 %v1702
        %4783 = vmatpush1.msra.mxu0 %v1701
        %4784 = vmatprep.subr.mxu0 %v1710
        %4785 = vmatpush1.msra.mxu0 %v1709
        %4786 = vmatprep.subr.mxu0 %v1718
        %4787 = vmatpush1.msra.mxu0 %v1717
        %4788 = vmatprep.subr.mxu0 %v1726
        %4789 = vmatpush1.msra.mxu0 %v1725
        %4790 = vmatprep.subr.mxu0 %v1734
        %4791 = vmatpush1.msra.mxu0 %v1733
        %4792 = vmatprep.subr.mxu0 %v1742
        %4793 = vmatpush1.msra.mxu0 %v1741
        %4794 = vmatprep.subr.mxu0 %v1750
        %4795 = vmatpush1.msra.mxu0 %v1749
        %4796 = vmatprep.subr.mxu0 %v1758
        %4797 = vmatpush1.msra.mxu0 %v1757
        %4798 = vmatprep.subr.mxu0 %v1766
        %4799 = vmatpush1.msra.mxu0 %v1765
        %4800 = vmatprep.subr.mxu0 %v1774
        %4801 = vmatpush1.msra.mxu0 %v1773
        %4802 = vmatprep.subr.mxu0 %v1782
        %4803 = vmatpush1.msra.mxu0 %v1781
        %4804 = vmatprep.subr.mxu0 %v1790
        %4805 = vmatpush1.msra.mxu0 %v1789
        %4806 = vmatprep.subr.mxu0 %v1798
        %4807 = vmatpush1.msra.mxu0 %v1797
        %4808 = vmatprep.subr.mxu0 %v1806
        %4809 = vmatpush1.msra.mxu0 %v1805
        %4810 = vmatprep.subr.mxu0 %v1814
        %4811 = vmatpush1.msra.mxu0 %v1813
        %4812 = vmatprep.subr.mxu0 %v1822
        %4813 = vmatpush1.msra.mxu0 %v1821
        %4814 = vmatprep.subr.mxu0 %v1830
        %4815 = vmatpush1.msra.mxu0 %v1829
        %4816 = vmatprep.subr.mxu0 %v1838
        %4817 = vmatpush1.msra.mxu0 %v1837
        %4818 = vmatprep.subr.mxu0 %v1846
        %4819 = vmatpush1.msra.mxu0 %v1845
        %4820 = vmatprep.subr.mxu0 %v1854
        %4821 = vmatpush1.msra.mxu0 %v1853
        %4822 = vmatprep.subr.mxu0 %v1862
        %4823 = vmatpush1.msra.mxu0 %v1861
        %4824 = vmatprep.subr.mxu0 %v1870
        %4825 = vmatpush1.msra.mxu0 %v1869
        %4826 = vmatprep.subr.mxu0 %v1878
        %4827 = vmatpush1.msra.mxu0 %v1877
        %4828 = vmatprep.subr.mxu0 %v1886
        %4829 = vmatpush1.msra.mxu0 %v1885
        %4830 = vmatprep.subr.mxu0 %v1894
        %4831 = vmatpush1.msra.mxu0 %v1893
        %4832 = vmatprep.subr.mxu0 %v1902
        %4833 = vmatpush1.msra.mxu0 %v1901
        %4834 = vmatprep.subr.mxu0 %v1910
        %4835 = vmatpush1.msra.mxu0 %v1909
        %4836 = vmatprep.subr.mxu0 %v1918
        %4837 = vmatpush1.msra.mxu0 %v1917
        %4838 = vmatprep.subr.mxu0 %v1926
        %4839 = vmatpush1.msra.mxu0 %v1925
        %4840 = vmatprep.subr.mxu0 %v1934
        %4841 = vmatpush1.msra.mxu0 %v1933
        %4842 = vmatprep.mubr.f32.mxu0 %v392
        %4843 = vmatmul.mubr.f32.gmra.mrb[0].mxu0 %v391
        %v4844 = vpop.f32.mrb[0].mxu0
        %v4845 = vadd.f32 %v4774, %v4844
        %v4846 = vpop.f32.mrb[0].mxu0
        %v4847 = vadd.f32 %v4776, %v4846
        %4848 = vdwg.mxu0
        %4849 = vmatprep.subr.mxu0 %v1942
        %4850 = vmatpush1.msra.mxu0 %v1941
        %4851 = vmatprep.subr.mxu0 %v1950
        %4852 = vmatpush1.msra.mxu0 %v1949
        %4853 = vmatprep.subr.mxu0 %v1958
        %4854 = vmatpush1.msra.mxu0 %v1957
        %4855 = vmatprep.subr.mxu0 %v1966
        %4856 = vmatpush1.msra.mxu0 %v1965
        %4857 = vmatprep.subr.mxu0 %v1974
        %4858 = vmatpush1.msra.mxu0 %v1973
        %4859 = vmatprep.subr.mxu0 %v1982
        %4860 = vmatpush1.msra.mxu0 %v1981
        %4861 = vmatprep.subr.mxu0 %v1990
        %4862 = vmatpush1.msra.mxu0 %v1989
        %4863 = vmatprep.subr.mxu0 %v1998
        %4864 = vmatpush1.msra.mxu0 %v1997
        %4865 = vmatprep.subr.mxu0 %v2006
        %4866 = vmatpush1.msra.mxu0 %v2005
        %4867 = vmatprep.subr.mxu0 %v2014
        %4868 = vmatpush1.msra.mxu0 %v2013
        %4869 = vmatprep.subr.mxu0 %v2022
        %4870 = vmatpush1.msra.mxu0 %v2021
        %4871 = vmatprep.subr.mxu0 %v2030
        %4872 = vmatpush1.msra.mxu0 %v2029
        %4873 = vmatprep.subr.mxu0 %v2038
        %4874 = vmatpush1.msra.mxu0 %v2037
        %4875 = vmatprep.subr.mxu0 %v2046
        %4876 = vmatpush1.msra.mxu0 %v2045
        %4877 = vmatprep.subr.mxu0 %v2054
        %4878 = vmatpush1.msra.mxu0 %v2053
        %4879 = vmatprep.subr.mxu0 %v2062
        %4880 = vmatpush1.msra.mxu0 %v2061
        %4881 = vmatprep.subr.mxu0 %v2070
        %4882 = vmatpush1.msra.mxu0 %v2069
        %4883 = vmatprep.subr.mxu0 %v2078
        %4884 = vmatpush1.msra.mxu0 %v2077
        %4885 = vmatprep.subr.mxu0 %v2086
        %4886 = vmatpush1.msra.mxu0 %v2085
        %4887 = vmatprep.subr.mxu0 %v2094
        %4888 = vmatpush1.msra.mxu0 %v2093
        %4889 = vmatprep.subr.mxu0 %v2102
        %4890 = vmatpush1.msra.mxu0 %v2101
        %4891 = vmatprep.subr.mxu0 %v2110
        %4892 = vmatpush1.msra.mxu0 %v2109
        %4893 = vmatprep.subr.mxu0 %v2118
        %4894 = vmatpush1.msra.mxu0 %v2117
        %4895 = vmatprep.subr.mxu0 %v2126
        %4896 = vmatpush1.msra.mxu0 %v2125
        %4897 = vmatprep.subr.mxu0 %v2134
        %4898 = vmatpush1.msra.mxu0 %v2133
        %4899 = vmatprep.subr.mxu0 %v2142
        %4900 = vmatpush1.msra.mxu0 %v2141
        %4901 = vmatprep.subr.mxu0 %v2150
        %4902 = vmatpush1.msra.mxu0 %v2149
        %4903 = vmatprep.subr.mxu0 %v2158
        %4904 = vmatpush1.msra.mxu0 %v2157
        %4905 = vmatprep.subr.mxu0 %v2166
        %4906 = vmatpush1.msra.mxu0 %v2165
        %4907 = vmatprep.subr.mxu0 %v2174
        %4908 = vmatpush1.msra.mxu0 %v2173
        %4909 = vmatprep.subr.mxu0 %v2182
        %4910 = vmatpush1.msra.mxu0 %v2181
        %4911 = vmatprep.subr.mxu0 %v2190
        %4912 = vmatpush1.msra.mxu0 %v2189
        %4913 = vmatprep.mubr.f32.mxu0 %v394
        %4914 = vmatmul.mubr.f32.gmra.mrb[0].mxu0 %v393
        %v4915 = vpop.f32.mrb[0].mxu0
        %v4916 = vadd.f32 %v4845, %v4915
        %v4917 = vpop.f32.mrb[0].mxu0
        %v4918 = vadd.f32 %v4847, %v4917
        %4919 = vdwg.mxu0
        %4920 = vmatprep.subr.mxu0 %v2198
        %4921 = vmatpush1.msra.mxu0 %v2197
        %4922 = vmatprep.subr.mxu0 %v2206
        %4923 = vmatpush1.msra.mxu0 %v2205
        %4924 = vmatprep.subr.mxu0 %v2214
        %4925 = vmatpush1.msra.mxu0 %v2213
        %4926 = vmatprep.subr.mxu0 %v2222
        %4927 = vmatpush1.msra.mxu0 %v2221
        %4928 = vmatprep.subr.mxu0 %v2230
        %4929 = vmatpush1.msra.mxu0 %v2229
        %4930 = vmatprep.subr.mxu0 %v2238
        %4931 = vmatpush1.msra.mxu0 %v2237
        %4932 = vmatprep.subr.mxu0 %v2246
        %4933 = vmatpush1.msra.mxu0 %v2245
        %4934 = vmatprep.subr.mxu0 %v2254
        %4935 = vmatpush1.msra.mxu0 %v2253
        %4936 = vmatprep.subr.mxu0 %v2262
        %4937 = vmatpush1.msra.mxu0 %v2261
        %4938 = vmatprep.subr.mxu0 %v2270
        %4939 = vmatpush1.msra.mxu0 %v2269
        %4940 = vmatprep.subr.mxu0 %v2278
        %4941 = vmatpush1.msra.mxu0 %v2277
        %4942 = vmatprep.subr.mxu0 %v2286
        %4943 = vmatpush1.msra.mxu0 %v2285
        %4944 = vmatprep.subr.mxu0 %v2294
        %4945 = vmatpush1.msra.mxu0 %v2293
        %4946 = vmatprep.subr.mxu0 %v2302
        %4947 = vmatpush1.msra.mxu0 %v2301
        %4948 = vmatprep.subr.mxu0 %v2310
        %4949 = vmatpush1.msra.mxu0 %v2309
        %4950 = vmatprep.subr.mxu0 %v2318
        %4951 = vmatpush1.msra.mxu0 %v2317
        %4952 = vmatprep.subr.mxu0 %v2326
        %4953 = vmatpush1.msra.mxu0 %v2325
        %4954 = vmatprep.subr.mxu0 %v2334
        %4955 = vmatpush1.msra.mxu0 %v2333
        %4956 = vmatprep.subr.mxu0 %v2342
        %4957 = vmatpush1.msra.mxu0 %v2341
        %4958 = vmatprep.subr.mxu0 %v2350
        %4959 = vmatpush1.msra.mxu0 %v2349
        %4960 = vmatprep.subr.mxu0 %v2358
        %4961 = vmatpush1.msra.mxu0 %v2357
        %4962 = vmatprep.subr.mxu0 %v2366
        %4963 = vmatpush1.msra.mxu0 %v2365
        %4964 = vmatprep.subr.mxu0 %v2374
        %4965 = vmatpush1.msra.mxu0 %v2373
        %4966 = vmatprep.subr.mxu0 %v2382
        %4967 = vmatpush1.msra.mxu0 %v2381
        %4968 = vmatprep.subr.mxu0 %v2390
        %4969 = vmatpush1.msra.mxu0 %v2389
        %4970 = vmatprep.subr.mxu0 %v2398
        %4971 = vmatpush1.msra.mxu0 %v2397
        %4972 = vmatprep.subr.mxu0 %v2406
        %4973 = vmatpush1.msra.mxu0 %v2405
        %4974 = vmatprep.subr.mxu0 %v2414
        %4975 = vmatpush1.msra.mxu0 %v2413
        %4976 = vmatprep.subr.mxu0 %v2422
        %4977 = vmatpush1.msra.mxu0 %v2421
        %4978 = vmatprep.subr.mxu0 %v2430
        %4979 = vmatpush1.msra.mxu0 %v2429
        %4980 = vmatprep.subr.mxu0 %v2438
        %4981 = vmatpush1.msra.mxu0 %v2437
        %4982 = vmatprep.subr.mxu0 %v2446
        %4983 = vmatpush1.msra.mxu0 %v2445
        %4984 = vmatprep.mubr.f32.mxu0 %v396
        %4985 = vmatmul.mubr.f32.gmra.mrb[0].mxu0 %v395
        %v4986 = vpop.f32.mrb[0].mxu0
        %v4987 = vadd.f32 %v4916, %v4986
        %v4988 = vpop.f32.mrb[0].mxu0
        %v4989 = vadd.f32 %v4918, %v4988
        %4990 = vdwg.mxu0
        %4991 = vmatprep.subr.mxu0 %v2454
        %4992 = vmatpush1.msra.mxu0 %v2453
        %4993 = vmatprep.subr.mxu0 %v2462
        %4994 = vmatpush1.msra.mxu0 %v2461
        %4995 = vmatprep.subr.mxu0 %v2470
        %4996 = vmatpush1.msra.mxu0 %v2469
        %4997 = vmatprep.subr.mxu0 %v2478
        %4998 = vmatpush1.msra.mxu0 %v2477
        %4999 = vmatprep.subr.mxu0 %v2486
        %5000 = vmatpush1.msra.mxu0 %v2485
        %5001 = vmatprep.subr.mxu0 %v2494
        %5002 = vmatpush1.msra.mxu0 %v2493
        %5003 = vmatprep.subr.mxu0 %v2502
        %5004 = vmatpush1.msra.mxu0 %v2501
        %5005 = vmatprep.subr.mxu0 %v2510
        %5006 = vmatpush1.msra.mxu0 %v2509
        %5007 = vmatprep.subr.mxu0 %v2518
        %5008 = vmatpush1.msra.mxu0 %v2517
        %5009 = vmatprep.subr.mxu0 %v2526
        %5010 = vmatpush1.msra.mxu0 %v2525
        %5011 = vmatprep.subr.mxu0 %v2534
        %5012 = vmatpush1.msra.mxu0 %v2533
        %5013 = vmatprep.subr.mxu0 %v2542
        %5014 = vmatpush1.msra.mxu0 %v2541
        %5015 = vmatprep.subr.mxu0 %v2550
        %5016 = vmatpush1.msra.mxu0 %v2549
        %5017 = vmatprep.subr.mxu0 %v2558
        %5018 = vmatpush1.msra.mxu0 %v2557
        %5019 = vmatprep.subr.mxu0 %v2566
        %5020 = vmatpush1.msra.mxu0 %v2565
        %5021 = vmatprep.subr.mxu0 %v2574
        %5022 = vmatpush1.msra.mxu0 %v2573
        %5023 = vmatprep.subr.mxu0 %v2582
        %5024 = vmatpush1.msra.mxu0 %v2581
        %5025 = vmatprep.subr.mxu0 %v2590
        %5026 = vmatpush1.msra.mxu0 %v2589
        %5027 = vmatprep.subr.mxu0 %v2598
        %5028 = vmatpush1.msra.mxu0 %v2597
        %5029 = vmatprep.subr.mxu0 %v2606
        %5030 = vmatpush1.msra.mxu0 %v2605
        %5031 = vmatprep.subr.mxu0 %v2614
        %5032 = vmatpush1.msra.mxu0 %v2613
        %5033 = vmatprep.subr.mxu0 %v2622
        %5034 = vmatpush1.msra.mxu0 %v2621
        %5035 = vmatprep.subr.mxu0 %v2630
        %5036 = vmatpush1.msra.mxu0 %v2629
        %5037 = vmatprep.subr.mxu0 %v2638
        %5038 = vmatpush1.msra.mxu0 %v2637
        %5039 = vmatprep.subr.mxu0 %v2646
        %5040 = vmatpush1.msra.mxu0 %v2645
        %5041 = vmatprep.subr.mxu0 %v2654
        %5042 = vmatpush1.msra.mxu0 %v2653
        %5043 = vmatprep.subr.mxu0 %v2662
        %5044 = vmatpush1.msra.mxu0 %v2661
        %5045 = vmatprep.subr.mxu0 %v2670
        %5046 = vmatpush1.msra.mxu0 %v2669
        %5047 = vmatprep.subr.mxu0 %v2678
        %5048 = vmatpush1.msra.mxu0 %v2677
        %5049 = vmatprep.subr.mxu0 %v2686
        %5050 = vmatpush1.msra.mxu0 %v2685
        %5051 = vmatprep.subr.mxu0 %v2694
        %5052 = vmatpush1.msra.mxu0 %v2693
        %5053 = vmatprep.subr.mxu0 %v2702
        %5054 = vmatpush1.msra.mxu0 %v2701
        %5055 = vmatprep.mubr.f32.mxu0 %v398
        %5056 = vmatmul.mubr.f32.gmra.mrb[0].mxu0 %v397
        %v5057 = vpop.f32.mrb[0].mxu0
        %v5058 = vadd.f32 %v4987, %v5057
        %v5059 = vpop.f32.mrb[0].mxu0
        %v5060 = vadd.f32 %v4989, %v5059
        %5061 = vdwg.mxu0
        %5062 = vmatprep.subr.mxu0 %v2710
        %5063 = vmatpush1.msra.mxu0 %v2709
        %5064 = vmatprep.subr.mxu0 %v2718
        %5065 = vmatpush1.msra.mxu0 %v2717
        %5066 = vmatprep.subr.mxu0 %v2726
        %5067 = vmatpush1.msra.mxu0 %v2725
        %5068 = vmatprep.subr.mxu0 %v2734
        %5069 = vmatpush1.msra.mxu0 %v2733
        %5070 = vmatprep.subr.mxu0 %v2742
        %5071 = vmatpush1.msra.mxu0 %v2741
        %5072 = vmatprep.subr.mxu0 %v2750
        %5073 = vmatpush1.msra.mxu0 %v2749
        %5074 = vmatprep.subr.mxu0 %v2758
        %5075 = vmatpush1.msra.mxu0 %v2757
        %5076 = vmatprep.subr.mxu0 %v2766
        %5077 = vmatpush1.msra.mxu0 %v2765
        %5078 = vmatprep.subr.mxu0 %v2774
        %5079 = vmatpush1.msra.mxu0 %v2773
        %5080 = vmatprep.subr.mxu0 %v2782
        %5081 = vmatpush1.msra.mxu0 %v2781
        %5082 = vmatprep.subr.mxu0 %v2790
        %5083 = vmatpush1.msra.mxu0 %v2789
        %5084 = vmatprep.subr.mxu0 %v2798
        %5085 = vmatpush1.msra.mxu0 %v2797
        %5086 = vmatprep.subr.mxu0 %v2806
        %5087 = vmatpush1.msra.mxu0 %v2805
        %5088 = vmatprep.subr.mxu0 %v2814
        %5089 = vmatpush1.msra.mxu0 %v2813
        %5090 = vmatprep.subr.mxu0 %v2822
        %5091 = vmatpush1.msra.mxu0 %v2821
        %5092 = vmatprep.subr.mxu0 %v2830
        %5093 = vmatpush1.msra.mxu0 %v2829
        %5094 = vmatprep.subr.mxu0 %v2838
        %5095 = vmatpush1.msra.mxu0 %v2837
        %5096 = vmatprep.subr.mxu0 %v2846
        %5097 = vmatpush1.msra.mxu0 %v2845
        %5098 = vmatprep.subr.mxu0 %v2854
        %5099 = vmatpush1.msra.mxu0 %v2853
        %5100 = vmatprep.subr.mxu0 %v2862
        %5101 = vmatpush1.msra.mxu0 %v2861
        %5102 = vmatprep.subr.mxu0 %v2870
        %5103 = vmatpush1.msra.mxu0 %v2869
        %5104 = vmatprep.subr.mxu0 %v2878
        %5105 = vmatpush1.msra.mxu0 %v2877
        %5106 = vmatprep.subr.mxu0 %v2886
        %5107 = vmatpush1.msra.mxu0 %v2885
        %5108 = vmatprep.subr.mxu0 %v2894
        %5109 = vmatpush1.msra.mxu0 %v2893
        %5110 = vmatprep.subr.mxu0 %v2902
        %5111 = vmatpush1.msra.mxu0 %v2901
        %5112 = vmatprep.subr.mxu0 %v2910
        %5113 = vmatpush1.msra.mxu0 %v2909
        %5114 = vmatprep.subr.mxu0 %v2918
        %5115 = vmatpush1.msra.mxu0 %v2917
        %5116 = vmatprep.subr.mxu0 %v2926
        %5117 = vmatpush1.msra.mxu0 %v2925
        %5118 = vmatprep.subr.mxu0 %v2934
        %5119 = vmatpush1.msra.mxu0 %v2933
        %5120 = vmatprep.subr.mxu0 %v2942
        %5121 = vmatpush1.msra.mxu0 %v2941
        %5122 = vmatprep.subr.mxu0 %v2950
        %5123 = vmatpush1.msra.mxu0 %v2949
        %5124 = vmatprep.subr.mxu0 %v2958
        %5125 = vmatpush1.msra.mxu0 %v2957
        %5126 = vmatprep.mubr.f32.mxu0 %v400
        %5127 = vmatmul.mubr.f32.gmra.mrb[0].mxu0 %v399
        %v5128 = vpop.f32.mrb[0].mxu0
        %v5129 = vadd.f32 %v5058, %v5128
        %v5130 = vpop.f32.mrb[0].mxu0
        %v5131 = vadd.f32 %v5060, %v5130
        %5132 = vdwg.mxu0
        %5133 = vmatprep.subr.mxu0 %v408
        %5134 = vmatpush1.msra.mxu0 %v407
        %5135 = vmatprep.subr.mxu0 %v416
        %5136 = vmatpush1.msra.mxu0 %v415
        %5137 = vmatprep.subr.mxu0 %v424
        %5138 = vmatpush1.msra.mxu0 %v423
        %5139 = vmatprep.subr.mxu0 %v432
        %5140 = vmatpush1.msra.mxu0 %v431
        %5141 = vmatprep.subr.mxu0 %v440
        %5142 = vmatpush1.msra.mxu0 %v439
        %5143 = vmatprep.subr.mxu0 %v448
        %5144 = vmatpush1.msra.mxu0 %v447
        %5145 = vmatprep.subr.mxu0 %v456
        %5146 = vmatpush1.msra.mxu0 %v455
        %5147 = vmatprep.subr.mxu0 %v464
        %5148 = vmatpush1.msra.mxu0 %v463
        %5149 = vmatprep.subr.mxu0 %v472
        %5150 = vmatpush1.msra.mxu0 %v471
        %5151 = vmatprep.subr.mxu0 %v480
        %5152 = vmatpush1.msra.mxu0 %v479
        %5153 = vmatprep.subr.mxu0 %v488
        %5154 = vmatpush1.msra.mxu0 %v487
        %5155 = vmatprep.subr.mxu0 %v496
        %5156 = vmatpush1.msra.mxu0 %v495
        %5157 = vmatprep.subr.mxu0 %v504
        %5158 = vmatpush1.msra.mxu0 %v503
        %5159 = vmatprep.subr.mxu0 %v512
        %5160 = vmatpush1.msra.mxu0 %v511
        %5161 = vmatprep.subr.mxu0 %v520
        %5162 = vmatpush1.msra.mxu0 %v519
        %5163 = vmatprep.subr.mxu0 %v528
        %5164 = vmatpush1.msra.mxu0 %v527
        %5165 = vmatprep.subr.mxu0 %v536
        %5166 = vmatpush1.msra.mxu0 %v535
        %5167 = vmatprep.subr.mxu0 %v544
        %5168 = vmatpush1.msra.mxu0 %v543
        %5169 = vmatprep.subr.mxu0 %v552
        %5170 = vmatpush1.msra.mxu0 %v551
        %5171 = vmatprep.subr.mxu0 %v560
        %5172 = vmatpush1.msra.mxu0 %v559
        %5173 = vmatprep.subr.mxu0 %v568
        %5174 = vmatpush1.msra.mxu0 %v567
        %5175 = vmatprep.subr.mxu0 %v576
        %5176 = vmatpush1.msra.mxu0 %v575
        %5177 = vmatprep.subr.mxu0 %v584
        %5178 = vmatpush1.msra.mxu0 %v583
        %5179 = vmatprep.subr.mxu0 %v592
        %5180 = vmatpush1.msra.mxu0 %v591
        %5181 = vmatprep.subr.mxu0 %v600
        %5182 = vmatpush1.msra.mxu0 %v599
        %5183 = vmatprep.subr.mxu0 %v608
        %5184 = vmatpush1.msra.mxu0 %v607
        %5185 = vmatprep.subr.mxu0 %v616
        %5186 = vmatpush1.msra.mxu0 %v615
        %5187 = vmatprep.subr.mxu0 %v624
        %5188 = vmatpush1.msra.mxu0 %v623
        %5189 = vmatprep.subr.mxu0 %v632
        %5190 = vmatpush1.msra.mxu0 %v631
        %5191 = vmatprep.subr.mxu0 %v640
        %5192 = vmatpush1.msra.mxu0 %v639
        %5193 = vmatprep.subr.mxu0 %v648
        %5194 = vmatpush1.msra.mxu0 %v647
        %5195 = vmatprep.subr.mxu0 %v656
        %5196 = vmatpush1.msra.mxu0 %v655
        %5197 = vmatprep.mubr.f32.mxu0 %v382
        %5198 = vmatmul.mubr.f32.gmra.mrb[0].mxu0 %v381
        %v5199 = vpop.f32.mrb[0].mxu0
        %v5200 = vadd.f32 %v2990, %v5199
        %v5201 = vpop.f32.mrb[0].mxu0
        %v5202 = vadd.f32 %v2994, %v5201
        %5203 = vdwg.mxu0
        %5204 = vmatprep.subr.mxu0 %v664
        %5205 = vmatpush1.msra.mxu0 %v663
        %5206 = vmatprep.subr.mxu0 %v672
        %5207 = vmatpush1.msra.mxu0 %v671
        %5208 = vmatprep.subr.mxu0 %v680
        %5209 = vmatpush1.msra.mxu0 %v679
        %5210 = vmatprep.subr.mxu0 %v688
        %5211 = vmatpush1.msra.mxu0 %v687
        %5212 = vmatprep.subr.mxu0 %v696
        %5213 = vmatpush1.msra.mxu0 %v695
        %5214 = vmatprep.subr.mxu0 %v704
        %5215 = vmatpush1.msra.mxu0 %v703
        %5216 = vmatprep.subr.mxu0 %v712
        %5217 = vmatpush1.msra.mxu0 %v711
        %5218 = vmatprep.subr.mxu0 %v720
        %5219 = vmatpush1.msra.mxu0 %v719
        %5220 = vmatprep.subr.mxu0 %v728
        %5221 = vmatpush1.msra.mxu0 %v727
        %5222 = vmatprep.subr.mxu0 %v736
        %5223 = vmatpush1.msra.mxu0 %v735
        %5224 = vmatprep.subr.mxu0 %v744
        %5225 = vmatpush1.msra.mxu0 %v743
        %5226 = vmatprep.subr.mxu0 %v752
        %5227 = vmatpush1.msra.mxu0 %v751
        %5228 = vmatprep.subr.mxu0 %v760
        %5229 = vmatpush1.msra.mxu0 %v759
        %5230 = vmatprep.subr.mxu0 %v768
        %5231 = vmatpush1.msra.mxu0 %v767
        %5232 = vmatprep.subr.mxu0 %v776
        %5233 = vmatpush1.msra.mxu0 %v775
        %5234 = vmatprep.subr.mxu0 %v784
        %5235 = vmatpush1.msra.mxu0 %v783
        %5236 = vmatprep.subr.mxu0 %v792
        %5237 = vmatpush1.msra.mxu0 %v791
        %5238 = vmatprep.subr.mxu0 %v800
        %5239 = vmatpush1.msra.mxu0 %v799
        %5240 = vmatprep.subr.mxu0 %v808
        %5241 = vmatpush1.msra.mxu0 %v807
        %5242 = vmatprep.subr.mxu0 %v816
        %5243 = vmatpush1.msra.mxu0 %v815
        %5244 = vmatprep.subr.mxu0 %v824
        %5245 = vmatpush1.msra.mxu0 %v823
        %5246 = vmatprep.subr.mxu0 %v832
        %5247 = vmatpush1.msra.mxu0 %v831
        %5248 = vmatprep.subr.mxu0 %v840
        %5249 = vmatpush1.msra.mxu0 %v839
        %5250 = vmatprep.subr.mxu0 %v848
        %5251 = vmatpush1.msra.mxu0 %v847
        %5252 = vmatprep.subr.mxu0 %v856
        %5253 = vmatpush1.msra.mxu0 %v855
        %5254 = vmatprep.subr.mxu0 %v864
        %5255 = vmatpush1.msra.mxu0 %v863
        %5256 = vmatprep.subr.mxu0 %v872
        %5257 = vmatpush1.msra.mxu0 %v871
        %5258 = vmatprep.subr.mxu0 %v880
        %5259 = vmatpush1.msra.mxu0 %v879
        %5260 = vmatprep.subr.mxu0 %v888
        %5261 = vmatpush1.msra.mxu0 %v887
        %5262 = vmatprep.subr.mxu0 %v896
        %5263 = vmatpush1.msra.mxu0 %v895
        %5264 = vmatprep.subr.mxu0 %v904
        %5265 = vmatpush1.msra.mxu0 %v903
        %5266 = vmatprep.subr.mxu0 %v912
        %5267 = vmatpush1.msra.mxu0 %v911
        %5268 = vmatprep.mubr.f32.mxu0 %v384
        %5269 = vmatmul.mubr.f32.gmra.mrb[0].mxu0 %v383
        %v5270 = vpop.f32.mrb[0].mxu0
        %v5271 = vadd.f32 %v5200, %v5270
        %v5272 = vpop.f32.mrb[0].mxu0
        %v5273 = vadd.f32 %v5202, %v5272
        %5274 = vdwg.mxu0
        %5275 = vmatprep.subr.mxu0 %v920
        %5276 = vmatpush1.msra.mxu0 %v919
        %5277 = vmatprep.subr.mxu0 %v928
        %5278 = vmatpush1.msra.mxu0 %v927
        %5279 = vmatprep.subr.mxu0 %v936
        %5280 = vmatpush1.msra.mxu0 %v935
        %5281 = vmatprep.subr.mxu0 %v944
        %5282 = vmatpush1.msra.mxu0 %v943
        %5283 = vmatprep.subr.mxu0 %v952
        %5284 = vmatpush1.msra.mxu0 %v951
        %5285 = vmatprep.subr.mxu0 %v960
        %5286 = vmatpush1.msra.mxu0 %v959
        %5287 = vmatprep.subr.mxu0 %v968
        %5288 = vmatpush1.msra.mxu0 %v967
        %5289 = vmatprep.subr.mxu0 %v976
        %5290 = vmatpush1.msra.mxu0 %v975
        %5291 = vmatprep.subr.mxu0 %v984
        %5292 = vmatpush1.msra.mxu0 %v983
        %5293 = vmatprep.subr.mxu0 %v992
        %5294 = vmatpush1.msra.mxu0 %v991
        %5295 = vmatprep.subr.mxu0 %v1000
        %5296 = vmatpush1.msra.mxu0 %v999
        %5297 = vmatprep.subr.mxu0 %v1008
        %5298 = vmatpush1.msra.mxu0 %v1007
        %5299 = vmatprep.subr.mxu0 %v1016
        %5300 = vmatpush1.msra.mxu0 %v1015
        %5301 = vmatprep.subr.mxu0 %v1024
        %5302 = vmatpush1.msra.mxu0 %v1023
        %5303 = vmatprep.subr.mxu0 %v1032
        %5304 = vmatpush1.msra.mxu0 %v1031
        %5305 = vmatprep.subr.mxu0 %v1040
        %5306 = vmatpush1.msra.mxu0 %v1039
        %5307 = vmatprep.subr.mxu0 %v1048
        %5308 = vmatpush1.msra.mxu0 %v1047
        %5309 = vmatprep.subr.mxu0 %v1056
        %5310 = vmatpush1.msra.mxu0 %v1055
        %5311 = vmatprep.subr.mxu0 %v1064
        %5312 = vmatpush1.msra.mxu0 %v1063
        %5313 = vmatprep.subr.mxu0 %v1072
        %5314 = vmatpush1.msra.mxu0 %v1071
        %5315 = vmatprep.subr.mxu0 %v1080
        %5316 = vmatpush1.msra.mxu0 %v1079
        %5317 = vmatprep.subr.mxu0 %v1088
        %5318 = vmatpush1.msra.mxu0 %v1087
        %5319 = vmatprep.subr.mxu0 %v1096
        %5320 = vmatpush1.msra.mxu0 %v1095
        %5321 = vmatprep.subr.mxu0 %v1104
        %5322 = vmatpush1.msra.mxu0 %v1103
        %5323 = vmatprep.subr.mxu0 %v1112
        %5324 = vmatpush1.msra.mxu0 %v1111
        %5325 = vmatprep.subr.mxu0 %v1120
        %5326 = vmatpush1.msra.mxu0 %v1119
        %5327 = vmatprep.subr.mxu0 %v1128
        %5328 = vmatpush1.msra.mxu0 %v1127
        %5329 = vmatprep.subr.mxu0 %v1136
        %5330 = vmatpush1.msra.mxu0 %v1135
        %5331 = vmatprep.subr.mxu0 %v1144
        %5332 = vmatpush1.msra.mxu0 %v1143
        %5333 = vmatprep.subr.mxu0 %v1152
        %5334 = vmatpush1.msra.mxu0 %v1151
        %5335 = vmatprep.subr.mxu0 %v1160
        %5336 = vmatpush1.msra.mxu0 %v1159
        %5337 = vmatprep.subr.mxu0 %v1168
        %5338 = vmatpush1.msra.mxu0 %v1167
        %5339 = vmatprep.mubr.f32.mxu0 %v386
        %5340 = vmatmul.mubr.f32.gmra.mrb[0].mxu0 %v385
        %v5341 = vpop.f32.mrb[0].mxu0
        %v5342 = vadd.f32 %v5271, %v5341
        %v5343 = vpop.f32.mrb[0].mxu0
        %v5344 = vadd.f32 %v5273, %v5343
        %5345 = vdwg.mxu0
        %5346 = vmatprep.subr.mxu0 %v1176
        %5347 = vmatpush1.msra.mxu0 %v1175
        %5348 = vmatprep.subr.mxu0 %v1184
        %5349 = vmatpush1.msra.mxu0 %v1183
        %5350 = vmatprep.subr.mxu0 %v1192
        %5351 = vmatpush1.msra.mxu0 %v1191
        %5352 = vmatprep.subr.mxu0 %v1200
        %5353 = vmatpush1.msra.mxu0 %v1199
        %5354 = vmatprep.subr.mxu0 %v1208
        %5355 = vmatpush1.msra.mxu0 %v1207
        %5356 = vmatprep.subr.mxu0 %v1216
        %5357 = vmatpush1.msra.mxu0 %v1215
        %5358 = vmatprep.subr.mxu0 %v1224
        %5359 = vmatpush1.msra.mxu0 %v1223
        %5360 = vmatprep.subr.mxu0 %v1232
        %5361 = vmatpush1.msra.mxu0 %v1231
        %5362 = vmatprep.subr.mxu0 %v1240
        %5363 = vmatpush1.msra.mxu0 %v1239
        %5364 = vmatprep.subr.mxu0 %v1248
        %5365 = vmatpush1.msra.mxu0 %v1247
        %5366 = vmatprep.subr.mxu0 %v1256
        %5367 = vmatpush1.msra.mxu0 %v1255
        %5368 = vmatprep.subr.mxu0 %v1264
        %5369 = vmatpush1.msra.mxu0 %v1263
        %5370 = vmatprep.subr.mxu0 %v1272
        %5371 = vmatpush1.msra.mxu0 %v1271
        %5372 = vmatprep.subr.mxu0 %v1280
        %5373 = vmatpush1.msra.mxu0 %v1279
        %5374 = vmatprep.subr.mxu0 %v1288
        %5375 = vmatpush1.msra.mxu0 %v1287
        %5376 = vmatprep.subr.mxu0 %v1296
        %5377 = vmatpush1.msra.mxu0 %v1295
        %5378 = vmatprep.subr.mxu0 %v1304
        %5379 = vmatpush1.msra.mxu0 %v1303
        %5380 = vmatprep.subr.mxu0 %v1312
        %5381 = vmatpush1.msra.mxu0 %v1311
        %5382 = vmatprep.subr.mxu0 %v1320
        %5383 = vmatpush1.msra.mxu0 %v1319
        %5384 = vmatprep.subr.mxu0 %v1328
        %5385 = vmatpush1.msra.mxu0 %v1327
        %5386 = vmatprep.subr.mxu0 %v1336
        %5387 = vmatpush1.msra.mxu0 %v1335
        %5388 = vmatprep.subr.mxu0 %v1344
        %5389 = vmatpush1.msra.mxu0 %v1343
        %5390 = vmatprep.subr.mxu0 %v1352
        %5391 = vmatpush1.msra.mxu0 %v1351
        %5392 = vmatprep.subr.mxu0 %v1360
        %5393 = vmatpush1.msra.mxu0 %v1359
        %5394 = vmatprep.subr.mxu0 %v1368
        %5395 = vmatpush1.msra.mxu0 %v1367
        %5396 = vmatprep.subr.mxu0 %v1376
        %5397 = vmatpush1.msra.mxu0 %v1375
        %5398 = vmatprep.subr.mxu0 %v1384
        %5399 = vmatpush1.msra.mxu0 %v1383
        %5400 = vmatprep.subr.mxu0 %v1392
        %5401 = vmatpush1.msra.mxu0 %v1391
        %5402 = vmatprep.subr.mxu0 %v1400
        %5403 = vmatpush1.msra.mxu0 %v1399
        %5404 = vmatprep.subr.mxu0 %v1408
        %5405 = vmatpush1.msra.mxu0 %v1407
        %5406 = vmatprep.subr.mxu0 %v1416
        %5407 = vmatpush1.msra.mxu0 %v1415
        %5408 = vmatprep.subr.mxu0 %v1424
        %5409 = vmatpush1.msra.mxu0 %v1423
        %5410 = vmatprep.mubr.f32.mxu0 %v388
        %5411 = vmatmul.mubr.f32.gmra.mrb[0].mxu0 %v387
        %v5412 = vpop.f32.mrb[0].mxu0
        %v5413 = vadd.f32 %v5342, %v5412
        %v5414 = vpop.f32.mrb[0].mxu0
        %v5415 = vadd.f32 %v5344, %v5414
        %5416 = vdwg.mxu0
        %5417 = vmatprep.subr.mxu0 %v1432
        %5418 = vmatpush1.msra.mxu0 %v1431
        %5419 = vmatprep.subr.mxu0 %v1440
        %5420 = vmatpush1.msra.mxu0 %v1439
        %5421 = vmatprep.subr.mxu0 %v1448
        %5422 = vmatpush1.msra.mxu0 %v1447
        %5423 = vmatprep.subr.mxu0 %v1456
        %5424 = vmatpush1.msra.mxu0 %v1455
        %5425 = vmatprep.subr.mxu0 %v1464
        %5426 = vmatpush1.msra.mxu0 %v1463
        %5427 = vmatprep.subr.mxu0 %v1472
        %5428 = vmatpush1.msra.mxu0 %v1471
        %5429 = vmatprep.subr.mxu0 %v1480
        %5430 = vmatpush1.msra.mxu0 %v1479
        %5431 = vmatprep.subr.mxu0 %v1488
        %5432 = vmatpush1.msra.mxu0 %v1487
        %5433 = vmatprep.subr.mxu0 %v1496
        %5434 = vmatpush1.msra.mxu0 %v1495
        %5435 = vmatprep.subr.mxu0 %v1504
        %5436 = vmatpush1.msra.mxu0 %v1503
        %5437 = vmatprep.subr.mxu0 %v1512
        %5438 = vmatpush1.msra.mxu0 %v1511
        %5439 = vmatprep.subr.mxu0 %v1520
        %5440 = vmatpush1.msra.mxu0 %v1519
        %5441 = vmatprep.subr.mxu0 %v1528
        %5442 = vmatpush1.msra.mxu0 %v1527
        %5443 = vmatprep.subr.mxu0 %v1536
        %5444 = vmatpush1.msra.mxu0 %v1535
        %5445 = vmatprep.subr.mxu0 %v1544
        %5446 = vmatpush1.msra.mxu0 %v1543
        %5447 = vmatprep.subr.mxu0 %v1552
        %5448 = vmatpush1.msra.mxu0 %v1551
        %5449 = vmatprep.subr.mxu0 %v1560
        %5450 = vmatpush1.msra.mxu0 %v1559
        %5451 = vmatprep.subr.mxu0 %v1568
        %5452 = vmatpush1.msra.mxu0 %v1567
        %5453 = vmatprep.subr.mxu0 %v1576
        %5454 = vmatpush1.msra.mxu0 %v1575
        %5455 = vmatprep.subr.mxu0 %v1584
        %5456 = vmatpush1.msra.mxu0 %v1583
        %5457 = vmatprep.subr.mxu0 %v1592
        %5458 = vmatpush1.msra.mxu0 %v1591
        %5459 = vmatprep.subr.mxu0 %v1600
        %5460 = vmatpush1.msra.mxu0 %v1599
        %5461 = vmatprep.subr.mxu0 %v1608
        %5462 = vmatpush1.msra.mxu0 %v1607
        %5463 = vmatprep.subr.mxu0 %v1616
        %5464 = vmatpush1.msra.mxu0 %v1615
        %5465 = vmatprep.subr.mxu0 %v1624
        %5466 = vmatpush1.msra.mxu0 %v1623
        %5467 = vmatprep.subr.mxu0 %v1632
        %5468 = vmatpush1.msra.mxu0 %v1631
        %5469 = vmatprep.subr.mxu0 %v1640
        %5470 = vmatpush1.msra.mxu0 %v1639
        %5471 = vmatprep.subr.mxu0 %v1648
        %5472 = vmatpush1.msra.mxu0 %v1647
        %5473 = vmatprep.subr.mxu0 %v1656
        %5474 = vmatpush1.msra.mxu0 %v1655
        %5475 = vmatprep.subr.mxu0 %v1664
        %5476 = vmatpush1.msra.mxu0 %v1663
        %5477 = vmatprep.subr.mxu0 %v1672
        %5478 = vmatpush1.msra.mxu0 %v1671
        %5479 = vmatprep.subr.mxu0 %v1680
        %5480 = vmatpush1.msra.mxu0 %v1679
        %5481 = vmatprep.mubr.f32.mxu0 %v390
        %5482 = vmatmul.mubr.f32.gmra.mrb[0].mxu0 %v389
        %v5483 = vpop.f32.mrb[0].mxu0
        %v5484 = vadd.f32 %v5413, %v5483
        %v5485 = vpop.f32.mrb[0].mxu0
        %v5486 = vadd.f32 %v5415, %v5485
        %5487 = vdwg.mxu0
        %5488 = vmatprep.subr.mxu0 %v1688
        %5489 = vmatpush1.msra.mxu0 %v1687
        %5490 = vmatprep.subr.mxu0 %v1696
        %5491 = vmatpush1.msra.mxu0 %v1695
        %5492 = vmatprep.subr.mxu0 %v1704
        %5493 = vmatpush1.msra.mxu0 %v1703
        %5494 = vmatprep.subr.mxu0 %v1712
        %5495 = vmatpush1.msra.mxu0 %v1711
        %5496 = vmatprep.subr.mxu0 %v1720
        %5497 = vmatpush1.msra.mxu0 %v1719
        %5498 = vmatprep.subr.mxu0 %v1728
        %5499 = vmatpush1.msra.mxu0 %v1727
        %5500 = vmatprep.subr.mxu0 %v1736
        %5501 = vmatpush1.msra.mxu0 %v1735
        %5502 = vmatprep.subr.mxu0 %v1744
        %5503 = vmatpush1.msra.mxu0 %v1743
        %5504 = vmatprep.subr.mxu0 %v1752
        %5505 = vmatpush1.msra.mxu0 %v1751
        %5506 = vmatprep.subr.mxu0 %v1760
        %5507 = vmatpush1.msra.mxu0 %v1759
        %5508 = vmatprep.subr.mxu0 %v1768
        %5509 = vmatpush1.msra.mxu0 %v1767
        %5510 = vmatprep.subr.mxu0 %v1776
        %5511 = vmatpush1.msra.mxu0 %v1775
        %5512 = vmatprep.subr.mxu0 %v1784
        %5513 = vmatpush1.msra.mxu0 %v1783
        %5514 = vmatprep.subr.mxu0 %v1792
        %5515 = vmatpush1.msra.mxu0 %v1791
        %5516 = vmatprep.subr.mxu0 %v1800
        %5517 = vmatpush1.msra.mxu0 %v1799
        %5518 = vmatprep.subr.mxu0 %v1808
        %5519 = vmatpush1.msra.mxu0 %v1807
        %5520 = vmatprep.subr.mxu0 %v1816
        %5521 = vmatpush1.msra.mxu0 %v1815
        %5522 = vmatprep.subr.mxu0 %v1824
        %5523 = vmatpush1.msra.mxu0 %v1823
        %5524 = vmatprep.subr.mxu0 %v1832
        %5525 = vmatpush1.msra.mxu0 %v1831
        %5526 = vmatprep.subr.mxu0 %v1840
        %5527 = vmatpush1.msra.mxu0 %v1839
        %5528 = vmatprep.subr.mxu0 %v1848
        %5529 = vmatpush1.msra.mxu0 %v1847
        %5530 = vmatprep.subr.mxu0 %v1856
        %5531 = vmatpush1.msra.mxu0 %v1855
        %5532 = vmatprep.subr.mxu0 %v1864
        %5533 = vmatpush1.msra.mxu0 %v1863
        %5534 = vmatprep.subr.mxu0 %v1872
        %5535 = vmatpush1.msra.mxu0 %v1871
        %5536 = vmatprep.subr.mxu0 %v1880
        %5537 = vmatpush1.msra.mxu0 %v1879
        %5538 = vmatprep.subr.mxu0 %v1888
        %5539 = vmatpush1.msra.mxu0 %v1887
        %5540 = vmatprep.subr.mxu0 %v1896
        %5541 = vmatpush1.msra.mxu0 %v1895
        %5542 = vmatprep.subr.mxu0 %v1904
        %5543 = vmatpush1.msra.mxu0 %v1903
        %5544 = vmatprep.subr.mxu0 %v1912
        %5545 = vmatpush1.msra.mxu0 %v1911
        %5546 = vmatprep.subr.mxu0 %v1920
        %5547 = vmatpush1.msra.mxu0 %v1919
        %5548 = vmatprep.subr.mxu0 %v1928
        %5549 = vmatpush1.msra.mxu0 %v1927
        %5550 = vmatprep.subr.mxu0 %v1936
        %5551 = vmatpush1.msra.mxu0 %v1935
        %5552 = vmatprep.mubr.f32.mxu0 %v392
        %5553 = vmatmul.mubr.f32.gmra.mrb[0].mxu0 %v391
        %v5554 = vpop.f32.mrb[0].mxu0
        %v5555 = vadd.f32 %v5484, %v5554
        %v5556 = vpop.f32.mrb[0].mxu0
        %v5557 = vadd.f32 %v5486, %v5556
        %5558 = vdwg.mxu0
        %5559 = vmatprep.subr.mxu0 %v1944
        %5560 = vmatpush1.msra.mxu0 %v1943
        %5561 = vmatprep.subr.mxu0 %v1952
        %5562 = vmatpush1.msra.mxu0 %v1951
        %5563 = vmatprep.subr.mxu0 %v1960
        %5564 = vmatpush1.msra.mxu0 %v1959
        %5565 = vmatprep.subr.mxu0 %v1968
        %5566 = vmatpush1.msra.mxu0 %v1967
        %5567 = vmatprep.subr.mxu0 %v1976
        %5568 = vmatpush1.msra.mxu0 %v1975
        %5569 = vmatprep.subr.mxu0 %v1984
        %5570 = vmatpush1.msra.mxu0 %v1983
        %5571 = vmatprep.subr.mxu0 %v1992
        %5572 = vmatpush1.msra.mxu0 %v1991
        %5573 = vmatprep.subr.mxu0 %v2000
        %5574 = vmatpush1.msra.mxu0 %v1999
        %5575 = vmatprep.subr.mxu0 %v2008
        %5576 = vmatpush1.msra.mxu0 %v2007
        %5577 = vmatprep.subr.mxu0 %v2016
        %5578 = vmatpush1.msra.mxu0 %v2015
        %5579 = vmatprep.subr.mxu0 %v2024
        %5580 = vmatpush1.msra.mxu0 %v2023
        %5581 = vmatprep.subr.mxu0 %v2032
        %5582 = vmatpush1.msra.mxu0 %v2031
        %5583 = vmatprep.subr.mxu0 %v2040
        %5584 = vmatpush1.msra.mxu0 %v2039
        %5585 = vmatprep.subr.mxu0 %v2048
        %5586 = vmatpush1.msra.mxu0 %v2047
        %5587 = vmatprep.subr.mxu0 %v2056
        %5588 = vmatpush1.msra.mxu0 %v2055
        %5589 = vmatprep.subr.mxu0 %v2064
        %5590 = vmatpush1.msra.mxu0 %v2063
        %5591 = vmatprep.subr.mxu0 %v2072
        %5592 = vmatpush1.msra.mxu0 %v2071
        %5593 = vmatprep.subr.mxu0 %v2080
        %5594 = vmatpush1.msra.mxu0 %v2079
        %5595 = vmatprep.subr.mxu0 %v2088
        %5596 = vmatpush1.msra.mxu0 %v2087
        %5597 = vmatprep.subr.mxu0 %v2096
        %5598 = vmatpush1.msra.mxu0 %v2095
        %5599 = vmatprep.subr.mxu0 %v2104
        %5600 = vmatpush1.msra.mxu0 %v2103
        %5601 = vmatprep.subr.mxu0 %v2112
        %5602 = vmatpush1.msra.mxu0 %v2111
        %5603 = vmatprep.subr.mxu0 %v2120
        %5604 = vmatpush1.msra.mxu0 %v2119
        %5605 = vmatprep.subr.mxu0 %v2128
        %5606 = vmatpush1.msra.mxu0 %v2127
        %5607 = vmatprep.subr.mxu0 %v2136
        %5608 = vmatpush1.msra.mxu0 %v2135
        %5609 = vmatprep.subr.mxu0 %v2144
        %5610 = vmatpush1.msra.mxu0 %v2143
        %5611 = vmatprep.subr.mxu0 %v2152
        %5612 = vmatpush1.msra.mxu0 %v2151
        %5613 = vmatprep.subr.mxu0 %v2160
        %5614 = vmatpush1.msra.mxu0 %v2159
        %5615 = vmatprep.subr.mxu0 %v2168
        %5616 = vmatpush1.msra.mxu0 %v2167
        %5617 = vmatprep.subr.mxu0 %v2176
        %5618 = vmatpush1.msra.mxu0 %v2175
        %5619 = vmatprep.subr.mxu0 %v2184
        %5620 = vmatpush1.msra.mxu0 %v2183
        %5621 = vmatprep.subr.mxu0 %v2192
        %5622 = vmatpush1.msra.mxu0 %v2191
        %5623 = vmatprep.mubr.f32.mxu0 %v394
        %5624 = vmatmul.mubr.f32.gmra.mrb[0].mxu0 %v393
        %v5625 = vpop.f32.mrb[0].mxu0
        %v5626 = vadd.f32 %v5555, %v5625
        %v5627 = vpop.f32.mrb[0].mxu0
        %v5628 = vadd.f32 %v5557, %v5627
        %5629 = vdwg.mxu0
        %5630 = vmatprep.subr.mxu0 %v2200
        %5631 = vmatpush1.msra.mxu0 %v2199
        %5632 = vmatprep.subr.mxu0 %v2208
        %5633 = vmatpush1.msra.mxu0 %v2207
        %5634 = vmatprep.subr.mxu0 %v2216
        %5635 = vmatpush1.msra.mxu0 %v2215
        %5636 = vmatprep.subr.mxu0 %v2224
        %5637 = vmatpush1.msra.mxu0 %v2223
        %5638 = vmatprep.subr.mxu0 %v2232
        %5639 = vmatpush1.msra.mxu0 %v2231
        %5640 = vmatprep.subr.mxu0 %v2240
        %5641 = vmatpush1.msra.mxu0 %v2239
        %5642 = vmatprep.subr.mxu0 %v2248
        %5643 = vmatpush1.msra.mxu0 %v2247
        %5644 = vmatprep.subr.mxu0 %v2256
        %5645 = vmatpush1.msra.mxu0 %v2255
        %5646 = vmatprep.subr.mxu0 %v2264
        %5647 = vmatpush1.msra.mxu0 %v2263
        %5648 = vmatprep.subr.mxu0 %v2272
        %5649 = vmatpush1.msra.mxu0 %v2271
        %5650 = vmatprep.subr.mxu0 %v2280
        %5651 = vmatpush1.msra.mxu0 %v2279
        %5652 = vmatprep.subr.mxu0 %v2288
        %5653 = vmatpush1.msra.mxu0 %v2287
        %5654 = vmatprep.subr.mxu0 %v2296
        %5655 = vmatpush1.msra.mxu0 %v2295
        %5656 = vmatprep.subr.mxu0 %v2304
        %5657 = vmatpush1.msra.mxu0 %v2303
        %5658 = vmatprep.subr.mxu0 %v2312
        %5659 = vmatpush1.msra.mxu0 %v2311
        %5660 = vmatprep.subr.mxu0 %v2320
        %5661 = vmatpush1.msra.mxu0 %v2319
        %5662 = vmatprep.subr.mxu0 %v2328
        %5663 = vmatpush1.msra.mxu0 %v2327
        %5664 = vmatprep.subr.mxu0 %v2336
        %5665 = vmatpush1.msra.mxu0 %v2335
        %5666 = vmatprep.subr.mxu0 %v2344
        %5667 = vmatpush1.msra.mxu0 %v2343
        %5668 = vmatprep.subr.mxu0 %v2352
        %5669 = vmatpush1.msra.mxu0 %v2351
        %5670 = vmatprep.subr.mxu0 %v2360
        %5671 = vmatpush1.msra.mxu0 %v2359
        %5672 = vmatprep.subr.mxu0 %v2368
        %5673 = vmatpush1.msra.mxu0 %v2367
        %5674 = vmatprep.subr.mxu0 %v2376
        %5675 = vmatpush1.msra.mxu0 %v2375
        %5676 = vmatprep.subr.mxu0 %v2384
        %5677 = vmatpush1.msra.mxu0 %v2383
        %5678 = vmatprep.subr.mxu0 %v2392
        %5679 = vmatpush1.msra.mxu0 %v2391
        %5680 = vmatprep.subr.mxu0 %v2400
        %5681 = vmatpush1.msra.mxu0 %v2399
        %5682 = vmatprep.subr.mxu0 %v2408
        %5683 = vmatpush1.msra.mxu0 %v2407
        %5684 = vmatprep.subr.mxu0 %v2416
        %5685 = vmatpush1.msra.mxu0 %v2415
        %5686 = vmatprep.subr.mxu0 %v2424
        %5687 = vmatpush1.msra.mxu0 %v2423
        %5688 = vmatprep.subr.mxu0 %v2432
        %5689 = vmatpush1.msra.mxu0 %v2431
        %5690 = vmatprep.subr.mxu0 %v2440
        %5691 = vmatpush1.msra.mxu0 %v2439
        %5692 = vmatprep.subr.mxu0 %v2448
        %5693 = vmatpush1.msra.mxu0 %v2447
        %5694 = vmatprep.mubr.f32.mxu0 %v396
        %5695 = vmatmul.mubr.f32.gmra.mrb[0].mxu0 %v395
        %v5696 = vpop.f32.mrb[0].mxu0
        %v5697 = vadd.f32 %v5626, %v5696
        %v5698 = vpop.f32.mrb[0].mxu0
        %v5699 = vadd.f32 %v5628, %v5698
        %5700 = vdwg.mxu0
        %5701 = vmatprep.subr.mxu0 %v2456
        %5702 = vmatpush1.msra.mxu0 %v2455
        %5703 = vmatprep.subr.mxu0 %v2464
        %5704 = vmatpush1.msra.mxu0 %v2463
        %5705 = vmatprep.subr.mxu0 %v2472
        %5706 = vmatpush1.msra.mxu0 %v2471
        %5707 = vmatprep.subr.mxu0 %v2480
        %5708 = vmatpush1.msra.mxu0 %v2479
        %5709 = vmatprep.subr.mxu0 %v2488
        %5710 = vmatpush1.msra.mxu0 %v2487
        %5711 = vmatprep.subr.mxu0 %v2496
        %5712 = vmatpush1.msra.mxu0 %v2495
        %5713 = vmatprep.subr.mxu0 %v2504
        %5714 = vmatpush1.msra.mxu0 %v2503
        %5715 = vmatprep.subr.mxu0 %v2512
        %5716 = vmatpush1.msra.mxu0 %v2511
        %5717 = vmatprep.subr.mxu0 %v2520
        %5718 = vmatpush1.msra.mxu0 %v2519
        %5719 = vmatprep.subr.mxu0 %v2528
        %5720 = vmatpush1.msra.mxu0 %v2527
        %5721 = vmatprep.subr.mxu0 %v2536
        %5722 = vmatpush1.msra.mxu0 %v2535
        %5723 = vmatprep.subr.mxu0 %v2544
        %5724 = vmatpush1.msra.mxu0 %v2543
        %5725 = vmatprep.subr.mxu0 %v2552
        %5726 = vmatpush1.msra.mxu0 %v2551
        %5727 = vmatprep.subr.mxu0 %v2560
        %5728 = vmatpush1.msra.mxu0 %v2559
        %5729 = vmatprep.subr.mxu0 %v2568
        %5730 = vmatpush1.msra.mxu0 %v2567
        %5731 = vmatprep.subr.mxu0 %v2576
        %5732 = vmatpush1.msra.mxu0 %v2575
        %5733 = vmatprep.subr.mxu0 %v2584
        %5734 = vmatpush1.msra.mxu0 %v2583
        %5735 = vmatprep.subr.mxu0 %v2592
        %5736 = vmatpush1.msra.mxu0 %v2591
        %5737 = vmatprep.subr.mxu0 %v2600
        %5738 = vmatpush1.msra.mxu0 %v2599
        %5739 = vmatprep.subr.mxu0 %v2608
        %5740 = vmatpush1.msra.mxu0 %v2607
        %5741 = vmatprep.subr.mxu0 %v2616
        %5742 = vmatpush1.msra.mxu0 %v2615
        %5743 = vmatprep.subr.mxu0 %v2624
        %5744 = vmatpush1.msra.mxu0 %v2623
        %5745 = vmatprep.subr.mxu0 %v2632
        %5746 = vmatpush1.msra.mxu0 %v2631
        %5747 = vmatprep.subr.mxu0 %v2640
        %5748 = vmatpush1.msra.mxu0 %v2639
        %5749 = vmatprep.subr.mxu0 %v2648
        %5750 = vmatpush1.msra.mxu0 %v2647
        %5751 = vmatprep.subr.mxu0 %v2656
        %5752 = vmatpush1.msra.mxu0 %v2655
        %5753 = vmatprep.subr.mxu0 %v2664
        %5754 = vmatpush1.msra.mxu0 %v2663
        %5755 = vmatprep.subr.mxu0 %v2672
        %5756 = vmatpush1.msra.mxu0 %v2671
        %5757 = vmatprep.subr.mxu0 %v2680
        %5758 = vmatpush1.msra.mxu0 %v2679
        %5759 = vmatprep.subr.mxu0 %v2688
        %5760 = vmatpush1.msra.mxu0 %v2687
        %5761 = vmatprep.subr.mxu0 %v2696
        %5762 = vmatpush1.msra.mxu0 %v2695
        %5763 = vmatprep.subr.mxu0 %v2704
        %5764 = vmatpush1.msra.mxu0 %v2703
        %5765 = vmatprep.mubr.f32.mxu0 %v398
        %5766 = vmatmul.mubr.f32.gmra.mrb[0].mxu0 %v397
        %v5767 = vpop.f32.mrb[0].mxu0
        %v5768 = vadd.f32 %v5697, %v5767
        %v5769 = vpop.f32.mrb[0].mxu0
        %v5770 = vadd.f32 %v5699, %v5769
        %5771 = vdwg.mxu0
        %5772 = vmatprep.subr.mxu0 %v2712
        %5773 = vmatpush1.msra.mxu0 %v2711
        %5774 = vmatprep.subr.mxu0 %v2720
        %5775 = vmatpush1.msra.mxu0 %v2719
        %5776 = vmatprep.subr.mxu0 %v2728
        %5777 = vmatpush1.msra.mxu0 %v2727
        %5778 = vmatprep.subr.mxu0 %v2736
        %5779 = vmatpush1.msra.mxu0 %v2735
        %5780 = vmatprep.subr.mxu0 %v2744
        %5781 = vmatpush1.msra.mxu0 %v2743
        %5782 = vmatprep.subr.mxu0 %v2752
        %5783 = vmatpush1.msra.mxu0 %v2751
        %5784 = vmatprep.subr.mxu0 %v2760
        %5785 = vmatpush1.msra.mxu0 %v2759
        %5786 = vmatprep.subr.mxu0 %v2768
        %5787 = vmatpush1.msra.mxu0 %v2767
        %5788 = vmatprep.subr.mxu0 %v2776
        %5789 = vmatpush1.msra.mxu0 %v2775
        %5790 = vmatprep.subr.mxu0 %v2784
        %5791 = vmatpush1.msra.mxu0 %v2783
        %5792 = vmatprep.subr.mxu0 %v2792
        %5793 = vmatpush1.msra.mxu0 %v2791
        %5794 = vmatprep.subr.mxu0 %v2800
        %5795 = vmatpush1.msra.mxu0 %v2799
        %5796 = vmatprep.subr.mxu0 %v2808
        %5797 = vmatpush1.msra.mxu0 %v2807
        %5798 = vmatprep.subr.mxu0 %v2816
        %5799 = vmatpush1.msra.mxu0 %v2815
        %5800 = vmatprep.subr.mxu0 %v2824
        %5801 = vmatpush1.msra.mxu0 %v2823
        %5802 = vmatprep.subr.mxu0 %v2832
        %5803 = vmatpush1.msra.mxu0 %v2831
        %5804 = vmatprep.subr.mxu0 %v2840
        %5805 = vmatpush1.msra.mxu0 %v2839
        %5806 = vmatprep.subr.mxu0 %v2848
        %5807 = vmatpush1.msra.mxu0 %v2847
        %5808 = vmatprep.subr.mxu0 %v2856
        %5809 = vmatpush1.msra.mxu0 %v2855
        %5810 = vmatprep.subr.mxu0 %v2864
        %5811 = vmatpush1.msra.mxu0 %v2863
        %5812 = vmatprep.subr.mxu0 %v2872
        %5813 = vmatpush1.msra.mxu0 %v2871
        %5814 = vmatprep.subr.mxu0 %v2880
        %5815 = vmatpush1.msra.mxu0 %v2879
        %5816 = vmatprep.subr.mxu0 %v2888
        %5817 = vmatpush1.msra.mxu0 %v2887
        %5818 = vmatprep.subr.mxu0 %v2896
        %5819 = vmatpush1.msra.mxu0 %v2895
        %5820 = vmatprep.subr.mxu0 %v2904
        %5821 = vmatpush1.msra.mxu0 %v2903
        %5822 = vmatprep.subr.mxu0 %v2912
        %5823 = vmatpush1.msra.mxu0 %v2911
        %5824 = vmatprep.subr.mxu0 %v2920
        %5825 = vmatpush1.msra.mxu0 %v2919
        %5826 = vmatprep.subr.mxu0 %v2928
        %5827 = vmatpush1.msra.mxu0 %v2927
        %5828 = vmatprep.subr.mxu0 %v2936
        %5829 = vmatpush1.msra.mxu0 %v2935
        %5830 = vmatprep.subr.mxu0 %v2944
        %5831 = vmatpush1.msra.mxu0 %v2943
        %5832 = vmatprep.subr.mxu0 %v2952
        %5833 = vmatpush1.msra.mxu0 %v2951
        %5834 = vmatprep.subr.mxu0 %v2960
        %5835 = vmatpush1.msra.mxu0 %v2959
        %5836 = vmatprep.mubr.f32.mxu0 %v400
        %5837 = vmatmul.mubr.f32.gmra.mrb[0].mxu0 %v399
        %v5838 = vpop.f32.mrb[0].mxu0
        %v5839 = vadd.f32 %v5768, %v5838
        %v5840 = vpop.f32.mrb[0].mxu0
        %v5841 = vadd.f32 %v5770, %v5840
        %5842 = vdwg.mxu0
        %v5843 = vxor.u32 %v3709, 2147483648
        %v5844 = vxor.u32 %v3711, 2147483648
        %v5845 = vxor.u32 %v4419, 2147483648
        %v5846 = vxor.u32 %v4421, 2147483648
        %v5847 = vxor.u32 %v5129, 2147483648
        %v5848 = vxor.u32 %v5131, 2147483648
        %v5849 = vxor.u32 %v5839, 2147483648
        %v5850 = vxor.u32 %v5841, 2147483648
        %v5851 = vmul.f32 %v5843, 1.442695
        %v5852 = vpow.pop %v5851
        %v5853 = vmul.f32 %v5844, 1.442695
        %v5854 = vpow.pop %v5853
        %v5855 = vmul.f32 %v5845, 1.442695
        %v5856 = vpow.pop %v5855
        %v5857 = vmul.f32 %v5846, 1.442695
        %v5858 = vpow.pop %v5857
        %v5859 = vmul.f32 %v5847, 1.442695
        %v5860 = vpow.pop %v5859
        %v5861 = vmul.f32 %v5848, 1.442695
        %v5862 = vpow.pop %v5861
        %v5863 = vmul.f32 %v5849, 1.442695
        %v5864 = vpow.pop %v5863
        %v5865 = vmul.f32 %v5850, 1.442695
        %v5866 = vpow.pop %v5865
        %v5867 = vadd.f32 %v5852, 1.0
        %v5868 = vadd.f32 %v5854, 1.0
        %v5869 = vadd.f32 %v5856, 1.0
        %v5870 = vadd.f32 %v5858, 1.0
        %v5871 = vadd.f32 %v5860, 1.0
        %v5872 = vadd.f32 %v5862, 1.0
        %v5873 = vadd.f32 %v5864, 1.0
        %v5874 = vadd.f32 %v5866, 1.0
        %v5875 = vrcp.pop %v5867
        %v5876 = vmul.f32 1.0, %v5875
        %v5877 = vrcp.pop %v5868
        %v5878 = vmul.f32 1.0, %v5877
        %v5879 = vrcp.pop %v5869
        %v5880 = vmul.f32 1.0, %v5879
        %v5881 = vrcp.pop %v5870
        %v5882 = vmul.f32 1.0, %v5881
        %v5883 = vrcp.pop %v5871
        %v5884 = vmul.f32 1.0, %v5883
        %v5885 = vrcp.pop %v5872
        %v5886 = vmul.f32 1.0, %v5885
        %v5887 = vrcp.pop %v5873
        %v5888 = vmul.f32 1.0, %v5887
        %v5889 = vrcp.pop %v5874
        %v5890 = vmul.f32 1.0, %v5889
        %v5891 = vld [vmem:[%s361] sm:$0xff]
        %v5892 = vld [vmem:[%s361 + $0x8] sm:$0xff]
        %v5893 = vld [vmem:[%s361 + $0x10] sm:$0xff]
        %v5894 = vld [vmem:[%s361 + $0x18] sm:$0xff]
        %v5895 = vld [vmem:[%s361 + $0x20] sm:$0xff]
        %v5896 = vld [vmem:[%s361 + $0x28] sm:$0xff]
        %v5897 = vld [vmem:[%s361 + $0x30] sm:$0xff]
        %v5898 = vld [vmem:[%s361 + $0x38] sm:$0xff]
        %v5899 = vmul.f32 %v5891, %v5876
        %v5900 = vmul.f32 %v5892, %v5878
        %v5901 = vmul.f32 %v5893, %v5880
        %v5902 = vmul.f32 %v5894, %v5882
        %v5903 = vmul.f32 %v5895, %v5884
        %v5904 = vmul.f32 %v5896, %v5886
        %v5905 = vmul.f32 %v5897, %v5888
        %v5906 = vmul.f32 %v5898, %v5890
        %v5907 = vld [vmem:[#allocation2] sm:$0xff]
        %v5908 = vld [vmem:[%s373] sm:$0xff]
        %v5909 = vld [vmem:[%s373 + $0x8] sm:$0xff]
        %v5910 = vld [vmem:[%s373 + $0x10] sm:$0xff]
        %v5911 = vld [vmem:[%s373 + $0x18] sm:$0xff]
        %v5912 = vld [vmem:[%s373 + $0x20] sm:$0xff]
        %v5913 = vld [vmem:[%s373 + $0x28] sm:$0xff]
        %v5914 = vld [vmem:[%s373 + $0x30] sm:$0xff]
        %v5915 = vld [vmem:[%s373 + $0x38] sm:$0xff]
        %v5916 = vld [vmem:[%s373 + $0x40] sm:$0xff]
        %v5917 = vld [vmem:[%s373 + $0x48] sm:$0xff]
        %v5918 = vld [vmem:[%s373 + $0x50] sm:$0xff]
        %v5919 = vld [vmem:[%s373 + $0x58] sm:$0xff]
        %v5920 = vld [vmem:[%s373 + $0x60] sm:$0xff]
        %v5921 = vld [vmem:[%s373 + $0x68] sm:$0xff]
        %v5922 = vld [vmem:[%s373 + $0x70] sm:$0xff]
        %v5923 = vld [vmem:[%s373 + $0x78] sm:$0xff]
        %v5924 = vld [vmem:[%s373 + $0x80] sm:$0xff]
        %v5925 = vld [vmem:[%s373 + $0x88] sm:$0xff]
        %v5926 = vld [vmem:[%s373 + $0x90] sm:$0xff]
        %v5927 = vld [vmem:[%s373 + $0x98] sm:$0xff]
        %v5928 = vld [vmem:[%s373 + $0xa0] sm:$0xff]
        %v5929 = vld [vmem:[%s373 + $0xa8] sm:$0xff]
        %v5930 = vld [vmem:[%s373 + $0xb0] sm:$0xff]
        %v5931 = vld [vmem:[%s373 + $0xb8] sm:$0xff]
        %v5932 = vld [vmem:[%s373 + $0xc0] sm:$0xff]
        %v5933 = vld [vmem:[%s373 + $0xc8] sm:$0xff]
        %v5934 = vld [vmem:[%s373 + $0xd0] sm:$0xff]
        %v5935 = vld [vmem:[%s373 + $0xd8] sm:$0xff]
        %v5936 = vld [vmem:[%s373 + $0xe0] sm:$0xff]
        %v5937 = vld [vmem:[%s373 + $0xe8] sm:$0xff]
        %v5938 = vld [vmem:[%s373 + $0xf0] sm:$0xff]
        %v5939 = vld [vmem:[%s373 + $0xf8] sm:$0xff]
        %v5940 = vld [vmem:[%s373 + $0x100] sm:$0xff]
        %v5941 = vld [vmem:[%s373 + $0x108] sm:$0xff]
        %v5942 = vld [vmem:[%s373 + $0x110] sm:$0xff]
        %v5943 = vld [vmem:[%s373 + $0x118] sm:$0xff]
        %v5944 = vld [vmem:[%s373 + $0x120] sm:$0xff]
        %v5945 = vld [vmem:[%s373 + $0x128] sm:$0xff]
        %v5946 = vld [vmem:[%s373 + $0x130] sm:$0xff]
        %v5947 = vld [vmem:[%s373 + $0x138] sm:$0xff]
        %v5948 = vld [vmem:[%s373 + $0x140] sm:$0xff]
        %v5949 = vld [vmem:[%s373 + $0x148] sm:$0xff]
        %v5950 = vld [vmem:[%s373 + $0x150] sm:$0xff]
        %v5951 = vld [vmem:[%s373 + $0x158] sm:$0xff]
        %v5952 = vld [vmem:[%s373 + $0x160] sm:$0xff]
        %v5953 = vld [vmem:[%s373 + $0x168] sm:$0xff]
        %v5954 = vld [vmem:[%s373 + $0x170] sm:$0xff]
        %v5955 = vld [vmem:[%s373 + $0x178] sm:$0xff]
        %v5956 = vld [vmem:[%s373 + $0x180] sm:$0xff]
        %v5957 = vld [vmem:[%s373 + $0x188] sm:$0xff]
        %v5958 = vld [vmem:[%s373 + $0x190] sm:$0xff]
        %v5959 = vld [vmem:[%s373 + $0x198] sm:$0xff]
        %v5960 = vld [vmem:[%s373 + $0x1a0] sm:$0xff]
        %v5961 = vld [vmem:[%s373 + $0x1a8] sm:$0xff]
        %v5962 = vld [vmem:[%s373 + $0x1b0] sm:$0xff]
        %v5963 = vld [vmem:[%s373 + $0x1b8] sm:$0xff]
        %v5964 = vld [vmem:[%s373 + $0x1c0] sm:$0xff]
        %v5965 = vld [vmem:[%s373 + $0x1c8] sm:$0xff]
        %v5966 = vld [vmem:[%s373 + $0x1d0] sm:$0xff]
        %v5967 = vld [vmem:[%s373 + $0x1d8] sm:$0xff]
        %v5968 = vld [vmem:[%s373 + $0x1e0] sm:$0xff]
        %v5969 = vld [vmem:[%s373 + $0x1e8] sm:$0xff]
        %v5970 = vld [vmem:[%s373 + $0x1f0] sm:$0xff]
        %v5971 = vld [vmem:[%s373 + $0x1f8] sm:$0xff]
        %v5972 = vld [vmem:[%s373 + $0x200] sm:$0xff]
        %v5973 = vld [vmem:[%s373 + $0x208] sm:$0xff]
        %v5974 = vld [vmem:[%s373 + $0x210] sm:$0xff]
        %v5975 = vld [vmem:[%s373 + $0x218] sm:$0xff]
        %v5976 = vld [vmem:[%s373 + $0x220] sm:$0xff]
        %v5977 = vld [vmem:[%s373 + $0x228] sm:$0xff]
        %v5978 = vld [vmem:[%s373 + $0x230] sm:$0xff]
        %v5979 = vld [vmem:[%s373 + $0x238] sm:$0xff]
        %v5980 = vld [vmem:[%s373 + $0x240] sm:$0xff]
        %v5981 = vld [vmem:[%s373 + $0x248] sm:$0xff]
        %v5982 = vld [vmem:[%s373 + $0x250] sm:$0xff]
        %v5983 = vld [vmem:[%s373 + $0x258] sm:$0xff]
        %v5984 = vld [vmem:[%s373 + $0x260] sm:$0xff]
        %v5985 = vld [vmem:[%s373 + $0x268] sm:$0xff]
        %v5986 = vld [vmem:[%s373 + $0x270] sm:$0xff]
        %v5987 = vld [vmem:[%s373 + $0x278] sm:$0xff]
        %v5988 = vld [vmem:[%s373 + $0x280] sm:$0xff]
        %v5989 = vld [vmem:[%s373 + $0x288] sm:$0xff]
        %v5990 = vld [vmem:[%s373 + $0x290] sm:$0xff]
        %v5991 = vld [vmem:[%s373 + $0x298] sm:$0xff]
        %v5992 = vld [vmem:[%s373 + $0x2a0] sm:$0xff]
        %v5993 = vld [vmem:[%s373 + $0x2a8] sm:$0xff]
        %v5994 = vld [vmem:[%s373 + $0x2b0] sm:$0xff]
        %v5995 = vld [vmem:[%s373 + $0x2b8] sm:$0xff]
        %v5996 = vld [vmem:[%s373 + $0x2c0] sm:$0xff]
        %v5997 = vld [vmem:[%s373 + $0x2c8] sm:$0xff]
        %v5998 = vld [vmem:[%s373 + $0x2d0] sm:$0xff]
        %v5999 = vld [vmem:[%s373 + $0x2d8] sm:$0xff]
        %v6000 = vld [vmem:[%s373 + $0x2e0] sm:$0xff]
        %v6001 = vld [vmem:[%s373 + $0x2e8] sm:$0xff]
        %v6002 = vld [vmem:[%s373 + $0x2f0] sm:$0xff]
        %v6003 = vld [vmem:[%s373 + $0x2f8] sm:$0xff]
        %v6004 = vld [vmem:[%s373 + $0x300] sm:$0xff]
        %v6005 = vld [vmem:[%s373 + $0x308] sm:$0xff]
        %v6006 = vld [vmem:[%s373 + $0x310] sm:$0xff]
        %v6007 = vld [vmem:[%s373 + $0x318] sm:$0xff]
        %v6008 = vld [vmem:[%s373 + $0x320] sm:$0xff]
        %v6009 = vld [vmem:[%s373 + $0x328] sm:$0xff]
        %v6010 = vld [vmem:[%s373 + $0x330] sm:$0xff]
        %v6011 = vld [vmem:[%s373 + $0x338] sm:$0xff]
        %v6012 = vld [vmem:[%s373 + $0x340] sm:$0xff]
        %v6013 = vld [vmem:[%s373 + $0x348] sm:$0xff]
        %v6014 = vld [vmem:[%s373 + $0x350] sm:$0xff]
        %v6015 = vld [vmem:[%s373 + $0x358] sm:$0xff]
        %v6016 = vld [vmem:[%s373 + $0x360] sm:$0xff]
        %v6017 = vld [vmem:[%s373 + $0x368] sm:$0xff]
        %v6018 = vld [vmem:[%s373 + $0x370] sm:$0xff]
        %v6019 = vld [vmem:[%s373 + $0x378] sm:$0xff]
        %v6020 = vld [vmem:[%s373 + $0x380] sm:$0xff]
        %v6021 = vld [vmem:[%s373 + $0x388] sm:$0xff]
        %v6022 = vld [vmem:[%s373 + $0x390] sm:$0xff]
        %v6023 = vld [vmem:[%s373 + $0x398] sm:$0xff]
        %v6024 = vld [vmem:[%s373 + $0x3a0] sm:$0xff]
        %v6025 = vld [vmem:[%s373 + $0x3a8] sm:$0xff]
        %v6026 = vld [vmem:[%s373 + $0x3b0] sm:$0xff]
        %v6027 = vld [vmem:[%s373 + $0x3b8] sm:$0xff]
        %v6028 = vld [vmem:[%s373 + $0x3c0] sm:$0xff]
        %v6029 = vld [vmem:[%s373 + $0x3c8] sm:$0xff]
        %v6030 = vld [vmem:[%s373 + $0x3d0] sm:$0xff]
        %v6031 = vld [vmem:[%s373 + $0x3d8] sm:$0xff]
        %v6032 = vld [vmem:[%s373 + $0x3e0] sm:$0xff]
        %v6033 = vld [vmem:[%s373 + $0x3e8] sm:$0xff]
        %v6034 = vld [vmem:[%s373 + $0x3f0] sm:$0xff]
        %v6035 = vld [vmem:[%s373 + $0x3f8] sm:$0xff]
        %6036 = vmatprep.subr.mxu0 0.0
        %6037 = vmatpush1.msra.mxu0 %v5908
        %6038 = vmatprep.subr.mxu0 0.0
        %6039 = vmatpush1.msra.mxu0 %v5909
        %6040 = vmatprep.subr.mxu0 0.0
        %6041 = vmatpush1.msra.mxu0 %v5910
        %6042 = vmatprep.subr.mxu0 0.0
        %6043 = vmatpush1.msra.mxu0 %v5911
        %6044 = vmatprep.subr.mxu0 0.0
        %6045 = vmatpush1.msra.mxu0 %v5912
        %6046 = vmatprep.subr.mxu0 0.0
        %6047 = vmatpush1.msra.mxu0 %v5913
        %6048 = vmatprep.subr.mxu0 0.0
        %6049 = vmatpush1.msra.mxu0 %v5914
        %6050 = vmatprep.subr.mxu0 0.0
        %6051 = vmatpush1.msra.mxu0 %v5915
        %6052 = vmatprep.subr.mxu0 0.0
        %6053 = vmatpush1.msra.mxu0 %v5916
        %6054 = vmatprep.subr.mxu0 0.0
        %6055 = vmatpush1.msra.mxu0 %v5917
        %6056 = vmatprep.subr.mxu0 0.0
        %6057 = vmatpush1.msra.mxu0 %v5918
        %6058 = vmatprep.subr.mxu0 0.0
        %6059 = vmatpush1.msra.mxu0 %v5919
        %6060 = vmatprep.subr.mxu0 0.0
        %6061 = vmatpush1.msra.mxu0 %v5920
        %6062 = vmatprep.subr.mxu0 0.0
        %6063 = vmatpush1.msra.mxu0 %v5921
        %6064 = vmatprep.subr.mxu0 0.0
        %6065 = vmatpush1.msra.mxu0 %v5922
        %6066 = vmatprep.subr.mxu0 0.0
        %6067 = vmatpush1.msra.mxu0 %v5923
        %6068 = vmatprep.subr.mxu0 0.0
        %6069 = vmatpush1.msra.mxu0 %v5924
        %6070 = vmatprep.subr.mxu0 0.0
        %6071 = vmatpush1.msra.mxu0 %v5925
        %6072 = vmatprep.subr.mxu0 0.0
        %6073 = vmatpush1.msra.mxu0 %v5926
        %6074 = vmatprep.subr.mxu0 0.0
        %6075 = vmatpush1.msra.mxu0 %v5927
        %6076 = vmatprep.subr.mxu0 0.0
        %6077 = vmatpush1.msra.mxu0 %v5928
        %6078 = vmatprep.subr.mxu0 0.0
        %6079 = vmatpush1.msra.mxu0 %v5929
        %6080 = vmatprep.subr.mxu0 0.0
        %6081 = vmatpush1.msra.mxu0 %v5930
        %6082 = vmatprep.subr.mxu0 0.0
        %6083 = vmatpush1.msra.mxu0 %v5931
        %6084 = vmatprep.subr.mxu0 0.0
        %6085 = vmatpush1.msra.mxu0 %v5932
        %6086 = vmatprep.subr.mxu0 0.0
        %6087 = vmatpush1.msra.mxu0 %v5933
        %6088 = vmatprep.subr.mxu0 0.0
        %6089 = vmatpush1.msra.mxu0 %v5934
        %6090 = vmatprep.subr.mxu0 0.0
        %6091 = vmatpush1.msra.mxu0 %v5935
        %6092 = vmatprep.subr.mxu0 0.0
        %6093 = vmatpush1.msra.mxu0 %v5936
        %6094 = vmatprep.subr.mxu0 0.0
        %6095 = vmatpush1.msra.mxu0 %v5937
        %6096 = vmatprep.subr.mxu0 0.0
        %6097 = vmatpush1.msra.mxu0 %v5938
        %6098 = vmatprep.subr.mxu0 0.0
        %6099 = vmatpush1.msra.mxu0 %v5939
        %6100 = vmatprep.mubr.f32.mxu0 %v5900
        %6101 = vmatmul.mubr.f32.gmra.mrb[0].mxu0 %v5899
        %v6102 = vpop.f32.mrb[0].mxu0
        %v6103 = vadd.f32 0.0, %v6102
        %v6104 = vpop.f32.mrb[0].mxu0
        %6105 = vdwg.mxu0
        %6106 = vmatprep.subr.mxu0 0.0
        %6107 = vmatpush1.msra.mxu0 %v5940
        %6108 = vmatprep.subr.mxu0 0.0
        %6109 = vmatpush1.msra.mxu0 %v5941
        %6110 = vmatprep.subr.mxu0 0.0
        %6111 = vmatpush1.msra.mxu0 %v5942
        %6112 = vmatprep.subr.mxu0 0.0
        %6113 = vmatpush1.msra.mxu0 %v5943
        %6114 = vmatprep.subr.mxu0 0.0
        %6115 = vmatpush1.msra.mxu0 %v5944
        %6116 = vmatprep.subr.mxu0 0.0
        %6117 = vmatpush1.msra.mxu0 %v5945
        %6118 = vmatprep.subr.mxu0 0.0
        %6119 = vmatpush1.msra.mxu0 %v5946
        %6120 = vmatprep.subr.mxu0 0.0
        %6121 = vmatpush1.msra.mxu0 %v5947
        %6122 = vmatprep.subr.mxu0 0.0
        %6123 = vmatpush1.msra.mxu0 %v5948
        %6124 = vmatprep.subr.mxu0 0.0
        %6125 = vmatpush1.msra.mxu0 %v5949
        %6126 = vmatprep.subr.mxu0 0.0
        %6127 = vmatpush1.msra.mxu0 %v5950
        %6128 = vmatprep.subr.mxu0 0.0
        %6129 = vmatpush1.msra.mxu0 %v5951
        %6130 = vmatprep.subr.mxu0 0.0
        %6131 = vmatpush1.msra.mxu0 %v5952
        %6132 = vmatprep.subr.mxu0 0.0
        %6133 = vmatpush1.msra.mxu0 %v5953
        %6134 = vmatprep.subr.mxu0 0.0
        %6135 = vmatpush1.msra.mxu0 %v5954
        %6136 = vmatprep.subr.mxu0 0.0
        %6137 = vmatpush1.msra.mxu0 %v5955
        %6138 = vmatprep.subr.mxu0 0.0
        %6139 = vmatpush1.msra.mxu0 %v5956
        %6140 = vmatprep.subr.mxu0 0.0
        %6141 = vmatpush1.msra.mxu0 %v5957
        %6142 = vmatprep.subr.mxu0 0.0
        %6143 = vmatpush1.msra.mxu0 %v5958
        %6144 = vmatprep.subr.mxu0 0.0
        %6145 = vmatpush1.msra.mxu0 %v5959
        %6146 = vmatprep.subr.mxu0 0.0
        %6147 = vmatpush1.msra.mxu0 %v5960
        %6148 = vmatprep.subr.mxu0 0.0
        %6149 = vmatpush1.msra.mxu0 %v5961
        %6150 = vmatprep.subr.mxu0 0.0
        %6151 = vmatpush1.msra.mxu0 %v5962
        %6152 = vmatprep.subr.mxu0 0.0
        %6153 = vmatpush1.msra.mxu0 %v5963
        %6154 = vmatprep.subr.mxu0 0.0
        %6155 = vmatpush1.msra.mxu0 %v5964
        %6156 = vmatprep.subr.mxu0 0.0
        %6157 = vmatpush1.msra.mxu0 %v5965
        %6158 = vmatprep.subr.mxu0 0.0
        %6159 = vmatpush1.msra.mxu0 %v5966
        %6160 = vmatprep.subr.mxu0 0.0
        %6161 = vmatpush1.msra.mxu0 %v5967
        %6162 = vmatprep.subr.mxu0 0.0
        %6163 = vmatpush1.msra.mxu0 %v5968
        %6164 = vmatprep.subr.mxu0 0.0
        %6165 = vmatpush1.msra.mxu0 %v5969
        %6166 = vmatprep.subr.mxu0 0.0
        %6167 = vmatpush1.msra.mxu0 %v5970
        %6168 = vmatprep.subr.mxu0 0.0
        %6169 = vmatpush1.msra.mxu0 %v5971
        %6170 = vmatprep.mubr.f32.mxu0 %v5902
        %6171 = vmatmul.mubr.f32.gmra.mrb[0].mxu0 %v5901
        %v6172 = vpop.f32.mrb[0].mxu0
        %v6173 = vadd.f32 %v6103, %v6172
        %v6174 = vpop.f32.mrb[0].mxu0
        %6175 = vdwg.mxu0
        %6176 = vmatprep.subr.mxu0 0.0
        %6177 = vmatpush1.msra.mxu0 %v5972
        %6178 = vmatprep.subr.mxu0 0.0
        %6179 = vmatpush1.msra.mxu0 %v5973
        %6180 = vmatprep.subr.mxu0 0.0
        %6181 = vmatpush1.msra.mxu0 %v5974
        %6182 = vmatprep.subr.mxu0 0.0
        %6183 = vmatpush1.msra.mxu0 %v5975
        %6184 = vmatprep.subr.mxu0 0.0
        %6185 = vmatpush1.msra.mxu0 %v5976
        %6186 = vmatprep.subr.mxu0 0.0
        %6187 = vmatpush1.msra.mxu0 %v5977
        %6188 = vmatprep.subr.mxu0 0.0
        %6189 = vmatpush1.msra.mxu0 %v5978
        %6190 = vmatprep.subr.mxu0 0.0
        %6191 = vmatpush1.msra.mxu0 %v5979
        %6192 = vmatprep.subr.mxu0 0.0
        %6193 = vmatpush1.msra.mxu0 %v5980
        %6194 = vmatprep.subr.mxu0 0.0
        %6195 = vmatpush1.msra.mxu0 %v5981
        %6196 = vmatprep.subr.mxu0 0.0
        %6197 = vmatpush1.msra.mxu0 %v5982
        %6198 = vmatprep.subr.mxu0 0.0
        %6199 = vmatpush1.msra.mxu0 %v5983
        %6200 = vmatprep.subr.mxu0 0.0
        %6201 = vmatpush1.msra.mxu0 %v5984
        %6202 = vmatprep.subr.mxu0 0.0
        %6203 = vmatpush1.msra.mxu0 %v5985
        %6204 = vmatprep.subr.mxu0 0.0
        %6205 = vmatpush1.msra.mxu0 %v5986
        %6206 = vmatprep.subr.mxu0 0.0
        %6207 = vmatpush1.msra.mxu0 %v5987
        %6208 = vmatprep.subr.mxu0 0.0
        %6209 = vmatpush1.msra.mxu0 %v5988
        %6210 = vmatprep.subr.mxu0 0.0
        %6211 = vmatpush1.msra.mxu0 %v5989
        %6212 = vmatprep.subr.mxu0 0.0
        %6213 = vmatpush1.msra.mxu0 %v5990
        %6214 = vmatprep.subr.mxu0 0.0
        %6215 = vmatpush1.msra.mxu0 %v5991
        %6216 = vmatprep.subr.mxu0 0.0
        %6217 = vmatpush1.msra.mxu0 %v5992
        %6218 = vmatprep.subr.mxu0 0.0
        %6219 = vmatpush1.msra.mxu0 %v5993
        %6220 = vmatprep.subr.mxu0 0.0
        %6221 = vmatpush1.msra.mxu0 %v5994
        %6222 = vmatprep.subr.mxu0 0.0
        %6223 = vmatpush1.msra.mxu0 %v5995
        %6224 = vmatprep.subr.mxu0 0.0
        %6225 = vmatpush1.msra.mxu0 %v5996
        %6226 = vmatprep.subr.mxu0 0.0
        %6227 = vmatpush1.msra.mxu0 %v5997
        %6228 = vmatprep.subr.mxu0 0.0
        %6229 = vmatpush1.msra.mxu0 %v5998
        %6230 = vmatprep.subr.mxu0 0.0
        %6231 = vmatpush1.msra.mxu0 %v5999
        %6232 = vmatprep.subr.mxu0 0.0
        %6233 = vmatpush1.msra.mxu0 %v6000
        %6234 = vmatprep.subr.mxu0 0.0
        %6235 = vmatpush1.msra.mxu0 %v6001
        %6236 = vmatprep.subr.mxu0 0.0
        %6237 = vmatpush1.msra.mxu0 %v6002
        %6238 = vmatprep.subr.mxu0 0.0
        %6239 = vmatpush1.msra.mxu0 %v6003
        %6240 = vmatprep.mubr.f32.mxu0 %v5904
        %6241 = vmatmul.mubr.f32.gmra.mrb[0].mxu0 %v5903
        %v6242 = vpop.f32.mrb[0].mxu0
        %v6243 = vadd.f32 %v6173, %v6242
        %v6244 = vpop.f32.mrb[0].mxu0
        %6245 = vdwg.mxu0
        %6246 = vmatprep.subr.mxu0 0.0
        %6247 = vmatpush1.msra.mxu0 %v6004
        %6248 = vmatprep.subr.mxu0 0.0
        %6249 = vmatpush1.msra.mxu0 %v6005
        %6250 = vmatprep.subr.mxu0 0.0
        %6251 = vmatpush1.msra.mxu0 %v6006
        %6252 = vmatprep.subr.mxu0 0.0
        %6253 = vmatpush1.msra.mxu0 %v6007
        %6254 = vmatprep.subr.mxu0 0.0
        %6255 = vmatpush1.msra.mxu0 %v6008
        %6256 = vmatprep.subr.mxu0 0.0
        %6257 = vmatpush1.msra.mxu0 %v6009
        %6258 = vmatprep.subr.mxu0 0.0
        %6259 = vmatpush1.msra.mxu0 %v6010
        %6260 = vmatprep.subr.mxu0 0.0
        %6261 = vmatpush1.msra.mxu0 %v6011
        %6262 = vmatprep.subr.mxu0 0.0
        %6263 = vmatpush1.msra.mxu0 %v6012
        %6264 = vmatprep.subr.mxu0 0.0
        %6265 = vmatpush1.msra.mxu0 %v6013
        %6266 = vmatprep.subr.mxu0 0.0
        %6267 = vmatpush1.msra.mxu0 %v6014
        %6268 = vmatprep.subr.mxu0 0.0
        %6269 = vmatpush1.msra.mxu0 %v6015
        %6270 = vmatprep.subr.mxu0 0.0
        %6271 = vmatpush1.msra.mxu0 %v6016
        %6272 = vmatprep.subr.mxu0 0.0
        %6273 = vmatpush1.msra.mxu0 %v6017
        %6274 = vmatprep.subr.mxu0 0.0
        %6275 = vmatpush1.msra.mxu0 %v6018
        %6276 = vmatprep.subr.mxu0 0.0
        %6277 = vmatpush1.msra.mxu0 %v6019
        %6278 = vmatprep.subr.mxu0 0.0
        %6279 = vmatpush1.msra.mxu0 %v6020
        %6280 = vmatprep.subr.mxu0 0.0
        %6281 = vmatpush1.msra.mxu0 %v6021
        %6282 = vmatprep.subr.mxu0 0.0
        %6283 = vmatpush1.msra.mxu0 %v6022
        %6284 = vmatprep.subr.mxu0 0.0
        %6285 = vmatpush1.msra.mxu0 %v6023
        %6286 = vmatprep.subr.mxu0 0.0
        %6287 = vmatpush1.msra.mxu0 %v6024
        %6288 = vmatprep.subr.mxu0 0.0
        %6289 = vmatpush1.msra.mxu0 %v6025
        %6290 = vmatprep.subr.mxu0 0.0
        %6291 = vmatpush1.msra.mxu0 %v6026
        %6292 = vmatprep.subr.mxu0 0.0
        %6293 = vmatpush1.msra.mxu0 %v6027
        %6294 = vmatprep.subr.mxu0 0.0
        %6295 = vmatpush1.msra.mxu0 %v6028
        %6296 = vmatprep.subr.mxu0 0.0
        %6297 = vmatpush1.msra.mxu0 %v6029
        %6298 = vmatprep.subr.mxu0 0.0
        %6299 = vmatpush1.msra.mxu0 %v6030
        %6300 = vmatprep.subr.mxu0 0.0
        %6301 = vmatpush1.msra.mxu0 %v6031
        %6302 = vmatprep.subr.mxu0 0.0
        %6303 = vmatpush1.msra.mxu0 %v6032
        %6304 = vmatprep.subr.mxu0 0.0
        %6305 = vmatpush1.msra.mxu0 %v6033
        %6306 = vmatprep.subr.mxu0 0.0
        %6307 = vmatpush1.msra.mxu0 %v6034
        %6308 = vmatprep.subr.mxu0 0.0
        %6309 = vmatpush1.msra.mxu0 %v6035
        %6310 = vmatprep.mubr.f32.mxu0 %v5906
        %6311 = vmatmul.mubr.f32.gmra.mrb[0].mxu0 %v5905
        %v6312 = vpop.f32.mrb[0].mxu0
        %v6313 = vadd.f32 %v6243, %v6312
        %v6314 = vpop.f32.mrb[0].mxu0
        %6315 = vdwg.mxu0
        %v6316 = vadd.f32 %v5907, %v6313
        %vm6317 = vcmask 130048
        %6318 = vst.msk [vmem:[#allocation2] sm:$0xff] %vm6317, %v6316
        %p6319 = scmp.eq.s32.totalorder %s22, 19
        // Predicated region
        $region61: #{bsl_multinet_seblock_ln_forward.3} parent=51 // pred_check
          %p6320 = pneg %p6319
        $region62: #{bsl_multinet_seblock_ln_forward.3} parent=51 // pred_check_branch
          %6322 = sbr.rel (%p6320) target = $region64
        $region63: #{bsl_multinet_seblock_ln_forward.3} parent=51 // pred_region
          %v6323 = vld [vmem:[#allocation2] sm:$0xff]
          %v6324 = vld [vmem:[%s5] sm:$0x1]
          %v6326 = vlaneseq
          %v6327 = vshrl.u32 %v6326, 7
          %v6328 = vsub.s32 0, %v6327
          %v6329 = vrot.slane %v6324, %v6328
          %v6331 = vadd.f32 %v6323, %v6329
          %v6332 = vld [vmem:[%s6] sm:$0xff]
          %v6333 = vld [vmem:[%s6 + $0x8] sm:$0xff]
          %v6334 = vld [vmem:[%s7] sm:$0x1]
          %v6336 = vlaneseq
          %v6337 = vshrl.u32 %v6336, 7
          %v6338 = vsub.s32 0, %v6337
          %v6339 = vrot.slane %v6334, %v6338
          %v6342 = vsel %vm6317, %v6331, 0
          %6344 = vmatprep.subr.mxu0 0.0
          %6345 = vmatpush1.msra.mxu0 %v6332
          %6346 = vmatprep.subr.mxu0 0.0
          %6347 = vmatpush1.msra.mxu0 %v6333
          %6348 = vmatprep.subr.mxu0 0.0
          %6349 = vmatpush1.msra.mxu0 0.0
          %6350 = vmatprep.subr.mxu0 0.0
          %6351 = vmatpush1.msra.mxu0 0.0
          %6352 = vmatprep.subr.mxu0 0.0
          %6353 = vmatpush1.msra.mxu0 0.0
          %6354 = vmatprep.subr.mxu0 0.0
          %6355 = vmatpush1.msra.mxu0 0.0
          %6356 = vmatprep.subr.mxu0 0.0
          %6357 = vmatpush1.msra.mxu0 0.0
          %6358 = vmatprep.subr.mxu0 0.0
          %6359 = vmatpush1.msra.mxu0 0.0
          %6360 = vmatprep.subr.mxu0 0.0
          %6361 = vmatpush1.msra.mxu0 0.0
          %6362 = vmatprep.subr.mxu0 0.0
          %6363 = vmatpush1.msra.mxu0 0.0
          %6364 = vmatprep.subr.mxu0 0.0
          %6365 = vmatpush1.msra.mxu0 0.0
          %6366 = vmatprep.subr.mxu0 0.0
          %6367 = vmatpush1.msra.mxu0 0.0
          %6368 = vmatprep.subr.mxu0 0.0
          %6369 = vmatpush1.msra.mxu0 0.0
          %6370 = vmatprep.subr.mxu0 0.0
          %6371 = vmatpush1.msra.mxu0 0.0
          %6372 = vmatprep.subr.mxu0 0.0
          %6373 = vmatpush1.msra.mxu0 0.0
          %6374 = vmatprep.subr.mxu0 0.0
          %6375 = vmatpush1.msra.mxu0 0.0
          %6376 = vmatprep.subr.mxu0 0.0
          %6377 = vmatpush1.msra.mxu0 0.0
          %6378 = vmatprep.subr.mxu0 0.0
          %6379 = vmatpush1.msra.mxu0 0.0
          %6380 = vmatprep.subr.mxu0 0.0
          %6381 = vmatpush1.msra.mxu0 0.0
          %6382 = vmatprep.subr.mxu0 0.0
          %6383 = vmatpush1.msra.mxu0 0.0
          %6384 = vmatprep.subr.mxu0 0.0
          %6385 = vmatpush1.msra.mxu0 0.0
          %6386 = vmatprep.subr.mxu0 0.0
          %6387 = vmatpush1.msra.mxu0 0.0
          %6388 = vmatprep.subr.mxu0 0.0
          %6389 = vmatpush1.msra.mxu0 0.0
          %6390 = vmatprep.subr.mxu0 0.0
          %6391 = vmatpush1.msra.mxu0 0.0
          %6392 = vmatprep.subr.mxu0 0.0
          %6393 = vmatpush1.msra.mxu0 0.0
          %6394 = vmatprep.subr.mxu0 0.0
          %6395 = vmatpush1.msra.mxu0 0.0
          %6396 = vmatprep.subr.mxu0 0.0
          %6397 = vmatpush1.msra.mxu0 0.0
          %6398 = vmatprep.subr.mxu0 0.0
          %6399 = vmatpush1.msra.mxu0 0.0
          %6400 = vmatprep.subr.mxu0 0.0
          %6401 = vmatpush1.msra.mxu0 0.0
          %6402 = vmatprep.subr.mxu0 0.0
          %6403 = vmatpush1.msra.mxu0 0.0
          %6404 = vmatprep.subr.mxu0 0.0
          %6405 = vmatpush1.msra.mxu0 0.0
          %6406 = vmatprep.subr.mxu0 0.0
          %6407 = vmatpush1.msra.mxu0 0.0
          %6408 = vmatprep.mubr.f32.mxu0 0.0
          %6409 = vmatmul.mubr.f32.gmra.mrb[0].mxu0 %v6342
          %v6410 = vpop.f32.mrb[0].mxu0
          %v6411 = vadd.f32 %v6339, %v6410
          %v6412 = vpop.f32.mrb[0].mxu0
          %6413 = vdwg.mxu0
          %v6414 = vxor.u32 %v6411, 2147483648
          %v6415 = vmul.f32 %v6414, 1.442695
          %v6416 = vpow.pop %v6415
          %v6417 = vadd.f32 %v6416, 1.0
          %v6418 = vrcp.pop %v6417
          %v6419 = vmul.f32 1.0, %v6418
          %6420 = vst [vmem:[%s8] sm:$0xff] %v6419
        $region64: #{bsl_multinet_seblock_ln_forward.3} parent=51 // pred_fallthru
          _
        // Predicated region
        $region65: #{bsl_multinet_seblock_ln_forward.3} parent=51 // pred_check
          %p6421 = pneg %p223
        $region66: #{bsl_multinet_seblock_ln_forward.3} parent=51 // pred_check_branch
          %6423 = sbr.rel (%p6421) target = $region68
        $region67: #{bsl_multinet_seblock_ln_forward.3} parent=51 // pred_region
          _
        $region68: #{bsl_multinet_seblock_ln_forward.3} parent=51 // pred_fallthru
          _
        // Predicated region
        $region69: #{bsl_multinet_seblock_ln_forward.3} parent=51 // pred_check
          %p6424 = pneg %p223
        $region70: #{bsl_multinet_seblock_ln_forward.3} parent=51 // pred_check_branch
          %6426 = sbr.rel (%p6424) target = $region72
        $region71: #{bsl_multinet_seblock_ln_forward.3} parent=51 // pred_region
          _
        $region72: #{bsl_multinet_seblock_ln_forward.3} parent=51 // pred_fallthru
          _
      $region52: #{bsl_multinet_seblock_ln_forward.3} parent=5 // pred_fallthru
        _
      %p6427 = scmp.le.s32.totalorder 2, %s17
      // Predicated region
      $region73: #{bsl_multinet_seblock_ln_forward.3} parent=5 // pred_check
        %p6428 = pneg %p6427
      $region74: #{bsl_multinet_seblock_ln_forward.3} parent=5 // pred_check_branch
        %6430 = sbr.rel (%p6428) target = $region76
      $region75: #{bsl_multinet_seblock_ln_forward.3} parent=5 // pred_region
        %s6431 = ssub.s32 %s17, 2
      $region76: #{bsl_multinet_seblock_ln_forward.3} parent=5 // pred_fallthru
        _
    $region6: #{bsl_multinet_seblock_ln_forward.3} parent=1 // loop_footer
      %s21 = sadd.s32 1, %s17
    $region7: #{bsl_multinet_seblock_ln_forward.3} parent=1 // loop_footer_branch
      %16 = sbr.rel target = $region3
    $region8: #{bsl_multinet_seblock_ln_forward.3} parent=1 // loop_exit
      _
    %6432 = vsyncpa [#allocation4], 1
    %s6433 = scalar_lea.sflag [#allocation4], 1
    %6434 = vsyncpa %s6433, 1

</llo_original>
